<compile_context>
chip_gen: v7x
topology: tpu7x:2x2x1
jax: 0.10.0
libtpu: 0.0.40
codegen_flags: <defaults>
</compile_context>

<pallas_src>
import numpy as np
import jax
import jax.numpy as jnp
from jax import lax
from jax.experimental import pallas as pl
from jax.experimental.pallas import tpu as pltpu


# ------------------------------ constants -----------------------------------

W_OUT = 18            # pooled image height/width (36 -> AdaptiveAvgPool2d(18))
S2 = W_OUT * W_OUT    # 324 pooled spatial positions per image
PAD0 = 24             # top/bottom margin rows in the conv2 scratch (>= 19, mult of 8)


# ---------------------------- fused Pallas kernel ----------------------------

def cnn3_fused_kernel(p_ref, w1_ref, b1_ref, m_ref, w2_ref, b2_ref,
                      pmat_ref, wfc_ref, bfc_ref, o_ref, pool_buf, tap_buf):
    # p_ref   : (B*S2, 36)   quadrant im2col patches for the B images of this step
    # w1_ref  : (36, 4*D)    block-diagonal conv1 weights (one block per quadrant)
    # b1_ref  : (1, 4*D)     conv1 bias tiled over the 4 pool quadrants
    # m_ref   : (9, B*S2, 1) per-tap 0/1 validity masks (conv2 SAME padding +
    #                        image-boundary isolation inside the shared buffer)
    # w2_ref  : (9*D, D)     conv2 weights, rows ordered [tap, cin]
    # b2_ref  : (1, D)
    # pmat_ref: (B, B*S2)    per-image averaging matrix (1/S2 on image b's columns)
    # wfc_ref : (D, CP)      fc weight^T zero-padded to CP=128 lanes
    # bfc_ref : (1, CP)
    # o_ref   : (1, B, CP)   lane-dense padded logits for this grid step
    # pool_buf: (PAD0 + B*S2 + PAD0, D) scratch holding the pooled images
    # tap_buf : (B*S2, 9*D)  scratch: conv2 taps concatenated on the lane axis
    D = b2_ref.shape[1]
    BS2 = tap_buf.shape[0]
    buf_rows = pool_buf.shape[0]

    # --- conv1 for all images and all 4 pool quadrants in ONE matmul ---------
    y1 = jnp.dot(p_ref[...], w1_ref[...], preferred_element_type=jnp.float32)
    y1 = jnp.maximum(y1 + b1_ref[...], 0.0)                      # (B*S2, 4*D)

    # --- exact 2x2 average pool: VPU add of the 4 quadrant lane-blocks -------
    pooled = 0.25 * (y1[:, 0:D] + y1[:, D:2 * D] +
                     y1[:, 2 * D:3 * D] + y1[:, 3 * D:4 * D])    # (B*S2, D)

    # Only the margin rows need zeroing (the per-tap masks already nullify any
    # out-of-image read, but a stray NaN in uninitialized scratch would survive
    # a multiply).  The interior is fully overwritten every step.
    pool_buf[0:PAD0, :] = jnp.zeros((PAD0, D), jnp.float32)
    pool_buf[PAD0 + BS2:buf_rows, :] = jnp.zeros((buf_rows - PAD0 - BS2, D),
                                                 jnp.float32)
    pool_buf[PAD0:PAD0 + BS2, :] = pooled

    # --- conv2 as ONE big-K matmul: (B*S2, 9*D) @ (9*D, D) --------------------
    # Each tap is a statically shifted window of the pooled buffer; the mask
    # zeroes neighbours that fall outside the 18x18 image (SAME padding) or
    # into the adjacent image when several images share the buffer.
    for kh in range(3):
        for kw in range(3):
            k = kh * 3 + kw
            off = (kh - 1) * W_OUT + (kw - 1)
            x_tap = pool_buf[PAD0 + off:PAD0 + off + BS2, :]     # (B*S2, D)
            if k != 4:                      # centre tap never leaves the image
                x_tap = x_tap * m_ref[k]
            tap_buf[:, k * D:(k + 1) * D] = x_tap
    acc = jnp.dot(tap_buf[...], w2_ref[...], preferred_element_type=jnp.float32)
    y2 = jnp.maximum(acc + b2_ref[...], 0.0)                     # (B*S2, D)

    # --- per-image global average pool (tiny matmul avoids unaligned reshapes)
    g = jnp.dot(pmat_ref[...], y2, preferred_element_type=jnp.float32)   # (B, D)

    # --- FC: lane-dense padded logits -----------------------------------------
    o_ref[0] = jnp.dot(g, wfc_ref[...],
                       preferred_element_type=jnp.float32) + bfc_ref[...]


# ------------------------------- JAX wrapper ---------------------------------

def cnn3_forward(x_nchw, params, imgs_per_step=None):
    w1, b1, w2, b2, wfc, bfc = params
    N, Cin, H, W = x_nchw.shape
    # NOTE: H = W = 36 so AdaptiveAvgPool2d(18) is exactly uniform 2x2 pooling.
    # TODO(synk): AdaptiveAvgPool2d(18) for H,W != 36 (uneven/overlapping
    # windows) is not implemented.
    assert Cin == 1 and H == 36 and W == 36
    D = w1.shape[0]
    C = wfc.shape[0]
    CP = 128                      # lane-padded logits width

    if imgs_per_step is None:
        # Fold image pairs into one grid step: big win on single-TC chips
        # (v5e/v6e) where grid=(N,) is just a sequential loop.  On v7x
        # (2 TensorCores) pass imgs_per_step=1 (for N=2) or N//2 so the
        # "parallel" batch grid axis keeps both cores busy.
        imgs_per_step = 2 if N % 2 == 0 else 1
    B = imgs_per_step
    assert N % B == 0
    steps = N // B
    BS2 = B * S2
    buf_rows = PAD0 + BS2 + PAD0

    # ---- conv1 quadrant im2col on the raw (tiny) input -----------------------
    # column layout: q*9 + (kh*3 + kw), q = pool quadrant (dy2*2 + dx2)
    # TODO(synk): for large N move this im2col inside the kernel (DMA the raw
    # padded image, build taps with shifted reads) to avoid the ~9x HBM blowup.
    xp = jnp.pad(x_nchw[:, 0], ((0, 0), (1, 1), (1, 1)))          # (N, 38, 38)
    cols = []
    for dy2 in range(2):                                          # pool quadrant
        for dx2 in range(2):
            for kh in range(3):                                   # conv tap
                for kw in range(3):
                    cols.append(xp[:, dy2 + kh: dy2 + kh + H: 2,
                                      dx2 + kw: dx2 + kw + W: 2])  # (N, 18, 18)
    p_all = jnp.stack(cols, axis=-1).reshape(N * S2, 36)

    # ---- weights in kernel-friendly layouts ----------------------------------
    w1_flat = jnp.transpose(w1, (2, 3, 1, 0)).reshape(9 * Cin, D)      # (9, D)
    w1_blk = jnp.kron(jnp.eye(4, dtype=w1.dtype), w1_flat)             # (36, 4D)
    b1_tiled = jnp.tile(b1, 4).reshape(1, 4 * D)
    w2_big = jnp.transpose(w2, (2, 3, 1, 0)).reshape(9 * D, D)         # [tap*ci, co]
    wfc_pad = jnp.zeros((D, CP), jnp.float32).at[:, :C].set(jnp.transpose(wfc))
    bfc_pad = jnp.zeros((1, CP), jnp.float32).at[0, :C].set(bfc)

    # ---- per-tap 0/1 validity masks (SAME padding + image isolation) ---------
    pos = np.arange(BS2)
    r = (pos % S2) // W_OUT
    c = (pos % S2) % W_OUT
    masks = np.zeros((9, BS2, 1), np.float32)
    for kh in range(3):
        for kw in range(3):
            valid = ((r + kh - 1 >= 0) & (r + kh - 1 < W_OUT) &
                     (c + kw - 1 >= 0) & (c + kw - 1 < W_OUT))
            masks[kh * 3 + kw, :, 0] = valid.astype(np.float32)
    masks = jnp.asarray(masks)

    # ---- per-image global-average matrix --------------------------------------
    pmat_np = np.zeros((B, BS2), np.float32)
    for b in range(B):
        pmat_np[b, b * S2:(b + 1) * S2] = 1.0 / S2
    pmat = jnp.asarray(pmat_np)

    # TODO(synk): for very large N, cast the MXU operands (patches, w1, taps,
    # w2, fc) to bfloat16 and pack images along the lane axis; at N=2 the
    # kernel is latency-bound and f32 keeps the accuracy check comfortable.
    out = pl.pallas_call(
        cnn3_fused_kernel,
        out_shape=jax.ShapeDtypeStruct((steps, B, CP), jnp.float32),
        grid=(steps,),
        in_specs=[
            pl.BlockSpec((BS2, 36), lambda s: (s, 0)),
            pl.BlockSpec((36, 4 * D), lambda s: (0, 0)),
            pl.BlockSpec((1, 4 * D), lambda s: (0, 0)),
            pl.BlockSpec((9, BS2, 1), lambda s: (0, 0, 0)),
            pl.BlockSpec((9 * D, D), lambda s: (0, 0)),
            pl.BlockSpec((1, D), lambda s: (0, 0)),
            pl.BlockSpec((B, BS2), lambda s: (0, 0)),
            pl.BlockSpec((D, CP), lambda s: (0, 0)),
            pl.BlockSpec((1, CP), lambda s: (0, 0)),
        ],
        out_specs=pl.BlockSpec((1, B, CP), lambda s: (s, 0, 0)),
        scratch_shapes=[pltpu.VMEM((buf_rows, D), jnp.float32),
                        pltpu.VMEM((BS2, 9 * D), jnp.float32)],
        compiler_params=pltpu.CompilerParams(
            dimension_semantics=("parallel",)),
    )(p_all, w1_blk, b1_tiled, masks, w2_big, b2.reshape(1, D), pmat,
      wfc_pad, bfc_pad)

    return out.reshape(N, CP)[:, :C]


# -------------------------------- reference ----------------------------------

def reference_forward(x, params):
    w1, b1, w2, b2, wfc, bfc = params
    dn = ('NCHW', 'OIHW', 'NCHW')
    y = lax.conv_general_dilated(x, w1, (1, 1), 'SAME', dimension_numbers=dn,
                                 precision=lax.Precision.HIGHEST)
    y = jax.nn.relu(y + b1[None, :, None, None])
    N, D, H, W = y.shape
    y = y.reshape(N, D, H // 2, 2, W // 2, 2).mean(axis=(3, 5))   # AdaptiveAvgPool2d(18)
    y = lax.conv_general_dilated(y, w2, (1, 1), 'SAME', dimension_numbers=dn,
                                 precision=lax.Precision.HIGHEST)
    y = jax.nn.relu(y + b2[None, :, None, None])
    y = y.mean(axis=(2, 3))                                       # AdaptiveAvgPool2d(1)
    return y @ wfc.T + bfc                                        # fc


# ----------------------------------- main ------------------------------------

if __name__ == "__main__":
    N, H, W = 2, 36, 36            # spatial 36 -> avgpool1 output 18 (exact 2x2)
    D, C = 32, 10                  # d (small) and num_classes

    key = jax.random.PRNGKey(0)
    ks = jax.random.split(key, 7)
    x = jax.random.normal(ks[0], (N, 1, H, W), dtype=jnp.float32)

    # Deterministic torch-like uniform(-1/sqrt(fan_in), 1/sqrt(fan_in)) init
    b1_bound = 1.0 / np.sqrt(1 * 3 * 3)
    b2_bound = 1.0 / np.sqrt(D * 3 * 3)
    fc_bound = 1.0 / np.sqrt(D)
    w1 = jax.random.uniform(ks[1], (D, 1, 3, 3), jnp.float32, -b1_bound, b1_bound)
    b1 = jax.random.uniform(ks[2], (D,), jnp.float32, -b1_bound, b1_bound)
    w2 = jax.random.uniform(ks[3], (D, D, 3, 3), jnp.float32, -b2_bound, b2_bound)
    b2 = jax.random.uniform(ks[4], (D,), jnp.float32, -b2_bound, b2_bound)
    wfc = jax.random.uniform(ks[5], (C, D), jnp.float32, -fc_bound, fc_bound)
    bfc = jax.random.uniform(ks[6], (C,), jnp.float32, -fc_bound, fc_bound)
    params = (w1, b1, w2, b2, wfc, bfc)

    out = jax.jit(cnn3_forward)(x, params)
    out = jax.block_until_ready(out)

    ref = np.asarray(reference_forward(x, params))
    assert out.shape == (N, C), out.shape
    if not np.allclose(np.asarray(out), ref, rtol=1e-2, atol=1e-2):
        raise RuntimeError(
            f"mismatch vs reference, max abs diff = {np.max(np.abs(np.asarray(out) - ref))}")

    print("KERNEL_OK")
</pallas_src>

<mosaic_0001>
module attributes {stable_mosaic.version = 11 : i64} {
  func.func @cnn3_fused_kernel(%arg0: i32, %arg1: memref<648x36xf32, #tpu.memory_space<vmem>>, %arg2: memref<36x128xf32, #tpu.memory_space<vmem>>, %arg3: memref<1x128xf32, #tpu.memory_space<vmem>>, %arg4: memref<9x648x1xf32, #tpu.memory_space<vmem>>, %arg5: memref<288x32xf32, #tpu.memory_space<vmem>>, %arg6: memref<1x32xf32, #tpu.memory_space<vmem>>, %arg7: memref<2x648xf32, #tpu.memory_space<vmem>>, %arg8: memref<32x128xf32, #tpu.memory_space<vmem>>, %arg9: memref<1x128xf32, #tpu.memory_space<vmem>>, %arg10: memref<1x2x128xf32, #tpu.memory_space<vmem>>, %arg11: memref<696x32xf32, #tpu.memory_space<vmem>>, %arg12: memref<648x288xf32, #tpu.memory_space<vmem>>) attributes {dimension_semantics = [#tpu.dimension_semantics<parallel>], iteration_bounds = array<i64: 1>, scalar_prefetch = 0 : i64, scratch_operands = 2 : i64, tpu.core_type = #tpu.core_type<tc>, window_params = [{transform_indices = @transform_0, window_bounds = array<i64: 648, 36>}, {pipeline_mode = #tpu.pipeline_mode<synchronous>, transform_indices = @transform_1, window_bounds = array<i64: 36, 128>}, {pipeline_mode = #tpu.pipeline_mode<synchronous>, transform_indices = @transform_2, window_bounds = array<i64: 1, 128>}, {pipeline_mode = #tpu.pipeline_mode<synchronous>, transform_indices = @transform_3, window_bounds = array<i64: 9, 648, 1>}, {pipeline_mode = #tpu.pipeline_mode<synchronous>, transform_indices = @transform_4, window_bounds = array<i64: 288, 32>}, {pipeline_mode = #tpu.pipeline_mode<synchronous>, transform_indices = @transform_5, window_bounds = array<i64: 1, 32>}, {pipeline_mode = #tpu.pipeline_mode<synchronous>, transform_indices = @transform_6, window_bounds = array<i64: 2, 648>}, {pipeline_mode = #tpu.pipeline_mode<synchronous>, transform_indices = @transform_7, window_bounds = array<i64: 32, 128>}, {pipeline_mode = #tpu.pipeline_mode<synchronous>, transform_indices = @transform_8, window_bounds = array<i64: 1, 128>}, {transform_indices = @transform_9, window_bounds = array<i64: 1, 2, 128>}]} {
    %c0 = arith.constant 0 : index
    %c0_0 = arith.constant 0 : index
    %0 = vector.load %arg1[%c0, %c0_0] : memref<648x36xf32, #tpu.memory_space<vmem>>, vector<648x36xf32>
    %c0_1 = arith.constant 0 : index
    %c0_2 = arith.constant 0 : index
    %1 = vector.load %arg2[%c0_1, %c0_2] : memref<36x128xf32, #tpu.memory_space<vmem>>, vector<36x128xf32>
    %cst = arith.constant dense<0.000000e+00> : vector<648x128xf32>
    %2 = tpu.matmul %0, %1, %cst {dimension_numbers = #tpu.dot_dimension_numbers<[1], [0], [0], [1], [0, 0, 1, 1], [], []>} : vector<648x36xf32>, vector<36x128xf32>, vector<648x128xf32> -> vector<648x128xf32>
    %c0_3 = arith.constant 0 : index
    %c0_4 = arith.constant 0 : index
    %3 = vector.load %arg3[%c0_3, %c0_4] : memref<1x128xf32, #tpu.memory_space<vmem>>, vector<1x128xf32>
    %4 = vector.broadcast %3 : vector<1x128xf32> to vector<648x128xf32>
    %5 = arith.addf %2, %4 : vector<648x128xf32>
    %cst_5 = arith.constant 0.000000e+00 : f32
    %6 = vector.broadcast %cst_5 : f32 to vector<648x128xf32>
    %7 = arith.maximumf %5, %6 : vector<648x128xf32>
    %8 = vector.extract_strided_slice %7 {offsets = [0, 0], sizes = [648, 32], strides = [1, 1]} : vector<648x128xf32> to vector<648x32xf32>
    %9 = vector.extract_strided_slice %7 {offsets = [0, 32], sizes = [648, 32], strides = [1, 1]} : vector<648x128xf32> to vector<648x32xf32>
    %10 = arith.addf %8, %9 : vector<648x32xf32>
    %11 = vector.extract_strided_slice %7 {offsets = [0, 64], sizes = [648, 32], strides = [1, 1]} : vector<648x128xf32> to vector<648x32xf32>
    %12 = arith.addf %10, %11 : vector<648x32xf32>
    %13 = vector.extract_strided_slice %7 {offsets = [0, 96], sizes = [648, 32], strides = [1, 1]} : vector<648x128xf32> to vector<648x32xf32>
    %14 = arith.addf %12, %13 : vector<648x32xf32>
    %cst_6 = arith.constant 2.500000e-01 : f32
    %15 = vector.broadcast %cst_6 : f32 to vector<648x32xf32>
    %16 = arith.mulf %15, %14 : vector<648x32xf32>
    %cst_7 = arith.constant 0.000000e+00 : f32
    %17 = vector.broadcast %cst_7 : f32 to vector<24x32xf32>
    %c0_8 = arith.constant 0 : index
    %c0_9 = arith.constant 0 : index
    %18 = vector.load %arg11[%c0_8, %c0_9] : memref<696x32xf32, #tpu.memory_space<vmem>>, vector<24x32xf32>
    tpu.vector_store %arg11[%c0_8, %c0_9], %17 {strides = array<i32>} : memref<696x32xf32, #tpu.memory_space<vmem>>, vector<24x32xf32>,
    %cst_10 = arith.constant 0.000000e+00 : f32
    %19 = vector.broadcast %cst_10 : f32 to vector<24x32xf32>
    %c672 = arith.constant 672 : index
    %c0_11 = arith.constant 0 : index
    %20 = vector.load %arg11[%c672, %c0_11] : memref<696x32xf32, #tpu.memory_space<vmem>>, vector<24x32xf32>
    tpu.vector_store %arg11[%c672, %c0_11], %19 {strides = array<i32>} : memref<696x32xf32, #tpu.memory_space<vmem>>, vector<24x32xf32>,
    %c24 = arith.constant 24 : index
    %c0_12 = arith.constant 0 : index
    %21 = vector.load %arg11[%c24, %c0_12] : memref<696x32xf32, #tpu.memory_space<vmem>>, vector<648x32xf32>
    tpu.vector_store %arg11[%c24, %c0_12], %16 {strides = array<i32>} : memref<696x32xf32, #tpu.memory_space<vmem>>, vector<648x32xf32>,
    %c5 = arith.constant 5 : index
    %c0_13 = arith.constant 0 : index
    %22 = vector.load %arg11[%c5, %c0_13] : memref<696x32xf32, #tpu.memory_space<vmem>>, vector<648x32xf32>
    %c0_14 = arith.constant 0 : index
    %c0_15 = arith.constant 0 : index
    %c0_16 = arith.constant 0 : index
    %23 = vector.load %arg4[%c0_14, %c0_15, %c0_16] : memref<9x648x1xf32, #tpu.memory_space<vmem>>, vector<1x648x1xf32>
    %24 = vector.shape_cast %23 : vector<1x648x1xf32> to vector<648x1xf32>
    %25 = vector.broadcast %24 : vector<648x1xf32> to vector<648x32xf32>
    %26 = arith.mulf %22, %25 : vector<648x32xf32>
    %c0_17 = arith.constant 0 : index
    %c0_18 = arith.constant 0 : index
    %27 = vector.load %arg12[%c0_17, %c0_18] : memref<648x288xf32, #tpu.memory_space<vmem>>, vector<648x32xf32>
    tpu.vector_store %arg12[%c0_17, %c0_18], %26 {strides = array<i32>} : memref<648x288xf32, #tpu.memory_space<vmem>>, vector<648x32xf32>,
    %c6 = arith.constant 6 : index
    %c0_19 = arith.constant 0 : index
    %28 = vector.load %arg11[%c6, %c0_19] : memref<696x32xf32, #tpu.memory_space<vmem>>, vector<648x32xf32>
    %c1 = arith.constant 1 : index
    %c0_20 = arith.constant 0 : index
    %c0_21 = arith.constant 0 : index
    %29 = vector.load %arg4[%c1, %c0_20, %c0_21] : memref<9x648x1xf32, #tpu.memory_space<vmem>>, vector<1x648x1xf32>
    %30 = vector.shape_cast %29 : vector<1x648x1xf32> to vector<648x1xf32>
    %31 = vector.broadcast %30 : vector<648x1xf32> to vector<648x32xf32>
    %32 = arith.mulf %28, %31 : vector<648x32xf32>
    %c0_22 = arith.constant 0 : index
    %c32 = arith.constant 32 : index
    %33 = vector.load %arg12[%c0_22, %c32] : memref<648x288xf32, #tpu.memory_space<vmem>>, vector<648x32xf32>
    tpu.vector_store %arg12[%c0_22, %c32], %32 {strides = array<i32>} : memref<648x288xf32, #tpu.memory_space<vmem>>, vector<648x32xf32>,
    %c7 = arith.constant 7 : index
    %c0_23 = arith.constant 0 : index
    %34 = vector.load %arg11[%c7, %c0_23] : memref<696x32xf32, #tpu.memory_space<vmem>>, vector<648x32xf32>
    %c2 = arith.constant 2 : index
    %c0_24 = arith.constant 0 : index
    %c0_25 = arith.constant 0 : index
    %35 = vector.load %arg4[%c2, %c0_24, %c0_25] : memref<9x648x1xf32, #tpu.memory_space<vmem>>, vector<1x648x1xf32>
    %36 = vector.shape_cast %35 : vector<1x648x1xf32> to vector<648x1xf32>
    %37 = vector.broadcast %36 : vector<648x1xf32> to vector<648x32xf32>
    %38 = arith.mulf %34, %37 : vector<648x32xf32>
    %c0_26 = arith.constant 0 : index
    %c64 = arith.constant 64 : index
    %39 = vector.load %arg12[%c0_26, %c64] : memref<648x288xf32, #tpu.memory_space<vmem>>, vector<648x32xf32>
    tpu.vector_store %arg12[%c0_26, %c64], %38 {strides = array<i32>} : memref<648x288xf32, #tpu.memory_space<vmem>>, vector<648x32xf32>,
    %c23 = arith.constant 23 : index
    %c0_27 = arith.constant 0 : index
    %40 = vector.load %arg11[%c23, %c0_27] : memref<696x32xf32, #tpu.memory_space<vmem>>, vector<648x32xf32>
    %c3 = arith.constant 3 : index
    %c0_28 = arith.constant 0 : index
    %c0_29 = arith.constant 0 : index
    %41 = vector.load %arg4[%c3, %c0_28, %c0_29] : memref<9x648x1xf32, #tpu.memory_space<vmem>>, vector<1x648x1xf32>
    %42 = vector.shape_cast %41 : vector<1x648x1xf32> to vector<648x1xf32>
    %43 = vector.broadcast %42 : vector<648x1xf32> to vector<648x32xf32>
    %44 = arith.mulf %40, %43 : vector<648x32xf32>
    %c0_30 = arith.constant 0 : index
    %c96 = arith.constant 96 : index
    %45 = vector.load %arg12[%c0_30, %c96] : memref<648x288xf32, #tpu.memory_space<vmem>>, vector<648x32xf32>
    tpu.vector_store %arg12[%c0_30, %c96], %44 {strides = array<i32>} : memref<648x288xf32, #tpu.memory_space<vmem>>, vector<648x32xf32>,
    %c24_31 = arith.constant 24 : index
    %c0_32 = arith.constant 0 : index
    %46 = vector.load %arg11[%c24_31, %c0_32] : memref<696x32xf32, #tpu.memory_space<vmem>>, vector<648x32xf32>
    %c0_33 = arith.constant 0 : index
    %c128 = arith.constant 128 : index
    %47 = vector.load %arg12[%c0_33, %c128] : memref<648x288xf32, #tpu.memory_space<vmem>>, vector<648x32xf32>
    tpu.vector_store %arg12[%c0_33, %c128], %46 {strides = array<i32>} : memref<648x288xf32, #tpu.memory_space<vmem>>, vector<648x32xf32>,
    %c25 = arith.constant 25 : index
    %c0_34 = arith.constant 0 : index
    %48 = vector.load %arg11[%c25, %c0_34] : memref<696x32xf32, #tpu.memory_space<vmem>>, vector<648x32xf32>
    %c5_35 = arith.constant 5 : index
    %c0_36 = arith.constant 0 : index
    %c0_37 = arith.constant 0 : index
    %49 = vector.load %arg4[%c5_35, %c0_36, %c0_37] : memref<9x648x1xf32, #tpu.memory_space<vmem>>, vector<1x648x1xf32>
    %50 = vector.shape_cast %49 : vector<1x648x1xf32> to vector<648x1xf32>
    %51 = vector.broadcast %50 : vector<648x1xf32> to vector<648x32xf32>
    %52 = arith.mulf %48, %51 : vector<648x32xf32>
    %c0_38 = arith.constant 0 : index
    %c160 = arith.constant 160 : index
    %53 = vector.load %arg12[%c0_38, %c160] : memref<648x288xf32, #tpu.memory_space<vmem>>, vector<648x32xf32>
    tpu.vector_store %arg12[%c0_38, %c160], %52 {strides = array<i32>} : memref<648x288xf32, #tpu.memory_space<vmem>>, vector<648x32xf32>,
    %c41 = arith.constant 41 : index
    %c0_39 = arith.constant 0 : index
    %54 = vector.load %arg11[%c41, %c0_39] : memref<696x32xf32, #tpu.memory_space<vmem>>, vector<648x32xf32>
    %c6_40 = arith.constant 6 : index
    %c0_41 = arith.constant 0 : index
    %c0_42 = arith.constant 0 : index
    %55 = vector.load %arg4[%c6_40, %c0_41, %c0_42] : memref<9x648x1xf32, #tpu.memory_space<vmem>>, vector<1x648x1xf32>
    %56 = vector.shape_cast %55 : vector<1x648x1xf32> to vector<648x1xf32>
    %57 = vector.broadcast %56 : vector<648x1xf32> to vector<648x32xf32>
    %58 = arith.mulf %54, %57 : vector<648x32xf32>
    %c0_43 = arith.constant 0 : index
    %c192 = arith.constant 192 : index
    %59 = vector.load %arg12[%c0_43, %c192] : memref<648x288xf32, #tpu.memory_space<vmem>>, vector<648x32xf32>
    tpu.vector_store %arg12[%c0_43, %c192], %58 {strides = array<i32>} : memref<648x288xf32, #tpu.memory_space<vmem>>, vector<648x32xf32>,
    %c42 = arith.constant 42 : index
    %c0_44 = arith.constant 0 : index
    %60 = vector.load %arg11[%c42, %c0_44] : memref<696x32xf32, #tpu.memory_space<vmem>>, vector<648x32xf32>
    %c7_45 = arith.constant 7 : index
    %c0_46 = arith.constant 0 : index
    %c0_47 = arith.constant 0 : index
    %61 = vector.load %arg4[%c7_45, %c0_46, %c0_47] : memref<9x648x1xf32, #tpu.memory_space<vmem>>, vector<1x648x1xf32>
    %62 = vector.shape_cast %61 : vector<1x648x1xf32> to vector<648x1xf32>
    %63 = vector.broadcast %62 : vector<648x1xf32> to vector<648x32xf32>
    %64 = arith.mulf %60, %63 : vector<648x32xf32>
    %c0_48 = arith.constant 0 : index
    %c224 = arith.constant 224 : index
    %65 = vector.load %arg12[%c0_48, %c224] : memref<648x288xf32, #tpu.memory_space<vmem>>, vector<648x32xf32>
    tpu.vector_store %arg12[%c0_48, %c224], %64 {strides = array<i32>} : memref<648x288xf32, #tpu.memory_space<vmem>>, vector<648x32xf32>,
    %c43 = arith.constant 43 : index
    %c0_49 = arith.constant 0 : index
    %66 = vector.load %arg11[%c43, %c0_49] : memref<696x32xf32, #tpu.memory_space<vmem>>, vector<648x32xf32>
    %c8 = arith.constant 8 : index
    %c0_50 = arith.constant 0 : index
    %c0_51 = arith.constant 0 : index
    %67 = vector.load %arg4[%c8, %c0_50, %c0_51] : memref<9x648x1xf32, #tpu.memory_space<vmem>>, vector<1x648x1xf32>
    %68 = vector.shape_cast %67 : vector<1x648x1xf32> to vector<648x1xf32>
    %69 = vector.broadcast %68 : vector<648x1xf32> to vector<648x32xf32>
    %70 = arith.mulf %66, %69 : vector<648x32xf32>
    %c0_52 = arith.constant 0 : index
    %c256 = arith.constant 256 : index
    %71 = vector.load %arg12[%c0_52, %c256] : memref<648x288xf32, #tpu.memory_space<vmem>>, vector<648x32xf32>
    tpu.vector_store %arg12[%c0_52, %c256], %70 {strides = array<i32>} : memref<648x288xf32, #tpu.memory_space<vmem>>, vector<648x32xf32>,
    %c0_53 = arith.constant 0 : index
    %c0_54 = arith.constant 0 : index
    %72 = vector.load %arg12[%c0_53, %c0_54] : memref<648x288xf32, #tpu.memory_space<vmem>>, vector<648x288xf32>
    %c0_55 = arith.constant 0 : index
    %c0_56 = arith.constant 0 : index
    %73 = vector.load %arg5[%c0_55, %c0_56] : memref<288x32xf32, #tpu.memory_space<vmem>>, vector<288x32xf32>
    %cst_57 = arith.constant dense<0.000000e+00> : vector<648x32xf32>
    %74 = tpu.matmul %72, %73, %cst_57 {dimension_numbers = #tpu.dot_dimension_numbers<[1], [0], [0], [1], [0, 0, 1, 1], [], []>} : vector<648x288xf32>, vector<288x32xf32>, vector<648x32xf32> -> vector<648x32xf32>
    %c0_58 = arith.constant 0 : index
    %c0_59 = arith.constant 0 : index
    %75 = vector.load %arg6[%c0_58, %c0_59] : memref<1x32xf32, #tpu.memory_space<vmem>>, vector<1x32xf32>
    %76 = vector.broadcast %75 : vector<1x32xf32> to vector<648x32xf32>
    %77 = arith.addf %74, %76 : vector<648x32xf32>
    %cst_60 = arith.constant 0.000000e+00 : f32
    %78 = vector.broadcast %cst_60 : f32 to vector<648x32xf32>
    %79 = arith.maximumf %77, %78 : vector<648x32xf32>
    %c0_61 = arith.constant 0 : index
    %c0_62 = arith.constant 0 : index
    %80 = vector.load %arg7[%c0_61, %c0_62] : memref<2x648xf32, #tpu.memory_space<vmem>>, vector<2x648xf32>
    %cst_63 = arith.constant dense<0.000000e+00> : vector<2x32xf32>
    %81 = tpu.matmul %80, %79, %cst_63 {dimension_numbers = #tpu.dot_dimension_numbers<[1], [0], [0], [1], [0, 0, 1, 1], [], []>} : vector<2x648xf32>, vector<648x32xf32>, vector<2x32xf32> -> vector<2x32xf32>
    %c0_64 = arith.constant 0 : index
    %c0_65 = arith.constant 0 : index
    %82 = vector.load %arg8[%c0_64, %c0_65] : memref<32x128xf32, #tpu.memory_space<vmem>>, vector<32x128xf32>
    %cst_66 = arith.constant dense<0.000000e+00> : vector<2x128xf32>
    %83 = tpu.matmul %81, %82, %cst_66 {dimension_numbers = #tpu.dot_dimension_numbers<[1], [0], [0], [1], [0, 0, 1, 1], [], []>} : vector<2x32xf32>, vector<32x128xf32>, vector<2x128xf32> -> vector<2x128xf32>
    %c0_67 = arith.constant 0 : index
    %c0_68 = arith.constant 0 : index
    %84 = vector.load %arg9[%c0_67, %c0_68] : memref<1x128xf32, #tpu.memory_space<vmem>>, vector<1x128xf32>
    %85 = vector.broadcast %84 : vector<1x128xf32> to vector<2x128xf32>
    %86 = arith.addf %83, %85 : vector<2x128xf32>
    %c0_69 = arith.constant 0 : index
    %c0_70 = arith.constant 0 : index
    %c0_71 = arith.constant 0 : index
    %87 = vector.load %arg10[%c0_69, %c0_70, %c0_71] : memref<1x2x128xf32, #tpu.memory_space<vmem>>, vector<1x2x128xf32>
    %88 = vector.shape_cast %87 : vector<1x2x128xf32> to vector<2x128xf32>
    %89 = vector.shape_cast %86 : vector<2x128xf32> to vector<1x2x128xf32>
    tpu.vector_store %arg10[%c0_69, %c0_70, %c0_71], %89 {strides = array<i32>} : memref<1x2x128xf32, #tpu.memory_space<vmem>>, vector<1x2x128xf32>,
    return
  }
  func.func @transform_0(%arg0: i32) -> (i32, i32) {
    %c0_i32 = arith.constant 0 : i32
    %c0_i32_0 = arith.constant 0 : i32
    return %arg0, %c0_i32 : i32, i32
  }
  func.func @transform_1(%arg0: i32) -> (i32, i32) {
    %c0_i32 = arith.constant 0 : i32
    %c0_i32_0 = arith.constant 0 : i32
    %c0_i32_1 = arith.constant 0 : i32
    return %c0_i32, %c0_i32_0 : i32, i32
  }
  func.func @transform_2(%arg0: i32) -> (i32, i32) {
    %c0_i32 = arith.constant 0 : i32
    %c0_i32_0 = arith.constant 0 : i32
    %c0_i32_1 = arith.constant 0 : i32
    return %c0_i32, %c0_i32_0 : i32, i32
  }
  func.func @transform_3(%arg0: i32) -> (i32, i32, i32) {
    %c0_i32 = arith.constant 0 : i32
    %c0_i32_0 = arith.constant 0 : i32
    %c0_i32_1 = arith.constant 0 : i32
    %c0_i32_2 = arith.constant 0 : i32
    return %c0_i32, %c0_i32_0, %c0_i32_1 : i32, i32, i32
  }
  func.func @transform_4(%arg0: i32) -> (i32, i32) {
    %c0_i32 = arith.constant 0 : i32
    %c0_i32_0 = arith.constant 0 : i32
    %c0_i32_1 = arith.constant 0 : i32
    return %c0_i32, %c0_i32_0 : i32, i32
  }
  func.func @transform_5(%arg0: i32) -> (i32, i32) {
    %c0_i32 = arith.constant 0 : i32
    %c0_i32_0 = arith.constant 0 : i32
    %c0_i32_1 = arith.constant 0 : i32
    return %c0_i32, %c0_i32_0 : i32, i32
  }
  func.func @transform_6(%arg0: i32) -> (i32, i32) {
    %c0_i32 = arith.constant 0 : i32
    %c0_i32_0 = arith.constant 0 : i32
    %c0_i32_1 = arith.constant 0 : i32
    return %c0_i32, %c0_i32_0 : i32, i32
  }
  func.func @transform_7(%arg0: i32) -> (i32, i32) {
    %c0_i32 = arith.constant 0 : i32
    %c0_i32_0 = arith.constant 0 : i32
    %c0_i32_1 = arith.constant 0 : i32
    return %c0_i32, %c0_i32_0 : i32, i32
  }
  func.func @transform_8(%arg0: i32) -> (i32, i32) {
    %c0_i32 = arith.constant 0 : i32
    %c0_i32_0 = arith.constant 0 : i32
    %c0_i32_1 = arith.constant 0 : i32
    return %c0_i32, %c0_i32_0 : i32, i32
  }
  func.func @transform_9(%arg0: i32) -> (i32, i32, i32) {
    %c0_i32 = arith.constant 0 : i32
    %c0_i32_0 = arith.constant 0 : i32
    %c0_i32_1 = arith.constant 0 : i32
    return %arg0, %c0_i32, %c0_i32_0 : i32, i32, i32
  }
}

</mosaic_0001>

<llo_original>
// kernel: mul.4
$region0: #{mul.4}
  %s0 = inlined_call_operand.vmem [shape: f32[3,3,32], index: 0, kind: input, shape index: {}]
  %s1 = inlined_call_operand.vmem [shape: f32[9,32], index: 1, kind: output, shape index: {}]
  $region1: #{mul.4} parent=0
    #allocation0 [shape = 'u8[12288]{0}', space=vmem, size = 0x3000, scoped, tag = 'scoped mem for input reshape']
    %s3 = sshllo.u32 0, 4
    %s4 = smul.addr 4, 2
    %s5 = scalar_lea.vmem %s0, %s4
    %v6 = vld [vmem:[%s5] sm:%s3]
    %s7 = scalar_lea.vmem [#allocation0], 16
    %8 = vst [vmem:[%s7] sm:%s3] %v6
    %s9 = scalar_lea.vmem %s0, 4
    %v10 = vld [vmem:[%s9] sm:%s3]
    %s11 = scalar_lea.vmem [#allocation0], 8
    %12 = vst [vmem:[%s11] sm:%s3] %v10
    %v13 = vld [vmem:[%s0] sm:%s3]
    %14 = vst [vmem:[#allocation0] sm:%s3] %v13
    %v15 = vld [vmem:[#allocation0] sm:$0x7]
    %vm16 = vcmask 261120
    %17 = vst.msk [vmem:[%s1] sm:$0x7] %vm16, %v15
    %s18 = scalar_lea.vmem [#allocation0], 8
    %v19 = vld [vmem:[%s18] sm:$0x7]
    %vm20 = vcmask 261120
    %s21 = scalar_lea.vmem %s1, 3
    %22 = vst.msk [vmem:[%s21] sm:$0x7] %vm20, %v19
    %s23 = scalar_lea.vmem [#allocation0], 16
    %v24 = vld [vmem:[%s23] sm:$0x7]
    %vm25 = vcmask 261120
    %s26 = scalar_lea.vmem %s1, 6
    %27 = vst.msk [vmem:[%s26] sm:$0x7] %vm25, %v24

// kernel: tile.8
$region0: #{tile.8}
  #allocation2 [shape = 's32[1]{0}', space=sflag, size = 0x4, scoped, tag = 'scoped memory for tile.8']
  %s0 = inlined_call_operand.hbm [shape: f32[32], index: 0, kind: input, shape index: {}]
  %s1 = inlined_call_operand.vmem [shape: f32[4,32], index: 1, kind: output, shape index: {}]
  $region1: #{tile.8} parent=0
    #allocation0 [shape = 'u8[512]{0}', space=vmem, size = 0x400, scoped, tag = 'operand span for operand 0']
    #allocation1 [shape = 's32[1]{0}', space=sflag, size = 0x4, scoped, tag = 'scoped memory for tile.8']
    %2 = vsyncpa [#allocation1], 0
    // Predicated region
    $region2: #{tile.8} parent=1 // pred_check
      _
    $region3: #{tile.8} parent=1 // pred_check_branch
      %4 = sbr.rel (0) target = $region5
    $region4: #{tile.8} parent=1 // pred_region
      %s6 = ssub.s32 16, 16
      %7 = vsyncadd [#allocation1], %s6
      %s9 = sshll.u32 [#allocation0], 4
      %s10 = int_to_ptr.vmem [resolvable:$true] %s9
      %12 = dma.hbm_to_vmem [thread:$0]  %s0, 16, %s10, [#allocation1]
    $region5: #{tile.8} parent=1 // pred_fallthru
      _
    // Predicated region
    $region6: #{tile.8} parent=1 // pred_check
      _
    $region7: #{tile.8} parent=1 // pred_check_branch
      %14 = sbr.rel (0) target = $region9
    $region8: #{tile.8} parent=1 // pred_region
      %15 = dma.done [#allocation1], 16
    $region9: #{tile.8} parent=1 // pred_fallthru
      _
    %v16 = vld [vmem:[#allocation0] ss:$0 sm:$0xff]
    %17 = vst [vmem:[%s1] sm:$0xf] %v16
    %18 = vsyncpa [#allocation1], 1

// kernel: tile.9
$region0: #{tile.9}
  %s0 = inlined_call_operand.vmem [shape: f32[4,32], index: 0, kind: input, shape index: {}]
  %s1 = inlined_call_operand.vmem [shape: f32[1,128], index: 1, kind: output, shape index: {}]
  $region1: #{tile.9} parent=0
    #allocation0 [shape = 'u8[4096]{0}', space=vmem, size = 0x1000, scoped, tag = 'scoped mem for output reshape']
    #allocation1 [shape = 'u8[4096]{0}', space=vmem, size = 0x1000, scoped, tag = 'scoped mem for input reshape']
    %s3 = sshllo.u32 0, 4
    %v4 = vld [vmem:[%s0] sm:%s3]
    %5 = vst [vmem:[#allocation1] sm:%s3] %v4
    %v6 = vld [vmem:[#allocation1] sm:$0x1]
    %vm7 = vcmask 261120
    %8 = vst.msk [vmem:[#allocation0] sm:$0x1] %vm7, %v6
    %s9 = scalar_lea.vmem [#allocation1], 3
    %v10 = vld [vmem:[%s9] sm:$0x1]
    %11 = vrot.lane.b32.xlu0 %v10, 96
    %v12 = vpop.permute.xlu0 %11
    %vm13 = vcmask 1048320
    %14 = vst.msk [vmem:[#allocation0] sm:$0x1] %vm13, %v12
    %s15 = scalar_lea.vmem [#allocation1], 2
    %v16 = vld [vmem:[%s15] sm:$0x1]
    %17 = vrot.lane.b32.xlu0 %v16, 64
    %v18 = vpop.permute.xlu0 %17
    %vm19 = vcmask 785920
    %20 = vst.msk [vmem:[#allocation0] sm:$0x1] %vm19, %v18
    %s21 = scalar_lea.vmem [#allocation1], 1
    %v22 = vld [vmem:[%s21] sm:$0x1]
    %23 = vrot.lane.b32.xlu0 %v22, 32
    %v24 = vpop.permute.xlu0 %23
    %vm25 = vcmask 523520
    %26 = vst.msk [vmem:[#allocation0] sm:$0x1] %vm25, %v24
    %s28 = sshllo.u32 0, 1
    %v30 = vld [vmem:[#allocation0] sm:%s28]
    %s31 = sshllo.u32 0, 1
    %32 = vst [vmem:[%s1] sm:%s31] %v30

// kernel: cnn3_forward.1
$region0: #{cnn3_forward.1}
  #allocation0 [shape = 'u32[]', space=smem, size = 0x4, offset = 0x4, fixed_abs, tag = 'smem constant byte address 0x4 - core index']
  #allocation1 [shape = 'u32[144,128]{1,0:T(1,128)}', space=vmem, size = 0x12000, scoped, tag = 'internal scratch']
  #allocation2 [shape = 'f32[696,32]{1,0:T(8,128)}', space=vmem, size = 0x57000, scoped, tag = 'scratch operand']
  #allocation3 [shape = 'f32[648,288]{1,0:T(8,128)}', space=vmem, size = 0xf3000, scoped, tag = 'scratch operand']
  %s0 = inlined_call_operand.vmem [shape: f32[648,36], index: 0, kind: input, shape index: {}]
  %s1 = inlined_call_operand.vmem [shape: f32[36,128], index: 1, kind: input, shape index: {}]
  %s2 = inlined_call_operand.vmem [shape: f32[1,128], index: 2, kind: input, shape index: {}]
  %s3 = inlined_call_operand.vmem [shape: f32[9,648,1], index: 3, kind: input, shape index: {}]
  %s4 = inlined_call_operand.vmem [shape: f32[288,32], index: 4, kind: input, shape index: {}]
  %s5 = inlined_call_operand.vmem [shape: f32[1,32], index: 5, kind: input, shape index: {}]
  %s6 = inlined_call_operand.vmem [shape: f32[2,648], index: 6, kind: input, shape index: {}]
  %s7 = inlined_call_operand.vmem [shape: f32[32,128], index: 7, kind: input, shape index: {}]
  %s8 = inlined_call_operand.vmem [shape: f32[1,128], index: 8, kind: input, shape index: {}]
  %s9 = inlined_call_operand.hbm [shape: f32[1,2,128], index: 9, kind: output, shape index: {}]
  %s10 = sld [smem:[#allocation0]]
  $region46: #{cnn3_forward.1} parent=0
    _
  %s12 = ssub.s32 1, %s10
  %s13 = scalar_select 0, %s12, %s10
  $region1: #{cnn3_forward.1} parent=0
    #allocation4 [shape = 'u8[1024]{0}', space=vmem, size = 0x400, scoped, tag = 'output window, operand 0, single buffered']
    #allocation5 [shape = 's32[1]{0}', space=sflag, size = 0x4, scoped, tag = 'scoped memory for cnn3_forward.1']
    %14 = vsyncpa [#allocation5], 0
    // Predicated region
    $region2: #{cnn3_forward.1} parent=1 // pred_check
      _
    $region3: #{cnn3_forward.1} parent=1 // pred_check_branch
      %16 = sbr.rel (0) target = $region5
    $region4: #{cnn3_forward.1} parent=1 // pred_region
      _
    $region5: #{cnn3_forward.1} parent=1 // pred_fallthru
      _
    // Predicated region
    $region6: #{cnn3_forward.1} parent=1 // pred_check
      _
    $region7: #{cnn3_forward.1} parent=1 // pred_check_branch
      %18 = sbr.rel (0) target = $region9
    $region8: #{cnn3_forward.1} parent=1 // pred_region
      _
    $region9: #{cnn3_forward.1} parent=1 // pred_fallthru
      _
    // Predicated region
    $region10: #{cnn3_forward.1} parent=1 // pred_check
      _
    $region11: #{cnn3_forward.1} parent=1 // pred_check_branch
      %20 = sbr.rel (0) target = $region13
    $region12: #{cnn3_forward.1} parent=1 // pred_region
      _
    $region13: #{cnn3_forward.1} parent=1 // pred_fallthru
      _
    // Predicated region
    $region14: #{cnn3_forward.1} parent=1 // pred_check
      _
    $region15: #{cnn3_forward.1} parent=1 // pred_check_branch
      %22 = sbr.rel (0) target = $region17
    $region16: #{cnn3_forward.1} parent=1 // pred_region
      _
    $region17: #{cnn3_forward.1} parent=1 // pred_fallthru
      _
    // Predicated region
    $region18: #{cnn3_forward.1} parent=1 // pred_check
      _
    $region19: #{cnn3_forward.1} parent=1 // pred_check_branch
      %24 = sbr.rel (0) target = $region21
    $region20: #{cnn3_forward.1} parent=1 // pred_region
      _
    $region21: #{cnn3_forward.1} parent=1 // pred_fallthru
      _
    // Predicated region
    $region22: #{cnn3_forward.1} parent=1 // pred_check
      _
    $region23: #{cnn3_forward.1} parent=1 // pred_check_branch
      %26 = sbr.rel (0) target = $region25
    $region24: #{cnn3_forward.1} parent=1 // pred_region
      _
    $region25: #{cnn3_forward.1} parent=1 // pred_fallthru
      _
    // Predicated region
    $region26: #{cnn3_forward.1} parent=1 // pred_check
      _
    $region27: #{cnn3_forward.1} parent=1 // pred_check_branch
      %28 = sbr.rel (0) target = $region29
    $region28: #{cnn3_forward.1} parent=1 // pred_region
      _
    $region29: #{cnn3_forward.1} parent=1 // pred_fallthru
      _
    // Predicated region
    $region30: #{cnn3_forward.1} parent=1 // pred_check
      _
    $region31: #{cnn3_forward.1} parent=1 // pred_check_branch
      %30 = sbr.rel (0) target = $region33
    $region32: #{cnn3_forward.1} parent=1 // pred_region
      _
    $region33: #{cnn3_forward.1} parent=1 // pred_fallthru
      _
    // Predicated region
    $region34: #{cnn3_forward.1} parent=1 // pred_check
      _
    $region35: #{cnn3_forward.1} parent=1 // pred_check_branch
      %32 = sbr.rel (0) target = $region37
    $region36: #{cnn3_forward.1} parent=1 // pred_region
      _
    $region37: #{cnn3_forward.1} parent=1 // pred_fallthru
      _
    %v33 = vld [vmem:[%s0] sm:$0xff]
    %v34 = vld [vmem:[%s0 + $0x8] sm:$0xff]
    %v35 = vld [vmem:[%s0 + $0x10] sm:$0xff]
    %v36 = vld [vmem:[%s0 + $0x18] sm:$0xff]
    %v37 = vld [vmem:[%s0 + $0x20] sm:$0xff]
    %v38 = vld [vmem:[%s0 + $0x28] sm:$0xff]
    %v39 = vld [vmem:[%s0 + $0x30] sm:$0xff]
    %v40 = vld [vmem:[%s0 + $0x38] sm:$0xff]
    %v41 = vld [vmem:[%s0 + $0x40] sm:$0xff]
    %v42 = vld [vmem:[%s0 + $0x48] sm:$0xff]
    %v43 = vld [vmem:[%s0 + $0x50] sm:$0xff]
    %v44 = vld [vmem:[%s0 + $0x58] sm:$0xff]
    %v45 = vld [vmem:[%s0 + $0x60] sm:$0xff]
    %v46 = vld [vmem:[%s0 + $0x68] sm:$0xff]
    %v47 = vld [vmem:[%s0 + $0x70] sm:$0xff]
    %v48 = vld [vmem:[%s0 + $0x78] sm:$0xff]
    %v49 = vld [vmem:[%s0 + $0x80] sm:$0xff]
    %v50 = vld [vmem:[%s0 + $0x88] sm:$0xff]
    %v51 = vld [vmem:[%s0 + $0x90] sm:$0xff]
    %v52 = vld [vmem:[%s0 + $0x98] sm:$0xff]
    %v53 = vld [vmem:[%s0 + $0xa0] sm:$0xff]
    %v54 = vld [vmem:[%s0 + $0xa8] sm:$0xff]
    %v55 = vld [vmem:[%s0 + $0xb0] sm:$0xff]
    %v56 = vld [vmem:[%s0 + $0xb8] sm:$0xff]
    %v57 = vld [vmem:[%s0 + $0xc0] sm:$0xff]
    %v58 = vld [vmem:[%s0 + $0xc8] sm:$0xff]
    %v59 = vld [vmem:[%s0 + $0xd0] sm:$0xff]
    %v60 = vld [vmem:[%s0 + $0xd8] sm:$0xff]
    %v61 = vld [vmem:[%s0 + $0xe0] sm:$0xff]
    %v62 = vld [vmem:[%s0 + $0xe8] sm:$0xff]
    %v63 = vld [vmem:[%s0 + $0xf0] sm:$0xff]
    %v64 = vld [vmem:[%s0 + $0xf8] sm:$0xff]
    %v65 = vld [vmem:[%s0 + $0x100] sm:$0xff]
    %v66 = vld [vmem:[%s0 + $0x108] sm:$0xff]
    %v67 = vld [vmem:[%s0 + $0x110] sm:$0xff]
    %v68 = vld [vmem:[%s0 + $0x118] sm:$0xff]
    %v69 = vld [vmem:[%s0 + $0x120] sm:$0xff]
    %v70 = vld [vmem:[%s0 + $0x128] sm:$0xff]
    %v71 = vld [vmem:[%s0 + $0x130] sm:$0xff]
    %v72 = vld [vmem:[%s0 + $0x138] sm:$0xff]
    %v73 = vld [vmem:[%s0 + $0x140] sm:$0xff]
    %v74 = vld [vmem:[%s0 + $0x148] sm:$0xff]
    %v75 = vld [vmem:[%s0 + $0x150] sm:$0xff]
    %v76 = vld [vmem:[%s0 + $0x158] sm:$0xff]
    %v77 = vld [vmem:[%s0 + $0x160] sm:$0xff]
    %v78 = vld [vmem:[%s0 + $0x168] sm:$0xff]
    %v79 = vld [vmem:[%s0 + $0x170] sm:$0xff]
    %v80 = vld [vmem:[%s0 + $0x178] sm:$0xff]
    %v81 = vld [vmem:[%s0 + $0x180] sm:$0xff]
    %v82 = vld [vmem:[%s0 + $0x188] sm:$0xff]
    %v83 = vld [vmem:[%s0 + $0x190] sm:$0xff]
    %v84 = vld [vmem:[%s0 + $0x198] sm:$0xff]
    %v85 = vld [vmem:[%s0 + $0x1a0] sm:$0xff]
    %v86 = vld [vmem:[%s0 + $0x1a8] sm:$0xff]
    %v87 = vld [vmem:[%s0 + $0x1b0] sm:$0xff]
    %v88 = vld [vmem:[%s0 + $0x1b8] sm:$0xff]
    %v89 = vld [vmem:[%s0 + $0x1c0] sm:$0xff]
    %v90 = vld [vmem:[%s0 + $0x1c8] sm:$0xff]
    %v91 = vld [vmem:[%s0 + $0x1d0] sm:$0xff]
    %v92 = vld [vmem:[%s0 + $0x1d8] sm:$0xff]
    %v93 = vld [vmem:[%s0 + $0x1e0] sm:$0xff]
    %v94 = vld [vmem:[%s0 + $0x1e8] sm:$0xff]
    %v95 = vld [vmem:[%s0 + $0x1f0] sm:$0xff]
    %v96 = vld [vmem:[%s0 + $0x1f8] sm:$0xff]
    %v97 = vld [vmem:[%s0 + $0x200] sm:$0xff]
    %v98 = vld [vmem:[%s0 + $0x208] sm:$0xff]
    %v99 = vld [vmem:[%s0 + $0x210] sm:$0xff]
    %v100 = vld [vmem:[%s0 + $0x218] sm:$0xff]
    %v101 = vld [vmem:[%s0 + $0x220] sm:$0xff]
    %v102 = vld [vmem:[%s0 + $0x228] sm:$0xff]
    %v103 = vld [vmem:[%s0 + $0x230] sm:$0xff]
    %v104 = vld [vmem:[%s0 + $0x238] sm:$0xff]
    %v105 = vld [vmem:[%s0 + $0x240] sm:$0xff]
    %v106 = vld [vmem:[%s0 + $0x248] sm:$0xff]
    %v107 = vld [vmem:[%s0 + $0x250] sm:$0xff]
    %v108 = vld [vmem:[%s0 + $0x258] sm:$0xff]
    %v109 = vld [vmem:[%s0 + $0x260] sm:$0xff]
    %v110 = vld [vmem:[%s0 + $0x268] sm:$0xff]
    %v111 = vld [vmem:[%s0 + $0x270] sm:$0xff]
    %v112 = vld [vmem:[%s0 + $0x278] sm:$0xff]
    %v113 = vld [vmem:[%s0 + $0x280] sm:$0xff]
    %v114 = vld [vmem:[%s1] sm:$0xff]
    %v115 = vld [vmem:[%s1 + $0x8] sm:$0xff]
    %v116 = vld [vmem:[%s1 + $0x10] sm:$0xff]
    %v117 = vld [vmem:[%s1 + $0x18] sm:$0xff]
    %v118 = vld [vmem:[%s1 + $0x20] sm:$0xf]
    %v119 = vld [vmem:[%s2] sm:$0x1]
    %v121 = vlaneseq
    %v122 = vshrl.u32 %v121, 7
    %v123 = vsub.s32 0, %v122
    %v124 = vrot.slane %v119, %v123
    %vm126 = vcmask 293888
    %v128 = vsel %vm126, %v33, 0
    %v131 = vsel %vm126, %v34, 0
    %v134 = vsel %vm126, %v35, 0
    %v137 = vsel %vm126, %v36, 0
    %v140 = vsel %vm126, %v37, 0
    %v143 = vsel %vm126, %v38, 0
    %v146 = vsel %vm126, %v39, 0
    %v149 = vsel %vm126, %v40, 0
    %v152 = vsel %vm126, %v41, 0
    %v155 = vsel %vm126, %v42, 0
    %v158 = vsel %vm126, %v43, 0
    %v161 = vsel %vm126, %v44, 0
    %v164 = vsel %vm126, %v45, 0
    %v167 = vsel %vm126, %v46, 0
    %v170 = vsel %vm126, %v47, 0
    %v173 = vsel %vm126, %v48, 0
    %v176 = vsel %vm126, %v49, 0
    %v179 = vsel %vm126, %v50, 0
    %v182 = vsel %vm126, %v51, 0
    %v185 = vsel %vm126, %v52, 0
    %v188 = vsel %vm126, %v53, 0
    %v191 = vsel %vm126, %v54, 0
    %v194 = vsel %vm126, %v55, 0
    %v197 = vsel %vm126, %v56, 0
    %v200 = vsel %vm126, %v57, 0
    %v203 = vsel %vm126, %v58, 0
    %v206 = vsel %vm126, %v59, 0
    %v209 = vsel %vm126, %v60, 0
    %v212 = vsel %vm126, %v61, 0
    %v215 = vsel %vm126, %v62, 0
    %v218 = vsel %vm126, %v63, 0
    %v221 = vsel %vm126, %v64, 0
    %v224 = vsel %vm126, %v65, 0
    %v227 = vsel %vm126, %v66, 0
    %v230 = vsel %vm126, %v67, 0
    %v233 = vsel %vm126, %v68, 0
    %v236 = vsel %vm126, %v69, 0
    %v239 = vsel %vm126, %v70, 0
    %v242 = vsel %vm126, %v71, 0
    %v245 = vsel %vm126, %v72, 0
    %v248 = vsel %vm126, %v73, 0
    %v251 = vsel %vm126, %v74, 0
    %v254 = vsel %vm126, %v75, 0
    %v257 = vsel %vm126, %v76, 0
    %v260 = vsel %vm126, %v77, 0
    %v263 = vsel %vm126, %v78, 0
    %v266 = vsel %vm126, %v79, 0
    %v269 = vsel %vm126, %v80, 0
    %v272 = vsel %vm126, %v81, 0
    %v275 = vsel %vm126, %v82, 0
    %v278 = vsel %vm126, %v83, 0
    %v281 = vsel %vm126, %v84, 0
    %v284 = vsel %vm126, %v85, 0
    %v287 = vsel %vm126, %v86, 0
    %v290 = vsel %vm126, %v87, 0
    %v293 = vsel %vm126, %v88, 0
    %v296 = vsel %vm126, %v89, 0
    %v299 = vsel %vm126, %v90, 0
    %v302 = vsel %vm126, %v91, 0
    %v305 = vsel %vm126, %v92, 0
    %v308 = vsel %vm126, %v93, 0
    %v311 = vsel %vm126, %v94, 0
    %v314 = vsel %vm126, %v95, 0
    %v317 = vsel %vm126, %v96, 0
    %v320 = vsel %vm126, %v97, 0
    %v323 = vsel %vm126, %v98, 0
    %v326 = vsel %vm126, %v99, 0
    %v329 = vsel %vm126, %v100, 0
    %v332 = vsel %vm126, %v101, 0
    %v335 = vsel %vm126, %v102, 0
    %v338 = vsel %vm126, %v103, 0
    %v341 = vsel %vm126, %v104, 0
    %v344 = vsel %vm126, %v105, 0
    %v347 = vsel %vm126, %v106, 0
    %v350 = vsel %vm126, %v107, 0
    %v353 = vsel %vm126, %v108, 0
    %v356 = vsel %vm126, %v109, 0
    %v359 = vsel %vm126, %v110, 0
    %v362 = vsel %vm126, %v111, 0
    %v365 = vsel %vm126, %v112, 0
    %v368 = vsel %vm126, %v113, 0
    %vm370 = vcmask 1043456
    %v372 = vsel %vm370, %v118, 0
    %374 = vmatprep.subr.mxu0 0.0
    %375 = vmatpush1.msra.mxu0 %v114
    %376 = vmatprep.subr.mxu0 0.0
    %377 = vmatpush1.msra.mxu0 %v115
    %378 = vmatprep.subr.mxu0 0.0
    %379 = vmatpush1.msra.mxu0 %v116
    %380 = vmatprep.subr.mxu0 0.0
    %381 = vmatpush1.msra.mxu0 %v117
    %382 = vmatprep.subr.mxu0 0.0
    %383 = vmatpush1.msra.mxu0 %v372
    %384 = vmatprep.subr.mxu0 0.0
    %385 = vmatpush1.msra.mxu0 0.0
    %386 = vmatprep.subr.mxu0 0.0
    %387 = vmatpush1.msra.mxu0 0.0
    %388 = vmatprep.subr.mxu0 0.0
    %389 = vmatpush1.msra.mxu0 0.0
    %390 = vmatprep.subr.mxu0 0.0
    %391 = vmatpush1.msra.mxu0 0.0
    %392 = vmatprep.subr.mxu0 0.0
    %393 = vmatpush1.msra.mxu0 0.0
    %394 = vmatprep.subr.mxu0 0.0
    %395 = vmatpush1.msra.mxu0 0.0
    %396 = vmatprep.subr.mxu0 0.0
    %397 = vmatpush1.msra.mxu0 0.0
    %398 = vmatprep.subr.mxu0 0.0
    %399 = vmatpush1.msra.mxu0 0.0
    %400 = vmatprep.subr.mxu0 0.0
    %401 = vmatpush1.msra.mxu0 0.0
    %402 = vmatprep.subr.mxu0 0.0
    %403 = vmatpush1.msra.mxu0 0.0
    %404 = vmatprep.subr.mxu0 0.0
    %405 = vmatpush1.msra.mxu0 0.0
    %406 = vmatprep.subr.mxu0 0.0
    %407 = vmatpush1.msra.mxu0 0.0
    %408 = vmatprep.subr.mxu0 0.0
    %409 = vmatpush1.msra.mxu0 0.0
    %410 = vmatprep.subr.mxu0 0.0
    %411 = vmatpush1.msra.mxu0 0.0
    %412 = vmatprep.subr.mxu0 0.0
    %413 = vmatpush1.msra.mxu0 0.0
    %414 = vmatprep.subr.mxu0 0.0
    %415 = vmatpush1.msra.mxu0 0.0
    %416 = vmatprep.subr.mxu0 0.0
    %417 = vmatpush1.msra.mxu0 0.0
    %418 = vmatprep.subr.mxu0 0.0
    %419 = vmatpush1.msra.mxu0 0.0
    %420 = vmatprep.subr.mxu0 0.0
    %421 = vmatpush1.msra.mxu0 0.0
    %422 = vmatprep.subr.mxu0 0.0
    %423 = vmatpush1.msra.mxu0 0.0
    %424 = vmatprep.subr.mxu0 0.0
    %425 = vmatpush1.msra.mxu0 0.0
    %426 = vmatprep.subr.mxu0 0.0
    %427 = vmatpush1.msra.mxu0 0.0
    %428 = vmatprep.subr.mxu0 0.0
    %429 = vmatpush1.msra.mxu0 0.0
    %430 = vmatprep.subr.mxu0 0.0
    %431 = vmatpush1.msra.mxu0 0.0
    %432 = vmatprep.subr.mxu0 0.0
    %433 = vmatpush1.msra.mxu0 0.0
    %434 = vmatprep.subr.mxu0 0.0
    %435 = vmatpush1.msra.mxu0 0.0
    %436 = vmatprep.subr.mxu0 0.0
    %437 = vmatpush1.msra.mxu0 0.0
    %438 = vmatprep.mubr.f32.mxu0 0.0
    %439 = vmatmul.mubr.f32.gmra.mrb[0].mxu0 %v128
    %v440 = vpop.f32.mrb[0].mxu0
    %v441 = vadd.f32 %v124, %v440
    %v442 = vpop.f32.mrb[0].mxu0
    %443 = vmatprep.mubr.f32.mxu0 0.0
    %444 = vmatmul.mubr.f32.gmra.mrb[0].mxu0 %v131
    %v445 = vpop.f32.mrb[0].mxu0
    %v446 = vadd.f32 %v124, %v445
    %v447 = vpop.f32.mrb[0].mxu0
    %448 = vmatprep.mubr.f32.mxu0 0.0
    %449 = vmatmul.mubr.f32.gmra.mrb[0].mxu0 %v134
    %v450 = vpop.f32.mrb[0].mxu0
    %v451 = vadd.f32 %v124, %v450
    %v452 = vpop.f32.mrb[0].mxu0
    %453 = vmatprep.mubr.f32.mxu0 0.0
    %454 = vmatmul.mubr.f32.gmra.mrb[0].mxu0 %v137
    %v455 = vpop.f32.mrb[0].mxu0
    %v456 = vadd.f32 %v124, %v455
    %v457 = vpop.f32.mrb[0].mxu0
    %458 = vmatprep.mubr.f32.mxu0 0.0
    %459 = vmatmul.mubr.f32.gmra.mrb[0].mxu0 %v140
    %v460 = vpop.f32.mrb[0].mxu0
    %v461 = vadd.f32 %v124, %v460
    %v462 = vpop.f32.mrb[0].mxu0
    %463 = vmatprep.mubr.f32.mxu0 0.0
    %464 = vmatmul.mubr.f32.gmra.mrb[0].mxu0 %v143
    %v465 = vpop.f32.mrb[0].mxu0
    %v466 = vadd.f32 %v124, %v465
    %v467 = vpop.f32.mrb[0].mxu0
    %468 = vmatprep.mubr.f32.mxu0 0.0
    %469 = vmatmul.mubr.f32.gmra.mrb[0].mxu0 %v146
    %v470 = vpop.f32.mrb[0].mxu0
    %v471 = vadd.f32 %v124, %v470
    %v472 = vpop.f32.mrb[0].mxu0
    %473 = vmatprep.mubr.f32.mxu0 0.0
    %474 = vmatmul.mubr.f32.gmra.mrb[0].mxu0 %v149
    %v475 = vpop.f32.mrb[0].mxu0
    %v476 = vadd.f32 %v124, %v475
    %v477 = vpop.f32.mrb[0].mxu0
    %478 = vmatprep.mubr.f32.mxu0 0.0
    %479 = vmatmul.mubr.f32.gmra.mrb[0].mxu0 %v152
    %v480 = vpop.f32.mrb[0].mxu0
    %v481 = vadd.f32 %v124, %v480
    %v482 = vpop.f32.mrb[0].mxu0
    %483 = vmatprep.mubr.f32.mxu0 0.0
    %484 = vmatmul.mubr.f32.gmra.mrb[0].mxu0 %v155
    %v485 = vpop.f32.mrb[0].mxu0
    %v486 = vadd.f32 %v124, %v485
    %v487 = vpop.f32.mrb[0].mxu0
    %488 = vmatprep.mubr.f32.mxu0 0.0
    %489 = vmatmul.mubr.f32.gmra.mrb[0].mxu0 %v158
    %v490 = vpop.f32.mrb[0].mxu0
    %v491 = vadd.f32 %v124, %v490
    %v492 = vpop.f32.mrb[0].mxu0
    %493 = vmatprep.mubr.f32.mxu0 0.0
    %494 = vmatmul.mubr.f32.gmra.mrb[0].mxu0 %v161
    %v495 = vpop.f32.mrb[0].mxu0
    %v496 = vadd.f32 %v124, %v495
    %v497 = vpop.f32.mrb[0].mxu0
    %498 = vmatprep.mubr.f32.mxu0 0.0
    %499 = vmatmul.mubr.f32.gmra.mrb[0].mxu0 %v164
    %v500 = vpop.f32.mrb[0].mxu0
    %v501 = vadd.f32 %v124, %v500
    %v502 = vpop.f32.mrb[0].mxu0
    %503 = vmatprep.mubr.f32.mxu0 0.0
    %504 = vmatmul.mubr.f32.gmra.mrb[0].mxu0 %v167
    %v505 = vpop.f32.mrb[0].mxu0
    %v506 = vadd.f32 %v124, %v505
    %v507 = vpop.f32.mrb[0].mxu0
    %508 = vmatprep.mubr.f32.mxu0 0.0
    %509 = vmatmul.mubr.f32.gmra.mrb[0].mxu0 %v170
    %v510 = vpop.f32.mrb[0].mxu0
    %v511 = vadd.f32 %v124, %v510
    %v512 = vpop.f32.mrb[0].mxu0
    %513 = vmatprep.mubr.f32.mxu0 0.0
    %514 = vmatmul.mubr.f32.gmra.mrb[0].mxu0 %v173
    %v515 = vpop.f32.mrb[0].mxu0
    %v516 = vadd.f32 %v124, %v515
    %v517 = vpop.f32.mrb[0].mxu0
    %518 = vmatprep.mubr.f32.mxu0 0.0
    %519 = vmatmul.mubr.f32.gmra.mrb[0].mxu0 %v176
    %v520 = vpop.f32.mrb[0].mxu0
    %v521 = vadd.f32 %v124, %v520
    %v522 = vpop.f32.mrb[0].mxu0
    %523 = vmatprep.mubr.f32.mxu0 0.0
    %524 = vmatmul.mubr.f32.gmra.mrb[0].mxu0 %v179
    %v525 = vpop.f32.mrb[0].mxu0
    %v526 = vadd.f32 %v124, %v525
    %v527 = vpop.f32.mrb[0].mxu0
    %528 = vmatprep.mubr.f32.mxu0 0.0
    %529 = vmatmul.mubr.f32.gmra.mrb[0].mxu0 %v182
    %v530 = vpop.f32.mrb[0].mxu0
    %v531 = vadd.f32 %v124, %v530
    %v532 = vpop.f32.mrb[0].mxu0
    %533 = vmatprep.mubr.f32.mxu0 0.0
    %534 = vmatmul.mubr.f32.gmra.mrb[0].mxu0 %v185
    %v535 = vpop.f32.mrb[0].mxu0
    %v536 = vadd.f32 %v124, %v535
    %v537 = vpop.f32.mrb[0].mxu0
    %538 = vmatprep.mubr.f32.mxu0 0.0
    %539 = vmatmul.mubr.f32.gmra.mrb[0].mxu0 %v188
    %v540 = vpop.f32.mrb[0].mxu0
    %v541 = vadd.f32 %v124, %v540
    %v542 = vpop.f32.mrb[0].mxu0
    %543 = vmatprep.mubr.f32.mxu0 0.0
    %544 = vmatmul.mubr.f32.gmra.mrb[0].mxu0 %v191
    %v545 = vpop.f32.mrb[0].mxu0
    %v546 = vadd.f32 %v124, %v545
    %v547 = vpop.f32.mrb[0].mxu0
    %548 = vmatprep.mubr.f32.mxu0 0.0
    %549 = vmatmul.mubr.f32.gmra.mrb[0].mxu0 %v194
    %v550 = vpop.f32.mrb[0].mxu0
    %v551 = vadd.f32 %v124, %v550
    %v552 = vpop.f32.mrb[0].mxu0
    %553 = vmatprep.mubr.f32.mxu0 0.0
    %554 = vmatmul.mubr.f32.gmra.mrb[0].mxu0 %v197
    %v555 = vpop.f32.mrb[0].mxu0
    %v556 = vadd.f32 %v124, %v555
    %v557 = vpop.f32.mrb[0].mxu0
    %558 = vmatprep.mubr.f32.mxu0 0.0
    %559 = vmatmul.mubr.f32.gmra.mrb[0].mxu0 %v200
    %v560 = vpop.f32.mrb[0].mxu0
    %v561 = vadd.f32 %v124, %v560
    %v562 = vpop.f32.mrb[0].mxu0
    %563 = vmatprep.mubr.f32.mxu0 0.0
    %564 = vmatmul.mubr.f32.gmra.mrb[0].mxu0 %v203
    %v565 = vpop.f32.mrb[0].mxu0
    %v566 = vadd.f32 %v124, %v565
    %v567 = vpop.f32.mrb[0].mxu0
    %568 = vmatprep.mubr.f32.mxu0 0.0
    %569 = vmatmul.mubr.f32.gmra.mrb[0].mxu0 %v206
    %v570 = vpop.f32.mrb[0].mxu0
    %v571 = vadd.f32 %v124, %v570
    %v572 = vpop.f32.mrb[0].mxu0
    %573 = vmatprep.mubr.f32.mxu0 0.0
    %574 = vmatmul.mubr.f32.gmra.mrb[0].mxu0 %v209
    %v575 = vpop.f32.mrb[0].mxu0
    %v576 = vadd.f32 %v124, %v575
    %v577 = vpop.f32.mrb[0].mxu0
    %578 = vmatprep.mubr.f32.mxu0 0.0
    %579 = vmatmul.mubr.f32.gmra.mrb[0].mxu0 %v212
    %v580 = vpop.f32.mrb[0].mxu0
    %v581 = vadd.f32 %v124, %v580
    %v582 = vpop.f32.mrb[0].mxu0
    %583 = vmatprep.mubr.f32.mxu0 0.0
    %584 = vmatmul.mubr.f32.gmra.mrb[0].mxu0 %v215
    %v585 = vpop.f32.mrb[0].mxu0
    %v586 = vadd.f32 %v124, %v585
    %v587 = vpop.f32.mrb[0].mxu0
    %588 = vmatprep.mubr.f32.mxu0 0.0
    %589 = vmatmul.mubr.f32.gmra.mrb[0].mxu0 %v218
    %v590 = vpop.f32.mrb[0].mxu0
    %v591 = vadd.f32 %v124, %v590
    %v592 = vpop.f32.mrb[0].mxu0
    %593 = vmatprep.mubr.f32.mxu0 0.0
    %594 = vmatmul.mubr.f32.gmra.mrb[0].mxu0 %v221
    %v595 = vpop.f32.mrb[0].mxu0
    %v596 = vadd.f32 %v124, %v595
    %v597 = vpop.f32.mrb[0].mxu0
    %598 = vmatprep.mubr.f32.mxu0 0.0
    %599 = vmatmul.mubr.f32.gmra.mrb[0].mxu0 %v224
    %v600 = vpop.f32.mrb[0].mxu0
    %v601 = vadd.f32 %v124, %v600
    %v602 = vpop.f32.mrb[0].mxu0
    %603 = vmatprep.mubr.f32.mxu0 0.0
    %604 = vmatmul.mubr.f32.gmra.mrb[0].mxu0 %v227
    %v605 = vpop.f32.mrb[0].mxu0
    %v606 = vadd.f32 %v124, %v605
    %v607 = vpop.f32.mrb[0].mxu0
    %608 = vmatprep.mubr.f32.mxu0 0.0
    %609 = vmatmul.mubr.f32.gmra.mrb[0].mxu0 %v230
    %v610 = vpop.f32.mrb[0].mxu0
    %v611 = vadd.f32 %v124, %v610
    %v612 = vpop.f32.mrb[0].mxu0
    %613 = vmatprep.mubr.f32.mxu0 0.0
    %614 = vmatmul.mubr.f32.gmra.mrb[0].mxu0 %v233
    %v615 = vpop.f32.mrb[0].mxu0
    %v616 = vadd.f32 %v124, %v615
    %v617 = vpop.f32.mrb[0].mxu0
    %618 = vmatprep.mubr.f32.mxu0 0.0
    %619 = vmatmul.mubr.f32.gmra.mrb[0].mxu0 %v236
    %v620 = vpop.f32.mrb[0].mxu0
    %v621 = vadd.f32 %v124, %v620
    %v622 = vpop.f32.mrb[0].mxu0
    %623 = vmatprep.mubr.f32.mxu0 0.0
    %624 = vmatmul.mubr.f32.gmra.mrb[0].mxu0 %v239
    %v625 = vpop.f32.mrb[0].mxu0
    %v626 = vadd.f32 %v124, %v625
    %v627 = vpop.f32.mrb[0].mxu0
    %628 = vmatprep.mubr.f32.mxu0 0.0
    %629 = vmatmul.mubr.f32.gmra.mrb[0].mxu0 %v242
    %v630 = vpop.f32.mrb[0].mxu0
    %v631 = vadd.f32 %v124, %v630
    %v632 = vpop.f32.mrb[0].mxu0
    %633 = vmatprep.mubr.f32.mxu0 0.0
    %634 = vmatmul.mubr.f32.gmra.mrb[0].mxu0 %v245
    %v635 = vpop.f32.mrb[0].mxu0
    %v636 = vadd.f32 %v124, %v635
    %v637 = vpop.f32.mrb[0].mxu0
    %638 = vmatprep.mubr.f32.mxu0 0.0
    %639 = vmatmul.mubr.f32.gmra.mrb[0].mxu0 %v248
    %v640 = vpop.f32.mrb[0].mxu0
    %v641 = vadd.f32 %v124, %v640
    %v642 = vpop.f32.mrb[0].mxu0
    %643 = vmatprep.mubr.f32.mxu0 0.0
    %644 = vmatmul.mubr.f32.gmra.mrb[0].mxu0 %v251
    %v645 = vpop.f32.mrb[0].mxu0
    %v646 = vadd.f32 %v124, %v645
    %v647 = vpop.f32.mrb[0].mxu0
    %648 = vmatprep.mubr.f32.mxu0 0.0
    %649 = vmatmul.mubr.f32.gmra.mrb[0].mxu0 %v254
    %v650 = vpop.f32.mrb[0].mxu0
    %v651 = vadd.f32 %v124, %v650
    %v652 = vpop.f32.mrb[0].mxu0
    %653 = vmatprep.mubr.f32.mxu0 0.0
    %654 = vmatmul.mubr.f32.gmra.mrb[0].mxu0 %v257
    %v655 = vpop.f32.mrb[0].mxu0
    %v656 = vadd.f32 %v124, %v655
    %v657 = vpop.f32.mrb[0].mxu0
    %658 = vmatprep.mubr.f32.mxu0 0.0
    %659 = vmatmul.mubr.f32.gmra.mrb[0].mxu0 %v260
    %v660 = vpop.f32.mrb[0].mxu0
    %v661 = vadd.f32 %v124, %v660
    %v662 = vpop.f32.mrb[0].mxu0
    %663 = vmatprep.mubr.f32.mxu0 0.0
    %664 = vmatmul.mubr.f32.gmra.mrb[0].mxu0 %v263
    %v665 = vpop.f32.mrb[0].mxu0
    %v666 = vadd.f32 %v124, %v665
    %v667 = vpop.f32.mrb[0].mxu0
    %668 = vmatprep.mubr.f32.mxu0 0.0
    %669 = vmatmul.mubr.f32.gmra.mrb[0].mxu0 %v266
    %v670 = vpop.f32.mrb[0].mxu0
    %v671 = vadd.f32 %v124, %v670
    %v672 = vpop.f32.mrb[0].mxu0
    %673 = vmatprep.mubr.f32.mxu0 0.0
    %674 = vmatmul.mubr.f32.gmra.mrb[0].mxu0 %v269
    %v675 = vpop.f32.mrb[0].mxu0
    %v676 = vadd.f32 %v124, %v675
    %v677 = vpop.f32.mrb[0].mxu0
    %678 = vmatprep.mubr.f32.mxu0 0.0
    %679 = vmatmul.mubr.f32.gmra.mrb[0].mxu0 %v272
    %v680 = vpop.f32.mrb[0].mxu0
    %v681 = vadd.f32 %v124, %v680
    %v682 = vpop.f32.mrb[0].mxu0
    %683 = vmatprep.mubr.f32.mxu0 0.0
    %684 = vmatmul.mubr.f32.gmra.mrb[0].mxu0 %v275
    %v685 = vpop.f32.mrb[0].mxu0
    %v686 = vadd.f32 %v124, %v685
    %v687 = vpop.f32.mrb[0].mxu0
    %688 = vmatprep.mubr.f32.mxu0 0.0
    %689 = vmatmul.mubr.f32.gmra.mrb[0].mxu0 %v278
    %v690 = vpop.f32.mrb[0].mxu0
    %v691 = vadd.f32 %v124, %v690
    %v692 = vpop.f32.mrb[0].mxu0
    %693 = vmatprep.mubr.f32.mxu0 0.0
    %694 = vmatmul.mubr.f32.gmra.mrb[0].mxu0 %v281
    %v695 = vpop.f32.mrb[0].mxu0
    %v696 = vadd.f32 %v124, %v695
    %v697 = vpop.f32.mrb[0].mxu0
    %698 = vmatprep.mubr.f32.mxu0 0.0
    %699 = vmatmul.mubr.f32.gmra.mrb[0].mxu0 %v284
    %v700 = vpop.f32.mrb[0].mxu0
    %v701 = vadd.f32 %v124, %v700
    %v702 = vpop.f32.mrb[0].mxu0
    %703 = vmatprep.mubr.f32.mxu0 0.0
    %704 = vmatmul.mubr.f32.gmra.mrb[0].mxu0 %v287
    %v705 = vpop.f32.mrb[0].mxu0
    %v706 = vadd.f32 %v124, %v705
    %v707 = vpop.f32.mrb[0].mxu0
    %708 = vmatprep.mubr.f32.mxu0 0.0
    %709 = vmatmul.mubr.f32.gmra.mrb[0].mxu0 %v290
    %v710 = vpop.f32.mrb[0].mxu0
    %v711 = vadd.f32 %v124, %v710
    %v712 = vpop.f32.mrb[0].mxu0
    %713 = vmatprep.mubr.f32.mxu0 0.0
    %714 = vmatmul.mubr.f32.gmra.mrb[0].mxu0 %v293
    %v715 = vpop.f32.mrb[0].mxu0
    %v716 = vadd.f32 %v124, %v715
    %v717 = vpop.f32.mrb[0].mxu0
    %718 = vmatprep.mubr.f32.mxu0 0.0
    %719 = vmatmul.mubr.f32.gmra.mrb[0].mxu0 %v296
    %v720 = vpop.f32.mrb[0].mxu0
    %v721 = vadd.f32 %v124, %v720
    %v722 = vpop.f32.mrb[0].mxu0
    %723 = vmatprep.mubr.f32.mxu0 0.0
    %724 = vmatmul.mubr.f32.gmra.mrb[0].mxu0 %v299
    %v725 = vpop.f32.mrb[0].mxu0
    %v726 = vadd.f32 %v124, %v725
    %v727 = vpop.f32.mrb[0].mxu0
    %728 = vmatprep.mubr.f32.mxu0 0.0
    %729 = vmatmul.mubr.f32.gmra.mrb[0].mxu0 %v302
    %v730 = vpop.f32.mrb[0].mxu0
    %v731 = vadd.f32 %v124, %v730
    %v732 = vpop.f32.mrb[0].mxu0
    %733 = vmatprep.mubr.f32.mxu0 0.0
    %734 = vmatmul.mubr.f32.gmra.mrb[0].mxu0 %v305
    %v735 = vpop.f32.mrb[0].mxu0
    %v736 = vadd.f32 %v124, %v735
    %v737 = vpop.f32.mrb[0].mxu0
    %738 = vmatprep.mubr.f32.mxu0 0.0
    %739 = vmatmul.mubr.f32.gmra.mrb[0].mxu0 %v308
    %v740 = vpop.f32.mrb[0].mxu0
    %v741 = vadd.f32 %v124, %v740
    %v742 = vpop.f32.mrb[0].mxu0
    %743 = vmatprep.mubr.f32.mxu0 0.0
    %744 = vmatmul.mubr.f32.gmra.mrb[0].mxu0 %v311
    %v745 = vpop.f32.mrb[0].mxu0
    %v746 = vadd.f32 %v124, %v745
    %v747 = vpop.f32.mrb[0].mxu0
    %748 = vmatprep.mubr.f32.mxu0 0.0
    %749 = vmatmul.mubr.f32.gmra.mrb[0].mxu0 %v314
    %v750 = vpop.f32.mrb[0].mxu0
    %v751 = vadd.f32 %v124, %v750
    %v752 = vpop.f32.mrb[0].mxu0
    %753 = vmatprep.mubr.f32.mxu0 0.0
    %754 = vmatmul.mubr.f32.gmra.mrb[0].mxu0 %v317
    %v755 = vpop.f32.mrb[0].mxu0
    %v756 = vadd.f32 %v124, %v755
    %v757 = vpop.f32.mrb[0].mxu0
    %758 = vmatprep.mubr.f32.mxu0 0.0
    %759 = vmatmul.mubr.f32.gmra.mrb[0].mxu0 %v320
    %v760 = vpop.f32.mrb[0].mxu0
    %v761 = vadd.f32 %v124, %v760
    %v762 = vpop.f32.mrb[0].mxu0
    %763 = vmatprep.mubr.f32.mxu0 0.0
    %764 = vmatmul.mubr.f32.gmra.mrb[0].mxu0 %v323
    %v765 = vpop.f32.mrb[0].mxu0
    %v766 = vadd.f32 %v124, %v765
    %v767 = vpop.f32.mrb[0].mxu0
    %768 = vmatprep.mubr.f32.mxu0 0.0
    %769 = vmatmul.mubr.f32.gmra.mrb[0].mxu0 %v326
    %v770 = vpop.f32.mrb[0].mxu0
    %v771 = vadd.f32 %v124, %v770
    %v772 = vpop.f32.mrb[0].mxu0
    %773 = vmatprep.mubr.f32.mxu0 0.0
    %774 = vmatmul.mubr.f32.gmra.mrb[0].mxu0 %v329
    %v775 = vpop.f32.mrb[0].mxu0
    %v776 = vadd.f32 %v124, %v775
    %v777 = vpop.f32.mrb[0].mxu0
    %778 = vmatprep.mubr.f32.mxu0 0.0
    %779 = vmatmul.mubr.f32.gmra.mrb[0].mxu0 %v332
    %v780 = vpop.f32.mrb[0].mxu0
    %v781 = vadd.f32 %v124, %v780
    %v782 = vpop.f32.mrb[0].mxu0
    %783 = vmatprep.mubr.f32.mxu0 0.0
    %784 = vmatmul.mubr.f32.gmra.mrb[0].mxu0 %v335
    %v785 = vpop.f32.mrb[0].mxu0
    %v786 = vadd.f32 %v124, %v785
    %v787 = vpop.f32.mrb[0].mxu0
    %788 = vmatprep.mubr.f32.mxu0 0.0
    %789 = vmatmul.mubr.f32.gmra.mrb[0].mxu0 %v338
    %v790 = vpop.f32.mrb[0].mxu0
    %v791 = vadd.f32 %v124, %v790
    %v792 = vpop.f32.mrb[0].mxu0
    %793 = vmatprep.mubr.f32.mxu0 0.0
    %794 = vmatmul.mubr.f32.gmra.mrb[0].mxu0 %v341
    %v795 = vpop.f32.mrb[0].mxu0
    %v796 = vadd.f32 %v124, %v795
    %v797 = vpop.f32.mrb[0].mxu0
    %798 = vmatprep.mubr.f32.mxu0 0.0
    %799 = vmatmul.mubr.f32.gmra.mrb[0].mxu0 %v344
    %v800 = vpop.f32.mrb[0].mxu0
    %v801 = vadd.f32 %v124, %v800
    %v802 = vpop.f32.mrb[0].mxu0
    %803 = vmatprep.mubr.f32.mxu0 0.0
    %804 = vmatmul.mubr.f32.gmra.mrb[0].mxu0 %v347
    %v805 = vpop.f32.mrb[0].mxu0
    %v806 = vadd.f32 %v124, %v805
    %v807 = vpop.f32.mrb[0].mxu0
    %808 = vmatprep.mubr.f32.mxu0 0.0
    %809 = vmatmul.mubr.f32.gmra.mrb[0].mxu0 %v350
    %v810 = vpop.f32.mrb[0].mxu0
    %v811 = vadd.f32 %v124, %v810
    %v812 = vpop.f32.mrb[0].mxu0
    %813 = vmatprep.mubr.f32.mxu0 0.0
    %814 = vmatmul.mubr.f32.gmra.mrb[0].mxu0 %v353
    %v815 = vpop.f32.mrb[0].mxu0
    %v816 = vadd.f32 %v124, %v815
    %v817 = vpop.f32.mrb[0].mxu0
    %818 = vmatprep.mubr.f32.mxu0 0.0
    %819 = vmatmul.mubr.f32.gmra.mrb[0].mxu0 %v356
    %v820 = vpop.f32.mrb[0].mxu0
    %v821 = vadd.f32 %v124, %v820
    %v822 = vpop.f32.mrb[0].mxu0
    %823 = vmatprep.mubr.f32.mxu0 0.0
    %824 = vmatmul.mubr.f32.gmra.mrb[0].mxu0 %v359
    %v825 = vpop.f32.mrb[0].mxu0
    %v826 = vadd.f32 %v124, %v825
    %v827 = vpop.f32.mrb[0].mxu0
    %828 = vmatprep.mubr.f32.mxu0 0.0
    %829 = vmatmul.mubr.f32.gmra.mrb[0].mxu0 %v362
    %v830 = vpop.f32.mrb[0].mxu0
    %v831 = vadd.f32 %v124, %v830
    %v832 = vpop.f32.mrb[0].mxu0
    %833 = vmatprep.mubr.f32.mxu0 0.0
    %834 = vmatmul.mubr.f32.gmra.mrb[0].mxu0 %v365
    %v835 = vpop.f32.mrb[0].mxu0
    %v836 = vadd.f32 %v124, %v835
    %v837 = vpop.f32.mrb[0].mxu0
    %838 = vmatprep.mubr.f32.mxu0 0.0
    %839 = vmatmul.mubr.f32.gmra.mrb[0].mxu0 %v368
    %v840 = vpop.f32.mrb[0].mxu0
    %v841 = vadd.f32 %v124, %v840
    %v842 = vpop.f32.mrb[0].mxu0
    %843 = vdwg.mxu0
    %v844 = vmax.f32 %v441, 0.0
    %v845 = vmax.f32 %v446, 0.0
    %v846 = vmax.f32 %v451, 0.0
    %v847 = vmax.f32 %v456, 0.0
    %v848 = vmax.f32 %v461, 0.0
    %v849 = vmax.f32 %v466, 0.0
    %v850 = vmax.f32 %v471, 0.0
    %v851 = vmax.f32 %v476, 0.0
    %v852 = vmax.f32 %v481, 0.0
    %v853 = vmax.f32 %v486, 0.0
    %v854 = vmax.f32 %v491, 0.0
    %v855 = vmax.f32 %v496, 0.0
    %v856 = vmax.f32 %v501, 0.0
    %v857 = vmax.f32 %v506, 0.0
    %v858 = vmax.f32 %v511, 0.0
    %v859 = vmax.f32 %v516, 0.0
    %v860 = vmax.f32 %v521, 0.0
    %v861 = vmax.f32 %v526, 0.0
    %v862 = vmax.f32 %v531, 0.0
    %v863 = vmax.f32 %v536, 0.0
    %v864 = vmax.f32 %v541, 0.0
    %v865 = vmax.f32 %v546, 0.0
    %v866 = vmax.f32 %v551, 0.0
    %v867 = vmax.f32 %v556, 0.0
    %v868 = vmax.f32 %v561, 0.0
    %v869 = vmax.f32 %v566, 0.0
    %v870 = vmax.f32 %v571, 0.0
    %v871 = vmax.f32 %v576, 0.0
    %v872 = vmax.f32 %v581, 0.0
    %v873 = vmax.f32 %v586, 0.0
    %v874 = vmax.f32 %v591, 0.0
    %v875 = vmax.f32 %v596, 0.0
    %v876 = vmax.f32 %v601, 0.0
    %v877 = vmax.f32 %v606, 0.0
    %v878 = vmax.f32 %v611, 0.0
    %v879 = vmax.f32 %v616, 0.0
    %v880 = vmax.f32 %v621, 0.0
    %v881 = vmax.f32 %v626, 0.0
    %v882 = vmax.f32 %v631, 0.0
    %v883 = vmax.f32 %v636, 0.0
    %v884 = vmax.f32 %v641, 0.0
    %v885 = vmax.f32 %v646, 0.0
    %v886 = vmax.f32 %v651, 0.0
    %v887 = vmax.f32 %v656, 0.0
    %v888 = vmax.f32 %v661, 0.0
    %v889 = vmax.f32 %v666, 0.0
    %v890 = vmax.f32 %v671, 0.0
    %v891 = vmax.f32 %v676, 0.0
    %v892 = vmax.f32 %v681, 0.0
    %v893 = vmax.f32 %v686, 0.0
    %v894 = vmax.f32 %v691, 0.0
    %v895 = vmax.f32 %v696, 0.0
    %v896 = vmax.f32 %v701, 0.0
    %v897 = vmax.f32 %v706, 0.0
    %v898 = vmax.f32 %v711, 0.0
    %v899 = vmax.f32 %v716, 0.0
    %v900 = vmax.f32 %v721, 0.0
    %v901 = vmax.f32 %v726, 0.0
    %v902 = vmax.f32 %v731, 0.0
    %v903 = vmax.f32 %v736, 0.0
    %v904 = vmax.f32 %v741, 0.0
    %v905 = vmax.f32 %v746, 0.0
    %v906 = vmax.f32 %v751, 0.0
    %v907 = vmax.f32 %v756, 0.0
    %v908 = vmax.f32 %v761, 0.0
    %v909 = vmax.f32 %v766, 0.0
    %v910 = vmax.f32 %v771, 0.0
    %v911 = vmax.f32 %v776, 0.0
    %v912 = vmax.f32 %v781, 0.0
    %v913 = vmax.f32 %v786, 0.0
    %v914 = vmax.f32 %v791, 0.0
    %v915 = vmax.f32 %v796, 0.0
    %v916 = vmax.f32 %v801, 0.0
    %v917 = vmax.f32 %v806, 0.0
    %v918 = vmax.f32 %v811, 0.0
    %v919 = vmax.f32 %v816, 0.0
    %v920 = vmax.f32 %v821, 0.0
    %v921 = vmax.f32 %v826, 0.0
    %v922 = vmax.f32 %v831, 0.0
    %v923 = vmax.f32 %v836, 0.0
    %v924 = vmax.f32 %v841, 0.0
    %1006 = vrot.lane.b32.xlu0 %v844, 96
    %v1007 = vpop.permute.xlu0 %1006
    %1008 = vrot.lane.b32.xlu0 %v845, 96
    %v1009 = vpop.permute.xlu0 %1008
    %1010 = vrot.lane.b32.xlu0 %v846, 96
    %v1011 = vpop.permute.xlu0 %1010
    %1012 = vrot.lane.b32.xlu0 %v847, 96
    %v1013 = vpop.permute.xlu0 %1012
    %1014 = vrot.lane.b32.xlu0 %v848, 96
    %v1015 = vpop.permute.xlu0 %1014
    %1016 = vrot.lane.b32.xlu0 %v849, 96
    %v1017 = vpop.permute.xlu0 %1016
    %1018 = vrot.lane.b32.xlu0 %v850, 96
    %v1019 = vpop.permute.xlu0 %1018
    %1020 = vrot.lane.b32.xlu0 %v851, 96
    %v1021 = vpop.permute.xlu0 %1020
    %1022 = vrot.lane.b32.xlu0 %v852, 96
    %v1023 = vpop.permute.xlu0 %1022
    %1024 = vrot.lane.b32.xlu0 %v853, 96
    %v1025 = vpop.permute.xlu0 %1024
    %1026 = vrot.lane.b32.xlu0 %v854, 96
    %v1027 = vpop.permute.xlu0 %1026
    %1028 = vrot.lane.b32.xlu0 %v855, 96
    %v1029 = vpop.permute.xlu0 %1028
    %1030 = vrot.lane.b32.xlu0 %v856, 96
    %v1031 = vpop.permute.xlu0 %1030
    %1032 = vrot.lane.b32.xlu0 %v857, 96
    %v1033 = vpop.permute.xlu0 %1032
    %1034 = vrot.lane.b32.xlu0 %v858, 96
    %v1035 = vpop.permute.xlu0 %1034
    %1036 = vrot.lane.b32.xlu0 %v859, 96
    %v1037 = vpop.permute.xlu0 %1036
    %1038 = vrot.lane.b32.xlu0 %v860, 96
    %v1039 = vpop.permute.xlu0 %1038
    %1040 = vrot.lane.b32.xlu0 %v861, 96
    %v1041 = vpop.permute.xlu0 %1040
    %1042 = vrot.lane.b32.xlu0 %v862, 96
    %v1043 = vpop.permute.xlu0 %1042
    %1044 = vrot.lane.b32.xlu0 %v863, 96
    %v1045 = vpop.permute.xlu0 %1044
    %1046 = vrot.lane.b32.xlu0 %v864, 96
    %v1047 = vpop.permute.xlu0 %1046
    %1048 = vrot.lane.b32.xlu0 %v865, 96
    %v1049 = vpop.permute.xlu0 %1048
    %1050 = vrot.lane.b32.xlu0 %v866, 96
    %v1051 = vpop.permute.xlu0 %1050
    %1052 = vrot.lane.b32.xlu0 %v867, 96
    %v1053 = vpop.permute.xlu0 %1052
    %1054 = vrot.lane.b32.xlu0 %v868, 96
    %v1055 = vpop.permute.xlu0 %1054
    %1056 = vrot.lane.b32.xlu0 %v869, 96
    %v1057 = vpop.permute.xlu0 %1056
    %1058 = vrot.lane.b32.xlu0 %v870, 96
    %v1059 = vpop.permute.xlu0 %1058
    %1060 = vrot.lane.b32.xlu0 %v871, 96
    %v1061 = vpop.permute.xlu0 %1060
    %1062 = vrot.lane.b32.xlu0 %v872, 96
    %v1063 = vpop.permute.xlu0 %1062
    %1064 = vrot.lane.b32.xlu0 %v873, 96
    %v1065 = vpop.permute.xlu0 %1064
    %1066 = vrot.lane.b32.xlu0 %v874, 96
    %v1067 = vpop.permute.xlu0 %1066
    %1068 = vrot.lane.b32.xlu0 %v875, 96
    %v1069 = vpop.permute.xlu0 %1068
    %1070 = vrot.lane.b32.xlu0 %v876, 96
    %v1071 = vpop.permute.xlu0 %1070
    %1072 = vrot.lane.b32.xlu0 %v877, 96
    %v1073 = vpop.permute.xlu0 %1072
    %1074 = vrot.lane.b32.xlu0 %v878, 96
    %v1075 = vpop.permute.xlu0 %1074
    %1076 = vrot.lane.b32.xlu0 %v879, 96
    %v1077 = vpop.permute.xlu0 %1076
    %1078 = vrot.lane.b32.xlu0 %v880, 96
    %v1079 = vpop.permute.xlu0 %1078
    %1080 = vrot.lane.b32.xlu0 %v881, 96
    %v1081 = vpop.permute.xlu0 %1080
    %1082 = vrot.lane.b32.xlu0 %v882, 96
    %v1083 = vpop.permute.xlu0 %1082
    %1084 = vrot.lane.b32.xlu0 %v883, 96
    %v1085 = vpop.permute.xlu0 %1084
    %1086 = vrot.lane.b32.xlu0 %v884, 96
    %v1087 = vpop.permute.xlu0 %1086
    %1088 = vrot.lane.b32.xlu0 %v885, 96
    %v1089 = vpop.permute.xlu0 %1088
    %1090 = vrot.lane.b32.xlu0 %v886, 96
    %v1091 = vpop.permute.xlu0 %1090
    %1092 = vrot.lane.b32.xlu0 %v887, 96
    %v1093 = vpop.permute.xlu0 %1092
    %1094 = vrot.lane.b32.xlu0 %v888, 96
    %v1095 = vpop.permute.xlu0 %1094
    %1096 = vrot.lane.b32.xlu0 %v889, 96
    %v1097 = vpop.permute.xlu0 %1096
    %1098 = vrot.lane.b32.xlu0 %v890, 96
    %v1099 = vpop.permute.xlu0 %1098
    %1100 = vrot.lane.b32.xlu0 %v891, 96
    %v1101 = vpop.permute.xlu0 %1100
    %1102 = vrot.lane.b32.xlu0 %v892, 96
    %v1103 = vpop.permute.xlu0 %1102
    %1104 = vrot.lane.b32.xlu0 %v893, 96
    %v1105 = vpop.permute.xlu0 %1104
    %1106 = vrot.lane.b32.xlu0 %v894, 96
    %v1107 = vpop.permute.xlu0 %1106
    %1108 = vrot.lane.b32.xlu0 %v895, 96
    %v1109 = vpop.permute.xlu0 %1108
    %1110 = vrot.lane.b32.xlu0 %v896, 96
    %v1111 = vpop.permute.xlu0 %1110
    %1112 = vrot.lane.b32.xlu0 %v897, 96
    %v1113 = vpop.permute.xlu0 %1112
    %1114 = vrot.lane.b32.xlu0 %v898, 96
    %v1115 = vpop.permute.xlu0 %1114
    %1116 = vrot.lane.b32.xlu0 %v899, 96
    %v1117 = vpop.permute.xlu0 %1116
    %1118 = vrot.lane.b32.xlu0 %v900, 96
    %v1119 = vpop.permute.xlu0 %1118
    %1120 = vrot.lane.b32.xlu0 %v901, 96
    %v1121 = vpop.permute.xlu0 %1120
    %1122 = vrot.lane.b32.xlu0 %v902, 96
    %v1123 = vpop.permute.xlu0 %1122
    %1124 = vrot.lane.b32.xlu0 %v903, 96
    %v1125 = vpop.permute.xlu0 %1124
    %1126 = vrot.lane.b32.xlu0 %v904, 96
    %v1127 = vpop.permute.xlu0 %1126
    %1128 = vrot.lane.b32.xlu0 %v905, 96
    %v1129 = vpop.permute.xlu0 %1128
    %1130 = vrot.lane.b32.xlu0 %v906, 96
    %v1131 = vpop.permute.xlu0 %1130
    %1132 = vrot.lane.b32.xlu0 %v907, 96
    %v1133 = vpop.permute.xlu0 %1132
    %1134 = vrot.lane.b32.xlu0 %v908, 96
    %v1135 = vpop.permute.xlu0 %1134
    %1136 = vrot.lane.b32.xlu0 %v909, 96
    %v1137 = vpop.permute.xlu0 %1136
    %1138 = vrot.lane.b32.xlu0 %v910, 96
    %v1139 = vpop.permute.xlu0 %1138
    %1140 = vrot.lane.b32.xlu0 %v911, 96
    %v1141 = vpop.permute.xlu0 %1140
    %1142 = vrot.lane.b32.xlu0 %v912, 96
    %v1143 = vpop.permute.xlu0 %1142
    %1144 = vrot.lane.b32.xlu0 %v913, 96
    %v1145 = vpop.permute.xlu0 %1144
    %1146 = vrot.lane.b32.xlu0 %v914, 96
    %v1147 = vpop.permute.xlu0 %1146
    %1148 = vrot.lane.b32.xlu0 %v915, 96
    %v1149 = vpop.permute.xlu0 %1148
    %1150 = vrot.lane.b32.xlu0 %v916, 96
    %v1151 = vpop.permute.xlu0 %1150
    %1152 = vrot.lane.b32.xlu0 %v917, 96
    %v1153 = vpop.permute.xlu0 %1152
    %1154 = vrot.lane.b32.xlu0 %v918, 96
    %v1155 = vpop.permute.xlu0 %1154
    %1156 = vrot.lane.b32.xlu0 %v919, 96
    %v1157 = vpop.permute.xlu0 %1156
    %1158 = vrot.lane.b32.xlu0 %v920, 96
    %v1159 = vpop.permute.xlu0 %1158
    %1160 = vrot.lane.b32.xlu0 %v921, 96
    %v1161 = vpop.permute.xlu0 %1160
    %1162 = vrot.lane.b32.xlu0 %v922, 96
    %v1163 = vpop.permute.xlu0 %1162
    %1164 = vrot.lane.b32.xlu0 %v923, 96
    %v1165 = vpop.permute.xlu0 %1164
    %1166 = vrot.lane.b32.xlu0 %v924, 96
    %v1167 = vpop.permute.xlu0 %1166
    %v1249 = vadd.f32 %v844, %v1007
    %v1250 = vadd.f32 %v845, %v1009
    %v1251 = vadd.f32 %v846, %v1011
    %v1252 = vadd.f32 %v847, %v1013
    %v1253 = vadd.f32 %v848, %v1015
    %v1254 = vadd.f32 %v849, %v1017
    %v1255 = vadd.f32 %v850, %v1019
    %v1256 = vadd.f32 %v851, %v1021
    %v1257 = vadd.f32 %v852, %v1023
    %v1258 = vadd.f32 %v853, %v1025
    %v1259 = vadd.f32 %v854, %v1027
    %v1260 = vadd.f32 %v855, %v1029
    %v1261 = vadd.f32 %v856, %v1031
    %v1262 = vadd.f32 %v857, %v1033
    %v1263 = vadd.f32 %v858, %v1035
    %v1264 = vadd.f32 %v859, %v1037
    %v1265 = vadd.f32 %v860, %v1039
    %v1266 = vadd.f32 %v861, %v1041
    %v1267 = vadd.f32 %v862, %v1043
    %v1268 = vadd.f32 %v863, %v1045
    %v1269 = vadd.f32 %v864, %v1047
    %v1270 = vadd.f32 %v865, %v1049
    %v1271 = vadd.f32 %v866, %v1051
    %v1272 = vadd.f32 %v867, %v1053
    %v1273 = vadd.f32 %v868, %v1055
    %v1274 = vadd.f32 %v869, %v1057
    %v1275 = vadd.f32 %v870, %v1059
    %v1276 = vadd.f32 %v871, %v1061
    %v1277 = vadd.f32 %v872, %v1063
    %v1278 = vadd.f32 %v873, %v1065
    %v1279 = vadd.f32 %v874, %v1067
    %v1280 = vadd.f32 %v875, %v1069
    %v1281 = vadd.f32 %v876, %v1071
    %v1282 = vadd.f32 %v877, %v1073
    %v1283 = vadd.f32 %v878, %v1075
    %v1284 = vadd.f32 %v879, %v1077
    %v1285 = vadd.f32 %v880, %v1079
    %v1286 = vadd.f32 %v881, %v1081
    %v1287 = vadd.f32 %v882, %v1083
    %v1288 = vadd.f32 %v883, %v1085
    %v1289 = vadd.f32 %v884, %v1087
    %v1290 = vadd.f32 %v885, %v1089
    %v1291 = vadd.f32 %v886, %v1091
    %v1292 = vadd.f32 %v887, %v1093
    %v1293 = vadd.f32 %v888, %v1095
    %v1294 = vadd.f32 %v889, %v1097
    %v1295 = vadd.f32 %v890, %v1099
    %v1296 = vadd.f32 %v891, %v1101
    %v1297 = vadd.f32 %v892, %v1103
    %v1298 = vadd.f32 %v893, %v1105
    %v1299 = vadd.f32 %v894, %v1107
    %v1300 = vadd.f32 %v895, %v1109
    %v1301 = vadd.f32 %v896, %v1111
    %v1302 = vadd.f32 %v897, %v1113
    %v1303 = vadd.f32 %v898, %v1115
    %v1304 = vadd.f32 %v899, %v1117
    %v1305 = vadd.f32 %v900, %v1119
    %v1306 = vadd.f32 %v901, %v1121
    %v1307 = vadd.f32 %v902, %v1123
    %v1308 = vadd.f32 %v903, %v1125
    %v1309 = vadd.f32 %v904, %v1127
    %v1310 = vadd.f32 %v905, %v1129
    %v1311 = vadd.f32 %v906, %v1131
    %v1312 = vadd.f32 %v907, %v1133
    %v1313 = vadd.f32 %v908, %v1135
    %v1314 = vadd.f32 %v909, %v1137
    %v1315 = vadd.f32 %v910, %v1139
    %v1316 = vadd.f32 %v911, %v1141
    %v1317 = vadd.f32 %v912, %v1143
    %v1318 = vadd.f32 %v913, %v1145
    %v1319 = vadd.f32 %v914, %v1147
    %v1320 = vadd.f32 %v915, %v1149
    %v1321 = vadd.f32 %v916, %v1151
    %v1322 = vadd.f32 %v917, %v1153
    %v1323 = vadd.f32 %v918, %v1155
    %v1324 = vadd.f32 %v919, %v1157
    %v1325 = vadd.f32 %v920, %v1159
    %v1326 = vadd.f32 %v921, %v1161
    %v1327 = vadd.f32 %v922, %v1163
    %v1328 = vadd.f32 %v923, %v1165
    %v1329 = vadd.f32 %v924, %v1167
    %1330 = vrot.lane.b32.xlu0 %v844, 64
    %v1331 = vpop.permute.xlu0 %1330
    %1332 = vrot.lane.b32.xlu0 %v845, 64
    %v1333 = vpop.permute.xlu0 %1332
    %1334 = vrot.lane.b32.xlu0 %v846, 64
    %v1335 = vpop.permute.xlu0 %1334
    %1336 = vrot.lane.b32.xlu0 %v847, 64
    %v1337 = vpop.permute.xlu0 %1336
    %1338 = vrot.lane.b32.xlu0 %v848, 64
    %v1339 = vpop.permute.xlu0 %1338
    %1340 = vrot.lane.b32.xlu0 %v849, 64
    %v1341 = vpop.permute.xlu0 %1340
    %1342 = vrot.lane.b32.xlu0 %v850, 64
    %v1343 = vpop.permute.xlu0 %1342
    %1344 = vrot.lane.b32.xlu0 %v851, 64
    %v1345 = vpop.permute.xlu0 %1344
    %1346 = vrot.lane.b32.xlu0 %v852, 64
    %v1347 = vpop.permute.xlu0 %1346
    %1348 = vrot.lane.b32.xlu0 %v853, 64
    %v1349 = vpop.permute.xlu0 %1348
    %1350 = vrot.lane.b32.xlu0 %v854, 64
    %v1351 = vpop.permute.xlu0 %1350
    %1352 = vrot.lane.b32.xlu0 %v855, 64
    %v1353 = vpop.permute.xlu0 %1352
    %1354 = vrot.lane.b32.xlu0 %v856, 64
    %v1355 = vpop.permute.xlu0 %1354
    %1356 = vrot.lane.b32.xlu0 %v857, 64
    %v1357 = vpop.permute.xlu0 %1356
    %1358 = vrot.lane.b32.xlu0 %v858, 64
    %v1359 = vpop.permute.xlu0 %1358
    %1360 = vrot.lane.b32.xlu0 %v859, 64
    %v1361 = vpop.permute.xlu0 %1360
    %1362 = vrot.lane.b32.xlu0 %v860, 64
    %v1363 = vpop.permute.xlu0 %1362
    %1364 = vrot.lane.b32.xlu0 %v861, 64
    %v1365 = vpop.permute.xlu0 %1364
    %1366 = vrot.lane.b32.xlu0 %v862, 64
    %v1367 = vpop.permute.xlu0 %1366
    %1368 = vrot.lane.b32.xlu0 %v863, 64
    %v1369 = vpop.permute.xlu0 %1368
    %1370 = vrot.lane.b32.xlu0 %v864, 64
    %v1371 = vpop.permute.xlu0 %1370
    %1372 = vrot.lane.b32.xlu0 %v865, 64
    %v1373 = vpop.permute.xlu0 %1372
    %1374 = vrot.lane.b32.xlu0 %v866, 64
    %v1375 = vpop.permute.xlu0 %1374
    %1376 = vrot.lane.b32.xlu0 %v867, 64
    %v1377 = vpop.permute.xlu0 %1376
    %1378 = vrot.lane.b32.xlu0 %v868, 64
    %v1379 = vpop.permute.xlu0 %1378
    %1380 = vrot.lane.b32.xlu0 %v869, 64
    %v1381 = vpop.permute.xlu0 %1380
    %1382 = vrot.lane.b32.xlu0 %v870, 64
    %v1383 = vpop.permute.xlu0 %1382
    %1384 = vrot.lane.b32.xlu0 %v871, 64
    %v1385 = vpop.permute.xlu0 %1384
    %1386 = vrot.lane.b32.xlu0 %v872, 64
    %v1387 = vpop.permute.xlu0 %1386
    %1388 = vrot.lane.b32.xlu0 %v873, 64
    %v1389 = vpop.permute.xlu0 %1388
    %1390 = vrot.lane.b32.xlu0 %v874, 64
    %v1391 = vpop.permute.xlu0 %1390
    %1392 = vrot.lane.b32.xlu0 %v875, 64
    %v1393 = vpop.permute.xlu0 %1392
    %1394 = vrot.lane.b32.xlu0 %v876, 64
    %v1395 = vpop.permute.xlu0 %1394
    %1396 = vrot.lane.b32.xlu0 %v877, 64
    %v1397 = vpop.permute.xlu0 %1396
    %1398 = vrot.lane.b32.xlu0 %v878, 64
    %v1399 = vpop.permute.xlu0 %1398
    %1400 = vrot.lane.b32.xlu0 %v879, 64
    %v1401 = vpop.permute.xlu0 %1400
    %1402 = vrot.lane.b32.xlu0 %v880, 64
    %v1403 = vpop.permute.xlu0 %1402
    %1404 = vrot.lane.b32.xlu0 %v881, 64
    %v1405 = vpop.permute.xlu0 %1404
    %1406 = vrot.lane.b32.xlu0 %v882, 64
    %v1407 = vpop.permute.xlu0 %1406
    %1408 = vrot.lane.b32.xlu0 %v883, 64
    %v1409 = vpop.permute.xlu0 %1408
    %1410 = vrot.lane.b32.xlu0 %v884, 64
    %v1411 = vpop.permute.xlu0 %1410
    %1412 = vrot.lane.b32.xlu0 %v885, 64
    %v1413 = vpop.permute.xlu0 %1412
    %1414 = vrot.lane.b32.xlu0 %v886, 64
    %v1415 = vpop.permute.xlu0 %1414
    %1416 = vrot.lane.b32.xlu0 %v887, 64
    %v1417 = vpop.permute.xlu0 %1416
    %1418 = vrot.lane.b32.xlu0 %v888, 64
    %v1419 = vpop.permute.xlu0 %1418
    %1420 = vrot.lane.b32.xlu0 %v889, 64
    %v1421 = vpop.permute.xlu0 %1420
    %1422 = vrot.lane.b32.xlu0 %v890, 64
    %v1423 = vpop.permute.xlu0 %1422
    %1424 = vrot.lane.b32.xlu0 %v891, 64
    %v1425 = vpop.permute.xlu0 %1424
    %1426 = vrot.lane.b32.xlu0 %v892, 64
    %v1427 = vpop.permute.xlu0 %1426
    %1428 = vrot.lane.b32.xlu0 %v893, 64
    %v1429 = vpop.permute.xlu0 %1428
    %1430 = vrot.lane.b32.xlu0 %v894, 64
    %v1431 = vpop.permute.xlu0 %1430
    %1432 = vrot.lane.b32.xlu0 %v895, 64
    %v1433 = vpop.permute.xlu0 %1432
    %1434 = vrot.lane.b32.xlu0 %v896, 64
    %v1435 = vpop.permute.xlu0 %1434
    %1436 = vrot.lane.b32.xlu0 %v897, 64
    %v1437 = vpop.permute.xlu0 %1436
    %1438 = vrot.lane.b32.xlu0 %v898, 64
    %v1439 = vpop.permute.xlu0 %1438
    %1440 = vrot.lane.b32.xlu0 %v899, 64
    %v1441 = vpop.permute.xlu0 %1440
    %1442 = vrot.lane.b32.xlu0 %v900, 64
    %v1443 = vpop.permute.xlu0 %1442
    %1444 = vrot.lane.b32.xlu0 %v901, 64
    %v1445 = vpop.permute.xlu0 %1444
    %1446 = vrot.lane.b32.xlu0 %v902, 64
    %v1447 = vpop.permute.xlu0 %1446
    %1448 = vrot.lane.b32.xlu0 %v903, 64
    %v1449 = vpop.permute.xlu0 %1448
    %1450 = vrot.lane.b32.xlu0 %v904, 64
    %v1451 = vpop.permute.xlu0 %1450
    %1452 = vrot.lane.b32.xlu0 %v905, 64
    %v1453 = vpop.permute.xlu0 %1452
    %1454 = vrot.lane.b32.xlu0 %v906, 64
    %v1455 = vpop.permute.xlu0 %1454
    %1456 = vrot.lane.b32.xlu0 %v907, 64
    %v1457 = vpop.permute.xlu0 %1456
    %1458 = vrot.lane.b32.xlu0 %v908, 64
    %v1459 = vpop.permute.xlu0 %1458
    %1460 = vrot.lane.b32.xlu0 %v909, 64
    %v1461 = vpop.permute.xlu0 %1460
    %1462 = vrot.lane.b32.xlu0 %v910, 64
    %v1463 = vpop.permute.xlu0 %1462
    %1464 = vrot.lane.b32.xlu0 %v911, 64
    %v1465 = vpop.permute.xlu0 %1464
    %1466 = vrot.lane.b32.xlu0 %v912, 64
    %v1467 = vpop.permute.xlu0 %1466
    %1468 = vrot.lane.b32.xlu0 %v913, 64
    %v1469 = vpop.permute.xlu0 %1468
    %1470 = vrot.lane.b32.xlu0 %v914, 64
    %v1471 = vpop.permute.xlu0 %1470
    %1472 = vrot.lane.b32.xlu0 %v915, 64
    %v1473 = vpop.permute.xlu0 %1472
    %1474 = vrot.lane.b32.xlu0 %v916, 64
    %v1475 = vpop.permute.xlu0 %1474
    %1476 = vrot.lane.b32.xlu0 %v917, 64
    %v1477 = vpop.permute.xlu0 %1476
    %1478 = vrot.lane.b32.xlu0 %v918, 64
    %v1479 = vpop.permute.xlu0 %1478
    %1480 = vrot.lane.b32.xlu0 %v919, 64
    %v1481 = vpop.permute.xlu0 %1480
    %1482 = vrot.lane.b32.xlu0 %v920, 64
    %v1483 = vpop.permute.xlu0 %1482
    %1484 = vrot.lane.b32.xlu0 %v921, 64
    %v1485 = vpop.permute.xlu0 %1484
    %1486 = vrot.lane.b32.xlu0 %v922, 64
    %v1487 = vpop.permute.xlu0 %1486
    %1488 = vrot.lane.b32.xlu0 %v923, 64
    %v1489 = vpop.permute.xlu0 %1488
    %1490 = vrot.lane.b32.xlu0 %v924, 64
    %v1491 = vpop.permute.xlu0 %1490
    %v1573 = vadd.f32 %v1249, %v1331
    %v1574 = vadd.f32 %v1250, %v1333
    %v1575 = vadd.f32 %v1251, %v1335
    %v1576 = vadd.f32 %v1252, %v1337
    %v1577 = vadd.f32 %v1253, %v1339
    %v1578 = vadd.f32 %v1254, %v1341
    %v1579 = vadd.f32 %v1255, %v1343
    %v1580 = vadd.f32 %v1256, %v1345
    %v1581 = vadd.f32 %v1257, %v1347
    %v1582 = vadd.f32 %v1258, %v1349
    %v1583 = vadd.f32 %v1259, %v1351
    %v1584 = vadd.f32 %v1260, %v1353
    %v1585 = vadd.f32 %v1261, %v1355
    %v1586 = vadd.f32 %v1262, %v1357
    %v1587 = vadd.f32 %v1263, %v1359
    %v1588 = vadd.f32 %v1264, %v1361
    %v1589 = vadd.f32 %v1265, %v1363
    %v1590 = vadd.f32 %v1266, %v1365
    %v1591 = vadd.f32 %v1267, %v1367
    %v1592 = vadd.f32 %v1268, %v1369
    %v1593 = vadd.f32 %v1269, %v1371
    %v1594 = vadd.f32 %v1270, %v1373
    %v1595 = vadd.f32 %v1271, %v1375
    %v1596 = vadd.f32 %v1272, %v1377
    %v1597 = vadd.f32 %v1273, %v1379
    %v1598 = vadd.f32 %v1274, %v1381
    %v1599 = vadd.f32 %v1275, %v1383
    %v1600 = vadd.f32 %v1276, %v1385
    %v1601 = vadd.f32 %v1277, %v1387
    %v1602 = vadd.f32 %v1278, %v1389
    %v1603 = vadd.f32 %v1279, %v1391
    %v1604 = vadd.f32 %v1280, %v1393
    %v1605 = vadd.f32 %v1281, %v1395
    %v1606 = vadd.f32 %v1282, %v1397
    %v1607 = vadd.f32 %v1283, %v1399
    %v1608 = vadd.f32 %v1284, %v1401
    %v1609 = vadd.f32 %v1285, %v1403
    %v1610 = vadd.f32 %v1286, %v1405
    %v1611 = vadd.f32 %v1287, %v1407
    %v1612 = vadd.f32 %v1288, %v1409
    %v1613 = vadd.f32 %v1289, %v1411
    %v1614 = vadd.f32 %v1290, %v1413
    %v1615 = vadd.f32 %v1291, %v1415
    %v1616 = vadd.f32 %v1292, %v1417
    %v1617 = vadd.f32 %v1293, %v1419
    %v1618 = vadd.f32 %v1294, %v1421
    %v1619 = vadd.f32 %v1295, %v1423
    %v1620 = vadd.f32 %v1296, %v1425
    %v1621 = vadd.f32 %v1297, %v1427
    %v1622 = vadd.f32 %v1298, %v1429
    %v1623 = vadd.f32 %v1299, %v1431
    %v1624 = vadd.f32 %v1300, %v1433
    %v1625 = vadd.f32 %v1301, %v1435
    %v1626 = vadd.f32 %v1302, %v1437
    %v1627 = vadd.f32 %v1303, %v1439
    %v1628 = vadd.f32 %v1304, %v1441
    %v1629 = vadd.f32 %v1305, %v1443
    %v1630 = vadd.f32 %v1306, %v1445
    %v1631 = vadd.f32 %v1307, %v1447
    %v1632 = vadd.f32 %v1308, %v1449
    %v1633 = vadd.f32 %v1309, %v1451
    %v1634 = vadd.f32 %v1310, %v1453
    %v1635 = vadd.f32 %v1311, %v1455
    %v1636 = vadd.f32 %v1312, %v1457
    %v1637 = vadd.f32 %v1313, %v1459
    %v1638 = vadd.f32 %v1314, %v1461
    %v1639 = vadd.f32 %v1315, %v1463
    %v1640 = vadd.f32 %v1316, %v1465
    %v1641 = vadd.f32 %v1317, %v1467
    %v1642 = vadd.f32 %v1318, %v1469
    %v1643 = vadd.f32 %v1319, %v1471
    %v1644 = vadd.f32 %v1320, %v1473
    %v1645 = vadd.f32 %v1321, %v1475
    %v1646 = vadd.f32 %v1322, %v1477
    %v1647 = vadd.f32 %v1323, %v1479
    %v1648 = vadd.f32 %v1324, %v1481
    %v1649 = vadd.f32 %v1325, %v1483
    %v1650 = vadd.f32 %v1326, %v1485
    %v1651 = vadd.f32 %v1327, %v1487
    %v1652 = vadd.f32 %v1328, %v1489
    %v1653 = vadd.f32 %v1329, %v1491
    %1654 = vrot.lane.b32.xlu0 %v844, 32
    %v1655 = vpop.permute.xlu0 %1654
    %1656 = vrot.lane.b32.xlu0 %v845, 32
    %v1657 = vpop.permute.xlu0 %1656
    %1658 = vrot.lane.b32.xlu0 %v846, 32
    %v1659 = vpop.permute.xlu0 %1658
    %1660 = vrot.lane.b32.xlu0 %v847, 32
    %v1661 = vpop.permute.xlu0 %1660
    %1662 = vrot.lane.b32.xlu0 %v848, 32
    %v1663 = vpop.permute.xlu0 %1662
    %1664 = vrot.lane.b32.xlu0 %v849, 32
    %v1665 = vpop.permute.xlu0 %1664
    %1666 = vrot.lane.b32.xlu0 %v850, 32
    %v1667 = vpop.permute.xlu0 %1666
    %1668 = vrot.lane.b32.xlu0 %v851, 32
    %v1669 = vpop.permute.xlu0 %1668
    %1670 = vrot.lane.b32.xlu0 %v852, 32
    %v1671 = vpop.permute.xlu0 %1670
    %1672 = vrot.lane.b32.xlu0 %v853, 32
    %v1673 = vpop.permute.xlu0 %1672
    %1674 = vrot.lane.b32.xlu0 %v854, 32
    %v1675 = vpop.permute.xlu0 %1674
    %1676 = vrot.lane.b32.xlu0 %v855, 32
    %v1677 = vpop.permute.xlu0 %1676
    %1678 = vrot.lane.b32.xlu0 %v856, 32
    %v1679 = vpop.permute.xlu0 %1678
    %1680 = vrot.lane.b32.xlu0 %v857, 32
    %v1681 = vpop.permute.xlu0 %1680
    %1682 = vrot.lane.b32.xlu0 %v858, 32
    %v1683 = vpop.permute.xlu0 %1682
    %1684 = vrot.lane.b32.xlu0 %v859, 32
    %v1685 = vpop.permute.xlu0 %1684
    %1686 = vrot.lane.b32.xlu0 %v860, 32
    %v1687 = vpop.permute.xlu0 %1686
    %1688 = vrot.lane.b32.xlu0 %v861, 32
    %v1689 = vpop.permute.xlu0 %1688
    %1690 = vrot.lane.b32.xlu0 %v862, 32
    %v1691 = vpop.permute.xlu0 %1690
    %1692 = vrot.lane.b32.xlu0 %v863, 32
    %v1693 = vpop.permute.xlu0 %1692
    %1694 = vrot.lane.b32.xlu0 %v864, 32
    %v1695 = vpop.permute.xlu0 %1694
    %1696 = vrot.lane.b32.xlu0 %v865, 32
    %v1697 = vpop.permute.xlu0 %1696
    %1698 = vrot.lane.b32.xlu0 %v866, 32
    %v1699 = vpop.permute.xlu0 %1698
    %1700 = vrot.lane.b32.xlu0 %v867, 32
    %v1701 = vpop.permute.xlu0 %1700
    %1702 = vrot.lane.b32.xlu0 %v868, 32
    %v1703 = vpop.permute.xlu0 %1702
    %1704 = vrot.lane.b32.xlu0 %v869, 32
    %v1705 = vpop.permute.xlu0 %1704
    %1706 = vrot.lane.b32.xlu0 %v870, 32
    %v1707 = vpop.permute.xlu0 %1706
    %1708 = vrot.lane.b32.xlu0 %v871, 32
    %v1709 = vpop.permute.xlu0 %1708
    %1710 = vrot.lane.b32.xlu0 %v872, 32
    %v1711 = vpop.permute.xlu0 %1710
    %1712 = vrot.lane.b32.xlu0 %v873, 32
    %v1713 = vpop.permute.xlu0 %1712
    %1714 = vrot.lane.b32.xlu0 %v874, 32
    %v1715 = vpop.permute.xlu0 %1714
    %1716 = vrot.lane.b32.xlu0 %v875, 32
    %v1717 = vpop.permute.xlu0 %1716
    %1718 = vrot.lane.b32.xlu0 %v876, 32
    %v1719 = vpop.permute.xlu0 %1718
    %1720 = vrot.lane.b32.xlu0 %v877, 32
    %v1721 = vpop.permute.xlu0 %1720
    %1722 = vrot.lane.b32.xlu0 %v878, 32
    %v1723 = vpop.permute.xlu0 %1722
    %1724 = vrot.lane.b32.xlu0 %v879, 32
    %v1725 = vpop.permute.xlu0 %1724
    %1726 = vrot.lane.b32.xlu0 %v880, 32
    %v1727 = vpop.permute.xlu0 %1726
    %1728 = vrot.lane.b32.xlu0 %v881, 32
    %v1729 = vpop.permute.xlu0 %1728
    %1730 = vrot.lane.b32.xlu0 %v882, 32
    %v1731 = vpop.permute.xlu0 %1730
    %1732 = vrot.lane.b32.xlu0 %v883, 32
    %v1733 = vpop.permute.xlu0 %1732
    %1734 = vrot.lane.b32.xlu0 %v884, 32
    %v1735 = vpop.permute.xlu0 %1734
    %1736 = vrot.lane.b32.xlu0 %v885, 32
    %v1737 = vpop.permute.xlu0 %1736
    %1738 = vrot.lane.b32.xlu0 %v886, 32
    %v1739 = vpop.permute.xlu0 %1738
    %1740 = vrot.lane.b32.xlu0 %v887, 32
    %v1741 = vpop.permute.xlu0 %1740
    %1742 = vrot.lane.b32.xlu0 %v888, 32
    %v1743 = vpop.permute.xlu0 %1742
    %1744 = vrot.lane.b32.xlu0 %v889, 32
    %v1745 = vpop.permute.xlu0 %1744
    %1746 = vrot.lane.b32.xlu0 %v890, 32
    %v1747 = vpop.permute.xlu0 %1746
    %1748 = vrot.lane.b32.xlu0 %v891, 32
    %v1749 = vpop.permute.xlu0 %1748
    %1750 = vrot.lane.b32.xlu0 %v892, 32
    %v1751 = vpop.permute.xlu0 %1750
    %1752 = vrot.lane.b32.xlu0 %v893, 32
    %v1753 = vpop.permute.xlu0 %1752
    %1754 = vrot.lane.b32.xlu0 %v894, 32
    %v1755 = vpop.permute.xlu0 %1754
    %1756 = vrot.lane.b32.xlu0 %v895, 32
    %v1757 = vpop.permute.xlu0 %1756
    %1758 = vrot.lane.b32.xlu0 %v896, 32
    %v1759 = vpop.permute.xlu0 %1758
    %1760 = vrot.lane.b32.xlu0 %v897, 32
    %v1761 = vpop.permute.xlu0 %1760
    %1762 = vrot.lane.b32.xlu0 %v898, 32
    %v1763 = vpop.permute.xlu0 %1762
    %1764 = vrot.lane.b32.xlu0 %v899, 32
    %v1765 = vpop.permute.xlu0 %1764
    %1766 = vrot.lane.b32.xlu0 %v900, 32
    %v1767 = vpop.permute.xlu0 %1766
    %1768 = vrot.lane.b32.xlu0 %v901, 32
    %v1769 = vpop.permute.xlu0 %1768
    %1770 = vrot.lane.b32.xlu0 %v902, 32
    %v1771 = vpop.permute.xlu0 %1770
    %1772 = vrot.lane.b32.xlu0 %v903, 32
    %v1773 = vpop.permute.xlu0 %1772
    %1774 = vrot.lane.b32.xlu0 %v904, 32
    %v1775 = vpop.permute.xlu0 %1774
    %1776 = vrot.lane.b32.xlu0 %v905, 32
    %v1777 = vpop.permute.xlu0 %1776
    %1778 = vrot.lane.b32.xlu0 %v906, 32
    %v1779 = vpop.permute.xlu0 %1778
    %1780 = vrot.lane.b32.xlu0 %v907, 32
    %v1781 = vpop.permute.xlu0 %1780
    %1782 = vrot.lane.b32.xlu0 %v908, 32
    %v1783 = vpop.permute.xlu0 %1782
    %1784 = vrot.lane.b32.xlu0 %v909, 32
    %v1785 = vpop.permute.xlu0 %1784
    %1786 = vrot.lane.b32.xlu0 %v910, 32
    %v1787 = vpop.permute.xlu0 %1786
    %1788 = vrot.lane.b32.xlu0 %v911, 32
    %v1789 = vpop.permute.xlu0 %1788
    %1790 = vrot.lane.b32.xlu0 %v912, 32
    %v1791 = vpop.permute.xlu0 %1790
    %1792 = vrot.lane.b32.xlu0 %v913, 32
    %v1793 = vpop.permute.xlu0 %1792
    %1794 = vrot.lane.b32.xlu0 %v914, 32
    %v1795 = vpop.permute.xlu0 %1794
    %1796 = vrot.lane.b32.xlu0 %v915, 32
    %v1797 = vpop.permute.xlu0 %1796
    %1798 = vrot.lane.b32.xlu0 %v916, 32
    %v1799 = vpop.permute.xlu0 %1798
    %1800 = vrot.lane.b32.xlu0 %v917, 32
    %v1801 = vpop.permute.xlu0 %1800
    %1802 = vrot.lane.b32.xlu0 %v918, 32
    %v1803 = vpop.permute.xlu0 %1802
    %1804 = vrot.lane.b32.xlu0 %v919, 32
    %v1805 = vpop.permute.xlu0 %1804
    %1806 = vrot.lane.b32.xlu0 %v920, 32
    %v1807 = vpop.permute.xlu0 %1806
    %1808 = vrot.lane.b32.xlu0 %v921, 32
    %v1809 = vpop.permute.xlu0 %1808
    %1810 = vrot.lane.b32.xlu0 %v922, 32
    %v1811 = vpop.permute.xlu0 %1810
    %1812 = vrot.lane.b32.xlu0 %v923, 32
    %v1813 = vpop.permute.xlu0 %1812
    %1814 = vrot.lane.b32.xlu0 %v924, 32
    %v1815 = vpop.permute.xlu0 %1814
    %v1897 = vadd.f32 %v1573, %v1655
    %v1898 = vadd.f32 %v1574, %v1657
    %v1899 = vadd.f32 %v1575, %v1659
    %v1900 = vadd.f32 %v1576, %v1661
    %v1901 = vadd.f32 %v1577, %v1663
    %v1902 = vadd.f32 %v1578, %v1665
    %v1903 = vadd.f32 %v1579, %v1667
    %v1904 = vadd.f32 %v1580, %v1669
    %v1905 = vadd.f32 %v1581, %v1671
    %v1906 = vadd.f32 %v1582, %v1673
    %v1907 = vadd.f32 %v1583, %v1675
    %v1908 = vadd.f32 %v1584, %v1677
    %v1909 = vadd.f32 %v1585, %v1679
    %v1910 = vadd.f32 %v1586, %v1681
    %v1911 = vadd.f32 %v1587, %v1683
    %v1912 = vadd.f32 %v1588, %v1685
    %v1913 = vadd.f32 %v1589, %v1687
    %v1914 = vadd.f32 %v1590, %v1689
    %v1915 = vadd.f32 %v1591, %v1691
    %v1916 = vadd.f32 %v1592, %v1693
    %v1917 = vadd.f32 %v1593, %v1695
    %v1918 = vadd.f32 %v1594, %v1697
    %v1919 = vadd.f32 %v1595, %v1699
    %v1920 = vadd.f32 %v1596, %v1701
    %v1921 = vadd.f32 %v1597, %v1703
    %v1922 = vadd.f32 %v1598, %v1705
    %v1923 = vadd.f32 %v1599, %v1707
    %v1924 = vadd.f32 %v1600, %v1709
    %v1925 = vadd.f32 %v1601, %v1711
    %v1926 = vadd.f32 %v1602, %v1713
    %v1927 = vadd.f32 %v1603, %v1715
    %v1928 = vadd.f32 %v1604, %v1717
    %v1929 = vadd.f32 %v1605, %v1719
    %v1930 = vadd.f32 %v1606, %v1721
    %v1931 = vadd.f32 %v1607, %v1723
    %v1932 = vadd.f32 %v1608, %v1725
    %v1933 = vadd.f32 %v1609, %v1727
    %v1934 = vadd.f32 %v1610, %v1729
    %v1935 = vadd.f32 %v1611, %v1731
    %v1936 = vadd.f32 %v1612, %v1733
    %v1937 = vadd.f32 %v1613, %v1735
    %v1938 = vadd.f32 %v1614, %v1737
    %v1939 = vadd.f32 %v1615, %v1739
    %v1940 = vadd.f32 %v1616, %v1741
    %v1941 = vadd.f32 %v1617, %v1743
    %v1942 = vadd.f32 %v1618, %v1745
    %v1943 = vadd.f32 %v1619, %v1747
    %v1944 = vadd.f32 %v1620, %v1749
    %v1945 = vadd.f32 %v1621, %v1751
    %v1946 = vadd.f32 %v1622, %v1753
    %v1947 = vadd.f32 %v1623, %v1755
    %v1948 = vadd.f32 %v1624, %v1757
    %v1949 = vadd.f32 %v1625, %v1759
    %v1950 = vadd.f32 %v1626, %v1761
    %v1951 = vadd.f32 %v1627, %v1763
    %v1952 = vadd.f32 %v1628, %v1765
    %v1953 = vadd.f32 %v1629, %v1767
    %v1954 = vadd.f32 %v1630, %v1769
    %v1955 = vadd.f32 %v1631, %v1771
    %v1956 = vadd.f32 %v1632, %v1773
    %v1957 = vadd.f32 %v1633, %v1775
    %v1958 = vadd.f32 %v1634, %v1777
    %v1959 = vadd.f32 %v1635, %v1779
    %v1960 = vadd.f32 %v1636, %v1781
    %v1961 = vadd.f32 %v1637, %v1783
    %v1962 = vadd.f32 %v1638, %v1785
    %v1963 = vadd.f32 %v1639, %v1787
    %v1964 = vadd.f32 %v1640, %v1789
    %v1965 = vadd.f32 %v1641, %v1791
    %v1966 = vadd.f32 %v1642, %v1793
    %v1967 = vadd.f32 %v1643, %v1795
    %v1968 = vadd.f32 %v1644, %v1797
    %v1969 = vadd.f32 %v1645, %v1799
    %v1970 = vadd.f32 %v1646, %v1801
    %v1971 = vadd.f32 %v1647, %v1803
    %v1972 = vadd.f32 %v1648, %v1805
    %v1973 = vadd.f32 %v1649, %v1807
    %v1974 = vadd.f32 %v1650, %v1809
    %v1975 = vadd.f32 %v1651, %v1811
    %v1976 = vadd.f32 %v1652, %v1813
    %v1977 = vadd.f32 %v1653, %v1815
    %v1978 = vmul.f32 %v1897, 0.25
    %v1979 = vmul.f32 %v1898, 0.25
    %v1980 = vmul.f32 %v1899, 0.25
    %v1981 = vmul.f32 %v1900, 0.25
    %v1982 = vmul.f32 %v1901, 0.25
    %v1983 = vmul.f32 %v1902, 0.25
    %v1984 = vmul.f32 %v1903, 0.25
    %v1985 = vmul.f32 %v1904, 0.25
    %v1986 = vmul.f32 %v1905, 0.25
    %v1987 = vmul.f32 %v1906, 0.25
    %v1988 = vmul.f32 %v1907, 0.25
    %v1989 = vmul.f32 %v1908, 0.25
    %v1990 = vmul.f32 %v1909, 0.25
    %v1991 = vmul.f32 %v1910, 0.25
    %v1992 = vmul.f32 %v1911, 0.25
    %v1993 = vmul.f32 %v1912, 0.25
    %v1994 = vmul.f32 %v1913, 0.25
    %v1995 = vmul.f32 %v1914, 0.25
    %v1996 = vmul.f32 %v1915, 0.25
    %v1997 = vmul.f32 %v1916, 0.25
    %v1998 = vmul.f32 %v1917, 0.25
    %v1999 = vmul.f32 %v1918, 0.25
    %v2000 = vmul.f32 %v1919, 0.25
    %v2001 = vmul.f32 %v1920, 0.25
    %v2002 = vmul.f32 %v1921, 0.25
    %v2003 = vmul.f32 %v1922, 0.25
    %v2004 = vmul.f32 %v1923, 0.25
    %v2005 = vmul.f32 %v1924, 0.25
    %v2006 = vmul.f32 %v1925, 0.25
    %v2007 = vmul.f32 %v1926, 0.25
    %v2008 = vmul.f32 %v1927, 0.25
    %v2009 = vmul.f32 %v1928, 0.25
    %v2010 = vmul.f32 %v1929, 0.25
    %v2011 = vmul.f32 %v1930, 0.25
    %v2012 = vmul.f32 %v1931, 0.25
    %v2013 = vmul.f32 %v1932, 0.25
    %v2014 = vmul.f32 %v1933, 0.25
    %v2015 = vmul.f32 %v1934, 0.25
    %v2016 = vmul.f32 %v1935, 0.25
    %v2017 = vmul.f32 %v1936, 0.25
    %v2018 = vmul.f32 %v1937, 0.25
    %v2019 = vmul.f32 %v1938, 0.25
    %v2020 = vmul.f32 %v1939, 0.25
    %v2021 = vmul.f32 %v1940, 0.25
    %v2022 = vmul.f32 %v1941, 0.25
    %v2023 = vmul.f32 %v1942, 0.25
    %v2024 = vmul.f32 %v1943, 0.25
    %v2025 = vmul.f32 %v1944, 0.25
    %v2026 = vmul.f32 %v1945, 0.25
    %v2027 = vmul.f32 %v1946, 0.25
    %v2028 = vmul.f32 %v1947, 0.25
    %v2029 = vmul.f32 %v1948, 0.25
    %v2030 = vmul.f32 %v1949, 0.25
    %v2031 = vmul.f32 %v1950, 0.25
    %v2032 = vmul.f32 %v1951, 0.25
    %v2033 = vmul.f32 %v1952, 0.25
    %v2034 = vmul.f32 %v1953, 0.25
    %v2035 = vmul.f32 %v1954, 0.25
    %v2036 = vmul.f32 %v1955, 0.25
    %v2037 = vmul.f32 %v1956, 0.25
    %v2038 = vmul.f32 %v1957, 0.25
    %v2039 = vmul.f32 %v1958, 0.25
    %v2040 = vmul.f32 %v1959, 0.25
    %v2041 = vmul.f32 %v1960, 0.25
    %v2042 = vmul.f32 %v1961, 0.25
    %v2043 = vmul.f32 %v1962, 0.25
    %v2044 = vmul.f32 %v1963, 0.25
    %v2045 = vmul.f32 %v1964, 0.25
    %v2046 = vmul.f32 %v1965, 0.25
    %v2047 = vmul.f32 %v1966, 0.25
    %v2048 = vmul.f32 %v1967, 0.25
    %v2049 = vmul.f32 %v1968, 0.25
    %v2050 = vmul.f32 %v1969, 0.25
    %v2051 = vmul.f32 %v1970, 0.25
    %v2052 = vmul.f32 %v1971, 0.25
    %v2053 = vmul.f32 %v1972, 0.25
    %v2054 = vmul.f32 %v1973, 0.25
    %v2055 = vmul.f32 %v1974, 0.25
    %v2056 = vmul.f32 %v1975, 0.25
    %v2057 = vmul.f32 %v1976, 0.25
    %v2058 = vmul.f32 %v1977, 0.25
    %vm2059 = vcmask 261120
    %2060 = vst.msk [vmem:[#allocation2] sm:$0xff] %vm2059, 0.0
    %2061 = vst.msk [vmem:[#allocation2 + $0x8] sm:$0xff] %vm2059, 0.0
    %2062 = vst.msk [vmem:[#allocation2 + $0x10] sm:$0xff] %vm2059, 0.0
    %2063 = vst.msk [vmem:[#allocation2 + $0x2a0] sm:$0xff] %vm2059, 0.0
    %2064 = vst.msk [vmem:[#allocation2 + $0x2a8] sm:$0xff] %vm2059, 0.0
    %2065 = vst.msk [vmem:[#allocation2 + $0x2b0] sm:$0xff] %vm2059, 0.0
    %2066 = vst.msk [vmem:[#allocation2 + $0x18] sm:$0xff] %vm2059, %v1978
    %2067 = vst.msk [vmem:[#allocation2 + $0x20] sm:$0xff] %vm2059, %v1979
    %2068 = vst.msk [vmem:[#allocation2 + $0x28] sm:$0xff] %vm2059, %v1980
    %2069 = vst.msk [vmem:[#allocation2 + $0x30] sm:$0xff] %vm2059, %v1981
    %2070 = vst.msk [vmem:[#allocation2 + $0x38] sm:$0xff] %vm2059, %v1982
    %2071 = vst.msk [vmem:[#allocation2 + $0x40] sm:$0xff] %vm2059, %v1983
    %2072 = vst.msk [vmem:[#allocation2 + $0x48] sm:$0xff] %vm2059, %v1984
    %2073 = vst.msk [vmem:[#allocation2 + $0x50] sm:$0xff] %vm2059, %v1985
    %2074 = vst.msk [vmem:[#allocation2 + $0x58] sm:$0xff] %vm2059, %v1986
    %2075 = vst.msk [vmem:[#allocation2 + $0x60] sm:$0xff] %vm2059, %v1987
    %2076 = vst.msk [vmem:[#allocation2 + $0x68] sm:$0xff] %vm2059, %v1988
    %2077 = vst.msk [vmem:[#allocation2 + $0x70] sm:$0xff] %vm2059, %v1989
    %2078 = vst.msk [vmem:[#allocation2 + $0x78] sm:$0xff] %vm2059, %v1990
    %2079 = vst.msk [vmem:[#allocation2 + $0x80] sm:$0xff] %vm2059, %v1991
    %2080 = vst.msk [vmem:[#allocation2 + $0x88] sm:$0xff] %vm2059, %v1992
    %2081 = vst.msk [vmem:[#allocation2 + $0x90] sm:$0xff] %vm2059, %v1993
    %2082 = vst.msk [vmem:[#allocation2 + $0x98] sm:$0xff] %vm2059, %v1994
    %2083 = vst.msk [vmem:[#allocation2 + $0xa0] sm:$0xff] %vm2059, %v1995
    %2084 = vst.msk [vmem:[#allocation2 + $0xa8] sm:$0xff] %vm2059, %v1996
    %2085 = vst.msk [vmem:[#allocation2 + $0xb0] sm:$0xff] %vm2059, %v1997
    %2086 = vst.msk [vmem:[#allocation2 + $0xb8] sm:$0xff] %vm2059, %v1998
    %2087 = vst.msk [vmem:[#allocation2 + $0xc0] sm:$0xff] %vm2059, %v1999
    %2088 = vst.msk [vmem:[#allocation2 + $0xc8] sm:$0xff] %vm2059, %v2000
    %2089 = vst.msk [vmem:[#allocation2 + $0xd0] sm:$0xff] %vm2059, %v2001
    %2090 = vst.msk [vmem:[#allocation2 + $0xd8] sm:$0xff] %vm2059, %v2002
    %2091 = vst.msk [vmem:[#allocation2 + $0xe0] sm:$0xff] %vm2059, %v2003
    %2092 = vst.msk [vmem:[#allocation2 + $0xe8] sm:$0xff] %vm2059, %v2004
    %2093 = vst.msk [vmem:[#allocation2 + $0xf0] sm:$0xff] %vm2059, %v2005
    %2094 = vst.msk [vmem:[#allocation2 + $0xf8] sm:$0xff] %vm2059, %v2006
    %2095 = vst.msk [vmem:[#allocation2 + $0x100] sm:$0xff] %vm2059, %v2007
    %2096 = vst.msk [vmem:[#allocation2 + $0x108] sm:$0xff] %vm2059, %v2008
    %2097 = vst.msk [vmem:[#allocation2 + $0x110] sm:$0xff] %vm2059, %v2009
    %2098 = vst.msk [vmem:[#allocation2 + $0x118] sm:$0xff] %vm2059, %v2010
    %2099 = vst.msk [vmem:[#allocation2 + $0x120] sm:$0xff] %vm2059, %v2011
    %2100 = vst.msk [vmem:[#allocation2 + $0x128] sm:$0xff] %vm2059, %v2012
    %2101 = vst.msk [vmem:[#allocation2 + $0x130] sm:$0xff] %vm2059, %v2013
    %2102 = vst.msk [vmem:[#allocation2 + $0x138] sm:$0xff] %vm2059, %v2014
    %2103 = vst.msk [vmem:[#allocation2 + $0x140] sm:$0xff] %vm2059, %v2015
    %2104 = vst.msk [vmem:[#allocation2 + $0x148] sm:$0xff] %vm2059, %v2016
    %2105 = vst.msk [vmem:[#allocation2 + $0x150] sm:$0xff] %vm2059, %v2017
    %2106 = vst.msk [vmem:[#allocation2 + $0x158] sm:$0xff] %vm2059, %v2018
    %2107 = vst.msk [vmem:[#allocation2 + $0x160] sm:$0xff] %vm2059, %v2019
    %2108 = vst.msk [vmem:[#allocation2 + $0x168] sm:$0xff] %vm2059, %v2020
    %2109 = vst.msk [vmem:[#allocation2 + $0x170] sm:$0xff] %vm2059, %v2021
    %2110 = vst.msk [vmem:[#allocation2 + $0x178] sm:$0xff] %vm2059, %v2022
    %2111 = vst.msk [vmem:[#allocation2 + $0x180] sm:$0xff] %vm2059, %v2023
    %2112 = vst.msk [vmem:[#allocation2 + $0x188] sm:$0xff] %vm2059, %v2024
    %2113 = vst.msk [vmem:[#allocation2 + $0x190] sm:$0xff] %vm2059, %v2025
    %2114 = vst.msk [vmem:[#allocation2 + $0x198] sm:$0xff] %vm2059, %v2026
    %2115 = vst.msk [vmem:[#allocation2 + $0x1a0] sm:$0xff] %vm2059, %v2027
    %2116 = vst.msk [vmem:[#allocation2 + $0x1a8] sm:$0xff] %vm2059, %v2028
    %2117 = vst.msk [vmem:[#allocation2 + $0x1b0] sm:$0xff] %vm2059, %v2029
    %2118 = vst.msk [vmem:[#allocation2 + $0x1b8] sm:$0xff] %vm2059, %v2030
    %2119 = vst.msk [vmem:[#allocation2 + $0x1c0] sm:$0xff] %vm2059, %v2031
    %2120 = vst.msk [vmem:[#allocation2 + $0x1c8] sm:$0xff] %vm2059, %v2032
    %2121 = vst.msk [vmem:[#allocation2 + $0x1d0] sm:$0xff] %vm2059, %v2033
    %2122 = vst.msk [vmem:[#allocation2 + $0x1d8] sm:$0xff] %vm2059, %v2034
    %2123 = vst.msk [vmem:[#allocation2 + $0x1e0] sm:$0xff] %vm2059, %v2035
    %2124 = vst.msk [vmem:[#allocation2 + $0x1e8] sm:$0xff] %vm2059, %v2036
    %2125 = vst.msk [vmem:[#allocation2 + $0x1f0] sm:$0xff] %vm2059, %v2037
    %2126 = vst.msk [vmem:[#allocation2 + $0x1f8] sm:$0xff] %vm2059, %v2038
    %2127 = vst.msk [vmem:[#allocation2 + $0x200] sm:$0xff] %vm2059, %v2039
    %2128 = vst.msk [vmem:[#allocation2 + $0x208] sm:$0xff] %vm2059, %v2040
    %2129 = vst.msk [vmem:[#allocation2 + $0x210] sm:$0xff] %vm2059, %v2041
    %2130 = vst.msk [vmem:[#allocation2 + $0x218] sm:$0xff] %vm2059, %v2042
    %2131 = vst.msk [vmem:[#allocation2 + $0x220] sm:$0xff] %vm2059, %v2043
    %2132 = vst.msk [vmem:[#allocation2 + $0x228] sm:$0xff] %vm2059, %v2044
    %2133 = vst.msk [vmem:[#allocation2 + $0x230] sm:$0xff] %vm2059, %v2045
    %2134 = vst.msk [vmem:[#allocation2 + $0x238] sm:$0xff] %vm2059, %v2046
    %2135 = vst.msk [vmem:[#allocation2 + $0x240] sm:$0xff] %vm2059, %v2047
    %2136 = vst.msk [vmem:[#allocation2 + $0x248] sm:$0xff] %vm2059, %v2048
    %2137 = vst.msk [vmem:[#allocation2 + $0x250] sm:$0xff] %vm2059, %v2049
    %2138 = vst.msk [vmem:[#allocation2 + $0x258] sm:$0xff] %vm2059, %v2050
    %2139 = vst.msk [vmem:[#allocation2 + $0x260] sm:$0xff] %vm2059, %v2051
    %2140 = vst.msk [vmem:[#allocation2 + $0x268] sm:$0xff] %vm2059, %v2052
    %2141 = vst.msk [vmem:[#allocation2 + $0x270] sm:$0xff] %vm2059, %v2053
    %2142 = vst.msk [vmem:[#allocation2 + $0x278] sm:$0xff] %vm2059, %v2054
    %2143 = vst.msk [vmem:[#allocation2 + $0x280] sm:$0xff] %vm2059, %v2055
    %2144 = vst.msk [vmem:[#allocation2 + $0x288] sm:$0xff] %vm2059, %v2056
    %2145 = vst.msk [vmem:[#allocation2 + $0x290] sm:$0xff] %vm2059, %v2057
    %2146 = vst.msk [vmem:[#allocation2 + $0x298] sm:$0xff] %vm2059, %v2058
    %v2147 = vld [vmem:[#allocation2 + $0x5] sm:$0xff]
    %v2148 = vld [vmem:[#allocation2 + $0xd] sm:$0xff]
    %v2149 = vld [vmem:[#allocation2 + $0x15] sm:$0xff]
    %v2150 = vld [vmem:[#allocation2 + $0x1d] sm:$0xff]
    %v2151 = vld [vmem:[#allocation2 + $0x25] sm:$0xff]
    %v2152 = vld [vmem:[#allocation2 + $0x2d] sm:$0xff]
    %v2153 = vld [vmem:[#allocation2 + $0x35] sm:$0xff]
    %v2154 = vld [vmem:[#allocation2 + $0x3d] sm:$0xff]
    %v2155 = vld [vmem:[#allocation2 + $0x45] sm:$0xff]
    %v2156 = vld [vmem:[#allocation2 + $0x4d] sm:$0xff]
    %v2157 = vld [vmem:[#allocation2 + $0x55] sm:$0xff]
    %v2158 = vld [vmem:[#allocation2 + $0x5d] sm:$0xff]
    %v2159 = vld [vmem:[#allocation2 + $0x65] sm:$0xff]
    %v2160 = vld [vmem:[#allocation2 + $0x6d] sm:$0xff]
    %v2161 = vld [vmem:[#allocation2 + $0x75] sm:$0xff]
    %v2162 = vld [vmem:[#allocation2 + $0x7d] sm:$0xff]
    %v2163 = vld [vmem:[#allocation2 + $0x85] sm:$0xff]
    %v2164 = vld [vmem:[#allocation2 + $0x8d] sm:$0xff]
    %v2165 = vld [vmem:[#allocation2 + $0x95] sm:$0xff]
    %v2166 = vld [vmem:[#allocation2 + $0x9d] sm:$0xff]
    %v2167 = vld [vmem:[#allocation2 + $0xa5] sm:$0xff]
    %v2168 = vld [vmem:[#allocation2 + $0xad] sm:$0xff]
    %v2169 = vld [vmem:[#allocation2 + $0xb5] sm:$0xff]
    %v2170 = vld [vmem:[#allocation2 + $0xbd] sm:$0xff]
    %v2171 = vld [vmem:[#allocation2 + $0xc5] sm:$0xff]
    %v2172 = vld [vmem:[#allocation2 + $0xcd] sm:$0xff]
    %v2173 = vld [vmem:[#allocation2 + $0xd5] sm:$0xff]
    %v2174 = vld [vmem:[#allocation2 + $0xdd] sm:$0xff]
    %v2175 = vld [vmem:[#allocation2 + $0xe5] sm:$0xff]
    %v2176 = vld [vmem:[#allocation2 + $0xed] sm:$0xff]
    %v2177 = vld [vmem:[#allocation2 + $0xf5] sm:$0xff]
    %v2178 = vld [vmem:[#allocation2 + $0xfd] sm:$0xff]
    %v2179 = vld [vmem:[#allocation2 + $0x105] sm:$0xff]
    %v2180 = vld [vmem:[#allocation2 + $0x10d] sm:$0xff]
    %v2181 = vld [vmem:[#allocation2 + $0x115] sm:$0xff]
    %v2182 = vld [vmem:[#allocation2 + $0x11d] sm:$0xff]
    %v2183 = vld [vmem:[#allocation2 + $0x125] sm:$0xff]
    %v2184 = vld [vmem:[#allocation2 + $0x12d] sm:$0xff]
    %v2185 = vld [vmem:[#allocation2 + $0x135] sm:$0xff]
    %v2186 = vld [vmem:[#allocation2 + $0x13d] sm:$0xff]
    %v2187 = vld [vmem:[#allocation2 + $0x145] sm:$0xff]
    %v2188 = vld [vmem:[#allocation2 + $0x14d] sm:$0xff]
    %v2189 = vld [vmem:[#allocation2 + $0x155] sm:$0xff]
    %v2190 = vld [vmem:[#allocation2 + $0x15d] sm:$0xff]
    %v2191 = vld [vmem:[#allocation2 + $0x165] sm:$0xff]
    %v2192 = vld [vmem:[#allocation2 + $0x16d] sm:$0xff]
    %v2193 = vld [vmem:[#allocation2 + $0x175] sm:$0xff]
    %v2194 = vld [vmem:[#allocation2 + $0x17d] sm:$0xff]
    %v2195 = vld [vmem:[#allocation2 + $0x185] sm:$0xff]
    %v2196 = vld [vmem:[#allocation2 + $0x18d] sm:$0xff]
    %v2197 = vld [vmem:[#allocation2 + $0x195] sm:$0xff]
    %v2198 = vld [vmem:[#allocation2 + $0x19d] sm:$0xff]
    %v2199 = vld [vmem:[#allocation2 + $0x1a5] sm:$0xff]
    %v2200 = vld [vmem:[#allocation2 + $0x1ad] sm:$0xff]
    %v2201 = vld [vmem:[#allocation2 + $0x1b5] sm:$0xff]
    %v2202 = vld [vmem:[#allocation2 + $0x1bd] sm:$0xff]
    %v2203 = vld [vmem:[#allocation2 + $0x1c5] sm:$0xff]
    %v2204 = vld [vmem:[#allocation2 + $0x1cd] sm:$0xff]
    %v2205 = vld [vmem:[#allocation2 + $0x1d5] sm:$0xff]
    %v2206 = vld [vmem:[#allocation2 + $0x1dd] sm:$0xff]
    %v2207 = vld [vmem:[#allocation2 + $0x1e5] sm:$0xff]
    %v2208 = vld [vmem:[#allocation2 + $0x1ed] sm:$0xff]
    %v2209 = vld [vmem:[#allocation2 + $0x1f5] sm:$0xff]
    %v2210 = vld [vmem:[#allocation2 + $0x1fd] sm:$0xff]
    %v2211 = vld [vmem:[#allocation2 + $0x205] sm:$0xff]
    %v2212 = vld [vmem:[#allocation2 + $0x20d] sm:$0xff]
    %v2213 = vld [vmem:[#allocation2 + $0x215] sm:$0xff]
    %v2214 = vld [vmem:[#allocation2 + $0x21d] sm:$0xff]
    %v2215 = vld [vmem:[#allocation2 + $0x225] sm:$0xff]
    %v2216 = vld [vmem:[#allocation2 + $0x22d] sm:$0xff]
    %v2217 = vld [vmem:[#allocation2 + $0x235] sm:$0xff]
    %v2218 = vld [vmem:[#allocation2 + $0x23d] sm:$0xff]
    %v2219 = vld [vmem:[#allocation2 + $0x245] sm:$0xff]
    %v2220 = vld [vmem:[#allocation2 + $0x24d] sm:$0xff]
    %v2221 = vld [vmem:[#allocation2 + $0x255] sm:$0xff]
    %v2222 = vld [vmem:[#allocation2 + $0x25d] sm:$0xff]
    %v2223 = vld [vmem:[#allocation2 + $0x265] sm:$0xff]
    %v2224 = vld [vmem:[#allocation2 + $0x26d] sm:$0xff]
    %v2225 = vld [vmem:[#allocation2 + $0x275] sm:$0xff]
    %v2226 = vld [vmem:[#allocation2 + $0x27d] sm:$0xff]
    %v2227 = vld [vmem:[#allocation2 + $0x285] sm:$0xff]
    %v2228 = vld [vmem:[%s3] sm:$0xff]
    %v2229 = vld [vmem:[%s3 + $0x8] sm:$0xff]
    %v2230 = vld [vmem:[%s3 + $0x10] sm:$0xff]
    %v2231 = vld [vmem:[%s3 + $0x18] sm:$0xff]
    %v2232 = vld [vmem:[%s3 + $0x20] sm:$0xff]
    %v2233 = vld [vmem:[%s3 + $0x28] sm:$0xff]
    %v2234 = vld [vmem:[%s3 + $0x30] sm:$0xff]
    %v2235 = vld [vmem:[%s3 + $0x38] sm:$0xff]
    %v2236 = vld [vmem:[%s3 + $0x40] sm:$0xff]
    %v2237 = vld [vmem:[%s3 + $0x48] sm:$0xff]
    %v2238 = vld [vmem:[%s3 + $0x50] sm:$0xff]
    %v2239 = vld [vmem:[%s3 + $0x58] sm:$0xff]
    %v2240 = vld [vmem:[%s3 + $0x60] sm:$0xff]
    %v2241 = vld [vmem:[%s3 + $0x68] sm:$0xff]
    %v2242 = vld [vmem:[%s3 + $0x70] sm:$0xff]
    %v2243 = vld [vmem:[%s3 + $0x78] sm:$0xff]
    %v2244 = vld [vmem:[%s3 + $0x80] sm:$0xff]
    %v2245 = vld [vmem:[%s3 + $0x88] sm:$0xff]
    %v2246 = vld [vmem:[%s3 + $0x90] sm:$0xff]
    %v2247 = vld [vmem:[%s3 + $0x98] sm:$0xff]
    %v2248 = vld [vmem:[%s3 + $0xa0] sm:$0xff]
    %v2249 = vld [vmem:[%s3 + $0xa8] sm:$0xff]
    %v2250 = vld [vmem:[%s3 + $0xb0] sm:$0xff]
    %v2251 = vld [vmem:[%s3 + $0xb8] sm:$0xff]
    %v2252 = vld [vmem:[%s3 + $0xc0] sm:$0xff]
    %v2253 = vld [vmem:[%s3 + $0xc8] sm:$0xff]
    %v2254 = vld [vmem:[%s3 + $0xd0] sm:$0xff]
    %v2255 = vld [vmem:[%s3 + $0xd8] sm:$0xff]
    %v2256 = vld [vmem:[%s3 + $0xe0] sm:$0xff]
    %v2257 = vld [vmem:[%s3 + $0xe8] sm:$0xff]
    %v2258 = vld [vmem:[%s3 + $0xf0] sm:$0xff]
    %v2259 = vld [vmem:[%s3 + $0xf8] sm:$0xff]
    %v2260 = vld [vmem:[%s3 + $0x100] sm:$0xff]
    %v2261 = vld [vmem:[%s3 + $0x108] sm:$0xff]
    %v2262 = vld [vmem:[%s3 + $0x110] sm:$0xff]
    %v2263 = vld [vmem:[%s3 + $0x118] sm:$0xff]
    %v2264 = vld [vmem:[%s3 + $0x120] sm:$0xff]
    %v2265 = vld [vmem:[%s3 + $0x128] sm:$0xff]
    %v2266 = vld [vmem:[%s3 + $0x130] sm:$0xff]
    %v2267 = vld [vmem:[%s3 + $0x138] sm:$0xff]
    %v2268 = vld [vmem:[%s3 + $0x140] sm:$0xff]
    %v2269 = vld [vmem:[%s3 + $0x148] sm:$0xff]
    %v2270 = vld [vmem:[%s3 + $0x150] sm:$0xff]
    %v2271 = vld [vmem:[%s3 + $0x158] sm:$0xff]
    %v2272 = vld [vmem:[%s3 + $0x160] sm:$0xff]
    %v2273 = vld [vmem:[%s3 + $0x168] sm:$0xff]
    %v2274 = vld [vmem:[%s3 + $0x170] sm:$0xff]
    %v2275 = vld [vmem:[%s3 + $0x178] sm:$0xff]
    %v2276 = vld [vmem:[%s3 + $0x180] sm:$0xff]
    %v2277 = vld [vmem:[%s3 + $0x188] sm:$0xff]
    %v2278 = vld [vmem:[%s3 + $0x190] sm:$0xff]
    %v2279 = vld [vmem:[%s3 + $0x198] sm:$0xff]
    %v2280 = vld [vmem:[%s3 + $0x1a0] sm:$0xff]
    %v2281 = vld [vmem:[%s3 + $0x1a8] sm:$0xff]
    %v2282 = vld [vmem:[%s3 + $0x1b0] sm:$0xff]
    %v2283 = vld [vmem:[%s3 + $0x1b8] sm:$0xff]
    %v2284 = vld [vmem:[%s3 + $0x1c0] sm:$0xff]
    %v2285 = vld [vmem:[%s3 + $0x1c8] sm:$0xff]
    %v2286 = vld [vmem:[%s3 + $0x1d0] sm:$0xff]
    %v2287 = vld [vmem:[%s3 + $0x1d8] sm:$0xff]
    %v2288 = vld [vmem:[%s3 + $0x1e0] sm:$0xff]
    %v2289 = vld [vmem:[%s3 + $0x1e8] sm:$0xff]
    %v2290 = vld [vmem:[%s3 + $0x1f0] sm:$0xff]
    %v2291 = vld [vmem:[%s3 + $0x1f8] sm:$0xff]
    %v2292 = vld [vmem:[%s3 + $0x200] sm:$0xff]
    %v2293 = vld [vmem:[%s3 + $0x208] sm:$0xff]
    %v2294 = vld [vmem:[%s3 + $0x210] sm:$0xff]
    %v2295 = vld [vmem:[%s3 + $0x218] sm:$0xff]
    %v2296 = vld [vmem:[%s3 + $0x220] sm:$0xff]
    %v2297 = vld [vmem:[%s3 + $0x228] sm:$0xff]
    %v2298 = vld [vmem:[%s3 + $0x230] sm:$0xff]
    %v2299 = vld [vmem:[%s3 + $0x238] sm:$0xff]
    %v2300 = vld [vmem:[%s3 + $0x240] sm:$0xff]
    %v2301 = vld [vmem:[%s3 + $0x248] sm:$0xff]
    %v2302 = vld [vmem:[%s3 + $0x250] sm:$0xff]
    %v2303 = vld [vmem:[%s3 + $0x258] sm:$0xff]
    %v2304 = vld [vmem:[%s3 + $0x260] sm:$0xff]
    %v2305 = vld [vmem:[%s3 + $0x268] sm:$0xff]
    %v2306 = vld [vmem:[%s3 + $0x270] sm:$0xff]
    %v2307 = vld [vmem:[%s3 + $0x278] sm:$0xff]
    %v2308 = vld [vmem:[%s3 + $0x280] sm:$0xff]
    %2310 = vset.pattern.permute.xlu0 0
    %2311 = vperm.xlu0 %2310, %v2228
    %v2312 = vpop.permute.xlu0 %2311
    %2315 = vset.pattern.permute.xlu0 0
    %2316 = vperm.xlu0 %2315, %v2229
    %v2317 = vpop.permute.xlu0 %2316
    %2320 = vset.pattern.permute.xlu0 0
    %2321 = vperm.xlu0 %2320, %v2230
    %v2322 = vpop.permute.xlu0 %2321
    %2325 = vset.pattern.permute.xlu0 0
    %2326 = vperm.xlu0 %2325, %v2231
    %v2327 = vpop.permute.xlu0 %2326
    %2330 = vset.pattern.permute.xlu0 0
    %2331 = vperm.xlu0 %2330, %v2232
    %v2332 = vpop.permute.xlu0 %2331
    %2335 = vset.pattern.permute.xlu0 0
    %2336 = vperm.xlu0 %2335, %v2233
    %v2337 = vpop.permute.xlu0 %2336
    %2340 = vset.pattern.permute.xlu0 0
    %2341 = vperm.xlu0 %2340, %v2234
    %v2342 = vpop.permute.xlu0 %2341
    %2345 = vset.pattern.permute.xlu0 0
    %2346 = vperm.xlu0 %2345, %v2235
    %v2347 = vpop.permute.xlu0 %2346
    %2350 = vset.pattern.permute.xlu0 0
    %2351 = vperm.xlu0 %2350, %v2236
    %v2352 = vpop.permute.xlu0 %2351
    %2355 = vset.pattern.permute.xlu0 0
    %2356 = vperm.xlu0 %2355, %v2237
    %v2357 = vpop.permute.xlu0 %2356
    %2360 = vset.pattern.permute.xlu0 0
    %2361 = vperm.xlu0 %2360, %v2238
    %v2362 = vpop.permute.xlu0 %2361
    %2365 = vset.pattern.permute.xlu0 0
    %2366 = vperm.xlu0 %2365, %v2239
    %v2367 = vpop.permute.xlu0 %2366
    %2370 = vset.pattern.permute.xlu0 0
    %2371 = vperm.xlu0 %2370, %v2240
    %v2372 = vpop.permute.xlu0 %2371
    %2375 = vset.pattern.permute.xlu0 0
    %2376 = vperm.xlu0 %2375, %v2241
    %v2377 = vpop.permute.xlu0 %2376
    %2380 = vset.pattern.permute.xlu0 0
    %2381 = vperm.xlu0 %2380, %v2242
    %v2382 = vpop.permute.xlu0 %2381
    %2385 = vset.pattern.permute.xlu0 0
    %2386 = vperm.xlu0 %2385, %v2243
    %v2387 = vpop.permute.xlu0 %2386
    %2390 = vset.pattern.permute.xlu0 0
    %2391 = vperm.xlu0 %2390, %v2244
    %v2392 = vpop.permute.xlu0 %2391
    %2395 = vset.pattern.permute.xlu0 0
    %2396 = vperm.xlu0 %2395, %v2245
    %v2397 = vpop.permute.xlu0 %2396
    %2400 = vset.pattern.permute.xlu0 0
    %2401 = vperm.xlu0 %2400, %v2246
    %v2402 = vpop.permute.xlu0 %2401
    %2405 = vset.pattern.permute.xlu0 0
    %2406 = vperm.xlu0 %2405, %v2247
    %v2407 = vpop.permute.xlu0 %2406
    %2410 = vset.pattern.permute.xlu0 0
    %2411 = vperm.xlu0 %2410, %v2248
    %v2412 = vpop.permute.xlu0 %2411
    %2415 = vset.pattern.permute.xlu0 0
    %2416 = vperm.xlu0 %2415, %v2249
    %v2417 = vpop.permute.xlu0 %2416
    %2420 = vset.pattern.permute.xlu0 0
    %2421 = vperm.xlu0 %2420, %v2250
    %v2422 = vpop.permute.xlu0 %2421
    %2425 = vset.pattern.permute.xlu0 0
    %2426 = vperm.xlu0 %2425, %v2251
    %v2427 = vpop.permute.xlu0 %2426
    %2430 = vset.pattern.permute.xlu0 0
    %2431 = vperm.xlu0 %2430, %v2252
    %v2432 = vpop.permute.xlu0 %2431
    %2435 = vset.pattern.permute.xlu0 0
    %2436 = vperm.xlu0 %2435, %v2253
    %v2437 = vpop.permute.xlu0 %2436
    %2440 = vset.pattern.permute.xlu0 0
    %2441 = vperm.xlu0 %2440, %v2254
    %v2442 = vpop.permute.xlu0 %2441
    %2445 = vset.pattern.permute.xlu0 0
    %2446 = vperm.xlu0 %2445, %v2255
    %v2447 = vpop.permute.xlu0 %2446
    %2450 = vset.pattern.permute.xlu0 0
    %2451 = vperm.xlu0 %2450, %v2256
    %v2452 = vpop.permute.xlu0 %2451
    %2455 = vset.pattern.permute.xlu0 0
    %2456 = vperm.xlu0 %2455, %v2257
    %v2457 = vpop.permute.xlu0 %2456
    %2460 = vset.pattern.permute.xlu0 0
    %2461 = vperm.xlu0 %2460, %v2258
    %v2462 = vpop.permute.xlu0 %2461
    %2465 = vset.pattern.permute.xlu0 0
    %2466 = vperm.xlu0 %2465, %v2259
    %v2467 = vpop.permute.xlu0 %2466
    %2470 = vset.pattern.permute.xlu0 0
    %2471 = vperm.xlu0 %2470, %v2260
    %v2472 = vpop.permute.xlu0 %2471
    %2475 = vset.pattern.permute.xlu0 0
    %2476 = vperm.xlu0 %2475, %v2261
    %v2477 = vpop.permute.xlu0 %2476
    %2480 = vset.pattern.permute.xlu0 0
    %2481 = vperm.xlu0 %2480, %v2262
    %v2482 = vpop.permute.xlu0 %2481
    %2485 = vset.pattern.permute.xlu0 0
    %2486 = vperm.xlu0 %2485, %v2263
    %v2487 = vpop.permute.xlu0 %2486
    %2490 = vset.pattern.permute.xlu0 0
    %2491 = vperm.xlu0 %2490, %v2264
    %v2492 = vpop.permute.xlu0 %2491
    %2495 = vset.pattern.permute.xlu0 0
    %2496 = vperm.xlu0 %2495, %v2265
    %v2497 = vpop.permute.xlu0 %2496
    %2500 = vset.pattern.permute.xlu0 0
    %2501 = vperm.xlu0 %2500, %v2266
    %v2502 = vpop.permute.xlu0 %2501
    %2505 = vset.pattern.permute.xlu0 0
    %2506 = vperm.xlu0 %2505, %v2267
    %v2507 = vpop.permute.xlu0 %2506
    %2510 = vset.pattern.permute.xlu0 0
    %2511 = vperm.xlu0 %2510, %v2268
    %v2512 = vpop.permute.xlu0 %2511
    %2515 = vset.pattern.permute.xlu0 0
    %2516 = vperm.xlu0 %2515, %v2269
    %v2517 = vpop.permute.xlu0 %2516
    %2520 = vset.pattern.permute.xlu0 0
    %2521 = vperm.xlu0 %2520, %v2270
    %v2522 = vpop.permute.xlu0 %2521
    %2525 = vset.pattern.permute.xlu0 0
    %2526 = vperm.xlu0 %2525, %v2271
    %v2527 = vpop.permute.xlu0 %2526
    %2530 = vset.pattern.permute.xlu0 0
    %2531 = vperm.xlu0 %2530, %v2272
    %v2532 = vpop.permute.xlu0 %2531
    %2535 = vset.pattern.permute.xlu0 0
    %2536 = vperm.xlu0 %2535, %v2273
    %v2537 = vpop.permute.xlu0 %2536
    %2540 = vset.pattern.permute.xlu0 0
    %2541 = vperm.xlu0 %2540, %v2274
    %v2542 = vpop.permute.xlu0 %2541
    %2545 = vset.pattern.permute.xlu0 0
    %2546 = vperm.xlu0 %2545, %v2275
    %v2547 = vpop.permute.xlu0 %2546
    %2550 = vset.pattern.permute.xlu0 0
    %2551 = vperm.xlu0 %2550, %v2276
    %v2552 = vpop.permute.xlu0 %2551
    %2555 = vset.pattern.permute.xlu0 0
    %2556 = vperm.xlu0 %2555, %v2277
    %v2557 = vpop.permute.xlu0 %2556
    %2560 = vset.pattern.permute.xlu0 0
    %2561 = vperm.xlu0 %2560, %v2278
    %v2562 = vpop.permute.xlu0 %2561
    %2565 = vset.pattern.permute.xlu0 0
    %2566 = vperm.xlu0 %2565, %v2279
    %v2567 = vpop.permute.xlu0 %2566
    %2570 = vset.pattern.permute.xlu0 0
    %2571 = vperm.xlu0 %2570, %v2280
    %v2572 = vpop.permute.xlu0 %2571
    %2575 = vset.pattern.permute.xlu0 0
    %2576 = vperm.xlu0 %2575, %v2281
    %v2577 = vpop.permute.xlu0 %2576
    %2580 = vset.pattern.permute.xlu0 0
    %2581 = vperm.xlu0 %2580, %v2282
    %v2582 = vpop.permute.xlu0 %2581
    %2585 = vset.pattern.permute.xlu0 0
    %2586 = vperm.xlu0 %2585, %v2283
    %v2587 = vpop.permute.xlu0 %2586
    %2590 = vset.pattern.permute.xlu0 0
    %2591 = vperm.xlu0 %2590, %v2284
    %v2592 = vpop.permute.xlu0 %2591
    %2595 = vset.pattern.permute.xlu0 0
    %2596 = vperm.xlu0 %2595, %v2285
    %v2597 = vpop.permute.xlu0 %2596
    %2600 = vset.pattern.permute.xlu0 0
    %2601 = vperm.xlu0 %2600, %v2286
    %v2602 = vpop.permute.xlu0 %2601
    %2605 = vset.pattern.permute.xlu0 0
    %2606 = vperm.xlu0 %2605, %v2287
    %v2607 = vpop.permute.xlu0 %2606
    %2610 = vset.pattern.permute.xlu0 0
    %2611 = vperm.xlu0 %2610, %v2288
    %v2612 = vpop.permute.xlu0 %2611
    %2615 = vset.pattern.permute.xlu0 0
    %2616 = vperm.xlu0 %2615, %v2289
    %v2617 = vpop.permute.xlu0 %2616
    %2620 = vset.pattern.permute.xlu0 0
    %2621 = vperm.xlu0 %2620, %v2290
    %v2622 = vpop.permute.xlu0 %2621
    %2625 = vset.pattern.permute.xlu0 0
    %2626 = vperm.xlu0 %2625, %v2291
    %v2627 = vpop.permute.xlu0 %2626
    %2630 = vset.pattern.permute.xlu0 0
    %2631 = vperm.xlu0 %2630, %v2292
    %v2632 = vpop.permute.xlu0 %2631
    %2635 = vset.pattern.permute.xlu0 0
    %2636 = vperm.xlu0 %2635, %v2293
    %v2637 = vpop.permute.xlu0 %2636
    %2640 = vset.pattern.permute.xlu0 0
    %2641 = vperm.xlu0 %2640, %v2294
    %v2642 = vpop.permute.xlu0 %2641
    %2645 = vset.pattern.permute.xlu0 0
    %2646 = vperm.xlu0 %2645, %v2295
    %v2647 = vpop.permute.xlu0 %2646
    %2650 = vset.pattern.permute.xlu0 0
    %2651 = vperm.xlu0 %2650, %v2296
    %v2652 = vpop.permute.xlu0 %2651
    %2655 = vset.pattern.permute.xlu0 0
    %2656 = vperm.xlu0 %2655, %v2297
    %v2657 = vpop.permute.xlu0 %2656
    %2660 = vset.pattern.permute.xlu0 0
    %2661 = vperm.xlu0 %2660, %v2298
    %v2662 = vpop.permute.xlu0 %2661
    %2665 = vset.pattern.permute.xlu0 0
    %2666 = vperm.xlu0 %2665, %v2299
    %v2667 = vpop.permute.xlu0 %2666
    %2670 = vset.pattern.permute.xlu0 0
    %2671 = vperm.xlu0 %2670, %v2300
    %v2672 = vpop.permute.xlu0 %2671
    %2675 = vset.pattern.permute.xlu0 0
    %2676 = vperm.xlu0 %2675, %v2301
    %v2677 = vpop.permute.xlu0 %2676
    %2680 = vset.pattern.permute.xlu0 0
    %2681 = vperm.xlu0 %2680, %v2302
    %v2682 = vpop.permute.xlu0 %2681
    %2685 = vset.pattern.permute.xlu0 0
    %2686 = vperm.xlu0 %2685, %v2303
    %v2687 = vpop.permute.xlu0 %2686
    %2690 = vset.pattern.permute.xlu0 0
    %2691 = vperm.xlu0 %2690, %v2304
    %v2692 = vpop.permute.xlu0 %2691
    %2695 = vset.pattern.permute.xlu0 0
    %2696 = vperm.xlu0 %2695, %v2305
    %v2697 = vpop.permute.xlu0 %2696
    %2700 = vset.pattern.permute.xlu0 0
    %2701 = vperm.xlu0 %2700, %v2306
    %v2702 = vpop.permute.xlu0 %2701
    %2705 = vset.pattern.permute.xlu0 0
    %2706 = vperm.xlu0 %2705, %v2307
    %v2707 = vpop.permute.xlu0 %2706
    %2710 = vset.pattern.permute.xlu0 0
    %2711 = vperm.xlu0 %2710, %v2308
    %v2712 = vpop.permute.xlu0 %2711
    %v2714 = vmul.f32 %v2147, %v2312
    %v2715 = vmul.f32 %v2148, %v2317
    %v2716 = vmul.f32 %v2149, %v2322
    %v2717 = vmul.f32 %v2150, %v2327
    %v2718 = vmul.f32 %v2151, %v2332
    %v2719 = vmul.f32 %v2152, %v2337
    %v2720 = vmul.f32 %v2153, %v2342
    %v2721 = vmul.f32 %v2154, %v2347
    %v2722 = vmul.f32 %v2155, %v2352
    %v2723 = vmul.f32 %v2156, %v2357
    %v2724 = vmul.f32 %v2157, %v2362
    %v2725 = vmul.f32 %v2158, %v2367
    %v2726 = vmul.f32 %v2159, %v2372
    %v2727 = vmul.f32 %v2160, %v2377
    %v2728 = vmul.f32 %v2161, %v2382
    %v2729 = vmul.f32 %v2162, %v2387
    %v2730 = vmul.f32 %v2163, %v2392
    %v2731 = vmul.f32 %v2164, %v2397
    %v2732 = vmul.f32 %v2165, %v2402
    %v2733 = vmul.f32 %v2166, %v2407
    %v2734 = vmul.f32 %v2167, %v2412
    %v2735 = vmul.f32 %v2168, %v2417
    %v2736 = vmul.f32 %v2169, %v2422
    %v2737 = vmul.f32 %v2170, %v2427
    %v2738 = vmul.f32 %v2171, %v2432
    %v2739 = vmul.f32 %v2172, %v2437
    %v2740 = vmul.f32 %v2173, %v2442
    %v2741 = vmul.f32 %v2174, %v2447
    %v2742 = vmul.f32 %v2175, %v2452
    %v2743 = vmul.f32 %v2176, %v2457
    %v2744 = vmul.f32 %v2177, %v2462
    %v2745 = vmul.f32 %v2178, %v2467
    %v2746 = vmul.f32 %v2179, %v2472
    %v2747 = vmul.f32 %v2180, %v2477
    %v2748 = vmul.f32 %v2181, %v2482
    %v2749 = vmul.f32 %v2182, %v2487
    %v2750 = vmul.f32 %v2183, %v2492
    %v2751 = vmul.f32 %v2184, %v2497
    %v2752 = vmul.f32 %v2185, %v2502
    %v2753 = vmul.f32 %v2186, %v2507
    %v2754 = vmul.f32 %v2187, %v2512
    %v2755 = vmul.f32 %v2188, %v2517
    %v2756 = vmul.f32 %v2189, %v2522
    %v2757 = vmul.f32 %v2190, %v2527
    %v2758 = vmul.f32 %v2191, %v2532
    %v2759 = vmul.f32 %v2192, %v2537
    %v2760 = vmul.f32 %v2193, %v2542
    %v2761 = vmul.f32 %v2194, %v2547
    %v2762 = vmul.f32 %v2195, %v2552
    %v2763 = vmul.f32 %v2196, %v2557
    %v2764 = vmul.f32 %v2197, %v2562
    %v2765 = vmul.f32 %v2198, %v2567
    %v2766 = vmul.f32 %v2199, %v2572
    %v2767 = vmul.f32 %v2200, %v2577
    %v2768 = vmul.f32 %v2201, %v2582
    %v2769 = vmul.f32 %v2202, %v2587
    %v2770 = vmul.f32 %v2203, %v2592
    %v2771 = vmul.f32 %v2204, %v2597
    %v2772 = vmul.f32 %v2205, %v2602
    %v2773 = vmul.f32 %v2206, %v2607
    %v2774 = vmul.f32 %v2207, %v2612
    %v2775 = vmul.f32 %v2208, %v2617
    %v2776 = vmul.f32 %v2209, %v2622
    %v2777 = vmul.f32 %v2210, %v2627
    %v2778 = vmul.f32 %v2211, %v2632
    %v2779 = vmul.f32 %v2212, %v2637
    %v2780 = vmul.f32 %v2213, %v2642
    %v2781 = vmul.f32 %v2214, %v2647
    %v2782 = vmul.f32 %v2215, %v2652
    %v2783 = vmul.f32 %v2216, %v2657
    %v2784 = vmul.f32 %v2217, %v2662
    %v2785 = vmul.f32 %v2218, %v2667
    %v2786 = vmul.f32 %v2219, %v2672
    %v2787 = vmul.f32 %v2220, %v2677
    %v2788 = vmul.f32 %v2221, %v2682
    %v2789 = vmul.f32 %v2222, %v2687
    %v2790 = vmul.f32 %v2223, %v2692
    %v2791 = vmul.f32 %v2224, %v2697
    %v2792 = vmul.f32 %v2225, %v2702
    %v2793 = vmul.f32 %v2226, %v2707
    %v2794 = vmul.f32 %v2227, %v2712
    %2795 = vst.msk [vmem:[#allocation3] sm:$0xff] %vm2059, %v2714
    %2796 = vst.msk [vmem:[#allocation3 + $0x18] sm:$0xff] %vm2059, %v2715
    %2797 = vst.msk [vmem:[#allocation3 + $0x30] sm:$0xff] %vm2059, %v2716
    %2798 = vst.msk [vmem:[#allocation3 + $0x48] sm:$0xff] %vm2059, %v2717
    %2799 = vst.msk [vmem:[#allocation3 + $0x60] sm:$0xff] %vm2059, %v2718
    %2800 = vst.msk [vmem:[#allocation3 + $0x78] sm:$0xff] %vm2059, %v2719
    %2801 = vst.msk [vmem:[#allocation3 + $0x90] sm:$0xff] %vm2059, %v2720
    %2802 = vst.msk [vmem:[#allocation3 + $0xa8] sm:$0xff] %vm2059, %v2721
    %2803 = vst.msk [vmem:[#allocation3 + $0xc0] sm:$0xff] %vm2059, %v2722
    %2804 = vst.msk [vmem:[#allocation3 + $0xd8] sm:$0xff] %vm2059, %v2723
    %2805 = vst.msk [vmem:[#allocation3 + $0xf0] sm:$0xff] %vm2059, %v2724
    %2806 = vst.msk [vmem:[#allocation3 + $0x108] sm:$0xff] %vm2059, %v2725
    %2807 = vst.msk [vmem:[#allocation3 + $0x120] sm:$0xff] %vm2059, %v2726
    %2808 = vst.msk [vmem:[#allocation3 + $0x138] sm:$0xff] %vm2059, %v2727
    %2809 = vst.msk [vmem:[#allocation3 + $0x150] sm:$0xff] %vm2059, %v2728
    %2810 = vst.msk [vmem:[#allocation3 + $0x168] sm:$0xff] %vm2059, %v2729
    %2811 = vst.msk [vmem:[#allocation3 + $0x180] sm:$0xff] %vm2059, %v2730
    %2812 = vst.msk [vmem:[#allocation3 + $0x198] sm:$0xff] %vm2059, %v2731
    %2813 = vst.msk [vmem:[#allocation3 + $0x1b0] sm:$0xff] %vm2059, %v2732
    %2814 = vst.msk [vmem:[#allocation3 + $0x1c8] sm:$0xff] %vm2059, %v2733
    %2815 = vst.msk [vmem:[#allocation3 + $0x1e0] sm:$0xff] %vm2059, %v2734
    %2816 = vst.msk [vmem:[#allocation3 + $0x1f8] sm:$0xff] %vm2059, %v2735
    %2817 = vst.msk [vmem:[#allocation3 + $0x210] sm:$0xff] %vm2059, %v2736
    %2818 = vst.msk [vmem:[#allocation3 + $0x228] sm:$0xff] %vm2059, %v2737
    %2819 = vst.msk [vmem:[#allocation3 + $0x240] sm:$0xff] %vm2059, %v2738
    %2820 = vst.msk [vmem:[#allocation3 + $0x258] sm:$0xff] %vm2059, %v2739
    %2821 = vst.msk [vmem:[#allocation3 + $0x270] sm:$0xff] %vm2059, %v2740
    %2822 = vst.msk [vmem:[#allocation3 + $0x288] sm:$0xff] %vm2059, %v2741
    %2823 = vst.msk [vmem:[#allocation3 + $0x2a0] sm:$0xff] %vm2059, %v2742
    %2824 = vst.msk [vmem:[#allocation3 + $0x2b8] sm:$0xff] %vm2059, %v2743
    %2825 = vst.msk [vmem:[#allocation3 + $0x2d0] sm:$0xff] %vm2059, %v2744
    %2826 = vst.msk [vmem:[#allocation3 + $0x2e8] sm:$0xff] %vm2059, %v2745
    %2827 = vst.msk [vmem:[#allocation3 + $0x300] sm:$0xff] %vm2059, %v2746
    %2828 = vst.msk [vmem:[#allocation3 + $0x318] sm:$0xff] %vm2059, %v2747
    %2829 = vst.msk [vmem:[#allocation3 + $0x330] sm:$0xff] %vm2059, %v2748
    %2830 = vst.msk [vmem:[#allocation3 + $0x348] sm:$0xff] %vm2059, %v2749
    %2831 = vst.msk [vmem:[#allocation3 + $0x360] sm:$0xff] %vm2059, %v2750
    %2832 = vst.msk [vmem:[#allocation3 + $0x378] sm:$0xff] %vm2059, %v2751
    %2833 = vst.msk [vmem:[#allocation3 + $0x390] sm:$0xff] %vm2059, %v2752
    %2834 = vst.msk [vmem:[#allocation3 + $0x3a8] sm:$0xff] %vm2059, %v2753
    %2835 = vst.msk [vmem:[#allocation3 + $0x3c0] sm:$0xff] %vm2059, %v2754
    %2836 = vst.msk [vmem:[#allocation3 + $0x3d8] sm:$0xff] %vm2059, %v2755
    %2837 = vst.msk [vmem:[#allocation3 + $0x3f0] sm:$0xff] %vm2059, %v2756
    %2838 = vst.msk [vmem:[#allocation3 + $0x408] sm:$0xff] %vm2059, %v2757
    %2839 = vst.msk [vmem:[#allocation3 + $0x420] sm:$0xff] %vm2059, %v2758
    %2840 = vst.msk [vmem:[#allocation3 + $0x438] sm:$0xff] %vm2059, %v2759
    %2841 = vst.msk [vmem:[#allocation3 + $0x450] sm:$0xff] %vm2059, %v2760
    %2842 = vst.msk [vmem:[#allocation3 + $0x468] sm:$0xff] %vm2059, %v2761
    %2843 = vst.msk [vmem:[#allocation3 + $0x480] sm:$0xff] %vm2059, %v2762
    %2844 = vst.msk [vmem:[#allocation3 + $0x498] sm:$0xff] %vm2059, %v2763
    %2845 = vst.msk [vmem:[#allocation3 + $0x4b0] sm:$0xff] %vm2059, %v2764
    %2846 = vst.msk [vmem:[#allocation3 + $0x4c8] sm:$0xff] %vm2059, %v2765
    %2847 = vst.msk [vmem:[#allocation3 + $0x4e0] sm:$0xff] %vm2059, %v2766
    %2848 = vst.msk [vmem:[#allocation3 + $0x4f8] sm:$0xff] %vm2059, %v2767
    %2849 = vst.msk [vmem:[#allocation3 + $0x510] sm:$0xff] %vm2059, %v2768
    %2850 = vst.msk [vmem:[#allocation3 + $0x528] sm:$0xff] %vm2059, %v2769
    %2851 = vst.msk [vmem:[#allocation3 + $0x540] sm:$0xff] %vm2059, %v2770
    %2852 = vst.msk [vmem:[#allocation3 + $0x558] sm:$0xff] %vm2059, %v2771
    %2853 = vst.msk [vmem:[#allocation3 + $0x570] sm:$0xff] %vm2059, %v2772
    %2854 = vst.msk [vmem:[#allocation3 + $0x588] sm:$0xff] %vm2059, %v2773
    %2855 = vst.msk [vmem:[#allocation3 + $0x5a0] sm:$0xff] %vm2059, %v2774
    %2856 = vst.msk [vmem:[#allocation3 + $0x5b8] sm:$0xff] %vm2059, %v2775
    %2857 = vst.msk [vmem:[#allocation3 + $0x5d0] sm:$0xff] %vm2059, %v2776
    %2858 = vst.msk [vmem:[#allocation3 + $0x5e8] sm:$0xff] %vm2059, %v2777
    %2859 = vst.msk [vmem:[#allocation3 + $0x600] sm:$0xff] %vm2059, %v2778
    %2860 = vst.msk [vmem:[#allocation3 + $0x618] sm:$0xff] %vm2059, %v2779
    %2861 = vst.msk [vmem:[#allocation3 + $0x630] sm:$0xff] %vm2059, %v2780
    %2862 = vst.msk [vmem:[#allocation3 + $0x648] sm:$0xff] %vm2059, %v2781
    %2863 = vst.msk [vmem:[#allocation3 + $0x660] sm:$0xff] %vm2059, %v2782
    %2864 = vst.msk [vmem:[#allocation3 + $0x678] sm:$0xff] %vm2059, %v2783
    %2865 = vst.msk [vmem:[#allocation3 + $0x690] sm:$0xff] %vm2059, %v2784
    %2866 = vst.msk [vmem:[#allocation3 + $0x6a8] sm:$0xff] %vm2059, %v2785
    %2867 = vst.msk [vmem:[#allocation3 + $0x6c0] sm:$0xff] %vm2059, %v2786
    %2868 = vst.msk [vmem:[#allocation3 + $0x6d8] sm:$0xff] %vm2059, %v2787
    %2869 = vst.msk [vmem:[#allocation3 + $0x6f0] sm:$0xff] %vm2059, %v2788
    %2870 = vst.msk [vmem:[#allocation3 + $0x708] sm:$0xff] %vm2059, %v2789
    %2871 = vst.msk [vmem:[#allocation3 + $0x720] sm:$0xff] %vm2059, %v2790
    %2872 = vst.msk [vmem:[#allocation3 + $0x738] sm:$0xff] %vm2059, %v2791
    %2873 = vst.msk [vmem:[#allocation3 + $0x750] sm:$0xff] %vm2059, %v2792
    %2874 = vst.msk [vmem:[#allocation3 + $0x768] sm:$0xff] %vm2059, %v2793
    %2875 = vst.msk [vmem:[#allocation3 + $0x780] sm:$0xff] %vm2059, %v2794
    %v2876 = vld [vmem:[#allocation2 + $0x6] sm:$0xff]
    %v2877 = vld [vmem:[#allocation2 + $0xe] sm:$0xff]
    %v2878 = vld [vmem:[#allocation2 + $0x16] sm:$0xff]
    %v2879 = vld [vmem:[#allocation2 + $0x1e] sm:$0xff]
    %v2880 = vld [vmem:[#allocation2 + $0x26] sm:$0xff]
    %v2881 = vld [vmem:[#allocation2 + $0x2e] sm:$0xff]
    %v2882 = vld [vmem:[#allocation2 + $0x36] sm:$0xff]
    %v2883 = vld [vmem:[#allocation2 + $0x3e] sm:$0xff]
    %v2884 = vld [vmem:[#allocation2 + $0x46] sm:$0xff]
    %v2885 = vld [vmem:[#allocation2 + $0x4e] sm:$0xff]
    %v2886 = vld [vmem:[#allocation2 + $0x56] sm:$0xff]
    %v2887 = vld [vmem:[#allocation2 + $0x5e] sm:$0xff]
    %v2888 = vld [vmem:[#allocation2 + $0x66] sm:$0xff]
    %v2889 = vld [vmem:[#allocation2 + $0x6e] sm:$0xff]
    %v2890 = vld [vmem:[#allocation2 + $0x76] sm:$0xff]
    %v2891 = vld [vmem:[#allocation2 + $0x7e] sm:$0xff]
    %v2892 = vld [vmem:[#allocation2 + $0x86] sm:$0xff]
    %v2893 = vld [vmem:[#allocation2 + $0x8e] sm:$0xff]
    %v2894 = vld [vmem:[#allocation2 + $0x96] sm:$0xff]
    %v2895 = vld [vmem:[#allocation2 + $0x9e] sm:$0xff]
    %v2896 = vld [vmem:[#allocation2 + $0xa6] sm:$0xff]
    %v2897 = vld [vmem:[#allocation2 + $0xae] sm:$0xff]
    %v2898 = vld [vmem:[#allocation2 + $0xb6] sm:$0xff]
    %v2899 = vld [vmem:[#allocation2 + $0xbe] sm:$0xff]
    %v2900 = vld [vmem:[#allocation2 + $0xc6] sm:$0xff]
    %v2901 = vld [vmem:[#allocation2 + $0xce] sm:$0xff]
    %v2902 = vld [vmem:[#allocation2 + $0xd6] sm:$0xff]
    %v2903 = vld [vmem:[#allocation2 + $0xde] sm:$0xff]
    %v2904 = vld [vmem:[#allocation2 + $0xe6] sm:$0xff]
    %v2905 = vld [vmem:[#allocation2 + $0xee] sm:$0xff]
    %v2906 = vld [vmem:[#allocation2 + $0xf6] sm:$0xff]
    %v2907 = vld [vmem:[#allocation2 + $0xfe] sm:$0xff]
    %v2908 = vld [vmem:[#allocation2 + $0x106] sm:$0xff]
    %v2909 = vld [vmem:[#allocation2 + $0x10e] sm:$0xff]
    %v2910 = vld [vmem:[#allocation2 + $0x116] sm:$0xff]
    %v2911 = vld [vmem:[#allocation2 + $0x11e] sm:$0xff]
    %v2912 = vld [vmem:[#allocation2 + $0x126] sm:$0xff]
    %v2913 = vld [vmem:[#allocation2 + $0x12e] sm:$0xff]
    %v2914 = vld [vmem:[#allocation2 + $0x136] sm:$0xff]
    %v2915 = vld [vmem:[#allocation2 + $0x13e] sm:$0xff]
    %v2916 = vld [vmem:[#allocation2 + $0x146] sm:$0xff]
    %v2917 = vld [vmem:[#allocation2 + $0x14e] sm:$0xff]
    %v2918 = vld [vmem:[#allocation2 + $0x156] sm:$0xff]
    %v2919 = vld [vmem:[#allocation2 + $0x15e] sm:$0xff]
    %v2920 = vld [vmem:[#allocation2 + $0x166] sm:$0xff]
    %v2921 = vld [vmem:[#allocation2 + $0x16e] sm:$0xff]
    %v2922 = vld [vmem:[#allocation2 + $0x176] sm:$0xff]
    %v2923 = vld [vmem:[#allocation2 + $0x17e] sm:$0xff]
    %v2924 = vld [vmem:[#allocation2 + $0x186] sm:$0xff]
    %v2925 = vld [vmem:[#allocation2 + $0x18e] sm:$0xff]
    %v2926 = vld [vmem:[#allocation2 + $0x196] sm:$0xff]
    %v2927 = vld [vmem:[#allocation2 + $0x19e] sm:$0xff]
    %v2928 = vld [vmem:[#allocation2 + $0x1a6] sm:$0xff]
    %v2929 = vld [vmem:[#allocation2 + $0x1ae] sm:$0xff]
    %v2930 = vld [vmem:[#allocation2 + $0x1b6] sm:$0xff]
    %v2931 = vld [vmem:[#allocation2 + $0x1be] sm:$0xff]
    %v2932 = vld [vmem:[#allocation2 + $0x1c6] sm:$0xff]
    %v2933 = vld [vmem:[#allocation2 + $0x1ce] sm:$0xff]
    %v2934 = vld [vmem:[#allocation2 + $0x1d6] sm:$0xff]
    %v2935 = vld [vmem:[#allocation2 + $0x1de] sm:$0xff]
    %v2936 = vld [vmem:[#allocation2 + $0x1e6] sm:$0xff]
    %v2937 = vld [vmem:[#allocation2 + $0x1ee] sm:$0xff]
    %v2938 = vld [vmem:[#allocation2 + $0x1f6] sm:$0xff]
    %v2939 = vld [vmem:[#allocation2 + $0x1fe] sm:$0xff]
    %v2940 = vld [vmem:[#allocation2 + $0x206] sm:$0xff]
    %v2941 = vld [vmem:[#allocation2 + $0x20e] sm:$0xff]
    %v2942 = vld [vmem:[#allocation2 + $0x216] sm:$0xff]
    %v2943 = vld [vmem:[#allocation2 + $0x21e] sm:$0xff]
    %v2944 = vld [vmem:[#allocation2 + $0x226] sm:$0xff]
    %v2945 = vld [vmem:[#allocation2 + $0x22e] sm:$0xff]
    %v2946 = vld [vmem:[#allocation2 + $0x236] sm:$0xff]
    %v2947 = vld [vmem:[#allocation2 + $0x23e] sm:$0xff]
    %v2948 = vld [vmem:[#allocation2 + $0x246] sm:$0xff]
    %v2949 = vld [vmem:[#allocation2 + $0x24e] sm:$0xff]
    %v2950 = vld [vmem:[#allocation2 + $0x256] sm:$0xff]
    %v2951 = vld [vmem:[#allocation2 + $0x25e] sm:$0xff]
    %v2952 = vld [vmem:[#allocation2 + $0x266] sm:$0xff]
    %v2953 = vld [vmem:[#allocation2 + $0x26e] sm:$0xff]
    %v2954 = vld [vmem:[#allocation2 + $0x276] sm:$0xff]
    %v2955 = vld [vmem:[#allocation2 + $0x27e] sm:$0xff]
    %v2956 = vld [vmem:[#allocation2 + $0x286] sm:$0xff]
    %s2957 = scalar_lea.vmem %s3, 648
    %v2958 = vld [vmem:[%s2957] sm:$0xff]
    %v2959 = vld [vmem:[%s2957 + $0x8] sm:$0xff]
    %v2960 = vld [vmem:[%s2957 + $0x10] sm:$0xff]
    %v2961 = vld [vmem:[%s2957 + $0x18] sm:$0xff]
    %v2962 = vld [vmem:[%s2957 + $0x20] sm:$0xff]
    %v2963 = vld [vmem:[%s2957 + $0x28] sm:$0xff]
    %v2964 = vld [vmem:[%s2957 + $0x30] sm:$0xff]
    %v2965 = vld [vmem:[%s2957 + $0x38] sm:$0xff]
    %v2966 = vld [vmem:[%s2957 + $0x40] sm:$0xff]
    %v2967 = vld [vmem:[%s2957 + $0x48] sm:$0xff]
    %v2968 = vld [vmem:[%s2957 + $0x50] sm:$0xff]
    %v2969 = vld [vmem:[%s2957 + $0x58] sm:$0xff]
    %v2970 = vld [vmem:[%s2957 + $0x60] sm:$0xff]
    %v2971 = vld [vmem:[%s2957 + $0x68] sm:$0xff]
    %v2972 = vld [vmem:[%s2957 + $0x70] sm:$0xff]
    %v2973 = vld [vmem:[%s2957 + $0x78] sm:$0xff]
    %v2974 = vld [vmem:[%s2957 + $0x80] sm:$0xff]
    %v2975 = vld [vmem:[%s2957 + $0x88] sm:$0xff]
    %v2976 = vld [vmem:[%s2957 + $0x90] sm:$0xff]
    %v2977 = vld [vmem:[%s2957 + $0x98] sm:$0xff]
    %v2978 = vld [vmem:[%s2957 + $0xa0] sm:$0xff]
    %v2979 = vld [vmem:[%s2957 + $0xa8] sm:$0xff]
    %v2980 = vld [vmem:[%s2957 + $0xb0] sm:$0xff]
    %v2981 = vld [vmem:[%s2957 + $0xb8] sm:$0xff]
    %v2982 = vld [vmem:[%s2957 + $0xc0] sm:$0xff]
    %v2983 = vld [vmem:[%s2957 + $0xc8] sm:$0xff]
    %v2984 = vld [vmem:[%s2957 + $0xd0] sm:$0xff]
    %v2985 = vld [vmem:[%s2957 + $0xd8] sm:$0xff]
    %v2986 = vld [vmem:[%s2957 + $0xe0] sm:$0xff]
    %v2987 = vld [vmem:[%s2957 + $0xe8] sm:$0xff]
    %v2988 = vld [vmem:[%s2957 + $0xf0] sm:$0xff]
    %v2989 = vld [vmem:[%s2957 + $0xf8] sm:$0xff]
    %v2990 = vld [vmem:[%s2957 + $0x100] sm:$0xff]
    %v2991 = vld [vmem:[%s2957 + $0x108] sm:$0xff]
    %v2992 = vld [vmem:[%s2957 + $0x110] sm:$0xff]
    %v2993 = vld [vmem:[%s2957 + $0x118] sm:$0xff]
    %v2994 = vld [vmem:[%s2957 + $0x120] sm:$0xff]
    %v2995 = vld [vmem:[%s2957 + $0x128] sm:$0xff]
    %v2996 = vld [vmem:[%s2957 + $0x130] sm:$0xff]
    %v2997 = vld [vmem:[%s2957 + $0x138] sm:$0xff]
    %v2998 = vld [vmem:[%s2957 + $0x140] sm:$0xff]
    %v2999 = vld [vmem:[%s2957 + $0x148] sm:$0xff]
    %v3000 = vld [vmem:[%s2957 + $0x150] sm:$0xff]
    %v3001 = vld [vmem:[%s2957 + $0x158] sm:$0xff]
    %v3002 = vld [vmem:[%s2957 + $0x160] sm:$0xff]
    %v3003 = vld [vmem:[%s2957 + $0x168] sm:$0xff]
    %v3004 = vld [vmem:[%s2957 + $0x170] sm:$0xff]
    %v3005 = vld [vmem:[%s2957 + $0x178] sm:$0xff]
    %v3006 = vld [vmem:[%s2957 + $0x180] sm:$0xff]
    %v3007 = vld [vmem:[%s2957 + $0x188] sm:$0xff]
    %v3008 = vld [vmem:[%s2957 + $0x190] sm:$0xff]
    %v3009 = vld [vmem:[%s2957 + $0x198] sm:$0xff]
    %v3010 = vld [vmem:[%s2957 + $0x1a0] sm:$0xff]
    %v3011 = vld [vmem:[%s2957 + $0x1a8] sm:$0xff]
    %v3012 = vld [vmem:[%s2957 + $0x1b0] sm:$0xff]
    %v3013 = vld [vmem:[%s2957 + $0x1b8] sm:$0xff]
    %v3014 = vld [vmem:[%s2957 + $0x1c0] sm:$0xff]
    %v3015 = vld [vmem:[%s2957 + $0x1c8] sm:$0xff]
    %v3016 = vld [vmem:[%s2957 + $0x1d0] sm:$0xff]
    %v3017 = vld [vmem:[%s2957 + $0x1d8] sm:$0xff]
    %v3018 = vld [vmem:[%s2957 + $0x1e0] sm:$0xff]
    %v3019 = vld [vmem:[%s2957 + $0x1e8] sm:$0xff]
    %v3020 = vld [vmem:[%s2957 + $0x1f0] sm:$0xff]
    %v3021 = vld [vmem:[%s2957 + $0x1f8] sm:$0xff]
    %v3022 = vld [vmem:[%s2957 + $0x200] sm:$0xff]
    %v3023 = vld [vmem:[%s2957 + $0x208] sm:$0xff]
    %v3024 = vld [vmem:[%s2957 + $0x210] sm:$0xff]
    %v3025 = vld [vmem:[%s2957 + $0x218] sm:$0xff]
    %v3026 = vld [vmem:[%s2957 + $0x220] sm:$0xff]
    %v3027 = vld [vmem:[%s2957 + $0x228] sm:$0xff]
    %v3028 = vld [vmem:[%s2957 + $0x230] sm:$0xff]
    %v3029 = vld [vmem:[%s2957 + $0x238] sm:$0xff]
    %v3030 = vld [vmem:[%s2957 + $0x240] sm:$0xff]
    %v3031 = vld [vmem:[%s2957 + $0x248] sm:$0xff]
    %v3032 = vld [vmem:[%s2957 + $0x250] sm:$0xff]
    %v3033 = vld [vmem:[%s2957 + $0x258] sm:$0xff]
    %v3034 = vld [vmem:[%s2957 + $0x260] sm:$0xff]
    %v3035 = vld [vmem:[%s2957 + $0x268] sm:$0xff]
    %v3036 = vld [vmem:[%s2957 + $0x270] sm:$0xff]
    %v3037 = vld [vmem:[%s2957 + $0x278] sm:$0xff]
    %v3038 = vld [vmem:[%s2957 + $0x280] sm:$0xff]
    %3040 = vset.pattern.permute.xlu0 0
    %3041 = vperm.xlu0 %3040, %v2958
    %v3042 = vpop.permute.xlu0 %3041
    %3045 = vset.pattern.permute.xlu0 0
    %3046 = vperm.xlu0 %3045, %v2959
    %v3047 = vpop.permute.xlu0 %3046
    %3050 = vset.pattern.permute.xlu0 0
    %3051 = vperm.xlu0 %3050, %v2960
    %v3052 = vpop.permute.xlu0 %3051
    %3055 = vset.pattern.permute.xlu0 0
    %3056 = vperm.xlu0 %3055, %v2961
    %v3057 = vpop.permute.xlu0 %3056
    %3060 = vset.pattern.permute.xlu0 0
    %3061 = vperm.xlu0 %3060, %v2962
    %v3062 = vpop.permute.xlu0 %3061
    %3065 = vset.pattern.permute.xlu0 0
    %3066 = vperm.xlu0 %3065, %v2963
    %v3067 = vpop.permute.xlu0 %3066
    %3070 = vset.pattern.permute.xlu0 0
    %3071 = vperm.xlu0 %3070, %v2964
    %v3072 = vpop.permute.xlu0 %3071
    %3075 = vset.pattern.permute.xlu0 0
    %3076 = vperm.xlu0 %3075, %v2965
    %v3077 = vpop.permute.xlu0 %3076
    %3080 = vset.pattern.permute.xlu0 0
    %3081 = vperm.xlu0 %3080, %v2966
    %v3082 = vpop.permute.xlu0 %3081
    %3085 = vset.pattern.permute.xlu0 0
    %3086 = vperm.xlu0 %3085, %v2967
    %v3087 = vpop.permute.xlu0 %3086
    %3090 = vset.pattern.permute.xlu0 0
    %3091 = vperm.xlu0 %3090, %v2968
    %v3092 = vpop.permute.xlu0 %3091
    %3095 = vset.pattern.permute.xlu0 0
    %3096 = vperm.xlu0 %3095, %v2969
    %v3097 = vpop.permute.xlu0 %3096
    %3100 = vset.pattern.permute.xlu0 0
    %3101 = vperm.xlu0 %3100, %v2970
    %v3102 = vpop.permute.xlu0 %3101
    %3105 = vset.pattern.permute.xlu0 0
    %3106 = vperm.xlu0 %3105, %v2971
    %v3107 = vpop.permute.xlu0 %3106
    %3110 = vset.pattern.permute.xlu0 0
    %3111 = vperm.xlu0 %3110, %v2972
    %v3112 = vpop.permute.xlu0 %3111
    %3115 = vset.pattern.permute.xlu0 0
    %3116 = vperm.xlu0 %3115, %v2973
    %v3117 = vpop.permute.xlu0 %3116
    %3120 = vset.pattern.permute.xlu0 0
    %3121 = vperm.xlu0 %3120, %v2974
    %v3122 = vpop.permute.xlu0 %3121
    %3125 = vset.pattern.permute.xlu0 0
    %3126 = vperm.xlu0 %3125, %v2975
    %v3127 = vpop.permute.xlu0 %3126
    %3130 = vset.pattern.permute.xlu0 0
    %3131 = vperm.xlu0 %3130, %v2976
    %v3132 = vpop.permute.xlu0 %3131
    %3135 = vset.pattern.permute.xlu0 0
    %3136 = vperm.xlu0 %3135, %v2977
    %v3137 = vpop.permute.xlu0 %3136
    %3140 = vset.pattern.permute.xlu0 0
    %3141 = vperm.xlu0 %3140, %v2978
    %v3142 = vpop.permute.xlu0 %3141
    %3145 = vset.pattern.permute.xlu0 0
    %3146 = vperm.xlu0 %3145, %v2979
    %v3147 = vpop.permute.xlu0 %3146
    %3150 = vset.pattern.permute.xlu0 0
    %3151 = vperm.xlu0 %3150, %v2980
    %v3152 = vpop.permute.xlu0 %3151
    %3155 = vset.pattern.permute.xlu0 0
    %3156 = vperm.xlu0 %3155, %v2981
    %v3157 = vpop.permute.xlu0 %3156
    %3160 = vset.pattern.permute.xlu0 0
    %3161 = vperm.xlu0 %3160, %v2982
    %v3162 = vpop.permute.xlu0 %3161
    %3165 = vset.pattern.permute.xlu0 0
    %3166 = vperm.xlu0 %3165, %v2983
    %v3167 = vpop.permute.xlu0 %3166
    %3170 = vset.pattern.permute.xlu0 0
    %3171 = vperm.xlu0 %3170, %v2984
    %v3172 = vpop.permute.xlu0 %3171
    %3175 = vset.pattern.permute.xlu0 0
    %3176 = vperm.xlu0 %3175, %v2985
    %v3177 = vpop.permute.xlu0 %3176
    %3180 = vset.pattern.permute.xlu0 0
    %3181 = vperm.xlu0 %3180, %v2986
    %v3182 = vpop.permute.xlu0 %3181
    %3185 = vset.pattern.permute.xlu0 0
    %3186 = vperm.xlu0 %3185, %v2987
    %v3187 = vpop.permute.xlu0 %3186
    %3190 = vset.pattern.permute.xlu0 0
    %3191 = vperm.xlu0 %3190, %v2988
    %v3192 = vpop.permute.xlu0 %3191
    %3195 = vset.pattern.permute.xlu0 0
    %3196 = vperm.xlu0 %3195, %v2989
    %v3197 = vpop.permute.xlu0 %3196
    %3200 = vset.pattern.permute.xlu0 0
    %3201 = vperm.xlu0 %3200, %v2990
    %v3202 = vpop.permute.xlu0 %3201
    %3205 = vset.pattern.permute.xlu0 0
    %3206 = vperm.xlu0 %3205, %v2991
    %v3207 = vpop.permute.xlu0 %3206
    %3210 = vset.pattern.permute.xlu0 0
    %3211 = vperm.xlu0 %3210, %v2992
    %v3212 = vpop.permute.xlu0 %3211
    %3215 = vset.pattern.permute.xlu0 0
    %3216 = vperm.xlu0 %3215, %v2993
    %v3217 = vpop.permute.xlu0 %3216
    %3220 = vset.pattern.permute.xlu0 0
    %3221 = vperm.xlu0 %3220, %v2994
    %v3222 = vpop.permute.xlu0 %3221
    %3225 = vset.pattern.permute.xlu0 0
    %3226 = vperm.xlu0 %3225, %v2995
    %v3227 = vpop.permute.xlu0 %3226
    %3230 = vset.pattern.permute.xlu0 0
    %3231 = vperm.xlu0 %3230, %v2996
    %v3232 = vpop.permute.xlu0 %3231
    %3235 = vset.pattern.permute.xlu0 0
    %3236 = vperm.xlu0 %3235, %v2997
    %v3237 = vpop.permute.xlu0 %3236
    %3240 = vset.pattern.permute.xlu0 0
    %3241 = vperm.xlu0 %3240, %v2998
    %v3242 = vpop.permute.xlu0 %3241
    %3245 = vset.pattern.permute.xlu0 0
    %3246 = vperm.xlu0 %3245, %v2999
    %v3247 = vpop.permute.xlu0 %3246
    %3250 = vset.pattern.permute.xlu0 0
    %3251 = vperm.xlu0 %3250, %v3000
    %v3252 = vpop.permute.xlu0 %3251
    %3255 = vset.pattern.permute.xlu0 0
    %3256 = vperm.xlu0 %3255, %v3001
    %v3257 = vpop.permute.xlu0 %3256
    %3260 = vset.pattern.permute.xlu0 0
    %3261 = vperm.xlu0 %3260, %v3002
    %v3262 = vpop.permute.xlu0 %3261
    %3265 = vset.pattern.permute.xlu0 0
    %3266 = vperm.xlu0 %3265, %v3003
    %v3267 = vpop.permute.xlu0 %3266
    %3270 = vset.pattern.permute.xlu0 0
    %3271 = vperm.xlu0 %3270, %v3004
    %v3272 = vpop.permute.xlu0 %3271
    %3275 = vset.pattern.permute.xlu0 0
    %3276 = vperm.xlu0 %3275, %v3005
    %v3277 = vpop.permute.xlu0 %3276
    %3280 = vset.pattern.permute.xlu0 0
    %3281 = vperm.xlu0 %3280, %v3006
    %v3282 = vpop.permute.xlu0 %3281
    %3285 = vset.pattern.permute.xlu0 0
    %3286 = vperm.xlu0 %3285, %v3007
    %v3287 = vpop.permute.xlu0 %3286
    %3290 = vset.pattern.permute.xlu0 0
    %3291 = vperm.xlu0 %3290, %v3008
    %v3292 = vpop.permute.xlu0 %3291
    %3295 = vset.pattern.permute.xlu0 0
    %3296 = vperm.xlu0 %3295, %v3009
    %v3297 = vpop.permute.xlu0 %3296
    %3300 = vset.pattern.permute.xlu0 0
    %3301 = vperm.xlu0 %3300, %v3010
    %v3302 = vpop.permute.xlu0 %3301
    %3305 = vset.pattern.permute.xlu0 0
    %3306 = vperm.xlu0 %3305, %v3011
    %v3307 = vpop.permute.xlu0 %3306
    %3310 = vset.pattern.permute.xlu0 0
    %3311 = vperm.xlu0 %3310, %v3012
    %v3312 = vpop.permute.xlu0 %3311
    %3315 = vset.pattern.permute.xlu0 0
    %3316 = vperm.xlu0 %3315, %v3013
    %v3317 = vpop.permute.xlu0 %3316
    %3320 = vset.pattern.permute.xlu0 0
    %3321 = vperm.xlu0 %3320, %v3014
    %v3322 = vpop.permute.xlu0 %3321
    %3325 = vset.pattern.permute.xlu0 0
    %3326 = vperm.xlu0 %3325, %v3015
    %v3327 = vpop.permute.xlu0 %3326
    %3330 = vset.pattern.permute.xlu0 0
    %3331 = vperm.xlu0 %3330, %v3016
    %v3332 = vpop.permute.xlu0 %3331
    %3335 = vset.pattern.permute.xlu0 0
    %3336 = vperm.xlu0 %3335, %v3017
    %v3337 = vpop.permute.xlu0 %3336
    %3340 = vset.pattern.permute.xlu0 0
    %3341 = vperm.xlu0 %3340, %v3018
    %v3342 = vpop.permute.xlu0 %3341
    %3345 = vset.pattern.permute.xlu0 0
    %3346 = vperm.xlu0 %3345, %v3019
    %v3347 = vpop.permute.xlu0 %3346
    %3350 = vset.pattern.permute.xlu0 0
    %3351 = vperm.xlu0 %3350, %v3020
    %v3352 = vpop.permute.xlu0 %3351
    %3355 = vset.pattern.permute.xlu0 0
    %3356 = vperm.xlu0 %3355, %v3021
    %v3357 = vpop.permute.xlu0 %3356
    %3360 = vset.pattern.permute.xlu0 0
    %3361 = vperm.xlu0 %3360, %v3022
    %v3362 = vpop.permute.xlu0 %3361
    %3365 = vset.pattern.permute.xlu0 0
    %3366 = vperm.xlu0 %3365, %v3023
    %v3367 = vpop.permute.xlu0 %3366
    %3370 = vset.pattern.permute.xlu0 0
    %3371 = vperm.xlu0 %3370, %v3024
    %v3372 = vpop.permute.xlu0 %3371
    %3375 = vset.pattern.permute.xlu0 0
    %3376 = vperm.xlu0 %3375, %v3025
    %v3377 = vpop.permute.xlu0 %3376
    %3380 = vset.pattern.permute.xlu0 0
    %3381 = vperm.xlu0 %3380, %v3026
    %v3382 = vpop.permute.xlu0 %3381
    %3385 = vset.pattern.permute.xlu0 0
    %3386 = vperm.xlu0 %3385, %v3027
    %v3387 = vpop.permute.xlu0 %3386
    %3390 = vset.pattern.permute.xlu0 0
    %3391 = vperm.xlu0 %3390, %v3028
    %v3392 = vpop.permute.xlu0 %3391
    %3395 = vset.pattern.permute.xlu0 0
    %3396 = vperm.xlu0 %3395, %v3029
    %v3397 = vpop.permute.xlu0 %3396
    %3400 = vset.pattern.permute.xlu0 0
    %3401 = vperm.xlu0 %3400, %v3030
    %v3402 = vpop.permute.xlu0 %3401
    %3405 = vset.pattern.permute.xlu0 0
    %3406 = vperm.xlu0 %3405, %v3031
    %v3407 = vpop.permute.xlu0 %3406
    %3410 = vset.pattern.permute.xlu0 0
    %3411 = vperm.xlu0 %3410, %v3032
    %v3412 = vpop.permute.xlu0 %3411
    %3415 = vset.pattern.permute.xlu0 0
    %3416 = vperm.xlu0 %3415, %v3033
    %v3417 = vpop.permute.xlu0 %3416
    %3420 = vset.pattern.permute.xlu0 0
    %3421 = vperm.xlu0 %3420, %v3034
    %v3422 = vpop.permute.xlu0 %3421
    %3425 = vset.pattern.permute.xlu0 0
    %3426 = vperm.xlu0 %3425, %v3035
    %v3427 = vpop.permute.xlu0 %3426
    %3430 = vset.pattern.permute.xlu0 0
    %3431 = vperm.xlu0 %3430, %v3036
    %v3432 = vpop.permute.xlu0 %3431
    %3435 = vset.pattern.permute.xlu0 0
    %3436 = vperm.xlu0 %3435, %v3037
    %v3437 = vpop.permute.xlu0 %3436
    %3440 = vset.pattern.permute.xlu0 0
    %3441 = vperm.xlu0 %3440, %v3038
    %v3442 = vpop.permute.xlu0 %3441
    %v3444 = vmul.f32 %v2876, %v3042
    %v3445 = vmul.f32 %v2877, %v3047
    %v3446 = vmul.f32 %v2878, %v3052
    %v3447 = vmul.f32 %v2879, %v3057
    %v3448 = vmul.f32 %v2880, %v3062
    %v3449 = vmul.f32 %v2881, %v3067
    %v3450 = vmul.f32 %v2882, %v3072
    %v3451 = vmul.f32 %v2883, %v3077
    %v3452 = vmul.f32 %v2884, %v3082
    %v3453 = vmul.f32 %v2885, %v3087
    %v3454 = vmul.f32 %v2886, %v3092
    %v3455 = vmul.f32 %v2887, %v3097
    %v3456 = vmul.f32 %v2888, %v3102
    %v3457 = vmul.f32 %v2889, %v3107
    %v3458 = vmul.f32 %v2890, %v3112
    %v3459 = vmul.f32 %v2891, %v3117
    %v3460 = vmul.f32 %v2892, %v3122
    %v3461 = vmul.f32 %v2893, %v3127
    %v3462 = vmul.f32 %v2894, %v3132
    %v3463 = vmul.f32 %v2895, %v3137
    %v3464 = vmul.f32 %v2896, %v3142
    %v3465 = vmul.f32 %v2897, %v3147
    %v3466 = vmul.f32 %v2898, %v3152
    %v3467 = vmul.f32 %v2899, %v3157
    %v3468 = vmul.f32 %v2900, %v3162
    %v3469 = vmul.f32 %v2901, %v3167
    %v3470 = vmul.f32 %v2902, %v3172
    %v3471 = vmul.f32 %v2903, %v3177
    %v3472 = vmul.f32 %v2904, %v3182
    %v3473 = vmul.f32 %v2905, %v3187
    %v3474 = vmul.f32 %v2906, %v3192
    %v3475 = vmul.f32 %v2907, %v3197
    %v3476 = vmul.f32 %v2908, %v3202
    %v3477 = vmul.f32 %v2909, %v3207
    %v3478 = vmul.f32 %v2910, %v3212
    %v3479 = vmul.f32 %v2911, %v3217
    %v3480 = vmul.f32 %v2912, %v3222
    %v3481 = vmul.f32 %v2913, %v3227
    %v3482 = vmul.f32 %v2914, %v3232
    %v3483 = vmul.f32 %v2915, %v3237
    %v3484 = vmul.f32 %v2916, %v3242
    %v3485 = vmul.f32 %v2917, %v3247
    %v3486 = vmul.f32 %v2918, %v3252
    %v3487 = vmul.f32 %v2919, %v3257
    %v3488 = vmul.f32 %v2920, %v3262
    %v3489 = vmul.f32 %v2921, %v3267
    %v3490 = vmul.f32 %v2922, %v3272
    %v3491 = vmul.f32 %v2923, %v3277
    %v3492 = vmul.f32 %v2924, %v3282
    %v3493 = vmul.f32 %v2925, %v3287
    %v3494 = vmul.f32 %v2926, %v3292
    %v3495 = vmul.f32 %v2927, %v3297
    %v3496 = vmul.f32 %v2928, %v3302
    %v3497 = vmul.f32 %v2929, %v3307
    %v3498 = vmul.f32 %v2930, %v3312
    %v3499 = vmul.f32 %v2931, %v3317
    %v3500 = vmul.f32 %v2932, %v3322
    %v3501 = vmul.f32 %v2933, %v3327
    %v3502 = vmul.f32 %v2934, %v3332
    %v3503 = vmul.f32 %v2935, %v3337
    %v3504 = vmul.f32 %v2936, %v3342
    %v3505 = vmul.f32 %v2937, %v3347
    %v3506 = vmul.f32 %v2938, %v3352
    %v3507 = vmul.f32 %v2939, %v3357
    %v3508 = vmul.f32 %v2940, %v3362
    %v3509 = vmul.f32 %v2941, %v3367
    %v3510 = vmul.f32 %v2942, %v3372
    %v3511 = vmul.f32 %v2943, %v3377
    %v3512 = vmul.f32 %v2944, %v3382
    %v3513 = vmul.f32 %v2945, %v3387
    %v3514 = vmul.f32 %v2946, %v3392
    %v3515 = vmul.f32 %v2947, %v3397
    %v3516 = vmul.f32 %v2948, %v3402
    %v3517 = vmul.f32 %v2949, %v3407
    %v3518 = vmul.f32 %v2950, %v3412
    %v3519 = vmul.f32 %v2951, %v3417
    %v3520 = vmul.f32 %v2952, %v3422
    %v3521 = vmul.f32 %v2953, %v3427
    %v3522 = vmul.f32 %v2954, %v3432
    %v3523 = vmul.f32 %v2955, %v3437
    %v3524 = vmul.f32 %v2956, %v3442
    %3606 = vrot.lane.b32.xlu0 %v3444, 32
    %v3607 = vpop.permute.xlu0 %3606
    %3608 = vrot.lane.b32.xlu0 %v3445, 32
    %v3609 = vpop.permute.xlu0 %3608
    %3610 = vrot.lane.b32.xlu0 %v3446, 32
    %v3611 = vpop.permute.xlu0 %3610
    %3612 = vrot.lane.b32.xlu0 %v3447, 32
    %v3613 = vpop.permute.xlu0 %3612
    %3614 = vrot.lane.b32.xlu0 %v3448, 32
    %v3615 = vpop.permute.xlu0 %3614
    %3616 = vrot.lane.b32.xlu0 %v3449, 32
    %v3617 = vpop.permute.xlu0 %3616
    %3618 = vrot.lane.b32.xlu0 %v3450, 32
    %v3619 = vpop.permute.xlu0 %3618
    %3620 = vrot.lane.b32.xlu0 %v3451, 32
    %v3621 = vpop.permute.xlu0 %3620
    %3622 = vrot.lane.b32.xlu0 %v3452, 32
    %v3623 = vpop.permute.xlu0 %3622
    %3624 = vrot.lane.b32.xlu0 %v3453, 32
    %v3625 = vpop.permute.xlu0 %3624
    %3626 = vrot.lane.b32.xlu0 %v3454, 32
    %v3627 = vpop.permute.xlu0 %3626
    %3628 = vrot.lane.b32.xlu0 %v3455, 32
    %v3629 = vpop.permute.xlu0 %3628
    %3630 = vrot.lane.b32.xlu0 %v3456, 32
    %v3631 = vpop.permute.xlu0 %3630
    %3632 = vrot.lane.b32.xlu0 %v3457, 32
    %v3633 = vpop.permute.xlu0 %3632
    %3634 = vrot.lane.b32.xlu0 %v3458, 32
    %v3635 = vpop.permute.xlu0 %3634
    %3636 = vrot.lane.b32.xlu0 %v3459, 32
    %v3637 = vpop.permute.xlu0 %3636
    %3638 = vrot.lane.b32.xlu0 %v3460, 32
    %v3639 = vpop.permute.xlu0 %3638
    %3640 = vrot.lane.b32.xlu0 %v3461, 32
    %v3641 = vpop.permute.xlu0 %3640
    %3642 = vrot.lane.b32.xlu0 %v3462, 32
    %v3643 = vpop.permute.xlu0 %3642
    %3644 = vrot.lane.b32.xlu0 %v3463, 32
    %v3645 = vpop.permute.xlu0 %3644
    %3646 = vrot.lane.b32.xlu0 %v3464, 32
    %v3647 = vpop.permute.xlu0 %3646
    %3648 = vrot.lane.b32.xlu0 %v3465, 32
    %v3649 = vpop.permute.xlu0 %3648
    %3650 = vrot.lane.b32.xlu0 %v3466, 32
    %v3651 = vpop.permute.xlu0 %3650
    %3652 = vrot.lane.b32.xlu0 %v3467, 32
    %v3653 = vpop.permute.xlu0 %3652
    %3654 = vrot.lane.b32.xlu0 %v3468, 32
    %v3655 = vpop.permute.xlu0 %3654
    %3656 = vrot.lane.b32.xlu0 %v3469, 32
    %v3657 = vpop.permute.xlu0 %3656
    %3658 = vrot.lane.b32.xlu0 %v3470, 32
    %v3659 = vpop.permute.xlu0 %3658
    %3660 = vrot.lane.b32.xlu0 %v3471, 32
    %v3661 = vpop.permute.xlu0 %3660
    %3662 = vrot.lane.b32.xlu0 %v3472, 32
    %v3663 = vpop.permute.xlu0 %3662
    %3664 = vrot.lane.b32.xlu0 %v3473, 32
    %v3665 = vpop.permute.xlu0 %3664
    %3666 = vrot.lane.b32.xlu0 %v3474, 32
    %v3667 = vpop.permute.xlu0 %3666
    %3668 = vrot.lane.b32.xlu0 %v3475, 32
    %v3669 = vpop.permute.xlu0 %3668
    %3670 = vrot.lane.b32.xlu0 %v3476, 32
    %v3671 = vpop.permute.xlu0 %3670
    %3672 = vrot.lane.b32.xlu0 %v3477, 32
    %v3673 = vpop.permute.xlu0 %3672
    %3674 = vrot.lane.b32.xlu0 %v3478, 32
    %v3675 = vpop.permute.xlu0 %3674
    %3676 = vrot.lane.b32.xlu0 %v3479, 32
    %v3677 = vpop.permute.xlu0 %3676
    %3678 = vrot.lane.b32.xlu0 %v3480, 32
    %v3679 = vpop.permute.xlu0 %3678
    %3680 = vrot.lane.b32.xlu0 %v3481, 32
    %v3681 = vpop.permute.xlu0 %3680
    %3682 = vrot.lane.b32.xlu0 %v3482, 32
    %v3683 = vpop.permute.xlu0 %3682
    %3684 = vrot.lane.b32.xlu0 %v3483, 32
    %v3685 = vpop.permute.xlu0 %3684
    %3686 = vrot.lane.b32.xlu0 %v3484, 32
    %v3687 = vpop.permute.xlu0 %3686
    %3688 = vrot.lane.b32.xlu0 %v3485, 32
    %v3689 = vpop.permute.xlu0 %3688
    %3690 = vrot.lane.b32.xlu0 %v3486, 32
    %v3691 = vpop.permute.xlu0 %3690
    %3692 = vrot.lane.b32.xlu0 %v3487, 32
    %v3693 = vpop.permute.xlu0 %3692
    %3694 = vrot.lane.b32.xlu0 %v3488, 32
    %v3695 = vpop.permute.xlu0 %3694
    %3696 = vrot.lane.b32.xlu0 %v3489, 32
    %v3697 = vpop.permute.xlu0 %3696
    %3698 = vrot.lane.b32.xlu0 %v3490, 32
    %v3699 = vpop.permute.xlu0 %3698
    %3700 = vrot.lane.b32.xlu0 %v3491, 32
    %v3701 = vpop.permute.xlu0 %3700
    %3702 = vrot.lane.b32.xlu0 %v3492, 32
    %v3703 = vpop.permute.xlu0 %3702
    %3704 = vrot.lane.b32.xlu0 %v3493, 32
    %v3705 = vpop.permute.xlu0 %3704
    %3706 = vrot.lane.b32.xlu0 %v3494, 32
    %v3707 = vpop.permute.xlu0 %3706
    %3708 = vrot.lane.b32.xlu0 %v3495, 32
    %v3709 = vpop.permute.xlu0 %3708
    %3710 = vrot.lane.b32.xlu0 %v3496, 32
    %v3711 = vpop.permute.xlu0 %3710
    %3712 = vrot.lane.b32.xlu0 %v3497, 32
    %v3713 = vpop.permute.xlu0 %3712
    %3714 = vrot.lane.b32.xlu0 %v3498, 32
    %v3715 = vpop.permute.xlu0 %3714
    %3716 = vrot.lane.b32.xlu0 %v3499, 32
    %v3717 = vpop.permute.xlu0 %3716
    %3718 = vrot.lane.b32.xlu0 %v3500, 32
    %v3719 = vpop.permute.xlu0 %3718
    %3720 = vrot.lane.b32.xlu0 %v3501, 32
    %v3721 = vpop.permute.xlu0 %3720
    %3722 = vrot.lane.b32.xlu0 %v3502, 32
    %v3723 = vpop.permute.xlu0 %3722
    %3724 = vrot.lane.b32.xlu0 %v3503, 32
    %v3725 = vpop.permute.xlu0 %3724
    %3726 = vrot.lane.b32.xlu0 %v3504, 32
    %v3727 = vpop.permute.xlu0 %3726
    %3728 = vrot.lane.b32.xlu0 %v3505, 32
    %v3729 = vpop.permute.xlu0 %3728
    %3730 = vrot.lane.b32.xlu0 %v3506, 32
    %v3731 = vpop.permute.xlu0 %3730
    %3732 = vrot.lane.b32.xlu0 %v3507, 32
    %v3733 = vpop.permute.xlu0 %3732
    %3734 = vrot.lane.b32.xlu0 %v3508, 32
    %v3735 = vpop.permute.xlu0 %3734
    %3736 = vrot.lane.b32.xlu0 %v3509, 32
    %v3737 = vpop.permute.xlu0 %3736
    %3738 = vrot.lane.b32.xlu0 %v3510, 32
    %v3739 = vpop.permute.xlu0 %3738
    %3740 = vrot.lane.b32.xlu0 %v3511, 32
    %v3741 = vpop.permute.xlu0 %3740
    %3742 = vrot.lane.b32.xlu0 %v3512, 32
    %v3743 = vpop.permute.xlu0 %3742
    %3744 = vrot.lane.b32.xlu0 %v3513, 32
    %v3745 = vpop.permute.xlu0 %3744
    %3746 = vrot.lane.b32.xlu0 %v3514, 32
    %v3747 = vpop.permute.xlu0 %3746
    %3748 = vrot.lane.b32.xlu0 %v3515, 32
    %v3749 = vpop.permute.xlu0 %3748
    %3750 = vrot.lane.b32.xlu0 %v3516, 32
    %v3751 = vpop.permute.xlu0 %3750
    %3752 = vrot.lane.b32.xlu0 %v3517, 32
    %v3753 = vpop.permute.xlu0 %3752
    %3754 = vrot.lane.b32.xlu0 %v3518, 32
    %v3755 = vpop.permute.xlu0 %3754
    %3756 = vrot.lane.b32.xlu0 %v3519, 32
    %v3757 = vpop.permute.xlu0 %3756
    %3758 = vrot.lane.b32.xlu0 %v3520, 32
    %v3759 = vpop.permute.xlu0 %3758
    %3760 = vrot.lane.b32.xlu0 %v3521, 32
    %v3761 = vpop.permute.xlu0 %3760
    %3762 = vrot.lane.b32.xlu0 %v3522, 32
    %v3763 = vpop.permute.xlu0 %3762
    %3764 = vrot.lane.b32.xlu0 %v3523, 32
    %v3765 = vpop.permute.xlu0 %3764
    %3766 = vrot.lane.b32.xlu0 %v3524, 32
    %v3767 = vpop.permute.xlu0 %3766
    %vm3849 = vcmask 523520
    %3850 = vst.msk [vmem:[#allocation3] sm:$0xff] %vm3849, %v3607
    %3851 = vst.msk [vmem:[#allocation3 + $0x18] sm:$0xff] %vm3849, %v3609
    %3852 = vst.msk [vmem:[#allocation3 + $0x30] sm:$0xff] %vm3849, %v3611
    %3853 = vst.msk [vmem:[#allocation3 + $0x48] sm:$0xff] %vm3849, %v3613
    %3854 = vst.msk [vmem:[#allocation3 + $0x60] sm:$0xff] %vm3849, %v3615
    %3855 = vst.msk [vmem:[#allocation3 + $0x78] sm:$0xff] %vm3849, %v3617
    %3856 = vst.msk [vmem:[#allocation3 + $0x90] sm:$0xff] %vm3849, %v3619
    %3857 = vst.msk [vmem:[#allocation3 + $0xa8] sm:$0xff] %vm3849, %v3621
    %3858 = vst.msk [vmem:[#allocation3 + $0xc0] sm:$0xff] %vm3849, %v3623
    %3859 = vst.msk [vmem:[#allocation3 + $0xd8] sm:$0xff] %vm3849, %v3625
    %3860 = vst.msk [vmem:[#allocation3 + $0xf0] sm:$0xff] %vm3849, %v3627
    %3861 = vst.msk [vmem:[#allocation3 + $0x108] sm:$0xff] %vm3849, %v3629
    %3862 = vst.msk [vmem:[#allocation3 + $0x120] sm:$0xff] %vm3849, %v3631
    %3863 = vst.msk [vmem:[#allocation3 + $0x138] sm:$0xff] %vm3849, %v3633
    %3864 = vst.msk [vmem:[#allocation3 + $0x150] sm:$0xff] %vm3849, %v3635
    %3865 = vst.msk [vmem:[#allocation3 + $0x168] sm:$0xff] %vm3849, %v3637
    %3866 = vst.msk [vmem:[#allocation3 + $0x180] sm:$0xff] %vm3849, %v3639
    %3867 = vst.msk [vmem:[#allocation3 + $0x198] sm:$0xff] %vm3849, %v3641
    %3868 = vst.msk [vmem:[#allocation3 + $0x1b0] sm:$0xff] %vm3849, %v3643
    %3869 = vst.msk [vmem:[#allocation3 + $0x1c8] sm:$0xff] %vm3849, %v3645
    %3870 = vst.msk [vmem:[#allocation3 + $0x1e0] sm:$0xff] %vm3849, %v3647
    %3871 = vst.msk [vmem:[#allocation3 + $0x1f8] sm:$0xff] %vm3849, %v3649
    %3872 = vst.msk [vmem:[#allocation3 + $0x210] sm:$0xff] %vm3849, %v3651
    %3873 = vst.msk [vmem:[#allocation3 + $0x228] sm:$0xff] %vm3849, %v3653
    %3874 = vst.msk [vmem:[#allocation3 + $0x240] sm:$0xff] %vm3849, %v3655
    %3875 = vst.msk [vmem:[#allocation3 + $0x258] sm:$0xff] %vm3849, %v3657
    %3876 = vst.msk [vmem:[#allocation3 + $0x270] sm:$0xff] %vm3849, %v3659
    %3877 = vst.msk [vmem:[#allocation3 + $0x288] sm:$0xff] %vm3849, %v3661
    %3878 = vst.msk [vmem:[#allocation3 + $0x2a0] sm:$0xff] %vm3849, %v3663
    %3879 = vst.msk [vmem:[#allocation3 + $0x2b8] sm:$0xff] %vm3849, %v3665
    %3880 = vst.msk [vmem:[#allocation3 + $0x2d0] sm:$0xff] %vm3849, %v3667
    %3881 = vst.msk [vmem:[#allocation3 + $0x2e8] sm:$0xff] %vm3849, %v3669
    %3882 = vst.msk [vmem:[#allocation3 + $0x300] sm:$0xff] %vm3849, %v3671
    %3883 = vst.msk [vmem:[#allocation3 + $0x318] sm:$0xff] %vm3849, %v3673
    %3884 = vst.msk [vmem:[#allocation3 + $0x330] sm:$0xff] %vm3849, %v3675
    %3885 = vst.msk [vmem:[#allocation3 + $0x348] sm:$0xff] %vm3849, %v3677
    %3886 = vst.msk [vmem:[#allocation3 + $0x360] sm:$0xff] %vm3849, %v3679
    %3887 = vst.msk [vmem:[#allocation3 + $0x378] sm:$0xff] %vm3849, %v3681
    %3888 = vst.msk [vmem:[#allocation3 + $0x390] sm:$0xff] %vm3849, %v3683
    %3889 = vst.msk [vmem:[#allocation3 + $0x3a8] sm:$0xff] %vm3849, %v3685
    %3890 = vst.msk [vmem:[#allocation3 + $0x3c0] sm:$0xff] %vm3849, %v3687
    %3891 = vst.msk [vmem:[#allocation3 + $0x3d8] sm:$0xff] %vm3849, %v3689
    %3892 = vst.msk [vmem:[#allocation3 + $0x3f0] sm:$0xff] %vm3849, %v3691
    %3893 = vst.msk [vmem:[#allocation3 + $0x408] sm:$0xff] %vm3849, %v3693
    %3894 = vst.msk [vmem:[#allocation3 + $0x420] sm:$0xff] %vm3849, %v3695
    %3895 = vst.msk [vmem:[#allocation3 + $0x438] sm:$0xff] %vm3849, %v3697
    %3896 = vst.msk [vmem:[#allocation3 + $0x450] sm:$0xff] %vm3849, %v3699
    %3897 = vst.msk [vmem:[#allocation3 + $0x468] sm:$0xff] %vm3849, %v3701
    %3898 = vst.msk [vmem:[#allocation3 + $0x480] sm:$0xff] %vm3849, %v3703
    %3899 = vst.msk [vmem:[#allocation3 + $0x498] sm:$0xff] %vm3849, %v3705
    %3900 = vst.msk [vmem:[#allocation3 + $0x4b0] sm:$0xff] %vm3849, %v3707
    %3901 = vst.msk [vmem:[#allocation3 + $0x4c8] sm:$0xff] %vm3849, %v3709
    %3902 = vst.msk [vmem:[#allocation3 + $0x4e0] sm:$0xff] %vm3849, %v3711
    %3903 = vst.msk [vmem:[#allocation3 + $0x4f8] sm:$0xff] %vm3849, %v3713
    %3904 = vst.msk [vmem:[#allocation3 + $0x510] sm:$0xff] %vm3849, %v3715
    %3905 = vst.msk [vmem:[#allocation3 + $0x528] sm:$0xff] %vm3849, %v3717
    %3906 = vst.msk [vmem:[#allocation3 + $0x540] sm:$0xff] %vm3849, %v3719
    %3907 = vst.msk [vmem:[#allocation3 + $0x558] sm:$0xff] %vm3849, %v3721
    %3908 = vst.msk [vmem:[#allocation3 + $0x570] sm:$0xff] %vm3849, %v3723
    %3909 = vst.msk [vmem:[#allocation3 + $0x588] sm:$0xff] %vm3849, %v3725
    %3910 = vst.msk [vmem:[#allocation3 + $0x5a0] sm:$0xff] %vm3849, %v3727
    %3911 = vst.msk [vmem:[#allocation3 + $0x5b8] sm:$0xff] %vm3849, %v3729
    %3912 = vst.msk [vmem:[#allocation3 + $0x5d0] sm:$0xff] %vm3849, %v3731
    %3913 = vst.msk [vmem:[#allocation3 + $0x5e8] sm:$0xff] %vm3849, %v3733
    %3914 = vst.msk [vmem:[#allocation3 + $0x600] sm:$0xff] %vm3849, %v3735
    %3915 = vst.msk [vmem:[#allocation3 + $0x618] sm:$0xff] %vm3849, %v3737
    %3916 = vst.msk [vmem:[#allocation3 + $0x630] sm:$0xff] %vm3849, %v3739
    %3917 = vst.msk [vmem:[#allocation3 + $0x648] sm:$0xff] %vm3849, %v3741
    %3918 = vst.msk [vmem:[#allocation3 + $0x660] sm:$0xff] %vm3849, %v3743
    %3919 = vst.msk [vmem:[#allocation3 + $0x678] sm:$0xff] %vm3849, %v3745
    %3920 = vst.msk [vmem:[#allocation3 + $0x690] sm:$0xff] %vm3849, %v3747
    %3921 = vst.msk [vmem:[#allocation3 + $0x6a8] sm:$0xff] %vm3849, %v3749
    %3922 = vst.msk [vmem:[#allocation3 + $0x6c0] sm:$0xff] %vm3849, %v3751
    %3923 = vst.msk [vmem:[#allocation3 + $0x6d8] sm:$0xff] %vm3849, %v3753
    %3924 = vst.msk [vmem:[#allocation3 + $0x6f0] sm:$0xff] %vm3849, %v3755
    %3925 = vst.msk [vmem:[#allocation3 + $0x708] sm:$0xff] %vm3849, %v3757
    %3926 = vst.msk [vmem:[#allocation3 + $0x720] sm:$0xff] %vm3849, %v3759
    %3927 = vst.msk [vmem:[#allocation3 + $0x738] sm:$0xff] %vm3849, %v3761
    %3928 = vst.msk [vmem:[#allocation3 + $0x750] sm:$0xff] %vm3849, %v3763
    %3929 = vst.msk [vmem:[#allocation3 + $0x768] sm:$0xff] %vm3849, %v3765
    %3930 = vst.msk [vmem:[#allocation3 + $0x780] sm:$0xff] %vm3849, %v3767
    %v3931 = vld [vmem:[#allocation2 + $0x7] sm:$0xff]
    %v3932 = vld [vmem:[#allocation2 + $0xf] sm:$0xff]
    %v3933 = vld [vmem:[#allocation2 + $0x17] sm:$0xff]
    %v3934 = vld [vmem:[#allocation2 + $0x1f] sm:$0xff]
    %v3935 = vld [vmem:[#allocation2 + $0x27] sm:$0xff]
    %v3936 = vld [vmem:[#allocation2 + $0x2f] sm:$0xff]
    %v3937 = vld [vmem:[#allocation2 + $0x37] sm:$0xff]
    %v3938 = vld [vmem:[#allocation2 + $0x3f] sm:$0xff]
    %v3939 = vld [vmem:[#allocation2 + $0x47] sm:$0xff]
    %v3940 = vld [vmem:[#allocation2 + $0x4f] sm:$0xff]
    %v3941 = vld [vmem:[#allocation2 + $0x57] sm:$0xff]
    %v3942 = vld [vmem:[#allocation2 + $0x5f] sm:$0xff]
    %v3943 = vld [vmem:[#allocation2 + $0x67] sm:$0xff]
    %v3944 = vld [vmem:[#allocation2 + $0x6f] sm:$0xff]
    %v3945 = vld [vmem:[#allocation2 + $0x77] sm:$0xff]
    %v3946 = vld [vmem:[#allocation2 + $0x7f] sm:$0xff]
    %v3947 = vld [vmem:[#allocation2 + $0x87] sm:$0xff]
    %v3948 = vld [vmem:[#allocation2 + $0x8f] sm:$0xff]
    %v3949 = vld [vmem:[#allocation2 + $0x97] sm:$0xff]
    %v3950 = vld [vmem:[#allocation2 + $0x9f] sm:$0xff]
    %v3951 = vld [vmem:[#allocation2 + $0xa7] sm:$0xff]
    %v3952 = vld [vmem:[#allocation2 + $0xaf] sm:$0xff]
    %v3953 = vld [vmem:[#allocation2 + $0xb7] sm:$0xff]
    %v3954 = vld [vmem:[#allocation2 + $0xbf] sm:$0xff]
    %v3955 = vld [vmem:[#allocation2 + $0xc7] sm:$0xff]
    %v3956 = vld [vmem:[#allocation2 + $0xcf] sm:$0xff]
    %v3957 = vld [vmem:[#allocation2 + $0xd7] sm:$0xff]
    %v3958 = vld [vmem:[#allocation2 + $0xdf] sm:$0xff]
    %v3959 = vld [vmem:[#allocation2 + $0xe7] sm:$0xff]
    %v3960 = vld [vmem:[#allocation2 + $0xef] sm:$0xff]
    %v3961 = vld [vmem:[#allocation2 + $0xf7] sm:$0xff]
    %v3962 = vld [vmem:[#allocation2 + $0xff] sm:$0xff]
    %v3963 = vld [vmem:[#allocation2 + $0x107] sm:$0xff]
    %v3964 = vld [vmem:[#allocation2 + $0x10f] sm:$0xff]
    %v3965 = vld [vmem:[#allocation2 + $0x117] sm:$0xff]
    %v3966 = vld [vmem:[#allocation2 + $0x11f] sm:$0xff]
    %v3967 = vld [vmem:[#allocation2 + $0x127] sm:$0xff]
    %v3968 = vld [vmem:[#allocation2 + $0x12f] sm:$0xff]
    %v3969 = vld [vmem:[#allocation2 + $0x137] sm:$0xff]
    %v3970 = vld [vmem:[#allocation2 + $0x13f] sm:$0xff]
    %v3971 = vld [vmem:[#allocation2 + $0x147] sm:$0xff]
    %v3972 = vld [vmem:[#allocation2 + $0x14f] sm:$0xff]
    %v3973 = vld [vmem:[#allocation2 + $0x157] sm:$0xff]
    %v3974 = vld [vmem:[#allocation2 + $0x15f] sm:$0xff]
    %v3975 = vld [vmem:[#allocation2 + $0x167] sm:$0xff]
    %v3976 = vld [vmem:[#allocation2 + $0x16f] sm:$0xff]
    %v3977 = vld [vmem:[#allocation2 + $0x177] sm:$0xff]
    %v3978 = vld [vmem:[#allocation2 + $0x17f] sm:$0xff]
    %v3979 = vld [vmem:[#allocation2 + $0x187] sm:$0xff]
    %v3980 = vld [vmem:[#allocation2 + $0x18f] sm:$0xff]
    %v3981 = vld [vmem:[#allocation2 + $0x197] sm:$0xff]
    %v3982 = vld [vmem:[#allocation2 + $0x19f] sm:$0xff]
    %v3983 = vld [vmem:[#allocation2 + $0x1a7] sm:$0xff]
    %v3984 = vld [vmem:[#allocation2 + $0x1af] sm:$0xff]
    %v3985 = vld [vmem:[#allocation2 + $0x1b7] sm:$0xff]
    %v3986 = vld [vmem:[#allocation2 + $0x1bf] sm:$0xff]
    %v3987 = vld [vmem:[#allocation2 + $0x1c7] sm:$0xff]
    %v3988 = vld [vmem:[#allocation2 + $0x1cf] sm:$0xff]
    %v3989 = vld [vmem:[#allocation2 + $0x1d7] sm:$0xff]
    %v3990 = vld [vmem:[#allocation2 + $0x1df] sm:$0xff]
    %v3991 = vld [vmem:[#allocation2 + $0x1e7] sm:$0xff]
    %v3992 = vld [vmem:[#allocation2 + $0x1ef] sm:$0xff]
    %v3993 = vld [vmem:[#allocation2 + $0x1f7] sm:$0xff]
    %v3994 = vld [vmem:[#allocation2 + $0x1ff] sm:$0xff]
    %v3995 = vld [vmem:[#allocation2 + $0x207] sm:$0xff]
    %v3996 = vld [vmem:[#allocation2 + $0x20f] sm:$0xff]
    %v3997 = vld [vmem:[#allocation2 + $0x217] sm:$0xff]
    %v3998 = vld [vmem:[#allocation2 + $0x21f] sm:$0xff]
    %v3999 = vld [vmem:[#allocation2 + $0x227] sm:$0xff]
    %v4000 = vld [vmem:[#allocation2 + $0x22f] sm:$0xff]
    %v4001 = vld [vmem:[#allocation2 + $0x237] sm:$0xff]
    %v4002 = vld [vmem:[#allocation2 + $0x23f] sm:$0xff]
    %v4003 = vld [vmem:[#allocation2 + $0x247] sm:$0xff]
    %v4004 = vld [vmem:[#allocation2 + $0x24f] sm:$0xff]
    %v4005 = vld [vmem:[#allocation2 + $0x257] sm:$0xff]
    %v4006 = vld [vmem:[#allocation2 + $0x25f] sm:$0xff]
    %v4007 = vld [vmem:[#allocation2 + $0x267] sm:$0xff]
    %v4008 = vld [vmem:[#allocation2 + $0x26f] sm:$0xff]
    %v4009 = vld [vmem:[#allocation2 + $0x277] sm:$0xff]
    %v4010 = vld [vmem:[#allocation2 + $0x27f] sm:$0xff]
    %v4011 = vld [vmem:[#allocation2 + $0x287] sm:$0xff]
    %s4012 = scalar_lea.vmem %s3, 1296
    %v4013 = vld [vmem:[%s4012] sm:$0xff]
    %v4014 = vld [vmem:[%s4012 + $0x8] sm:$0xff]
    %v4015 = vld [vmem:[%s4012 + $0x10] sm:$0xff]
    %v4016 = vld [vmem:[%s4012 + $0x18] sm:$0xff]
    %v4017 = vld [vmem:[%s4012 + $0x20] sm:$0xff]
    %v4018 = vld [vmem:[%s4012 + $0x28] sm:$0xff]
    %v4019 = vld [vmem:[%s4012 + $0x30] sm:$0xff]
    %v4020 = vld [vmem:[%s4012 + $0x38] sm:$0xff]
    %v4021 = vld [vmem:[%s4012 + $0x40] sm:$0xff]
    %v4022 = vld [vmem:[%s4012 + $0x48] sm:$0xff]
    %v4023 = vld [vmem:[%s4012 + $0x50] sm:$0xff]
    %v4024 = vld [vmem:[%s4012 + $0x58] sm:$0xff]
    %v4025 = vld [vmem:[%s4012 + $0x60] sm:$0xff]
    %v4026 = vld [vmem:[%s4012 + $0x68] sm:$0xff]
    %v4027 = vld [vmem:[%s4012 + $0x70] sm:$0xff]
    %v4028 = vld [vmem:[%s4012 + $0x78] sm:$0xff]
    %v4029 = vld [vmem:[%s4012 + $0x80] sm:$0xff]
    %v4030 = vld [vmem:[%s4012 + $0x88] sm:$0xff]
    %v4031 = vld [vmem:[%s4012 + $0x90] sm:$0xff]
    %v4032 = vld [vmem:[%s4012 + $0x98] sm:$0xff]
    %v4033 = vld [vmem:[%s4012 + $0xa0] sm:$0xff]
    %v4034 = vld [vmem:[%s4012 + $0xa8] sm:$0xff]
    %v4035 = vld [vmem:[%s4012 + $0xb0] sm:$0xff]
    %v4036 = vld [vmem:[%s4012 + $0xb8] sm:$0xff]
    %v4037 = vld [vmem:[%s4012 + $0xc0] sm:$0xff]
    %v4038 = vld [vmem:[%s4012 + $0xc8] sm:$0xff]
    %v4039 = vld [vmem:[%s4012 + $0xd0] sm:$0xff]
    %v4040 = vld [vmem:[%s4012 + $0xd8] sm:$0xff]
    %v4041 = vld [vmem:[%s4012 + $0xe0] sm:$0xff]
    %v4042 = vld [vmem:[%s4012 + $0xe8] sm:$0xff]
    %v4043 = vld [vmem:[%s4012 + $0xf0] sm:$0xff]
    %v4044 = vld [vmem:[%s4012 + $0xf8] sm:$0xff]
    %v4045 = vld [vmem:[%s4012 + $0x100] sm:$0xff]
    %v4046 = vld [vmem:[%s4012 + $0x108] sm:$0xff]
    %v4047 = vld [vmem:[%s4012 + $0x110] sm:$0xff]
    %v4048 = vld [vmem:[%s4012 + $0x118] sm:$0xff]
    %v4049 = vld [vmem:[%s4012 + $0x120] sm:$0xff]
    %v4050 = vld [vmem:[%s4012 + $0x128] sm:$0xff]
    %v4051 = vld [vmem:[%s4012 + $0x130] sm:$0xff]
    %v4052 = vld [vmem:[%s4012 + $0x138] sm:$0xff]
    %v4053 = vld [vmem:[%s4012 + $0x140] sm:$0xff]
    %v4054 = vld [vmem:[%s4012 + $0x148] sm:$0xff]
    %v4055 = vld [vmem:[%s4012 + $0x150] sm:$0xff]
    %v4056 = vld [vmem:[%s4012 + $0x158] sm:$0xff]
    %v4057 = vld [vmem:[%s4012 + $0x160] sm:$0xff]
    %v4058 = vld [vmem:[%s4012 + $0x168] sm:$0xff]
    %v4059 = vld [vmem:[%s4012 + $0x170] sm:$0xff]
    %v4060 = vld [vmem:[%s4012 + $0x178] sm:$0xff]
    %v4061 = vld [vmem:[%s4012 + $0x180] sm:$0xff]
    %v4062 = vld [vmem:[%s4012 + $0x188] sm:$0xff]
    %v4063 = vld [vmem:[%s4012 + $0x190] sm:$0xff]
    %v4064 = vld [vmem:[%s4012 + $0x198] sm:$0xff]
    %v4065 = vld [vmem:[%s4012 + $0x1a0] sm:$0xff]
    %v4066 = vld [vmem:[%s4012 + $0x1a8] sm:$0xff]
    %v4067 = vld [vmem:[%s4012 + $0x1b0] sm:$0xff]
    %v4068 = vld [vmem:[%s4012 + $0x1b8] sm:$0xff]
    %v4069 = vld [vmem:[%s4012 + $0x1c0] sm:$0xff]
    %v4070 = vld [vmem:[%s4012 + $0x1c8] sm:$0xff]
    %v4071 = vld [vmem:[%s4012 + $0x1d0] sm:$0xff]
    %v4072 = vld [vmem:[%s4012 + $0x1d8] sm:$0xff]
    %v4073 = vld [vmem:[%s4012 + $0x1e0] sm:$0xff]
    %v4074 = vld [vmem:[%s4012 + $0x1e8] sm:$0xff]
    %v4075 = vld [vmem:[%s4012 + $0x1f0] sm:$0xff]
    %v4076 = vld [vmem:[%s4012 + $0x1f8] sm:$0xff]
    %v4077 = vld [vmem:[%s4012 + $0x200] sm:$0xff]
    %v4078 = vld [vmem:[%s4012 + $0x208] sm:$0xff]
    %v4079 = vld [vmem:[%s4012 + $0x210] sm:$0xff]
    %v4080 = vld [vmem:[%s4012 + $0x218] sm:$0xff]
    %v4081 = vld [vmem:[%s4012 + $0x220] sm:$0xff]
    %v4082 = vld [vmem:[%s4012 + $0x228] sm:$0xff]
    %v4083 = vld [vmem:[%s4012 + $0x230] sm:$0xff]
    %v4084 = vld [vmem:[%s4012 + $0x238] sm:$0xff]
    %v4085 = vld [vmem:[%s4012 + $0x240] sm:$0xff]
    %v4086 = vld [vmem:[%s4012 + $0x248] sm:$0xff]
    %v4087 = vld [vmem:[%s4012 + $0x250] sm:$0xff]
    %v4088 = vld [vmem:[%s4012 + $0x258] sm:$0xff]
    %v4089 = vld [vmem:[%s4012 + $0x260] sm:$0xff]
    %v4090 = vld [vmem:[%s4012 + $0x268] sm:$0xff]
    %v4091 = vld [vmem:[%s4012 + $0x270] sm:$0xff]
    %v4092 = vld [vmem:[%s4012 + $0x278] sm:$0xff]
    %v4093 = vld [vmem:[%s4012 + $0x280] sm:$0xff]
    %4095 = vset.pattern.permute.xlu0 0
    %4096 = vperm.xlu0 %4095, %v4013
    %v4097 = vpop.permute.xlu0 %4096
    %4100 = vset.pattern.permute.xlu0 0
    %4101 = vperm.xlu0 %4100, %v4014
    %v4102 = vpop.permute.xlu0 %4101
    %4105 = vset.pattern.permute.xlu0 0
    %4106 = vperm.xlu0 %4105, %v4015
    %v4107 = vpop.permute.xlu0 %4106
    %4110 = vset.pattern.permute.xlu0 0
    %4111 = vperm.xlu0 %4110, %v4016
    %v4112 = vpop.permute.xlu0 %4111
    %4115 = vset.pattern.permute.xlu0 0
    %4116 = vperm.xlu0 %4115, %v4017
    %v4117 = vpop.permute.xlu0 %4116
    %4120 = vset.pattern.permute.xlu0 0
    %4121 = vperm.xlu0 %4120, %v4018
    %v4122 = vpop.permute.xlu0 %4121
    %4125 = vset.pattern.permute.xlu0 0
    %4126 = vperm.xlu0 %4125, %v4019
    %v4127 = vpop.permute.xlu0 %4126
    %4130 = vset.pattern.permute.xlu0 0
    %4131 = vperm.xlu0 %4130, %v4020
    %v4132 = vpop.permute.xlu0 %4131
    %4135 = vset.pattern.permute.xlu0 0
    %4136 = vperm.xlu0 %4135, %v4021
    %v4137 = vpop.permute.xlu0 %4136
    %4140 = vset.pattern.permute.xlu0 0
    %4141 = vperm.xlu0 %4140, %v4022
    %v4142 = vpop.permute.xlu0 %4141
    %4145 = vset.pattern.permute.xlu0 0
    %4146 = vperm.xlu0 %4145, %v4023
    %v4147 = vpop.permute.xlu0 %4146
    %4150 = vset.pattern.permute.xlu0 0
    %4151 = vperm.xlu0 %4150, %v4024
    %v4152 = vpop.permute.xlu0 %4151
    %4155 = vset.pattern.permute.xlu0 0
    %4156 = vperm.xlu0 %4155, %v4025
    %v4157 = vpop.permute.xlu0 %4156
    %4160 = vset.pattern.permute.xlu0 0
    %4161 = vperm.xlu0 %4160, %v4026
    %v4162 = vpop.permute.xlu0 %4161
    %4165 = vset.pattern.permute.xlu0 0
    %4166 = vperm.xlu0 %4165, %v4027
    %v4167 = vpop.permute.xlu0 %4166
    %4170 = vset.pattern.permute.xlu0 0
    %4171 = vperm.xlu0 %4170, %v4028
    %v4172 = vpop.permute.xlu0 %4171
    %4175 = vset.pattern.permute.xlu0 0
    %4176 = vperm.xlu0 %4175, %v4029
    %v4177 = vpop.permute.xlu0 %4176
    %4180 = vset.pattern.permute.xlu0 0
    %4181 = vperm.xlu0 %4180, %v4030
    %v4182 = vpop.permute.xlu0 %4181
    %4185 = vset.pattern.permute.xlu0 0
    %4186 = vperm.xlu0 %4185, %v4031
    %v4187 = vpop.permute.xlu0 %4186
    %4190 = vset.pattern.permute.xlu0 0
    %4191 = vperm.xlu0 %4190, %v4032
    %v4192 = vpop.permute.xlu0 %4191
    %4195 = vset.pattern.permute.xlu0 0
    %4196 = vperm.xlu0 %4195, %v4033
    %v4197 = vpop.permute.xlu0 %4196
    %4200 = vset.pattern.permute.xlu0 0
    %4201 = vperm.xlu0 %4200, %v4034
    %v4202 = vpop.permute.xlu0 %4201
    %4205 = vset.pattern.permute.xlu0 0
    %4206 = vperm.xlu0 %4205, %v4035
    %v4207 = vpop.permute.xlu0 %4206
    %4210 = vset.pattern.permute.xlu0 0
    %4211 = vperm.xlu0 %4210, %v4036
    %v4212 = vpop.permute.xlu0 %4211
    %4215 = vset.pattern.permute.xlu0 0
    %4216 = vperm.xlu0 %4215, %v4037
    %v4217 = vpop.permute.xlu0 %4216
    %4220 = vset.pattern.permute.xlu0 0
    %4221 = vperm.xlu0 %4220, %v4038
    %v4222 = vpop.permute.xlu0 %4221
    %4225 = vset.pattern.permute.xlu0 0
    %4226 = vperm.xlu0 %4225, %v4039
    %v4227 = vpop.permute.xlu0 %4226
    %4230 = vset.pattern.permute.xlu0 0
    %4231 = vperm.xlu0 %4230, %v4040
    %v4232 = vpop.permute.xlu0 %4231
    %4235 = vset.pattern.permute.xlu0 0
    %4236 = vperm.xlu0 %4235, %v4041
    %v4237 = vpop.permute.xlu0 %4236
    %4240 = vset.pattern.permute.xlu0 0
    %4241 = vperm.xlu0 %4240, %v4042
    %v4242 = vpop.permute.xlu0 %4241
    %4245 = vset.pattern.permute.xlu0 0
    %4246 = vperm.xlu0 %4245, %v4043
    %v4247 = vpop.permute.xlu0 %4246
    %4250 = vset.pattern.permute.xlu0 0
    %4251 = vperm.xlu0 %4250, %v4044
    %v4252 = vpop.permute.xlu0 %4251
    %4255 = vset.pattern.permute.xlu0 0
    %4256 = vperm.xlu0 %4255, %v4045
    %v4257 = vpop.permute.xlu0 %4256
    %4260 = vset.pattern.permute.xlu0 0
    %4261 = vperm.xlu0 %4260, %v4046
    %v4262 = vpop.permute.xlu0 %4261
    %4265 = vset.pattern.permute.xlu0 0
    %4266 = vperm.xlu0 %4265, %v4047
    %v4267 = vpop.permute.xlu0 %4266
    %4270 = vset.pattern.permute.xlu0 0
    %4271 = vperm.xlu0 %4270, %v4048
    %v4272 = vpop.permute.xlu0 %4271
    %4275 = vset.pattern.permute.xlu0 0
    %4276 = vperm.xlu0 %4275, %v4049
    %v4277 = vpop.permute.xlu0 %4276
    %4280 = vset.pattern.permute.xlu0 0
    %4281 = vperm.xlu0 %4280, %v4050
    %v4282 = vpop.permute.xlu0 %4281
    %4285 = vset.pattern.permute.xlu0 0
    %4286 = vperm.xlu0 %4285, %v4051
    %v4287 = vpop.permute.xlu0 %4286
    %4290 = vset.pattern.permute.xlu0 0
    %4291 = vperm.xlu0 %4290, %v4052
    %v4292 = vpop.permute.xlu0 %4291
    %4295 = vset.pattern.permute.xlu0 0
    %4296 = vperm.xlu0 %4295, %v4053
    %v4297 = vpop.permute.xlu0 %4296
    %4300 = vset.pattern.permute.xlu0 0
    %4301 = vperm.xlu0 %4300, %v4054
    %v4302 = vpop.permute.xlu0 %4301
    %4305 = vset.pattern.permute.xlu0 0
    %4306 = vperm.xlu0 %4305, %v4055
    %v4307 = vpop.permute.xlu0 %4306
    %4310 = vset.pattern.permute.xlu0 0
    %4311 = vperm.xlu0 %4310, %v4056
    %v4312 = vpop.permute.xlu0 %4311
    %4315 = vset.pattern.permute.xlu0 0
    %4316 = vperm.xlu0 %4315, %v4057
    %v4317 = vpop.permute.xlu0 %4316
    %4320 = vset.pattern.permute.xlu0 0
    %4321 = vperm.xlu0 %4320, %v4058
    %v4322 = vpop.permute.xlu0 %4321
    %4325 = vset.pattern.permute.xlu0 0
    %4326 = vperm.xlu0 %4325, %v4059
    %v4327 = vpop.permute.xlu0 %4326
    %4330 = vset.pattern.permute.xlu0 0
    %4331 = vperm.xlu0 %4330, %v4060
    %v4332 = vpop.permute.xlu0 %4331
    %4335 = vset.pattern.permute.xlu0 0
    %4336 = vperm.xlu0 %4335, %v4061
    %v4337 = vpop.permute.xlu0 %4336
    %4340 = vset.pattern.permute.xlu0 0
    %4341 = vperm.xlu0 %4340, %v4062
    %v4342 = vpop.permute.xlu0 %4341
    %4345 = vset.pattern.permute.xlu0 0
    %4346 = vperm.xlu0 %4345, %v4063
    %v4347 = vpop.permute.xlu0 %4346
    %4350 = vset.pattern.permute.xlu0 0
    %4351 = vperm.xlu0 %4350, %v4064
    %v4352 = vpop.permute.xlu0 %4351
    %4355 = vset.pattern.permute.xlu0 0
    %4356 = vperm.xlu0 %4355, %v4065
    %v4357 = vpop.permute.xlu0 %4356
    %4360 = vset.pattern.permute.xlu0 0
    %4361 = vperm.xlu0 %4360, %v4066
    %v4362 = vpop.permute.xlu0 %4361
    %4365 = vset.pattern.permute.xlu0 0
    %4366 = vperm.xlu0 %4365, %v4067
    %v4367 = vpop.permute.xlu0 %4366
    %4370 = vset.pattern.permute.xlu0 0
    %4371 = vperm.xlu0 %4370, %v4068
    %v4372 = vpop.permute.xlu0 %4371
    %4375 = vset.pattern.permute.xlu0 0
    %4376 = vperm.xlu0 %4375, %v4069
    %v4377 = vpop.permute.xlu0 %4376
    %4380 = vset.pattern.permute.xlu0 0
    %4381 = vperm.xlu0 %4380, %v4070
    %v4382 = vpop.permute.xlu0 %4381
    %4385 = vset.pattern.permute.xlu0 0
    %4386 = vperm.xlu0 %4385, %v4071
    %v4387 = vpop.permute.xlu0 %4386
    %4390 = vset.pattern.permute.xlu0 0
    %4391 = vperm.xlu0 %4390, %v4072
    %v4392 = vpop.permute.xlu0 %4391
    %4395 = vset.pattern.permute.xlu0 0
    %4396 = vperm.xlu0 %4395, %v4073
    %v4397 = vpop.permute.xlu0 %4396
    %4400 = vset.pattern.permute.xlu0 0
    %4401 = vperm.xlu0 %4400, %v4074
    %v4402 = vpop.permute.xlu0 %4401
    %4405 = vset.pattern.permute.xlu0 0
    %4406 = vperm.xlu0 %4405, %v4075
    %v4407 = vpop.permute.xlu0 %4406
    %4410 = vset.pattern.permute.xlu0 0
    %4411 = vperm.xlu0 %4410, %v4076
    %v4412 = vpop.permute.xlu0 %4411
    %4415 = vset.pattern.permute.xlu0 0
    %4416 = vperm.xlu0 %4415, %v4077
    %v4417 = vpop.permute.xlu0 %4416
    %4420 = vset.pattern.permute.xlu0 0
    %4421 = vperm.xlu0 %4420, %v4078
    %v4422 = vpop.permute.xlu0 %4421
    %4425 = vset.pattern.permute.xlu0 0
    %4426 = vperm.xlu0 %4425, %v4079
    %v4427 = vpop.permute.xlu0 %4426
    %4430 = vset.pattern.permute.xlu0 0
    %4431 = vperm.xlu0 %4430, %v4080
    %v4432 = vpop.permute.xlu0 %4431
    %4435 = vset.pattern.permute.xlu0 0
    %4436 = vperm.xlu0 %4435, %v4081
    %v4437 = vpop.permute.xlu0 %4436
    %4440 = vset.pattern.permute.xlu0 0
    %4441 = vperm.xlu0 %4440, %v4082
    %v4442 = vpop.permute.xlu0 %4441
    %4445 = vset.pattern.permute.xlu0 0
    %4446 = vperm.xlu0 %4445, %v4083
    %v4447 = vpop.permute.xlu0 %4446
    %4450 = vset.pattern.permute.xlu0 0
    %4451 = vperm.xlu0 %4450, %v4084
    %v4452 = vpop.permute.xlu0 %4451
    %4455 = vset.pattern.permute.xlu0 0
    %4456 = vperm.xlu0 %4455, %v4085
    %v4457 = vpop.permute.xlu0 %4456
    %4460 = vset.pattern.permute.xlu0 0
    %4461 = vperm.xlu0 %4460, %v4086
    %v4462 = vpop.permute.xlu0 %4461
    %4465 = vset.pattern.permute.xlu0 0
    %4466 = vperm.xlu0 %4465, %v4087
    %v4467 = vpop.permute.xlu0 %4466
    %4470 = vset.pattern.permute.xlu0 0
    %4471 = vperm.xlu0 %4470, %v4088
    %v4472 = vpop.permute.xlu0 %4471
    %4475 = vset.pattern.permute.xlu0 0
    %4476 = vperm.xlu0 %4475, %v4089
    %v4477 = vpop.permute.xlu0 %4476
    %4480 = vset.pattern.permute.xlu0 0
    %4481 = vperm.xlu0 %4480, %v4090
    %v4482 = vpop.permute.xlu0 %4481
    %4485 = vset.pattern.permute.xlu0 0
    %4486 = vperm.xlu0 %4485, %v4091
    %v4487 = vpop.permute.xlu0 %4486
    %4490 = vset.pattern.permute.xlu0 0
    %4491 = vperm.xlu0 %4490, %v4092
    %v4492 = vpop.permute.xlu0 %4491
    %4495 = vset.pattern.permute.xlu0 0
    %4496 = vperm.xlu0 %4495, %v4093
    %v4497 = vpop.permute.xlu0 %4496
    %v4499 = vmul.f32 %v3931, %v4097
    %v4500 = vmul.f32 %v3932, %v4102
    %v4501 = vmul.f32 %v3933, %v4107
    %v4502 = vmul.f32 %v3934, %v4112
    %v4503 = vmul.f32 %v3935, %v4117
    %v4504 = vmul.f32 %v3936, %v4122
    %v4505 = vmul.f32 %v3937, %v4127
    %v4506 = vmul.f32 %v3938, %v4132
    %v4507 = vmul.f32 %v3939, %v4137
    %v4508 = vmul.f32 %v3940, %v4142
    %v4509 = vmul.f32 %v3941, %v4147
    %v4510 = vmul.f32 %v3942, %v4152
    %v4511 = vmul.f32 %v3943, %v4157
    %v4512 = vmul.f32 %v3944, %v4162
    %v4513 = vmul.f32 %v3945, %v4167
    %v4514 = vmul.f32 %v3946, %v4172
    %v4515 = vmul.f32 %v3947, %v4177
    %v4516 = vmul.f32 %v3948, %v4182
    %v4517 = vmul.f32 %v3949, %v4187
    %v4518 = vmul.f32 %v3950, %v4192
    %v4519 = vmul.f32 %v3951, %v4197
    %v4520 = vmul.f32 %v3952, %v4202
    %v4521 = vmul.f32 %v3953, %v4207
    %v4522 = vmul.f32 %v3954, %v4212
    %v4523 = vmul.f32 %v3955, %v4217
    %v4524 = vmul.f32 %v3956, %v4222
    %v4525 = vmul.f32 %v3957, %v4227
    %v4526 = vmul.f32 %v3958, %v4232
    %v4527 = vmul.f32 %v3959, %v4237
    %v4528 = vmul.f32 %v3960, %v4242
    %v4529 = vmul.f32 %v3961, %v4247
    %v4530 = vmul.f32 %v3962, %v4252
    %v4531 = vmul.f32 %v3963, %v4257
    %v4532 = vmul.f32 %v3964, %v4262
    %v4533 = vmul.f32 %v3965, %v4267
    %v4534 = vmul.f32 %v3966, %v4272
    %v4535 = vmul.f32 %v3967, %v4277
    %v4536 = vmul.f32 %v3968, %v4282
    %v4537 = vmul.f32 %v3969, %v4287
    %v4538 = vmul.f32 %v3970, %v4292
    %v4539 = vmul.f32 %v3971, %v4297
    %v4540 = vmul.f32 %v3972, %v4302
    %v4541 = vmul.f32 %v3973, %v4307
    %v4542 = vmul.f32 %v3974, %v4312
    %v4543 = vmul.f32 %v3975, %v4317
    %v4544 = vmul.f32 %v3976, %v4322
    %v4545 = vmul.f32 %v3977, %v4327
    %v4546 = vmul.f32 %v3978, %v4332
    %v4547 = vmul.f32 %v3979, %v4337
    %v4548 = vmul.f32 %v3980, %v4342
    %v4549 = vmul.f32 %v3981, %v4347
    %v4550 = vmul.f32 %v3982, %v4352
    %v4551 = vmul.f32 %v3983, %v4357
    %v4552 = vmul.f32 %v3984, %v4362
    %v4553 = vmul.f32 %v3985, %v4367
    %v4554 = vmul.f32 %v3986, %v4372
    %v4555 = vmul.f32 %v3987, %v4377
    %v4556 = vmul.f32 %v3988, %v4382
    %v4557 = vmul.f32 %v3989, %v4387
    %v4558 = vmul.f32 %v3990, %v4392
    %v4559 = vmul.f32 %v3991, %v4397
    %v4560 = vmul.f32 %v3992, %v4402
    %v4561 = vmul.f32 %v3993, %v4407
    %v4562 = vmul.f32 %v3994, %v4412
    %v4563 = vmul.f32 %v3995, %v4417
    %v4564 = vmul.f32 %v3996, %v4422
    %v4565 = vmul.f32 %v3997, %v4427
    %v4566 = vmul.f32 %v3998, %v4432
    %v4567 = vmul.f32 %v3999, %v4437
    %v4568 = vmul.f32 %v4000, %v4442
    %v4569 = vmul.f32 %v4001, %v4447
    %v4570 = vmul.f32 %v4002, %v4452
    %v4571 = vmul.f32 %v4003, %v4457
    %v4572 = vmul.f32 %v4004, %v4462
    %v4573 = vmul.f32 %v4005, %v4467
    %v4574 = vmul.f32 %v4006, %v4472
    %v4575 = vmul.f32 %v4007, %v4477
    %v4576 = vmul.f32 %v4008, %v4482
    %v4577 = vmul.f32 %v4009, %v4487
    %v4578 = vmul.f32 %v4010, %v4492
    %v4579 = vmul.f32 %v4011, %v4497
    %4661 = vrot.lane.b32.xlu0 %v4499, 64
    %v4662 = vpop.permute.xlu0 %4661
    %4663 = vrot.lane.b32.xlu0 %v4500, 64
    %v4664 = vpop.permute.xlu0 %4663
    %4665 = vrot.lane.b32.xlu0 %v4501, 64
    %v4666 = vpop.permute.xlu0 %4665
    %4667 = vrot.lane.b32.xlu0 %v4502, 64
    %v4668 = vpop.permute.xlu0 %4667
    %4669 = vrot.lane.b32.xlu0 %v4503, 64
    %v4670 = vpop.permute.xlu0 %4669
    %4671 = vrot.lane.b32.xlu0 %v4504, 64
    %v4672 = vpop.permute.xlu0 %4671
    %4673 = vrot.lane.b32.xlu0 %v4505, 64
    %v4674 = vpop.permute.xlu0 %4673
    %4675 = vrot.lane.b32.xlu0 %v4506, 64
    %v4676 = vpop.permute.xlu0 %4675
    %4677 = vrot.lane.b32.xlu0 %v4507, 64
    %v4678 = vpop.permute.xlu0 %4677
    %4679 = vrot.lane.b32.xlu0 %v4508, 64
    %v4680 = vpop.permute.xlu0 %4679
    %4681 = vrot.lane.b32.xlu0 %v4509, 64
    %v4682 = vpop.permute.xlu0 %4681
    %4683 = vrot.lane.b32.xlu0 %v4510, 64
    %v4684 = vpop.permute.xlu0 %4683
    %4685 = vrot.lane.b32.xlu0 %v4511, 64
    %v4686 = vpop.permute.xlu0 %4685
    %4687 = vrot.lane.b32.xlu0 %v4512, 64
    %v4688 = vpop.permute.xlu0 %4687
    %4689 = vrot.lane.b32.xlu0 %v4513, 64
    %v4690 = vpop.permute.xlu0 %4689
    %4691 = vrot.lane.b32.xlu0 %v4514, 64
    %v4692 = vpop.permute.xlu0 %4691
    %4693 = vrot.lane.b32.xlu0 %v4515, 64
    %v4694 = vpop.permute.xlu0 %4693
    %4695 = vrot.lane.b32.xlu0 %v4516, 64
    %v4696 = vpop.permute.xlu0 %4695
    %4697 = vrot.lane.b32.xlu0 %v4517, 64
    %v4698 = vpop.permute.xlu0 %4697
    %4699 = vrot.lane.b32.xlu0 %v4518, 64
    %v4700 = vpop.permute.xlu0 %4699
    %4701 = vrot.lane.b32.xlu0 %v4519, 64
    %v4702 = vpop.permute.xlu0 %4701
    %4703 = vrot.lane.b32.xlu0 %v4520, 64
    %v4704 = vpop.permute.xlu0 %4703
    %4705 = vrot.lane.b32.xlu0 %v4521, 64
    %v4706 = vpop.permute.xlu0 %4705
    %4707 = vrot.lane.b32.xlu0 %v4522, 64
    %v4708 = vpop.permute.xlu0 %4707
    %4709 = vrot.lane.b32.xlu0 %v4523, 64
    %v4710 = vpop.permute.xlu0 %4709
    %4711 = vrot.lane.b32.xlu0 %v4524, 64
    %v4712 = vpop.permute.xlu0 %4711
    %4713 = vrot.lane.b32.xlu0 %v4525, 64
    %v4714 = vpop.permute.xlu0 %4713
    %4715 = vrot.lane.b32.xlu0 %v4526, 64
    %v4716 = vpop.permute.xlu0 %4715
    %4717 = vrot.lane.b32.xlu0 %v4527, 64
    %v4718 = vpop.permute.xlu0 %4717
    %4719 = vrot.lane.b32.xlu0 %v4528, 64
    %v4720 = vpop.permute.xlu0 %4719
    %4721 = vrot.lane.b32.xlu0 %v4529, 64
    %v4722 = vpop.permute.xlu0 %4721
    %4723 = vrot.lane.b32.xlu0 %v4530, 64
    %v4724 = vpop.permute.xlu0 %4723
    %4725 = vrot.lane.b32.xlu0 %v4531, 64
    %v4726 = vpop.permute.xlu0 %4725
    %4727 = vrot.lane.b32.xlu0 %v4532, 64
    %v4728 = vpop.permute.xlu0 %4727
    %4729 = vrot.lane.b32.xlu0 %v4533, 64
    %v4730 = vpop.permute.xlu0 %4729
    %4731 = vrot.lane.b32.xlu0 %v4534, 64
    %v4732 = vpop.permute.xlu0 %4731
    %4733 = vrot.lane.b32.xlu0 %v4535, 64
    %v4734 = vpop.permute.xlu0 %4733
    %4735 = vrot.lane.b32.xlu0 %v4536, 64
    %v4736 = vpop.permute.xlu0 %4735
    %4737 = vrot.lane.b32.xlu0 %v4537, 64
    %v4738 = vpop.permute.xlu0 %4737
    %4739 = vrot.lane.b32.xlu0 %v4538, 64
    %v4740 = vpop.permute.xlu0 %4739
    %4741 = vrot.lane.b32.xlu0 %v4539, 64
    %v4742 = vpop.permute.xlu0 %4741
    %4743 = vrot.lane.b32.xlu0 %v4540, 64
    %v4744 = vpop.permute.xlu0 %4743
    %4745 = vrot.lane.b32.xlu0 %v4541, 64
    %v4746 = vpop.permute.xlu0 %4745
    %4747 = vrot.lane.b32.xlu0 %v4542, 64
    %v4748 = vpop.permute.xlu0 %4747
    %4749 = vrot.lane.b32.xlu0 %v4543, 64
    %v4750 = vpop.permute.xlu0 %4749
    %4751 = vrot.lane.b32.xlu0 %v4544, 64
    %v4752 = vpop.permute.xlu0 %4751
    %4753 = vrot.lane.b32.xlu0 %v4545, 64
    %v4754 = vpop.permute.xlu0 %4753
    %4755 = vrot.lane.b32.xlu0 %v4546, 64
    %v4756 = vpop.permute.xlu0 %4755
    %4757 = vrot.lane.b32.xlu0 %v4547, 64
    %v4758 = vpop.permute.xlu0 %4757
    %4759 = vrot.lane.b32.xlu0 %v4548, 64
    %v4760 = vpop.permute.xlu0 %4759
    %4761 = vrot.lane.b32.xlu0 %v4549, 64
    %v4762 = vpop.permute.xlu0 %4761
    %4763 = vrot.lane.b32.xlu0 %v4550, 64
    %v4764 = vpop.permute.xlu0 %4763
    %4765 = vrot.lane.b32.xlu0 %v4551, 64
    %v4766 = vpop.permute.xlu0 %4765
    %4767 = vrot.lane.b32.xlu0 %v4552, 64
    %v4768 = vpop.permute.xlu0 %4767
    %4769 = vrot.lane.b32.xlu0 %v4553, 64
    %v4770 = vpop.permute.xlu0 %4769
    %4771 = vrot.lane.b32.xlu0 %v4554, 64
    %v4772 = vpop.permute.xlu0 %4771
    %4773 = vrot.lane.b32.xlu0 %v4555, 64
    %v4774 = vpop.permute.xlu0 %4773
    %4775 = vrot.lane.b32.xlu0 %v4556, 64
    %v4776 = vpop.permute.xlu0 %4775
    %4777 = vrot.lane.b32.xlu0 %v4557, 64
    %v4778 = vpop.permute.xlu0 %4777
    %4779 = vrot.lane.b32.xlu0 %v4558, 64
    %v4780 = vpop.permute.xlu0 %4779
    %4781 = vrot.lane.b32.xlu0 %v4559, 64
    %v4782 = vpop.permute.xlu0 %4781
    %4783 = vrot.lane.b32.xlu0 %v4560, 64
    %v4784 = vpop.permute.xlu0 %4783
    %4785 = vrot.lane.b32.xlu0 %v4561, 64
    %v4786 = vpop.permute.xlu0 %4785
    %4787 = vrot.lane.b32.xlu0 %v4562, 64
    %v4788 = vpop.permute.xlu0 %4787
    %4789 = vrot.lane.b32.xlu0 %v4563, 64
    %v4790 = vpop.permute.xlu0 %4789
    %4791 = vrot.lane.b32.xlu0 %v4564, 64
    %v4792 = vpop.permute.xlu0 %4791
    %4793 = vrot.lane.b32.xlu0 %v4565, 64
    %v4794 = vpop.permute.xlu0 %4793
    %4795 = vrot.lane.b32.xlu0 %v4566, 64
    %v4796 = vpop.permute.xlu0 %4795
    %4797 = vrot.lane.b32.xlu0 %v4567, 64
    %v4798 = vpop.permute.xlu0 %4797
    %4799 = vrot.lane.b32.xlu0 %v4568, 64
    %v4800 = vpop.permute.xlu0 %4799
    %4801 = vrot.lane.b32.xlu0 %v4569, 64
    %v4802 = vpop.permute.xlu0 %4801
    %4803 = vrot.lane.b32.xlu0 %v4570, 64
    %v4804 = vpop.permute.xlu0 %4803
    %4805 = vrot.lane.b32.xlu0 %v4571, 64
    %v4806 = vpop.permute.xlu0 %4805
    %4807 = vrot.lane.b32.xlu0 %v4572, 64
    %v4808 = vpop.permute.xlu0 %4807
    %4809 = vrot.lane.b32.xlu0 %v4573, 64
    %v4810 = vpop.permute.xlu0 %4809
    %4811 = vrot.lane.b32.xlu0 %v4574, 64
    %v4812 = vpop.permute.xlu0 %4811
    %4813 = vrot.lane.b32.xlu0 %v4575, 64
    %v4814 = vpop.permute.xlu0 %4813
    %4815 = vrot.lane.b32.xlu0 %v4576, 64
    %v4816 = vpop.permute.xlu0 %4815
    %4817 = vrot.lane.b32.xlu0 %v4577, 64
    %v4818 = vpop.permute.xlu0 %4817
    %4819 = vrot.lane.b32.xlu0 %v4578, 64
    %v4820 = vpop.permute.xlu0 %4819
    %4821 = vrot.lane.b32.xlu0 %v4579, 64
    %v4822 = vpop.permute.xlu0 %4821
    %vm4904 = vcmask 785920
    %4905 = vst.msk [vmem:[#allocation3] sm:$0xff] %vm4904, %v4662
    %4906 = vst.msk [vmem:[#allocation3 + $0x18] sm:$0xff] %vm4904, %v4664
    %4907 = vst.msk [vmem:[#allocation3 + $0x30] sm:$0xff] %vm4904, %v4666
    %4908 = vst.msk [vmem:[#allocation3 + $0x48] sm:$0xff] %vm4904, %v4668
    %4909 = vst.msk [vmem:[#allocation3 + $0x60] sm:$0xff] %vm4904, %v4670
    %4910 = vst.msk [vmem:[#allocation3 + $0x78] sm:$0xff] %vm4904, %v4672
    %4911 = vst.msk [vmem:[#allocation3 + $0x90] sm:$0xff] %vm4904, %v4674
    %4912 = vst.msk [vmem:[#allocation3 + $0xa8] sm:$0xff] %vm4904, %v4676
    %4913 = vst.msk [vmem:[#allocation3 + $0xc0] sm:$0xff] %vm4904, %v4678
    %4914 = vst.msk [vmem:[#allocation3 + $0xd8] sm:$0xff] %vm4904, %v4680
    %4915 = vst.msk [vmem:[#allocation3 + $0xf0] sm:$0xff] %vm4904, %v4682
    %4916 = vst.msk [vmem:[#allocation3 + $0x108] sm:$0xff] %vm4904, %v4684
    %4917 = vst.msk [vmem:[#allocation3 + $0x120] sm:$0xff] %vm4904, %v4686
    %4918 = vst.msk [vmem:[#allocation3 + $0x138] sm:$0xff] %vm4904, %v4688
    %4919 = vst.msk [vmem:[#allocation3 + $0x150] sm:$0xff] %vm4904, %v4690
    %4920 = vst.msk [vmem:[#allocation3 + $0x168] sm:$0xff] %vm4904, %v4692
    %4921 = vst.msk [vmem:[#allocation3 + $0x180] sm:$0xff] %vm4904, %v4694
    %4922 = vst.msk [vmem:[#allocation3 + $0x198] sm:$0xff] %vm4904, %v4696
    %4923 = vst.msk [vmem:[#allocation3 + $0x1b0] sm:$0xff] %vm4904, %v4698
    %4924 = vst.msk [vmem:[#allocation3 + $0x1c8] sm:$0xff] %vm4904, %v4700
    %4925 = vst.msk [vmem:[#allocation3 + $0x1e0] sm:$0xff] %vm4904, %v4702
    %4926 = vst.msk [vmem:[#allocation3 + $0x1f8] sm:$0xff] %vm4904, %v4704
    %4927 = vst.msk [vmem:[#allocation3 + $0x210] sm:$0xff] %vm4904, %v4706
    %4928 = vst.msk [vmem:[#allocation3 + $0x228] sm:$0xff] %vm4904, %v4708
    %4929 = vst.msk [vmem:[#allocation3 + $0x240] sm:$0xff] %vm4904, %v4710
    %4930 = vst.msk [vmem:[#allocation3 + $0x258] sm:$0xff] %vm4904, %v4712
    %4931 = vst.msk [vmem:[#allocation3 + $0x270] sm:$0xff] %vm4904, %v4714
    %4932 = vst.msk [vmem:[#allocation3 + $0x288] sm:$0xff] %vm4904, %v4716
    %4933 = vst.msk [vmem:[#allocation3 + $0x2a0] sm:$0xff] %vm4904, %v4718
    %4934 = vst.msk [vmem:[#allocation3 + $0x2b8] sm:$0xff] %vm4904, %v4720
    %4935 = vst.msk [vmem:[#allocation3 + $0x2d0] sm:$0xff] %vm4904, %v4722
    %4936 = vst.msk [vmem:[#allocation3 + $0x2e8] sm:$0xff] %vm4904, %v4724
    %4937 = vst.msk [vmem:[#allocation3 + $0x300] sm:$0xff] %vm4904, %v4726
    %4938 = vst.msk [vmem:[#allocation3 + $0x318] sm:$0xff] %vm4904, %v4728
    %4939 = vst.msk [vmem:[#allocation3 + $0x330] sm:$0xff] %vm4904, %v4730
    %4940 = vst.msk [vmem:[#allocation3 + $0x348] sm:$0xff] %vm4904, %v4732
    %4941 = vst.msk [vmem:[#allocation3 + $0x360] sm:$0xff] %vm4904, %v4734
    %4942 = vst.msk [vmem:[#allocation3 + $0x378] sm:$0xff] %vm4904, %v4736
    %4943 = vst.msk [vmem:[#allocation3 + $0x390] sm:$0xff] %vm4904, %v4738
    %4944 = vst.msk [vmem:[#allocation3 + $0x3a8] sm:$0xff] %vm4904, %v4740
    %4945 = vst.msk [vmem:[#allocation3 + $0x3c0] sm:$0xff] %vm4904, %v4742
    %4946 = vst.msk [vmem:[#allocation3 + $0x3d8] sm:$0xff] %vm4904, %v4744
    %4947 = vst.msk [vmem:[#allocation3 + $0x3f0] sm:$0xff] %vm4904, %v4746
    %4948 = vst.msk [vmem:[#allocation3 + $0x408] sm:$0xff] %vm4904, %v4748
    %4949 = vst.msk [vmem:[#allocation3 + $0x420] sm:$0xff] %vm4904, %v4750
    %4950 = vst.msk [vmem:[#allocation3 + $0x438] sm:$0xff] %vm4904, %v4752
    %4951 = vst.msk [vmem:[#allocation3 + $0x450] sm:$0xff] %vm4904, %v4754
    %4952 = vst.msk [vmem:[#allocation3 + $0x468] sm:$0xff] %vm4904, %v4756
    %4953 = vst.msk [vmem:[#allocation3 + $0x480] sm:$0xff] %vm4904, %v4758
    %4954 = vst.msk [vmem:[#allocation3 + $0x498] sm:$0xff] %vm4904, %v4760
    %4955 = vst.msk [vmem:[#allocation3 + $0x4b0] sm:$0xff] %vm4904, %v4762
    %4956 = vst.msk [vmem:[#allocation3 + $0x4c8] sm:$0xff] %vm4904, %v4764
    %4957 = vst.msk [vmem:[#allocation3 + $0x4e0] sm:$0xff] %vm4904, %v4766
    %4958 = vst.msk [vmem:[#allocation3 + $0x4f8] sm:$0xff] %vm4904, %v4768
    %4959 = vst.msk [vmem:[#allocation3 + $0x510] sm:$0xff] %vm4904, %v4770
    %4960 = vst.msk [vmem:[#allocation3 + $0x528] sm:$0xff] %vm4904, %v4772
    %4961 = vst.msk [vmem:[#allocation3 + $0x540] sm:$0xff] %vm4904, %v4774
    %4962 = vst.msk [vmem:[#allocation3 + $0x558] sm:$0xff] %vm4904, %v4776
    %4963 = vst.msk [vmem:[#allocation3 + $0x570] sm:$0xff] %vm4904, %v4778
    %4964 = vst.msk [vmem:[#allocation3 + $0x588] sm:$0xff] %vm4904, %v4780
    %4965 = vst.msk [vmem:[#allocation3 + $0x5a0] sm:$0xff] %vm4904, %v4782
    %4966 = vst.msk [vmem:[#allocation3 + $0x5b8] sm:$0xff] %vm4904, %v4784
    %4967 = vst.msk [vmem:[#allocation3 + $0x5d0] sm:$0xff] %vm4904, %v4786
    %4968 = vst.msk [vmem:[#allocation3 + $0x5e8] sm:$0xff] %vm4904, %v4788
    %4969 = vst.msk [vmem:[#allocation3 + $0x600] sm:$0xff] %vm4904, %v4790
    %4970 = vst.msk [vmem:[#allocation3 + $0x618] sm:$0xff] %vm4904, %v4792
    %4971 = vst.msk [vmem:[#allocation3 + $0x630] sm:$0xff] %vm4904, %v4794
    %4972 = vst.msk [vmem:[#allocation3 + $0x648] sm:$0xff] %vm4904, %v4796
    %4973 = vst.msk [vmem:[#allocation3 + $0x660] sm:$0xff] %vm4904, %v4798
    %4974 = vst.msk [vmem:[#allocation3 + $0x678] sm:$0xff] %vm4904, %v4800
    %4975 = vst.msk [vmem:[#allocation3 + $0x690] sm:$0xff] %vm4904, %v4802
    %4976 = vst.msk [vmem:[#allocation3 + $0x6a8] sm:$0xff] %vm4904, %v4804
    %4977 = vst.msk [vmem:[#allocation3 + $0x6c0] sm:$0xff] %vm4904, %v4806
    %4978 = vst.msk [vmem:[#allocation3 + $0x6d8] sm:$0xff] %vm4904, %v4808
    %4979 = vst.msk [vmem:[#allocation3 + $0x6f0] sm:$0xff] %vm4904, %v4810
    %4980 = vst.msk [vmem:[#allocation3 + $0x708] sm:$0xff] %vm4904, %v4812
    %4981 = vst.msk [vmem:[#allocation3 + $0x720] sm:$0xff] %vm4904, %v4814
    %4982 = vst.msk [vmem:[#allocation3 + $0x738] sm:$0xff] %vm4904, %v4816
    %4983 = vst.msk [vmem:[#allocation3 + $0x750] sm:$0xff] %vm4904, %v4818
    %4984 = vst.msk [vmem:[#allocation3 + $0x768] sm:$0xff] %vm4904, %v4820
    %4985 = vst.msk [vmem:[#allocation3 + $0x780] sm:$0xff] %vm4904, %v4822
    %v4986 = vld [vmem:[#allocation2 + $0x17] sm:$0xff]
    %v4987 = vld [vmem:[#allocation2 + $0x1f] sm:$0xff]
    %v4988 = vld [vmem:[#allocation2 + $0x27] sm:$0xff]
    %v4989 = vld [vmem:[#allocation2 + $0x2f] sm:$0xff]
    %v4990 = vld [vmem:[#allocation2 + $0x37] sm:$0xff]
    %v4991 = vld [vmem:[#allocation2 + $0x3f] sm:$0xff]
    %v4992 = vld [vmem:[#allocation2 + $0x47] sm:$0xff]
    %v4993 = vld [vmem:[#allocation2 + $0x4f] sm:$0xff]
    %v4994 = vld [vmem:[#allocation2 + $0x57] sm:$0xff]
    %v4995 = vld [vmem:[#allocation2 + $0x5f] sm:$0xff]
    %v4996 = vld [vmem:[#allocation2 + $0x67] sm:$0xff]
    %v4997 = vld [vmem:[#allocation2 + $0x6f] sm:$0xff]
    %v4998 = vld [vmem:[#allocation2 + $0x77] sm:$0xff]
    %v4999 = vld [vmem:[#allocation2 + $0x7f] sm:$0xff]
    %v5000 = vld [vmem:[#allocation2 + $0x87] sm:$0xff]
    %v5001 = vld [vmem:[#allocation2 + $0x8f] sm:$0xff]
    %v5002 = vld [vmem:[#allocation2 + $0x97] sm:$0xff]
    %v5003 = vld [vmem:[#allocation2 + $0x9f] sm:$0xff]
    %v5004 = vld [vmem:[#allocation2 + $0xa7] sm:$0xff]
    %v5005 = vld [vmem:[#allocation2 + $0xaf] sm:$0xff]
    %v5006 = vld [vmem:[#allocation2 + $0xb7] sm:$0xff]
    %v5007 = vld [vmem:[#allocation2 + $0xbf] sm:$0xff]
    %v5008 = vld [vmem:[#allocation2 + $0xc7] sm:$0xff]
    %v5009 = vld [vmem:[#allocation2 + $0xcf] sm:$0xff]
    %v5010 = vld [vmem:[#allocation2 + $0xd7] sm:$0xff]
    %v5011 = vld [vmem:[#allocation2 + $0xdf] sm:$0xff]
    %v5012 = vld [vmem:[#allocation2 + $0xe7] sm:$0xff]
    %v5013 = vld [vmem:[#allocation2 + $0xef] sm:$0xff]
    %v5014 = vld [vmem:[#allocation2 + $0xf7] sm:$0xff]
    %v5015 = vld [vmem:[#allocation2 + $0xff] sm:$0xff]
    %v5016 = vld [vmem:[#allocation2 + $0x107] sm:$0xff]
    %v5017 = vld [vmem:[#allocation2 + $0x10f] sm:$0xff]
    %v5018 = vld [vmem:[#allocation2 + $0x117] sm:$0xff]
    %v5019 = vld [vmem:[#allocation2 + $0x11f] sm:$0xff]
    %v5020 = vld [vmem:[#allocation2 + $0x127] sm:$0xff]
    %v5021 = vld [vmem:[#allocation2 + $0x12f] sm:$0xff]
    %v5022 = vld [vmem:[#allocation2 + $0x137] sm:$0xff]
    %v5023 = vld [vmem:[#allocation2 + $0x13f] sm:$0xff]
    %v5024 = vld [vmem:[#allocation2 + $0x147] sm:$0xff]
    %v5025 = vld [vmem:[#allocation2 + $0x14f] sm:$0xff]
    %v5026 = vld [vmem:[#allocation2 + $0x157] sm:$0xff]
    %v5027 = vld [vmem:[#allocation2 + $0x15f] sm:$0xff]
    %v5028 = vld [vmem:[#allocation2 + $0x167] sm:$0xff]
    %v5029 = vld [vmem:[#allocation2 + $0x16f] sm:$0xff]
    %v5030 = vld [vmem:[#allocation2 + $0x177] sm:$0xff]
    %v5031 = vld [vmem:[#allocation2 + $0x17f] sm:$0xff]
    %v5032 = vld [vmem:[#allocation2 + $0x187] sm:$0xff]
    %v5033 = vld [vmem:[#allocation2 + $0x18f] sm:$0xff]
    %v5034 = vld [vmem:[#allocation2 + $0x197] sm:$0xff]
    %v5035 = vld [vmem:[#allocation2 + $0x19f] sm:$0xff]
    %v5036 = vld [vmem:[#allocation2 + $0x1a7] sm:$0xff]
    %v5037 = vld [vmem:[#allocation2 + $0x1af] sm:$0xff]
    %v5038 = vld [vmem:[#allocation2 + $0x1b7] sm:$0xff]
    %v5039 = vld [vmem:[#allocation2 + $0x1bf] sm:$0xff]
    %v5040 = vld [vmem:[#allocation2 + $0x1c7] sm:$0xff]
    %v5041 = vld [vmem:[#allocation2 + $0x1cf] sm:$0xff]
    %v5042 = vld [vmem:[#allocation2 + $0x1d7] sm:$0xff]
    %v5043 = vld [vmem:[#allocation2 + $0x1df] sm:$0xff]
    %v5044 = vld [vmem:[#allocation2 + $0x1e7] sm:$0xff]
    %v5045 = vld [vmem:[#allocation2 + $0x1ef] sm:$0xff]
    %v5046 = vld [vmem:[#allocation2 + $0x1f7] sm:$0xff]
    %v5047 = vld [vmem:[#allocation2 + $0x1ff] sm:$0xff]
    %v5048 = vld [vmem:[#allocation2 + $0x207] sm:$0xff]
    %v5049 = vld [vmem:[#allocation2 + $0x20f] sm:$0xff]
    %v5050 = vld [vmem:[#allocation2 + $0x217] sm:$0xff]
    %v5051 = vld [vmem:[#allocation2 + $0x21f] sm:$0xff]
    %v5052 = vld [vmem:[#allocation2 + $0x227] sm:$0xff]
    %v5053 = vld [vmem:[#allocation2 + $0x22f] sm:$0xff]
    %v5054 = vld [vmem:[#allocation2 + $0x237] sm:$0xff]
    %v5055 = vld [vmem:[#allocation2 + $0x23f] sm:$0xff]
    %v5056 = vld [vmem:[#allocation2 + $0x247] sm:$0xff]
    %v5057 = vld [vmem:[#allocation2 + $0x24f] sm:$0xff]
    %v5058 = vld [vmem:[#allocation2 + $0x257] sm:$0xff]
    %v5059 = vld [vmem:[#allocation2 + $0x25f] sm:$0xff]
    %v5060 = vld [vmem:[#allocation2 + $0x267] sm:$0xff]
    %v5061 = vld [vmem:[#allocation2 + $0x26f] sm:$0xff]
    %v5062 = vld [vmem:[#allocation2 + $0x277] sm:$0xff]
    %v5063 = vld [vmem:[#allocation2 + $0x27f] sm:$0xff]
    %v5064 = vld [vmem:[#allocation2 + $0x287] sm:$0xff]
    %v5065 = vld [vmem:[#allocation2 + $0x28f] sm:$0xff]
    %v5066 = vld [vmem:[#allocation2 + $0x297] sm:$0xff]
    %s5067 = scalar_lea.vmem %s3, 1944
    %v5068 = vld [vmem:[%s5067] sm:$0xff]
    %v5069 = vld [vmem:[%s5067 + $0x8] sm:$0xff]
    %v5070 = vld [vmem:[%s5067 + $0x10] sm:$0xff]
    %v5071 = vld [vmem:[%s5067 + $0x18] sm:$0xff]
    %v5072 = vld [vmem:[%s5067 + $0x20] sm:$0xff]
    %v5073 = vld [vmem:[%s5067 + $0x28] sm:$0xff]
    %v5074 = vld [vmem:[%s5067 + $0x30] sm:$0xff]
    %v5075 = vld [vmem:[%s5067 + $0x38] sm:$0xff]
    %v5076 = vld [vmem:[%s5067 + $0x40] sm:$0xff]
    %v5077 = vld [vmem:[%s5067 + $0x48] sm:$0xff]
    %v5078 = vld [vmem:[%s5067 + $0x50] sm:$0xff]
    %v5079 = vld [vmem:[%s5067 + $0x58] sm:$0xff]
    %v5080 = vld [vmem:[%s5067 + $0x60] sm:$0xff]
    %v5081 = vld [vmem:[%s5067 + $0x68] sm:$0xff]
    %v5082 = vld [vmem:[%s5067 + $0x70] sm:$0xff]
    %v5083 = vld [vmem:[%s5067 + $0x78] sm:$0xff]
    %v5084 = vld [vmem:[%s5067 + $0x80] sm:$0xff]
    %v5085 = vld [vmem:[%s5067 + $0x88] sm:$0xff]
    %v5086 = vld [vmem:[%s5067 + $0x90] sm:$0xff]
    %v5087 = vld [vmem:[%s5067 + $0x98] sm:$0xff]
    %v5088 = vld [vmem:[%s5067 + $0xa0] sm:$0xff]
    %v5089 = vld [vmem:[%s5067 + $0xa8] sm:$0xff]
    %v5090 = vld [vmem:[%s5067 + $0xb0] sm:$0xff]
    %v5091 = vld [vmem:[%s5067 + $0xb8] sm:$0xff]
    %v5092 = vld [vmem:[%s5067 + $0xc0] sm:$0xff]
    %v5093 = vld [vmem:[%s5067 + $0xc8] sm:$0xff]
    %v5094 = vld [vmem:[%s5067 + $0xd0] sm:$0xff]
    %v5095 = vld [vmem:[%s5067 + $0xd8] sm:$0xff]
    %v5096 = vld [vmem:[%s5067 + $0xe0] sm:$0xff]
    %v5097 = vld [vmem:[%s5067 + $0xe8] sm:$0xff]
    %v5098 = vld [vmem:[%s5067 + $0xf0] sm:$0xff]
    %v5099 = vld [vmem:[%s5067 + $0xf8] sm:$0xff]
    %v5100 = vld [vmem:[%s5067 + $0x100] sm:$0xff]
    %v5101 = vld [vmem:[%s5067 + $0x108] sm:$0xff]
    %v5102 = vld [vmem:[%s5067 + $0x110] sm:$0xff]
    %v5103 = vld [vmem:[%s5067 + $0x118] sm:$0xff]
    %v5104 = vld [vmem:[%s5067 + $0x120] sm:$0xff]
    %v5105 = vld [vmem:[%s5067 + $0x128] sm:$0xff]
    %v5106 = vld [vmem:[%s5067 + $0x130] sm:$0xff]
    %v5107 = vld [vmem:[%s5067 + $0x138] sm:$0xff]
    %v5108 = vld [vmem:[%s5067 + $0x140] sm:$0xff]
    %v5109 = vld [vmem:[%s5067 + $0x148] sm:$0xff]
    %v5110 = vld [vmem:[%s5067 + $0x150] sm:$0xff]
    %v5111 = vld [vmem:[%s5067 + $0x158] sm:$0xff]
    %v5112 = vld [vmem:[%s5067 + $0x160] sm:$0xff]
    %v5113 = vld [vmem:[%s5067 + $0x168] sm:$0xff]
    %v5114 = vld [vmem:[%s5067 + $0x170] sm:$0xff]
    %v5115 = vld [vmem:[%s5067 + $0x178] sm:$0xff]
    %v5116 = vld [vmem:[%s5067 + $0x180] sm:$0xff]
    %v5117 = vld [vmem:[%s5067 + $0x188] sm:$0xff]
    %v5118 = vld [vmem:[%s5067 + $0x190] sm:$0xff]
    %v5119 = vld [vmem:[%s5067 + $0x198] sm:$0xff]
    %v5120 = vld [vmem:[%s5067 + $0x1a0] sm:$0xff]
    %v5121 = vld [vmem:[%s5067 + $0x1a8] sm:$0xff]
    %v5122 = vld [vmem:[%s5067 + $0x1b0] sm:$0xff]
    %v5123 = vld [vmem:[%s5067 + $0x1b8] sm:$0xff]
    %v5124 = vld [vmem:[%s5067 + $0x1c0] sm:$0xff]
    %v5125 = vld [vmem:[%s5067 + $0x1c8] sm:$0xff]
    %v5126 = vld [vmem:[%s5067 + $0x1d0] sm:$0xff]
    %v5127 = vld [vmem:[%s5067 + $0x1d8] sm:$0xff]
    %v5128 = vld [vmem:[%s5067 + $0x1e0] sm:$0xff]
    %v5129 = vld [vmem:[%s5067 + $0x1e8] sm:$0xff]
    %v5130 = vld [vmem:[%s5067 + $0x1f0] sm:$0xff]
    %v5131 = vld [vmem:[%s5067 + $0x1f8] sm:$0xff]
    %v5132 = vld [vmem:[%s5067 + $0x200] sm:$0xff]
    %v5133 = vld [vmem:[%s5067 + $0x208] sm:$0xff]
    %v5134 = vld [vmem:[%s5067 + $0x210] sm:$0xff]
    %v5135 = vld [vmem:[%s5067 + $0x218] sm:$0xff]
    %v5136 = vld [vmem:[%s5067 + $0x220] sm:$0xff]
    %v5137 = vld [vmem:[%s5067 + $0x228] sm:$0xff]
    %v5138 = vld [vmem:[%s5067 + $0x230] sm:$0xff]
    %v5139 = vld [vmem:[%s5067 + $0x238] sm:$0xff]
    %v5140 = vld [vmem:[%s5067 + $0x240] sm:$0xff]
    %v5141 = vld [vmem:[%s5067 + $0x248] sm:$0xff]
    %v5142 = vld [vmem:[%s5067 + $0x250] sm:$0xff]
    %v5143 = vld [vmem:[%s5067 + $0x258] sm:$0xff]
    %v5144 = vld [vmem:[%s5067 + $0x260] sm:$0xff]
    %v5145 = vld [vmem:[%s5067 + $0x268] sm:$0xff]
    %v5146 = vld [vmem:[%s5067 + $0x270] sm:$0xff]
    %v5147 = vld [vmem:[%s5067 + $0x278] sm:$0xff]
    %v5148 = vld [vmem:[%s5067 + $0x280] sm:$0xff]
    %5150 = vset.pattern.permute.xlu0 0
    %5151 = vperm.xlu0 %5150, %v5068
    %v5152 = vpop.permute.xlu0 %5151
    %5155 = vset.pattern.permute.xlu0 0
    %5156 = vperm.xlu0 %5155, %v5069
    %v5157 = vpop.permute.xlu0 %5156
    %5160 = vset.pattern.permute.xlu0 0
    %5161 = vperm.xlu0 %5160, %v5070
    %v5162 = vpop.permute.xlu0 %5161
    %5165 = vset.pattern.permute.xlu0 0
    %5166 = vperm.xlu0 %5165, %v5071
    %v5167 = vpop.permute.xlu0 %5166
    %5170 = vset.pattern.permute.xlu0 0
    %5171 = vperm.xlu0 %5170, %v5072
    %v5172 = vpop.permute.xlu0 %5171
    %5175 = vset.pattern.permute.xlu0 0
    %5176 = vperm.xlu0 %5175, %v5073
    %v5177 = vpop.permute.xlu0 %5176
    %5180 = vset.pattern.permute.xlu0 0
    %5181 = vperm.xlu0 %5180, %v5074
    %v5182 = vpop.permute.xlu0 %5181
    %5185 = vset.pattern.permute.xlu0 0
    %5186 = vperm.xlu0 %5185, %v5075
    %v5187 = vpop.permute.xlu0 %5186
    %5190 = vset.pattern.permute.xlu0 0
    %5191 = vperm.xlu0 %5190, %v5076
    %v5192 = vpop.permute.xlu0 %5191
    %5195 = vset.pattern.permute.xlu0 0
    %5196 = vperm.xlu0 %5195, %v5077
    %v5197 = vpop.permute.xlu0 %5196
    %5200 = vset.pattern.permute.xlu0 0
    %5201 = vperm.xlu0 %5200, %v5078
    %v5202 = vpop.permute.xlu0 %5201
    %5205 = vset.pattern.permute.xlu0 0
    %5206 = vperm.xlu0 %5205, %v5079
    %v5207 = vpop.permute.xlu0 %5206
    %5210 = vset.pattern.permute.xlu0 0
    %5211 = vperm.xlu0 %5210, %v5080
    %v5212 = vpop.permute.xlu0 %5211
    %5215 = vset.pattern.permute.xlu0 0
    %5216 = vperm.xlu0 %5215, %v5081
    %v5217 = vpop.permute.xlu0 %5216
    %5220 = vset.pattern.permute.xlu0 0
    %5221 = vperm.xlu0 %5220, %v5082
    %v5222 = vpop.permute.xlu0 %5221
    %5225 = vset.pattern.permute.xlu0 0
    %5226 = vperm.xlu0 %5225, %v5083
    %v5227 = vpop.permute.xlu0 %5226
    %5230 = vset.pattern.permute.xlu0 0
    %5231 = vperm.xlu0 %5230, %v5084
    %v5232 = vpop.permute.xlu0 %5231
    %5235 = vset.pattern.permute.xlu0 0
    %5236 = vperm.xlu0 %5235, %v5085
    %v5237 = vpop.permute.xlu0 %5236
    %5240 = vset.pattern.permute.xlu0 0
    %5241 = vperm.xlu0 %5240, %v5086
    %v5242 = vpop.permute.xlu0 %5241
    %5245 = vset.pattern.permute.xlu0 0
    %5246 = vperm.xlu0 %5245, %v5087
    %v5247 = vpop.permute.xlu0 %5246
    %5250 = vset.pattern.permute.xlu0 0
    %5251 = vperm.xlu0 %5250, %v5088
    %v5252 = vpop.permute.xlu0 %5251
    %5255 = vset.pattern.permute.xlu0 0
    %5256 = vperm.xlu0 %5255, %v5089
    %v5257 = vpop.permute.xlu0 %5256
    %5260 = vset.pattern.permute.xlu0 0
    %5261 = vperm.xlu0 %5260, %v5090
    %v5262 = vpop.permute.xlu0 %5261
    %5265 = vset.pattern.permute.xlu0 0
    %5266 = vperm.xlu0 %5265, %v5091
    %v5267 = vpop.permute.xlu0 %5266
    %5270 = vset.pattern.permute.xlu0 0
    %5271 = vperm.xlu0 %5270, %v5092
    %v5272 = vpop.permute.xlu0 %5271
    %5275 = vset.pattern.permute.xlu0 0
    %5276 = vperm.xlu0 %5275, %v5093
    %v5277 = vpop.permute.xlu0 %5276
    %5280 = vset.pattern.permute.xlu0 0
    %5281 = vperm.xlu0 %5280, %v5094
    %v5282 = vpop.permute.xlu0 %5281
    %5285 = vset.pattern.permute.xlu0 0
    %5286 = vperm.xlu0 %5285, %v5095
    %v5287 = vpop.permute.xlu0 %5286
    %5290 = vset.pattern.permute.xlu0 0
    %5291 = vperm.xlu0 %5290, %v5096
    %v5292 = vpop.permute.xlu0 %5291
    %5295 = vset.pattern.permute.xlu0 0
    %5296 = vperm.xlu0 %5295, %v5097
    %v5297 = vpop.permute.xlu0 %5296
    %5300 = vset.pattern.permute.xlu0 0
    %5301 = vperm.xlu0 %5300, %v5098
    %v5302 = vpop.permute.xlu0 %5301
    %5305 = vset.pattern.permute.xlu0 0
    %5306 = vperm.xlu0 %5305, %v5099
    %v5307 = vpop.permute.xlu0 %5306
    %5310 = vset.pattern.permute.xlu0 0
    %5311 = vperm.xlu0 %5310, %v5100
    %v5312 = vpop.permute.xlu0 %5311
    %5315 = vset.pattern.permute.xlu0 0
    %5316 = vperm.xlu0 %5315, %v5101
    %v5317 = vpop.permute.xlu0 %5316
    %5320 = vset.pattern.permute.xlu0 0
    %5321 = vperm.xlu0 %5320, %v5102
    %v5322 = vpop.permute.xlu0 %5321
    %5325 = vset.pattern.permute.xlu0 0
    %5326 = vperm.xlu0 %5325, %v5103
    %v5327 = vpop.permute.xlu0 %5326
    %5330 = vset.pattern.permute.xlu0 0
    %5331 = vperm.xlu0 %5330, %v5104
    %v5332 = vpop.permute.xlu0 %5331
    %5335 = vset.pattern.permute.xlu0 0
    %5336 = vperm.xlu0 %5335, %v5105
    %v5337 = vpop.permute.xlu0 %5336
    %5340 = vset.pattern.permute.xlu0 0
    %5341 = vperm.xlu0 %5340, %v5106
    %v5342 = vpop.permute.xlu0 %5341
    %5345 = vset.pattern.permute.xlu0 0
    %5346 = vperm.xlu0 %5345, %v5107
    %v5347 = vpop.permute.xlu0 %5346
    %5350 = vset.pattern.permute.xlu0 0
    %5351 = vperm.xlu0 %5350, %v5108
    %v5352 = vpop.permute.xlu0 %5351
    %5355 = vset.pattern.permute.xlu0 0
    %5356 = vperm.xlu0 %5355, %v5109
    %v5357 = vpop.permute.xlu0 %5356
    %5360 = vset.pattern.permute.xlu0 0
    %5361 = vperm.xlu0 %5360, %v5110
    %v5362 = vpop.permute.xlu0 %5361
    %5365 = vset.pattern.permute.xlu0 0
    %5366 = vperm.xlu0 %5365, %v5111
    %v5367 = vpop.permute.xlu0 %5366
    %5370 = vset.pattern.permute.xlu0 0
    %5371 = vperm.xlu0 %5370, %v5112
    %v5372 = vpop.permute.xlu0 %5371
    %5375 = vset.pattern.permute.xlu0 0
    %5376 = vperm.xlu0 %5375, %v5113
    %v5377 = vpop.permute.xlu0 %5376
    %5380 = vset.pattern.permute.xlu0 0
    %5381 = vperm.xlu0 %5380, %v5114
    %v5382 = vpop.permute.xlu0 %5381
    %5385 = vset.pattern.permute.xlu0 0
    %5386 = vperm.xlu0 %5385, %v5115
    %v5387 = vpop.permute.xlu0 %5386
    %5390 = vset.pattern.permute.xlu0 0
    %5391 = vperm.xlu0 %5390, %v5116
    %v5392 = vpop.permute.xlu0 %5391
    %5395 = vset.pattern.permute.xlu0 0
    %5396 = vperm.xlu0 %5395, %v5117
    %v5397 = vpop.permute.xlu0 %5396
    %5400 = vset.pattern.permute.xlu0 0
    %5401 = vperm.xlu0 %5400, %v5118
    %v5402 = vpop.permute.xlu0 %5401
    %5405 = vset.pattern.permute.xlu0 0
    %5406 = vperm.xlu0 %5405, %v5119
    %v5407 = vpop.permute.xlu0 %5406
    %5410 = vset.pattern.permute.xlu0 0
    %5411 = vperm.xlu0 %5410, %v5120
    %v5412 = vpop.permute.xlu0 %5411
    %5415 = vset.pattern.permute.xlu0 0
    %5416 = vperm.xlu0 %5415, %v5121
    %v5417 = vpop.permute.xlu0 %5416
    %5420 = vset.pattern.permute.xlu0 0
    %5421 = vperm.xlu0 %5420, %v5122
    %v5422 = vpop.permute.xlu0 %5421
    %5425 = vset.pattern.permute.xlu0 0
    %5426 = vperm.xlu0 %5425, %v5123
    %v5427 = vpop.permute.xlu0 %5426
    %5430 = vset.pattern.permute.xlu0 0
    %5431 = vperm.xlu0 %5430, %v5124
    %v5432 = vpop.permute.xlu0 %5431
    %5435 = vset.pattern.permute.xlu0 0
    %5436 = vperm.xlu0 %5435, %v5125
    %v5437 = vpop.permute.xlu0 %5436
    %5440 = vset.pattern.permute.xlu0 0
    %5441 = vperm.xlu0 %5440, %v5126
    %v5442 = vpop.permute.xlu0 %5441
    %5445 = vset.pattern.permute.xlu0 0
    %5446 = vperm.xlu0 %5445, %v5127
    %v5447 = vpop.permute.xlu0 %5446
    %5450 = vset.pattern.permute.xlu0 0
    %5451 = vperm.xlu0 %5450, %v5128
    %v5452 = vpop.permute.xlu0 %5451
    %5455 = vset.pattern.permute.xlu0 0
    %5456 = vperm.xlu0 %5455, %v5129
    %v5457 = vpop.permute.xlu0 %5456
    %5460 = vset.pattern.permute.xlu0 0
    %5461 = vperm.xlu0 %5460, %v5130
    %v5462 = vpop.permute.xlu0 %5461
    %5465 = vset.pattern.permute.xlu0 0
    %5466 = vperm.xlu0 %5465, %v5131
    %v5467 = vpop.permute.xlu0 %5466
    %5470 = vset.pattern.permute.xlu0 0
    %5471 = vperm.xlu0 %5470, %v5132
    %v5472 = vpop.permute.xlu0 %5471
    %5475 = vset.pattern.permute.xlu0 0
    %5476 = vperm.xlu0 %5475, %v5133
    %v5477 = vpop.permute.xlu0 %5476
    %5480 = vset.pattern.permute.xlu0 0
    %5481 = vperm.xlu0 %5480, %v5134
    %v5482 = vpop.permute.xlu0 %5481
    %5485 = vset.pattern.permute.xlu0 0
    %5486 = vperm.xlu0 %5485, %v5135
    %v5487 = vpop.permute.xlu0 %5486
    %5490 = vset.pattern.permute.xlu0 0
    %5491 = vperm.xlu0 %5490, %v5136
    %v5492 = vpop.permute.xlu0 %5491
    %5495 = vset.pattern.permute.xlu0 0
    %5496 = vperm.xlu0 %5495, %v5137
    %v5497 = vpop.permute.xlu0 %5496
    %5500 = vset.pattern.permute.xlu0 0
    %5501 = vperm.xlu0 %5500, %v5138
    %v5502 = vpop.permute.xlu0 %5501
    %5505 = vset.pattern.permute.xlu0 0
    %5506 = vperm.xlu0 %5505, %v5139
    %v5507 = vpop.permute.xlu0 %5506
    %5510 = vset.pattern.permute.xlu0 0
    %5511 = vperm.xlu0 %5510, %v5140
    %v5512 = vpop.permute.xlu0 %5511
    %5515 = vset.pattern.permute.xlu0 0
    %5516 = vperm.xlu0 %5515, %v5141
    %v5517 = vpop.permute.xlu0 %5516
    %5520 = vset.pattern.permute.xlu0 0
    %5521 = vperm.xlu0 %5520, %v5142
    %v5522 = vpop.permute.xlu0 %5521
    %5525 = vset.pattern.permute.xlu0 0
    %5526 = vperm.xlu0 %5525, %v5143
    %v5527 = vpop.permute.xlu0 %5526
    %5530 = vset.pattern.permute.xlu0 0
    %5531 = vperm.xlu0 %5530, %v5144
    %v5532 = vpop.permute.xlu0 %5531
    %5535 = vset.pattern.permute.xlu0 0
    %5536 = vperm.xlu0 %5535, %v5145
    %v5537 = vpop.permute.xlu0 %5536
    %5540 = vset.pattern.permute.xlu0 0
    %5541 = vperm.xlu0 %5540, %v5146
    %v5542 = vpop.permute.xlu0 %5541
    %5545 = vset.pattern.permute.xlu0 0
    %5546 = vperm.xlu0 %5545, %v5147
    %v5547 = vpop.permute.xlu0 %5546
    %5550 = vset.pattern.permute.xlu0 0
    %5551 = vperm.xlu0 %5550, %v5148
    %v5552 = vpop.permute.xlu0 %5551
    %v5554 = vmul.f32 %v4986, %v5152
    %v5555 = vmul.f32 %v4987, %v5157
    %v5556 = vmul.f32 %v4988, %v5162
    %v5557 = vmul.f32 %v4989, %v5167
    %v5558 = vmul.f32 %v4990, %v5172
    %v5559 = vmul.f32 %v4991, %v5177
    %v5560 = vmul.f32 %v4992, %v5182
    %v5561 = vmul.f32 %v4993, %v5187
    %v5562 = vmul.f32 %v4994, %v5192
    %v5563 = vmul.f32 %v4995, %v5197
    %v5564 = vmul.f32 %v4996, %v5202
    %v5565 = vmul.f32 %v4997, %v5207
    %v5566 = vmul.f32 %v4998, %v5212
    %v5567 = vmul.f32 %v4999, %v5217
    %v5568 = vmul.f32 %v5000, %v5222
    %v5569 = vmul.f32 %v5001, %v5227
    %v5570 = vmul.f32 %v5002, %v5232
    %v5571 = vmul.f32 %v5003, %v5237
    %v5572 = vmul.f32 %v5004, %v5242
    %v5573 = vmul.f32 %v5005, %v5247
    %v5574 = vmul.f32 %v5006, %v5252
    %v5575 = vmul.f32 %v5007, %v5257
    %v5576 = vmul.f32 %v5008, %v5262
    %v5577 = vmul.f32 %v5009, %v5267
    %v5578 = vmul.f32 %v5010, %v5272
    %v5579 = vmul.f32 %v5011, %v5277
    %v5580 = vmul.f32 %v5012, %v5282
    %v5581 = vmul.f32 %v5013, %v5287
    %v5582 = vmul.f32 %v5014, %v5292
    %v5583 = vmul.f32 %v5015, %v5297
    %v5584 = vmul.f32 %v5016, %v5302
    %v5585 = vmul.f32 %v5017, %v5307
    %v5586 = vmul.f32 %v5018, %v5312
    %v5587 = vmul.f32 %v5019, %v5317
    %v5588 = vmul.f32 %v5020, %v5322
    %v5589 = vmul.f32 %v5021, %v5327
    %v5590 = vmul.f32 %v5022, %v5332
    %v5591 = vmul.f32 %v5023, %v5337
    %v5592 = vmul.f32 %v5024, %v5342
    %v5593 = vmul.f32 %v5025, %v5347
    %v5594 = vmul.f32 %v5026, %v5352
    %v5595 = vmul.f32 %v5027, %v5357
    %v5596 = vmul.f32 %v5028, %v5362
    %v5597 = vmul.f32 %v5029, %v5367
    %v5598 = vmul.f32 %v5030, %v5372
    %v5599 = vmul.f32 %v5031, %v5377
    %v5600 = vmul.f32 %v5032, %v5382
    %v5601 = vmul.f32 %v5033, %v5387
    %v5602 = vmul.f32 %v5034, %v5392
    %v5603 = vmul.f32 %v5035, %v5397
    %v5604 = vmul.f32 %v5036, %v5402
    %v5605 = vmul.f32 %v5037, %v5407
    %v5606 = vmul.f32 %v5038, %v5412
    %v5607 = vmul.f32 %v5039, %v5417
    %v5608 = vmul.f32 %v5040, %v5422
    %v5609 = vmul.f32 %v5041, %v5427
    %v5610 = vmul.f32 %v5042, %v5432
    %v5611 = vmul.f32 %v5043, %v5437
    %v5612 = vmul.f32 %v5044, %v5442
    %v5613 = vmul.f32 %v5045, %v5447
    %v5614 = vmul.f32 %v5046, %v5452
    %v5615 = vmul.f32 %v5047, %v5457
    %v5616 = vmul.f32 %v5048, %v5462
    %v5617 = vmul.f32 %v5049, %v5467
    %v5618 = vmul.f32 %v5050, %v5472
    %v5619 = vmul.f32 %v5051, %v5477
    %v5620 = vmul.f32 %v5052, %v5482
    %v5621 = vmul.f32 %v5053, %v5487
    %v5622 = vmul.f32 %v5054, %v5492
    %v5623 = vmul.f32 %v5055, %v5497
    %v5624 = vmul.f32 %v5056, %v5502
    %v5625 = vmul.f32 %v5057, %v5507
    %v5626 = vmul.f32 %v5058, %v5512
    %v5627 = vmul.f32 %v5059, %v5517
    %v5628 = vmul.f32 %v5060, %v5522
    %v5629 = vmul.f32 %v5061, %v5527
    %v5630 = vmul.f32 %v5062, %v5532
    %v5631 = vmul.f32 %v5063, %v5537
    %v5632 = vmul.f32 %v5064, %v5542
    %v5633 = vmul.f32 %v5065, %v5547
    %v5634 = vmul.f32 %v5066, %v5552
    %5716 = vrot.lane.b32.xlu0 %v5554, 96
    %v5717 = vpop.permute.xlu0 %5716
    %5718 = vrot.lane.b32.xlu0 %v5555, 96
    %v5719 = vpop.permute.xlu0 %5718
    %5720 = vrot.lane.b32.xlu0 %v5556, 96
    %v5721 = vpop.permute.xlu0 %5720
    %5722 = vrot.lane.b32.xlu0 %v5557, 96
    %v5723 = vpop.permute.xlu0 %5722
    %5724 = vrot.lane.b32.xlu0 %v5558, 96
    %v5725 = vpop.permute.xlu0 %5724
    %5726 = vrot.lane.b32.xlu0 %v5559, 96
    %v5727 = vpop.permute.xlu0 %5726
    %5728 = vrot.lane.b32.xlu0 %v5560, 96
    %v5729 = vpop.permute.xlu0 %5728
    %5730 = vrot.lane.b32.xlu0 %v5561, 96
    %v5731 = vpop.permute.xlu0 %5730
    %5732 = vrot.lane.b32.xlu0 %v5562, 96
    %v5733 = vpop.permute.xlu0 %5732
    %5734 = vrot.lane.b32.xlu0 %v5563, 96
    %v5735 = vpop.permute.xlu0 %5734
    %5736 = vrot.lane.b32.xlu0 %v5564, 96
    %v5737 = vpop.permute.xlu0 %5736
    %5738 = vrot.lane.b32.xlu0 %v5565, 96
    %v5739 = vpop.permute.xlu0 %5738
    %5740 = vrot.lane.b32.xlu0 %v5566, 96
    %v5741 = vpop.permute.xlu0 %5740
    %5742 = vrot.lane.b32.xlu0 %v5567, 96
    %v5743 = vpop.permute.xlu0 %5742
    %5744 = vrot.lane.b32.xlu0 %v5568, 96
    %v5745 = vpop.permute.xlu0 %5744
    %5746 = vrot.lane.b32.xlu0 %v5569, 96
    %v5747 = vpop.permute.xlu0 %5746
    %5748 = vrot.lane.b32.xlu0 %v5570, 96
    %v5749 = vpop.permute.xlu0 %5748
    %5750 = vrot.lane.b32.xlu0 %v5571, 96
    %v5751 = vpop.permute.xlu0 %5750
    %5752 = vrot.lane.b32.xlu0 %v5572, 96
    %v5753 = vpop.permute.xlu0 %5752
    %5754 = vrot.lane.b32.xlu0 %v5573, 96
    %v5755 = vpop.permute.xlu0 %5754
    %5756 = vrot.lane.b32.xlu0 %v5574, 96
    %v5757 = vpop.permute.xlu0 %5756
    %5758 = vrot.lane.b32.xlu0 %v5575, 96
    %v5759 = vpop.permute.xlu0 %5758
    %5760 = vrot.lane.b32.xlu0 %v5576, 96
    %v5761 = vpop.permute.xlu0 %5760
    %5762 = vrot.lane.b32.xlu0 %v5577, 96
    %v5763 = vpop.permute.xlu0 %5762
    %5764 = vrot.lane.b32.xlu0 %v5578, 96
    %v5765 = vpop.permute.xlu0 %5764
    %5766 = vrot.lane.b32.xlu0 %v5579, 96
    %v5767 = vpop.permute.xlu0 %5766
    %5768 = vrot.lane.b32.xlu0 %v5580, 96
    %v5769 = vpop.permute.xlu0 %5768
    %5770 = vrot.lane.b32.xlu0 %v5581, 96
    %v5771 = vpop.permute.xlu0 %5770
    %5772 = vrot.lane.b32.xlu0 %v5582, 96
    %v5773 = vpop.permute.xlu0 %5772
    %5774 = vrot.lane.b32.xlu0 %v5583, 96
    %v5775 = vpop.permute.xlu0 %5774
    %5776 = vrot.lane.b32.xlu0 %v5584, 96
    %v5777 = vpop.permute.xlu0 %5776
    %5778 = vrot.lane.b32.xlu0 %v5585, 96
    %v5779 = vpop.permute.xlu0 %5778
    %5780 = vrot.lane.b32.xlu0 %v5586, 96
    %v5781 = vpop.permute.xlu0 %5780
    %5782 = vrot.lane.b32.xlu0 %v5587, 96
    %v5783 = vpop.permute.xlu0 %5782
    %5784 = vrot.lane.b32.xlu0 %v5588, 96
    %v5785 = vpop.permute.xlu0 %5784
    %5786 = vrot.lane.b32.xlu0 %v5589, 96
    %v5787 = vpop.permute.xlu0 %5786
    %5788 = vrot.lane.b32.xlu0 %v5590, 96
    %v5789 = vpop.permute.xlu0 %5788
    %5790 = vrot.lane.b32.xlu0 %v5591, 96
    %v5791 = vpop.permute.xlu0 %5790
    %5792 = vrot.lane.b32.xlu0 %v5592, 96
    %v5793 = vpop.permute.xlu0 %5792
    %5794 = vrot.lane.b32.xlu0 %v5593, 96
    %v5795 = vpop.permute.xlu0 %5794
    %5796 = vrot.lane.b32.xlu0 %v5594, 96
    %v5797 = vpop.permute.xlu0 %5796
    %5798 = vrot.lane.b32.xlu0 %v5595, 96
    %v5799 = vpop.permute.xlu0 %5798
    %5800 = vrot.lane.b32.xlu0 %v5596, 96
    %v5801 = vpop.permute.xlu0 %5800
    %5802 = vrot.lane.b32.xlu0 %v5597, 96
    %v5803 = vpop.permute.xlu0 %5802
    %5804 = vrot.lane.b32.xlu0 %v5598, 96
    %v5805 = vpop.permute.xlu0 %5804
    %5806 = vrot.lane.b32.xlu0 %v5599, 96
    %v5807 = vpop.permute.xlu0 %5806
    %5808 = vrot.lane.b32.xlu0 %v5600, 96
    %v5809 = vpop.permute.xlu0 %5808
    %5810 = vrot.lane.b32.xlu0 %v5601, 96
    %v5811 = vpop.permute.xlu0 %5810
    %5812 = vrot.lane.b32.xlu0 %v5602, 96
    %v5813 = vpop.permute.xlu0 %5812
    %5814 = vrot.lane.b32.xlu0 %v5603, 96
    %v5815 = vpop.permute.xlu0 %5814
    %5816 = vrot.lane.b32.xlu0 %v5604, 96
    %v5817 = vpop.permute.xlu0 %5816
    %5818 = vrot.lane.b32.xlu0 %v5605, 96
    %v5819 = vpop.permute.xlu0 %5818
    %5820 = vrot.lane.b32.xlu0 %v5606, 96
    %v5821 = vpop.permute.xlu0 %5820
    %5822 = vrot.lane.b32.xlu0 %v5607, 96
    %v5823 = vpop.permute.xlu0 %5822
    %5824 = vrot.lane.b32.xlu0 %v5608, 96
    %v5825 = vpop.permute.xlu0 %5824
    %5826 = vrot.lane.b32.xlu0 %v5609, 96
    %v5827 = vpop.permute.xlu0 %5826
    %5828 = vrot.lane.b32.xlu0 %v5610, 96
    %v5829 = vpop.permute.xlu0 %5828
    %5830 = vrot.lane.b32.xlu0 %v5611, 96
    %v5831 = vpop.permute.xlu0 %5830
    %5832 = vrot.lane.b32.xlu0 %v5612, 96
    %v5833 = vpop.permute.xlu0 %5832
    %5834 = vrot.lane.b32.xlu0 %v5613, 96
    %v5835 = vpop.permute.xlu0 %5834
    %5836 = vrot.lane.b32.xlu0 %v5614, 96
    %v5837 = vpop.permute.xlu0 %5836
    %5838 = vrot.lane.b32.xlu0 %v5615, 96
    %v5839 = vpop.permute.xlu0 %5838
    %5840 = vrot.lane.b32.xlu0 %v5616, 96
    %v5841 = vpop.permute.xlu0 %5840
    %5842 = vrot.lane.b32.xlu0 %v5617, 96
    %v5843 = vpop.permute.xlu0 %5842
    %5844 = vrot.lane.b32.xlu0 %v5618, 96
    %v5845 = vpop.permute.xlu0 %5844
    %5846 = vrot.lane.b32.xlu0 %v5619, 96
    %v5847 = vpop.permute.xlu0 %5846
    %5848 = vrot.lane.b32.xlu0 %v5620, 96
    %v5849 = vpop.permute.xlu0 %5848
    %5850 = vrot.lane.b32.xlu0 %v5621, 96
    %v5851 = vpop.permute.xlu0 %5850
    %5852 = vrot.lane.b32.xlu0 %v5622, 96
    %v5853 = vpop.permute.xlu0 %5852
    %5854 = vrot.lane.b32.xlu0 %v5623, 96
    %v5855 = vpop.permute.xlu0 %5854
    %5856 = vrot.lane.b32.xlu0 %v5624, 96
    %v5857 = vpop.permute.xlu0 %5856
    %5858 = vrot.lane.b32.xlu0 %v5625, 96
    %v5859 = vpop.permute.xlu0 %5858
    %5860 = vrot.lane.b32.xlu0 %v5626, 96
    %v5861 = vpop.permute.xlu0 %5860
    %5862 = vrot.lane.b32.xlu0 %v5627, 96
    %v5863 = vpop.permute.xlu0 %5862
    %5864 = vrot.lane.b32.xlu0 %v5628, 96
    %v5865 = vpop.permute.xlu0 %5864
    %5866 = vrot.lane.b32.xlu0 %v5629, 96
    %v5867 = vpop.permute.xlu0 %5866
    %5868 = vrot.lane.b32.xlu0 %v5630, 96
    %v5869 = vpop.permute.xlu0 %5868
    %5870 = vrot.lane.b32.xlu0 %v5631, 96
    %v5871 = vpop.permute.xlu0 %5870
    %5872 = vrot.lane.b32.xlu0 %v5632, 96
    %v5873 = vpop.permute.xlu0 %5872
    %5874 = vrot.lane.b32.xlu0 %v5633, 96
    %v5875 = vpop.permute.xlu0 %5874
    %5876 = vrot.lane.b32.xlu0 %v5634, 96
    %v5877 = vpop.permute.xlu0 %5876
    %vm5959 = vcmask 1048320
    %5960 = vst.msk [vmem:[#allocation3] sm:$0xff] %vm5959, %v5717
    %5961 = vst.msk [vmem:[#allocation3 + $0x18] sm:$0xff] %vm5959, %v5719
    %5962 = vst.msk [vmem:[#allocation3 + $0x30] sm:$0xff] %vm5959, %v5721
    %5963 = vst.msk [vmem:[#allocation3 + $0x48] sm:$0xff] %vm5959, %v5723
    %5964 = vst.msk [vmem:[#allocation3 + $0x60] sm:$0xff] %vm5959, %v5725
    %5965 = vst.msk [vmem:[#allocation3 + $0x78] sm:$0xff] %vm5959, %v5727
    %5966 = vst.msk [vmem:[#allocation3 + $0x90] sm:$0xff] %vm5959, %v5729
    %5967 = vst.msk [vmem:[#allocation3 + $0xa8] sm:$0xff] %vm5959, %v5731
    %5968 = vst.msk [vmem:[#allocation3 + $0xc0] sm:$0xff] %vm5959, %v5733
    %5969 = vst.msk [vmem:[#allocation3 + $0xd8] sm:$0xff] %vm5959, %v5735
    %5970 = vst.msk [vmem:[#allocation3 + $0xf0] sm:$0xff] %vm5959, %v5737
    %5971 = vst.msk [vmem:[#allocation3 + $0x108] sm:$0xff] %vm5959, %v5739
    %5972 = vst.msk [vmem:[#allocation3 + $0x120] sm:$0xff] %vm5959, %v5741
    %5973 = vst.msk [vmem:[#allocation3 + $0x138] sm:$0xff] %vm5959, %v5743
    %5974 = vst.msk [vmem:[#allocation3 + $0x150] sm:$0xff] %vm5959, %v5745
    %5975 = vst.msk [vmem:[#allocation3 + $0x168] sm:$0xff] %vm5959, %v5747
    %5976 = vst.msk [vmem:[#allocation3 + $0x180] sm:$0xff] %vm5959, %v5749
    %5977 = vst.msk [vmem:[#allocation3 + $0x198] sm:$0xff] %vm5959, %v5751
    %5978 = vst.msk [vmem:[#allocation3 + $0x1b0] sm:$0xff] %vm5959, %v5753
    %5979 = vst.msk [vmem:[#allocation3 + $0x1c8] sm:$0xff] %vm5959, %v5755
    %5980 = vst.msk [vmem:[#allocation3 + $0x1e0] sm:$0xff] %vm5959, %v5757
    %5981 = vst.msk [vmem:[#allocation3 + $0x1f8] sm:$0xff] %vm5959, %v5759
    %5982 = vst.msk [vmem:[#allocation3 + $0x210] sm:$0xff] %vm5959, %v5761
    %5983 = vst.msk [vmem:[#allocation3 + $0x228] sm:$0xff] %vm5959, %v5763
    %5984 = vst.msk [vmem:[#allocation3 + $0x240] sm:$0xff] %vm5959, %v5765
    %5985 = vst.msk [vmem:[#allocation3 + $0x258] sm:$0xff] %vm5959, %v5767
    %5986 = vst.msk [vmem:[#allocation3 + $0x270] sm:$0xff] %vm5959, %v5769
    %5987 = vst.msk [vmem:[#allocation3 + $0x288] sm:$0xff] %vm5959, %v5771
    %5988 = vst.msk [vmem:[#allocation3 + $0x2a0] sm:$0xff] %vm5959, %v5773
    %5989 = vst.msk [vmem:[#allocation3 + $0x2b8] sm:$0xff] %vm5959, %v5775
    %5990 = vst.msk [vmem:[#allocation3 + $0x2d0] sm:$0xff] %vm5959, %v5777
    %5991 = vst.msk [vmem:[#allocation3 + $0x2e8] sm:$0xff] %vm5959, %v5779
    %5992 = vst.msk [vmem:[#allocation3 + $0x300] sm:$0xff] %vm5959, %v5781
    %5993 = vst.msk [vmem:[#allocation3 + $0x318] sm:$0xff] %vm5959, %v5783
    %5994 = vst.msk [vmem:[#allocation3 + $0x330] sm:$0xff] %vm5959, %v5785
    %5995 = vst.msk [vmem:[#allocation3 + $0x348] sm:$0xff] %vm5959, %v5787
    %5996 = vst.msk [vmem:[#allocation3 + $0x360] sm:$0xff] %vm5959, %v5789
    %5997 = vst.msk [vmem:[#allocation3 + $0x378] sm:$0xff] %vm5959, %v5791
    %5998 = vst.msk [vmem:[#allocation3 + $0x390] sm:$0xff] %vm5959, %v5793
    %5999 = vst.msk [vmem:[#allocation3 + $0x3a8] sm:$0xff] %vm5959, %v5795
    %6000 = vst.msk [vmem:[#allocation3 + $0x3c0] sm:$0xff] %vm5959, %v5797
    %6001 = vst.msk [vmem:[#allocation3 + $0x3d8] sm:$0xff] %vm5959, %v5799
    %6002 = vst.msk [vmem:[#allocation3 + $0x3f0] sm:$0xff] %vm5959, %v5801
    %6003 = vst.msk [vmem:[#allocation3 + $0x408] sm:$0xff] %vm5959, %v5803
    %6004 = vst.msk [vmem:[#allocation3 + $0x420] sm:$0xff] %vm5959, %v5805
    %6005 = vst.msk [vmem:[#allocation3 + $0x438] sm:$0xff] %vm5959, %v5807
    %6006 = vst.msk [vmem:[#allocation3 + $0x450] sm:$0xff] %vm5959, %v5809
    %6007 = vst.msk [vmem:[#allocation3 + $0x468] sm:$0xff] %vm5959, %v5811
    %6008 = vst.msk [vmem:[#allocation3 + $0x480] sm:$0xff] %vm5959, %v5813
    %6009 = vst.msk [vmem:[#allocation3 + $0x498] sm:$0xff] %vm5959, %v5815
    %6010 = vst.msk [vmem:[#allocation3 + $0x4b0] sm:$0xff] %vm5959, %v5817
    %6011 = vst.msk [vmem:[#allocation3 + $0x4c8] sm:$0xff] %vm5959, %v5819
    %6012 = vst.msk [vmem:[#allocation3 + $0x4e0] sm:$0xff] %vm5959, %v5821
    %6013 = vst.msk [vmem:[#allocation3 + $0x4f8] sm:$0xff] %vm5959, %v5823
    %6014 = vst.msk [vmem:[#allocation3 + $0x510] sm:$0xff] %vm5959, %v5825
    %6015 = vst.msk [vmem:[#allocation3 + $0x528] sm:$0xff] %vm5959, %v5827
    %6016 = vst.msk [vmem:[#allocation3 + $0x540] sm:$0xff] %vm5959, %v5829
    %6017 = vst.msk [vmem:[#allocation3 + $0x558] sm:$0xff] %vm5959, %v5831
    %6018 = vst.msk [vmem:[#allocation3 + $0x570] sm:$0xff] %vm5959, %v5833
    %6019 = vst.msk [vmem:[#allocation3 + $0x588] sm:$0xff] %vm5959, %v5835
    %6020 = vst.msk [vmem:[#allocation3 + $0x5a0] sm:$0xff] %vm5959, %v5837
    %6021 = vst.msk [vmem:[#allocation3 + $0x5b8] sm:$0xff] %vm5959, %v5839
    %6022 = vst.msk [vmem:[#allocation3 + $0x5d0] sm:$0xff] %vm5959, %v5841
    %6023 = vst.msk [vmem:[#allocation3 + $0x5e8] sm:$0xff] %vm5959, %v5843
    %6024 = vst.msk [vmem:[#allocation3 + $0x600] sm:$0xff] %vm5959, %v5845
    %6025 = vst.msk [vmem:[#allocation3 + $0x618] sm:$0xff] %vm5959, %v5847
    %6026 = vst.msk [vmem:[#allocation3 + $0x630] sm:$0xff] %vm5959, %v5849
    %6027 = vst.msk [vmem:[#allocation3 + $0x648] sm:$0xff] %vm5959, %v5851
    %6028 = vst.msk [vmem:[#allocation3 + $0x660] sm:$0xff] %vm5959, %v5853
    %6029 = vst.msk [vmem:[#allocation3 + $0x678] sm:$0xff] %vm5959, %v5855
    %6030 = vst.msk [vmem:[#allocation3 + $0x690] sm:$0xff] %vm5959, %v5857
    %6031 = vst.msk [vmem:[#allocation3 + $0x6a8] sm:$0xff] %vm5959, %v5859
    %6032 = vst.msk [vmem:[#allocation3 + $0x6c0] sm:$0xff] %vm5959, %v5861
    %6033 = vst.msk [vmem:[#allocation3 + $0x6d8] sm:$0xff] %vm5959, %v5863
    %6034 = vst.msk [vmem:[#allocation3 + $0x6f0] sm:$0xff] %vm5959, %v5865
    %6035 = vst.msk [vmem:[#allocation3 + $0x708] sm:$0xff] %vm5959, %v5867
    %6036 = vst.msk [vmem:[#allocation3 + $0x720] sm:$0xff] %vm5959, %v5869
    %6037 = vst.msk [vmem:[#allocation3 + $0x738] sm:$0xff] %vm5959, %v5871
    %6038 = vst.msk [vmem:[#allocation3 + $0x750] sm:$0xff] %vm5959, %v5873
    %6039 = vst.msk [vmem:[#allocation3 + $0x768] sm:$0xff] %vm5959, %v5875
    %6040 = vst.msk [vmem:[#allocation3 + $0x780] sm:$0xff] %vm5959, %v5877
    %v6041 = vld [vmem:[#allocation2 + $0x18] sm:$0xff]
    %v6042 = vld [vmem:[#allocation2 + $0x20] sm:$0xff]
    %v6043 = vld [vmem:[#allocation2 + $0x28] sm:$0xff]
    %v6044 = vld [vmem:[#allocation2 + $0x30] sm:$0xff]
    %v6045 = vld [vmem:[#allocation2 + $0x38] sm:$0xff]
    %v6046 = vld [vmem:[#allocation2 + $0x40] sm:$0xff]
    %v6047 = vld [vmem:[#allocation2 + $0x48] sm:$0xff]
    %v6048 = vld [vmem:[#allocation2 + $0x50] sm:$0xff]
    %v6049 = vld [vmem:[#allocation2 + $0x58] sm:$0xff]
    %v6050 = vld [vmem:[#allocation2 + $0x60] sm:$0xff]
    %v6051 = vld [vmem:[#allocation2 + $0x68] sm:$0xff]
    %v6052 = vld [vmem:[#allocation2 + $0x70] sm:$0xff]
    %v6053 = vld [vmem:[#allocation2 + $0x78] sm:$0xff]
    %v6054 = vld [vmem:[#allocation2 + $0x80] sm:$0xff]
    %v6055 = vld [vmem:[#allocation2 + $0x88] sm:$0xff]
    %v6056 = vld [vmem:[#allocation2 + $0x90] sm:$0xff]
    %v6057 = vld [vmem:[#allocation2 + $0x98] sm:$0xff]
    %v6058 = vld [vmem:[#allocation2 + $0xa0] sm:$0xff]
    %v6059 = vld [vmem:[#allocation2 + $0xa8] sm:$0xff]
    %v6060 = vld [vmem:[#allocation2 + $0xb0] sm:$0xff]
    %v6061 = vld [vmem:[#allocation2 + $0xb8] sm:$0xff]
    %v6062 = vld [vmem:[#allocation2 + $0xc0] sm:$0xff]
    %v6063 = vld [vmem:[#allocation2 + $0xc8] sm:$0xff]
    %v6064 = vld [vmem:[#allocation2 + $0xd0] sm:$0xff]
    %v6065 = vld [vmem:[#allocation2 + $0xd8] sm:$0xff]
    %v6066 = vld [vmem:[#allocation2 + $0xe0] sm:$0xff]
    %v6067 = vld [vmem:[#allocation2 + $0xe8] sm:$0xff]
    %v6068 = vld [vmem:[#allocation2 + $0xf0] sm:$0xff]
    %v6069 = vld [vmem:[#allocation2 + $0xf8] sm:$0xff]
    %v6070 = vld [vmem:[#allocation2 + $0x100] sm:$0xff]
    %v6071 = vld [vmem:[#allocation2 + $0x108] sm:$0xff]
    %v6072 = vld [vmem:[#allocation2 + $0x110] sm:$0xff]
    %v6073 = vld [vmem:[#allocation2 + $0x118] sm:$0xff]
    %v6074 = vld [vmem:[#allocation2 + $0x120] sm:$0xff]
    %v6075 = vld [vmem:[#allocation2 + $0x128] sm:$0xff]
    %v6076 = vld [vmem:[#allocation2 + $0x130] sm:$0xff]
    %v6077 = vld [vmem:[#allocation2 + $0x138] sm:$0xff]
    %v6078 = vld [vmem:[#allocation2 + $0x140] sm:$0xff]
    %v6079 = vld [vmem:[#allocation2 + $0x148] sm:$0xff]
    %v6080 = vld [vmem:[#allocation2 + $0x150] sm:$0xff]
    %v6081 = vld [vmem:[#allocation2 + $0x158] sm:$0xff]
    %v6082 = vld [vmem:[#allocation2 + $0x160] sm:$0xff]
    %v6083 = vld [vmem:[#allocation2 + $0x168] sm:$0xff]
    %v6084 = vld [vmem:[#allocation2 + $0x170] sm:$0xff]
    %v6085 = vld [vmem:[#allocation2 + $0x178] sm:$0xff]
    %v6086 = vld [vmem:[#allocation2 + $0x180] sm:$0xff]
    %v6087 = vld [vmem:[#allocation2 + $0x188] sm:$0xff]
    %v6088 = vld [vmem:[#allocation2 + $0x190] sm:$0xff]
    %v6089 = vld [vmem:[#allocation2 + $0x198] sm:$0xff]
    %v6090 = vld [vmem:[#allocation2 + $0x1a0] sm:$0xff]
    %v6091 = vld [vmem:[#allocation2 + $0x1a8] sm:$0xff]
    %v6092 = vld [vmem:[#allocation2 + $0x1b0] sm:$0xff]
    %v6093 = vld [vmem:[#allocation2 + $0x1b8] sm:$0xff]
    %v6094 = vld [vmem:[#allocation2 + $0x1c0] sm:$0xff]
    %v6095 = vld [vmem:[#allocation2 + $0x1c8] sm:$0xff]
    %v6096 = vld [vmem:[#allocation2 + $0x1d0] sm:$0xff]
    %v6097 = vld [vmem:[#allocation2 + $0x1d8] sm:$0xff]
    %v6098 = vld [vmem:[#allocation2 + $0x1e0] sm:$0xff]
    %v6099 = vld [vmem:[#allocation2 + $0x1e8] sm:$0xff]
    %v6100 = vld [vmem:[#allocation2 + $0x1f0] sm:$0xff]
    %v6101 = vld [vmem:[#allocation2 + $0x1f8] sm:$0xff]
    %v6102 = vld [vmem:[#allocation2 + $0x200] sm:$0xff]
    %v6103 = vld [vmem:[#allocation2 + $0x208] sm:$0xff]
    %v6104 = vld [vmem:[#allocation2 + $0x210] sm:$0xff]
    %v6105 = vld [vmem:[#allocation2 + $0x218] sm:$0xff]
    %v6106 = vld [vmem:[#allocation2 + $0x220] sm:$0xff]
    %v6107 = vld [vmem:[#allocation2 + $0x228] sm:$0xff]
    %v6108 = vld [vmem:[#allocation2 + $0x230] sm:$0xff]
    %v6109 = vld [vmem:[#allocation2 + $0x238] sm:$0xff]
    %v6110 = vld [vmem:[#allocation2 + $0x240] sm:$0xff]
    %v6111 = vld [vmem:[#allocation2 + $0x248] sm:$0xff]
    %v6112 = vld [vmem:[#allocation2 + $0x250] sm:$0xff]
    %v6113 = vld [vmem:[#allocation2 + $0x258] sm:$0xff]
    %v6114 = vld [vmem:[#allocation2 + $0x260] sm:$0xff]
    %v6115 = vld [vmem:[#allocation2 + $0x268] sm:$0xff]
    %v6116 = vld [vmem:[#allocation2 + $0x270] sm:$0xff]
    %v6117 = vld [vmem:[#allocation2 + $0x278] sm:$0xff]
    %v6118 = vld [vmem:[#allocation2 + $0x280] sm:$0xff]
    %v6119 = vld [vmem:[#allocation2 + $0x288] sm:$0xff]
    %v6120 = vld [vmem:[#allocation2 + $0x290] sm:$0xff]
    %v6121 = vld [vmem:[#allocation2 + $0x298] sm:$0xff]
    %6122 = vst.msk [vmem:[#allocation3 + $0x8] sm:$0xff] %vm2059, %v6041
    %6123 = vst.msk [vmem:[#allocation3 + $0x20] sm:$0xff] %vm2059, %v6042
    %6124 = vst.msk [vmem:[#allocation3 + $0x38] sm:$0xff] %vm2059, %v6043
    %6125 = vst.msk [vmem:[#allocation3 + $0x50] sm:$0xff] %vm2059, %v6044
    %6126 = vst.msk [vmem:[#allocation3 + $0x68] sm:$0xff] %vm2059, %v6045
    %6127 = vst.msk [vmem:[#allocation3 + $0x80] sm:$0xff] %vm2059, %v6046
    %6128 = vst.msk [vmem:[#allocation3 + $0x98] sm:$0xff] %vm2059, %v6047
    %6129 = vst.msk [vmem:[#allocation3 + $0xb0] sm:$0xff] %vm2059, %v6048
    %6130 = vst.msk [vmem:[#allocation3 + $0xc8] sm:$0xff] %vm2059, %v6049
    %6131 = vst.msk [vmem:[#allocation3 + $0xe0] sm:$0xff] %vm2059, %v6050
    %6132 = vst.msk [vmem:[#allocation3 + $0xf8] sm:$0xff] %vm2059, %v6051
    %6133 = vst.msk [vmem:[#allocation3 + $0x110] sm:$0xff] %vm2059, %v6052
    %6134 = vst.msk [vmem:[#allocation3 + $0x128] sm:$0xff] %vm2059, %v6053
    %6135 = vst.msk [vmem:[#allocation3 + $0x140] sm:$0xff] %vm2059, %v6054
    %6136 = vst.msk [vmem:[#allocation3 + $0x158] sm:$0xff] %vm2059, %v6055
    %6137 = vst.msk [vmem:[#allocation3 + $0x170] sm:$0xff] %vm2059, %v6056
    %6138 = vst.msk [vmem:[#allocation3 + $0x188] sm:$0xff] %vm2059, %v6057
    %6139 = vst.msk [vmem:[#allocation3 + $0x1a0] sm:$0xff] %vm2059, %v6058
    %6140 = vst.msk [vmem:[#allocation3 + $0x1b8] sm:$0xff] %vm2059, %v6059
    %6141 = vst.msk [vmem:[#allocation3 + $0x1d0] sm:$0xff] %vm2059, %v6060
    %6142 = vst.msk [vmem:[#allocation3 + $0x1e8] sm:$0xff] %vm2059, %v6061
    %6143 = vst.msk [vmem:[#allocation3 + $0x200] sm:$0xff] %vm2059, %v6062
    %6144 = vst.msk [vmem:[#allocation3 + $0x218] sm:$0xff] %vm2059, %v6063
    %6145 = vst.msk [vmem:[#allocation3 + $0x230] sm:$0xff] %vm2059, %v6064
    %6146 = vst.msk [vmem:[#allocation3 + $0x248] sm:$0xff] %vm2059, %v6065
    %6147 = vst.msk [vmem:[#allocation3 + $0x260] sm:$0xff] %vm2059, %v6066
    %6148 = vst.msk [vmem:[#allocation3 + $0x278] sm:$0xff] %vm2059, %v6067
    %6149 = vst.msk [vmem:[#allocation3 + $0x290] sm:$0xff] %vm2059, %v6068
    %6150 = vst.msk [vmem:[#allocation3 + $0x2a8] sm:$0xff] %vm2059, %v6069
    %6151 = vst.msk [vmem:[#allocation3 + $0x2c0] sm:$0xff] %vm2059, %v6070
    %6152 = vst.msk [vmem:[#allocation3 + $0x2d8] sm:$0xff] %vm2059, %v6071
    %6153 = vst.msk [vmem:[#allocation3 + $0x2f0] sm:$0xff] %vm2059, %v6072
    %6154 = vst.msk [vmem:[#allocation3 + $0x308] sm:$0xff] %vm2059, %v6073
    %6155 = vst.msk [vmem:[#allocation3 + $0x320] sm:$0xff] %vm2059, %v6074
    %6156 = vst.msk [vmem:[#allocation3 + $0x338] sm:$0xff] %vm2059, %v6075
    %6157 = vst.msk [vmem:[#allocation3 + $0x350] sm:$0xff] %vm2059, %v6076
    %6158 = vst.msk [vmem:[#allocation3 + $0x368] sm:$0xff] %vm2059, %v6077
    %6159 = vst.msk [vmem:[#allocation3 + $0x380] sm:$0xff] %vm2059, %v6078
    %6160 = vst.msk [vmem:[#allocation3 + $0x398] sm:$0xff] %vm2059, %v6079
    %6161 = vst.msk [vmem:[#allocation3 + $0x3b0] sm:$0xff] %vm2059, %v6080
    %6162 = vst.msk [vmem:[#allocation3 + $0x3c8] sm:$0xff] %vm2059, %v6081
    %6163 = vst.msk [vmem:[#allocation3 + $0x3e0] sm:$0xff] %vm2059, %v6082
    %6164 = vst.msk [vmem:[#allocation3 + $0x3f8] sm:$0xff] %vm2059, %v6083
    %6165 = vst.msk [vmem:[#allocation3 + $0x410] sm:$0xff] %vm2059, %v6084
    %6166 = vst.msk [vmem:[#allocation3 + $0x428] sm:$0xff] %vm2059, %v6085
    %6167 = vst.msk [vmem:[#allocation3 + $0x440] sm:$0xff] %vm2059, %v6086
    %6168 = vst.msk [vmem:[#allocation3 + $0x458] sm:$0xff] %vm2059, %v6087
    %6169 = vst.msk [vmem:[#allocation3 + $0x470] sm:$0xff] %vm2059, %v6088
    %6170 = vst.msk [vmem:[#allocation3 + $0x488] sm:$0xff] %vm2059, %v6089
    %6171 = vst.msk [vmem:[#allocation3 + $0x4a0] sm:$0xff] %vm2059, %v6090
    %6172 = vst.msk [vmem:[#allocation3 + $0x4b8] sm:$0xff] %vm2059, %v6091
    %6173 = vst.msk [vmem:[#allocation3 + $0x4d0] sm:$0xff] %vm2059, %v6092
    %6174 = vst.msk [vmem:[#allocation3 + $0x4e8] sm:$0xff] %vm2059, %v6093
    %6175 = vst.msk [vmem:[#allocation3 + $0x500] sm:$0xff] %vm2059, %v6094
    %6176 = vst.msk [vmem:[#allocation3 + $0x518] sm:$0xff] %vm2059, %v6095
    %6177 = vst.msk [vmem:[#allocation3 + $0x530] sm:$0xff] %vm2059, %v6096
    %6178 = vst.msk [vmem:[#allocation3 + $0x548] sm:$0xff] %vm2059, %v6097
    %6179 = vst.msk [vmem:[#allocation3 + $0x560] sm:$0xff] %vm2059, %v6098
    %6180 = vst.msk [vmem:[#allocation3 + $0x578] sm:$0xff] %vm2059, %v6099
    %6181 = vst.msk [vmem:[#allocation3 + $0x590] sm:$0xff] %vm2059, %v6100
    %6182 = vst.msk [vmem:[#allocation3 + $0x5a8] sm:$0xff] %vm2059, %v6101
    %6183 = vst.msk [vmem:[#allocation3 + $0x5c0] sm:$0xff] %vm2059, %v6102
    %6184 = vst.msk [vmem:[#allocation3 + $0x5d8] sm:$0xff] %vm2059, %v6103
    %6185 = vst.msk [vmem:[#allocation3 + $0x5f0] sm:$0xff] %vm2059, %v6104
    %6186 = vst.msk [vmem:[#allocation3 + $0x608] sm:$0xff] %vm2059, %v6105
    %6187 = vst.msk [vmem:[#allocation3 + $0x620] sm:$0xff] %vm2059, %v6106
    %6188 = vst.msk [vmem:[#allocation3 + $0x638] sm:$0xff] %vm2059, %v6107
    %6189 = vst.msk [vmem:[#allocation3 + $0x650] sm:$0xff] %vm2059, %v6108
    %6190 = vst.msk [vmem:[#allocation3 + $0x668] sm:$0xff] %vm2059, %v6109
    %6191 = vst.msk [vmem:[#allocation3 + $0x680] sm:$0xff] %vm2059, %v6110
    %6192 = vst.msk [vmem:[#allocation3 + $0x698] sm:$0xff] %vm2059, %v6111
    %6193 = vst.msk [vmem:[#allocation3 + $0x6b0] sm:$0xff] %vm2059, %v6112
    %6194 = vst.msk [vmem:[#allocation3 + $0x6c8] sm:$0xff] %vm2059, %v6113
    %6195 = vst.msk [vmem:[#allocation3 + $0x6e0] sm:$0xff] %vm2059, %v6114
    %6196 = vst.msk [vmem:[#allocation3 + $0x6f8] sm:$0xff] %vm2059, %v6115
    %6197 = vst.msk [vmem:[#allocation3 + $0x710] sm:$0xff] %vm2059, %v6116
    %6198 = vst.msk [vmem:[#allocation3 + $0x728] sm:$0xff] %vm2059, %v6117
    %6199 = vst.msk [vmem:[#allocation3 + $0x740] sm:$0xff] %vm2059, %v6118
    %6200 = vst.msk [vmem:[#allocation3 + $0x758] sm:$0xff] %vm2059, %v6119
    %6201 = vst.msk [vmem:[#allocation3 + $0x770] sm:$0xff] %vm2059, %v6120
    %6202 = vst.msk [vmem:[#allocation3 + $0x788] sm:$0xff] %vm2059, %v6121
    %v6203 = vld [vmem:[#allocation2 + $0x19] sm:$0xff]
    %v6204 = vld [vmem:[#allocation2 + $0x21] sm:$0xff]
    %v6205 = vld [vmem:[#allocation2 + $0x29] sm:$0xff]
    %v6206 = vld [vmem:[#allocation2 + $0x31] sm:$0xff]
    %v6207 = vld [vmem:[#allocation2 + $0x39] sm:$0xff]
    %v6208 = vld [vmem:[#allocation2 + $0x41] sm:$0xff]
    %v6209 = vld [vmem:[#allocation2 + $0x49] sm:$0xff]
    %v6210 = vld [vmem:[#allocation2 + $0x51] sm:$0xff]
    %v6211 = vld [vmem:[#allocation2 + $0x59] sm:$0xff]
    %v6212 = vld [vmem:[#allocation2 + $0x61] sm:$0xff]
    %v6213 = vld [vmem:[#allocation2 + $0x69] sm:$0xff]
    %v6214 = vld [vmem:[#allocation2 + $0x71] sm:$0xff]
    %v6215 = vld [vmem:[#allocation2 + $0x79] sm:$0xff]
    %v6216 = vld [vmem:[#allocation2 + $0x81] sm:$0xff]
    %v6217 = vld [vmem:[#allocation2 + $0x89] sm:$0xff]
    %v6218 = vld [vmem:[#allocation2 + $0x91] sm:$0xff]
    %v6219 = vld [vmem:[#allocation2 + $0x99] sm:$0xff]
    %v6220 = vld [vmem:[#allocation2 + $0xa1] sm:$0xff]
    %v6221 = vld [vmem:[#allocation2 + $0xa9] sm:$0xff]
    %v6222 = vld [vmem:[#allocation2 + $0xb1] sm:$0xff]
    %v6223 = vld [vmem:[#allocation2 + $0xb9] sm:$0xff]
    %v6224 = vld [vmem:[#allocation2 + $0xc1] sm:$0xff]
    %v6225 = vld [vmem:[#allocation2 + $0xc9] sm:$0xff]
    %v6226 = vld [vmem:[#allocation2 + $0xd1] sm:$0xff]
    %v6227 = vld [vmem:[#allocation2 + $0xd9] sm:$0xff]
    %v6228 = vld [vmem:[#allocation2 + $0xe1] sm:$0xff]
    %v6229 = vld [vmem:[#allocation2 + $0xe9] sm:$0xff]
    %v6230 = vld [vmem:[#allocation2 + $0xf1] sm:$0xff]
    %v6231 = vld [vmem:[#allocation2 + $0xf9] sm:$0xff]
    %v6232 = vld [vmem:[#allocation2 + $0x101] sm:$0xff]
    %v6233 = vld [vmem:[#allocation2 + $0x109] sm:$0xff]
    %v6234 = vld [vmem:[#allocation2 + $0x111] sm:$0xff]
    %v6235 = vld [vmem:[#allocation2 + $0x119] sm:$0xff]
    %v6236 = vld [vmem:[#allocation2 + $0x121] sm:$0xff]
    %v6237 = vld [vmem:[#allocation2 + $0x129] sm:$0xff]
    %v6238 = vld [vmem:[#allocation2 + $0x131] sm:$0xff]
    %v6239 = vld [vmem:[#allocation2 + $0x139] sm:$0xff]
    %v6240 = vld [vmem:[#allocation2 + $0x141] sm:$0xff]
    %v6241 = vld [vmem:[#allocation2 + $0x149] sm:$0xff]
    %v6242 = vld [vmem:[#allocation2 + $0x151] sm:$0xff]
    %v6243 = vld [vmem:[#allocation2 + $0x159] sm:$0xff]
    %v6244 = vld [vmem:[#allocation2 + $0x161] sm:$0xff]
    %v6245 = vld [vmem:[#allocation2 + $0x169] sm:$0xff]
    %v6246 = vld [vmem:[#allocation2 + $0x171] sm:$0xff]
    %v6247 = vld [vmem:[#allocation2 + $0x179] sm:$0xff]
    %v6248 = vld [vmem:[#allocation2 + $0x181] sm:$0xff]
    %v6249 = vld [vmem:[#allocation2 + $0x189] sm:$0xff]
    %v6250 = vld [vmem:[#allocation2 + $0x191] sm:$0xff]
    %v6251 = vld [vmem:[#allocation2 + $0x199] sm:$0xff]
    %v6252 = vld [vmem:[#allocation2 + $0x1a1] sm:$0xff]
    %v6253 = vld [vmem:[#allocation2 + $0x1a9] sm:$0xff]
    %v6254 = vld [vmem:[#allocation2 + $0x1b1] sm:$0xff]
    %v6255 = vld [vmem:[#allocation2 + $0x1b9] sm:$0xff]
    %v6256 = vld [vmem:[#allocation2 + $0x1c1] sm:$0xff]
    %v6257 = vld [vmem:[#allocation2 + $0x1c9] sm:$0xff]
    %v6258 = vld [vmem:[#allocation2 + $0x1d1] sm:$0xff]
    %v6259 = vld [vmem:[#allocation2 + $0x1d9] sm:$0xff]
    %v6260 = vld [vmem:[#allocation2 + $0x1e1] sm:$0xff]
    %v6261 = vld [vmem:[#allocation2 + $0x1e9] sm:$0xff]
    %v6262 = vld [vmem:[#allocation2 + $0x1f1] sm:$0xff]
    %v6263 = vld [vmem:[#allocation2 + $0x1f9] sm:$0xff]
    %v6264 = vld [vmem:[#allocation2 + $0x201] sm:$0xff]
    %v6265 = vld [vmem:[#allocation2 + $0x209] sm:$0xff]
    %v6266 = vld [vmem:[#allocation2 + $0x211] sm:$0xff]
    %v6267 = vld [vmem:[#allocation2 + $0x219] sm:$0xff]
    %v6268 = vld [vmem:[#allocation2 + $0x221] sm:$0xff]
    %v6269 = vld [vmem:[#allocation2 + $0x229] sm:$0xff]
    %v6270 = vld [vmem:[#allocation2 + $0x231] sm:$0xff]
    %v6271 = vld [vmem:[#allocation2 + $0x239] sm:$0xff]
    %v6272 = vld [vmem:[#allocation2 + $0x241] sm:$0xff]
    %v6273 = vld [vmem:[#allocation2 + $0x249] sm:$0xff]
    %v6274 = vld [vmem:[#allocation2 + $0x251] sm:$0xff]
    %v6275 = vld [vmem:[#allocation2 + $0x259] sm:$0xff]
    %v6276 = vld [vmem:[#allocation2 + $0x261] sm:$0xff]
    %v6277 = vld [vmem:[#allocation2 + $0x269] sm:$0xff]
    %v6278 = vld [vmem:[#allocation2 + $0x271] sm:$0xff]
    %v6279 = vld [vmem:[#allocation2 + $0x279] sm:$0xff]
    %v6280 = vld [vmem:[#allocation2 + $0x281] sm:$0xff]
    %v6281 = vld [vmem:[#allocation2 + $0x289] sm:$0xff]
    %v6282 = vld [vmem:[#allocation2 + $0x291] sm:$0xff]
    %v6283 = vld [vmem:[#allocation2 + $0x299] sm:$0xff]
    %s6284 = scalar_lea.vmem %s3, 3240
    %v6285 = vld [vmem:[%s6284] sm:$0xff]
    %v6286 = vld [vmem:[%s6284 + $0x8] sm:$0xff]
    %v6287 = vld [vmem:[%s6284 + $0x10] sm:$0xff]
    %v6288 = vld [vmem:[%s6284 + $0x18] sm:$0xff]
    %v6289 = vld [vmem:[%s6284 + $0x20] sm:$0xff]
    %v6290 = vld [vmem:[%s6284 + $0x28] sm:$0xff]
    %v6291 = vld [vmem:[%s6284 + $0x30] sm:$0xff]
    %v6292 = vld [vmem:[%s6284 + $0x38] sm:$0xff]
    %v6293 = vld [vmem:[%s6284 + $0x40] sm:$0xff]
    %v6294 = vld [vmem:[%s6284 + $0x48] sm:$0xff]
    %v6295 = vld [vmem:[%s6284 + $0x50] sm:$0xff]
    %v6296 = vld [vmem:[%s6284 + $0x58] sm:$0xff]
    %v6297 = vld [vmem:[%s6284 + $0x60] sm:$0xff]
    %v6298 = vld [vmem:[%s6284 + $0x68] sm:$0xff]
    %v6299 = vld [vmem:[%s6284 + $0x70] sm:$0xff]
    %v6300 = vld [vmem:[%s6284 + $0x78] sm:$0xff]
    %v6301 = vld [vmem:[%s6284 + $0x80] sm:$0xff]
    %v6302 = vld [vmem:[%s6284 + $0x88] sm:$0xff]
    %v6303 = vld [vmem:[%s6284 + $0x90] sm:$0xff]
    %v6304 = vld [vmem:[%s6284 + $0x98] sm:$0xff]
    %v6305 = vld [vmem:[%s6284 + $0xa0] sm:$0xff]
    %v6306 = vld [vmem:[%s6284 + $0xa8] sm:$0xff]
    %v6307 = vld [vmem:[%s6284 + $0xb0] sm:$0xff]
    %v6308 = vld [vmem:[%s6284 + $0xb8] sm:$0xff]
    %v6309 = vld [vmem:[%s6284 + $0xc0] sm:$0xff]
    %v6310 = vld [vmem:[%s6284 + $0xc8] sm:$0xff]
    %v6311 = vld [vmem:[%s6284 + $0xd0] sm:$0xff]
    %v6312 = vld [vmem:[%s6284 + $0xd8] sm:$0xff]
    %v6313 = vld [vmem:[%s6284 + $0xe0] sm:$0xff]
    %v6314 = vld [vmem:[%s6284 + $0xe8] sm:$0xff]
    %v6315 = vld [vmem:[%s6284 + $0xf0] sm:$0xff]
    %v6316 = vld [vmem:[%s6284 + $0xf8] sm:$0xff]
    %v6317 = vld [vmem:[%s6284 + $0x100] sm:$0xff]
    %v6318 = vld [vmem:[%s6284 + $0x108] sm:$0xff]
    %v6319 = vld [vmem:[%s6284 + $0x110] sm:$0xff]
    %v6320 = vld [vmem:[%s6284 + $0x118] sm:$0xff]
    %v6321 = vld [vmem:[%s6284 + $0x120] sm:$0xff]
    %v6322 = vld [vmem:[%s6284 + $0x128] sm:$0xff]
    %v6323 = vld [vmem:[%s6284 + $0x130] sm:$0xff]
    %v6324 = vld [vmem:[%s6284 + $0x138] sm:$0xff]
    %v6325 = vld [vmem:[%s6284 + $0x140] sm:$0xff]
    %v6326 = vld [vmem:[%s6284 + $0x148] sm:$0xff]
    %v6327 = vld [vmem:[%s6284 + $0x150] sm:$0xff]
    %v6328 = vld [vmem:[%s6284 + $0x158] sm:$0xff]
    %v6329 = vld [vmem:[%s6284 + $0x160] sm:$0xff]
    %v6330 = vld [vmem:[%s6284 + $0x168] sm:$0xff]
    %v6331 = vld [vmem:[%s6284 + $0x170] sm:$0xff]
    %v6332 = vld [vmem:[%s6284 + $0x178] sm:$0xff]
    %v6333 = vld [vmem:[%s6284 + $0x180] sm:$0xff]
    %v6334 = vld [vmem:[%s6284 + $0x188] sm:$0xff]
    %v6335 = vld [vmem:[%s6284 + $0x190] sm:$0xff]
    %v6336 = vld [vmem:[%s6284 + $0x198] sm:$0xff]
    %v6337 = vld [vmem:[%s6284 + $0x1a0] sm:$0xff]
    %v6338 = vld [vmem:[%s6284 + $0x1a8] sm:$0xff]
    %v6339 = vld [vmem:[%s6284 + $0x1b0] sm:$0xff]
    %v6340 = vld [vmem:[%s6284 + $0x1b8] sm:$0xff]
    %v6341 = vld [vmem:[%s6284 + $0x1c0] sm:$0xff]
    %v6342 = vld [vmem:[%s6284 + $0x1c8] sm:$0xff]
    %v6343 = vld [vmem:[%s6284 + $0x1d0] sm:$0xff]
    %v6344 = vld [vmem:[%s6284 + $0x1d8] sm:$0xff]
    %v6345 = vld [vmem:[%s6284 + $0x1e0] sm:$0xff]
    %v6346 = vld [vmem:[%s6284 + $0x1e8] sm:$0xff]
    %v6347 = vld [vmem:[%s6284 + $0x1f0] sm:$0xff]
    %v6348 = vld [vmem:[%s6284 + $0x1f8] sm:$0xff]
    %v6349 = vld [vmem:[%s6284 + $0x200] sm:$0xff]
    %v6350 = vld [vmem:[%s6284 + $0x208] sm:$0xff]
    %v6351 = vld [vmem:[%s6284 + $0x210] sm:$0xff]
    %v6352 = vld [vmem:[%s6284 + $0x218] sm:$0xff]
    %v6353 = vld [vmem:[%s6284 + $0x220] sm:$0xff]
    %v6354 = vld [vmem:[%s6284 + $0x228] sm:$0xff]
    %v6355 = vld [vmem:[%s6284 + $0x230] sm:$0xff]
    %v6356 = vld [vmem:[%s6284 + $0x238] sm:$0xff]
    %v6357 = vld [vmem:[%s6284 + $0x240] sm:$0xff]
    %v6358 = vld [vmem:[%s6284 + $0x248] sm:$0xff]
    %v6359 = vld [vmem:[%s6284 + $0x250] sm:$0xff]
    %v6360 = vld [vmem:[%s6284 + $0x258] sm:$0xff]
    %v6361 = vld [vmem:[%s6284 + $0x260] sm:$0xff]
    %v6362 = vld [vmem:[%s6284 + $0x268] sm:$0xff]
    %v6363 = vld [vmem:[%s6284 + $0x270] sm:$0xff]
    %v6364 = vld [vmem:[%s6284 + $0x278] sm:$0xff]
    %v6365 = vld [vmem:[%s6284 + $0x280] sm:$0xff]
    %6367 = vset.pattern.permute.xlu0 0
    %6368 = vperm.xlu0 %6367, %v6285
    %v6369 = vpop.permute.xlu0 %6368
    %6372 = vset.pattern.permute.xlu0 0
    %6373 = vperm.xlu0 %6372, %v6286
    %v6374 = vpop.permute.xlu0 %6373
    %6377 = vset.pattern.permute.xlu0 0
    %6378 = vperm.xlu0 %6377, %v6287
    %v6379 = vpop.permute.xlu0 %6378
    %6382 = vset.pattern.permute.xlu0 0
    %6383 = vperm.xlu0 %6382, %v6288
    %v6384 = vpop.permute.xlu0 %6383
    %6387 = vset.pattern.permute.xlu0 0
    %6388 = vperm.xlu0 %6387, %v6289
    %v6389 = vpop.permute.xlu0 %6388
    %6392 = vset.pattern.permute.xlu0 0
    %6393 = vperm.xlu0 %6392, %v6290
    %v6394 = vpop.permute.xlu0 %6393
    %6397 = vset.pattern.permute.xlu0 0
    %6398 = vperm.xlu0 %6397, %v6291
    %v6399 = vpop.permute.xlu0 %6398
    %6402 = vset.pattern.permute.xlu0 0
    %6403 = vperm.xlu0 %6402, %v6292
    %v6404 = vpop.permute.xlu0 %6403
    %6407 = vset.pattern.permute.xlu0 0
    %6408 = vperm.xlu0 %6407, %v6293
    %v6409 = vpop.permute.xlu0 %6408
    %6412 = vset.pattern.permute.xlu0 0
    %6413 = vperm.xlu0 %6412, %v6294
    %v6414 = vpop.permute.xlu0 %6413
    %6417 = vset.pattern.permute.xlu0 0
    %6418 = vperm.xlu0 %6417, %v6295
    %v6419 = vpop.permute.xlu0 %6418
    %6422 = vset.pattern.permute.xlu0 0
    %6423 = vperm.xlu0 %6422, %v6296
    %v6424 = vpop.permute.xlu0 %6423
    %6427 = vset.pattern.permute.xlu0 0
    %6428 = vperm.xlu0 %6427, %v6297
    %v6429 = vpop.permute.xlu0 %6428
    %6432 = vset.pattern.permute.xlu0 0
    %6433 = vperm.xlu0 %6432, %v6298
    %v6434 = vpop.permute.xlu0 %6433
    %6437 = vset.pattern.permute.xlu0 0
    %6438 = vperm.xlu0 %6437, %v6299
    %v6439 = vpop.permute.xlu0 %6438
    %6442 = vset.pattern.permute.xlu0 0
    %6443 = vperm.xlu0 %6442, %v6300
    %v6444 = vpop.permute.xlu0 %6443
    %6447 = vset.pattern.permute.xlu0 0
    %6448 = vperm.xlu0 %6447, %v6301
    %v6449 = vpop.permute.xlu0 %6448
    %6452 = vset.pattern.permute.xlu0 0
    %6453 = vperm.xlu0 %6452, %v6302
    %v6454 = vpop.permute.xlu0 %6453
    %6457 = vset.pattern.permute.xlu0 0
    %6458 = vperm.xlu0 %6457, %v6303
    %v6459 = vpop.permute.xlu0 %6458
    %6462 = vset.pattern.permute.xlu0 0
    %6463 = vperm.xlu0 %6462, %v6304
    %v6464 = vpop.permute.xlu0 %6463
    %6467 = vset.pattern.permute.xlu0 0
    %6468 = vperm.xlu0 %6467, %v6305
    %v6469 = vpop.permute.xlu0 %6468
    %6472 = vset.pattern.permute.xlu0 0
    %6473 = vperm.xlu0 %6472, %v6306
    %v6474 = vpop.permute.xlu0 %6473
    %6477 = vset.pattern.permute.xlu0 0
    %6478 = vperm.xlu0 %6477, %v6307
    %v6479 = vpop.permute.xlu0 %6478
    %6482 = vset.pattern.permute.xlu0 0
    %6483 = vperm.xlu0 %6482, %v6308
    %v6484 = vpop.permute.xlu0 %6483
    %6487 = vset.pattern.permute.xlu0 0
    %6488 = vperm.xlu0 %6487, %v6309
    %v6489 = vpop.permute.xlu0 %6488
    %6492 = vset.pattern.permute.xlu0 0
    %6493 = vperm.xlu0 %6492, %v6310
    %v6494 = vpop.permute.xlu0 %6493
    %6497 = vset.pattern.permute.xlu0 0
    %6498 = vperm.xlu0 %6497, %v6311
    %v6499 = vpop.permute.xlu0 %6498
    %6502 = vset.pattern.permute.xlu0 0
    %6503 = vperm.xlu0 %6502, %v6312
    %v6504 = vpop.permute.xlu0 %6503
    %6507 = vset.pattern.permute.xlu0 0
    %6508 = vperm.xlu0 %6507, %v6313
    %v6509 = vpop.permute.xlu0 %6508
    %6512 = vset.pattern.permute.xlu0 0
    %6513 = vperm.xlu0 %6512, %v6314
    %v6514 = vpop.permute.xlu0 %6513
    %6517 = vset.pattern.permute.xlu0 0
    %6518 = vperm.xlu0 %6517, %v6315
    %v6519 = vpop.permute.xlu0 %6518
    %6522 = vset.pattern.permute.xlu0 0
    %6523 = vperm.xlu0 %6522, %v6316
    %v6524 = vpop.permute.xlu0 %6523
    %6527 = vset.pattern.permute.xlu0 0
    %6528 = vperm.xlu0 %6527, %v6317
    %v6529 = vpop.permute.xlu0 %6528
    %6532 = vset.pattern.permute.xlu0 0
    %6533 = vperm.xlu0 %6532, %v6318
    %v6534 = vpop.permute.xlu0 %6533
    %6537 = vset.pattern.permute.xlu0 0
    %6538 = vperm.xlu0 %6537, %v6319
    %v6539 = vpop.permute.xlu0 %6538
    %6542 = vset.pattern.permute.xlu0 0
    %6543 = vperm.xlu0 %6542, %v6320
    %v6544 = vpop.permute.xlu0 %6543
    %6547 = vset.pattern.permute.xlu0 0
    %6548 = vperm.xlu0 %6547, %v6321
    %v6549 = vpop.permute.xlu0 %6548
    %6552 = vset.pattern.permute.xlu0 0
    %6553 = vperm.xlu0 %6552, %v6322
    %v6554 = vpop.permute.xlu0 %6553
    %6557 = vset.pattern.permute.xlu0 0
    %6558 = vperm.xlu0 %6557, %v6323
    %v6559 = vpop.permute.xlu0 %6558
    %6562 = vset.pattern.permute.xlu0 0
    %6563 = vperm.xlu0 %6562, %v6324
    %v6564 = vpop.permute.xlu0 %6563
    %6567 = vset.pattern.permute.xlu0 0
    %6568 = vperm.xlu0 %6567, %v6325
    %v6569 = vpop.permute.xlu0 %6568
    %6572 = vset.pattern.permute.xlu0 0
    %6573 = vperm.xlu0 %6572, %v6326
    %v6574 = vpop.permute.xlu0 %6573
    %6577 = vset.pattern.permute.xlu0 0
    %6578 = vperm.xlu0 %6577, %v6327
    %v6579 = vpop.permute.xlu0 %6578
    %6582 = vset.pattern.permute.xlu0 0
    %6583 = vperm.xlu0 %6582, %v6328
    %v6584 = vpop.permute.xlu0 %6583
    %6587 = vset.pattern.permute.xlu0 0
    %6588 = vperm.xlu0 %6587, %v6329
    %v6589 = vpop.permute.xlu0 %6588
    %6592 = vset.pattern.permute.xlu0 0
    %6593 = vperm.xlu0 %6592, %v6330
    %v6594 = vpop.permute.xlu0 %6593
    %6597 = vset.pattern.permute.xlu0 0
    %6598 = vperm.xlu0 %6597, %v6331
    %v6599 = vpop.permute.xlu0 %6598
    %6602 = vset.pattern.permute.xlu0 0
    %6603 = vperm.xlu0 %6602, %v6332
    %v6604 = vpop.permute.xlu0 %6603
    %6607 = vset.pattern.permute.xlu0 0
    %6608 = vperm.xlu0 %6607, %v6333
    %v6609 = vpop.permute.xlu0 %6608
    %6612 = vset.pattern.permute.xlu0 0
    %6613 = vperm.xlu0 %6612, %v6334
    %v6614 = vpop.permute.xlu0 %6613
    %6617 = vset.pattern.permute.xlu0 0
    %6618 = vperm.xlu0 %6617, %v6335
    %v6619 = vpop.permute.xlu0 %6618
    %6622 = vset.pattern.permute.xlu0 0
    %6623 = vperm.xlu0 %6622, %v6336
    %v6624 = vpop.permute.xlu0 %6623
    %6627 = vset.pattern.permute.xlu0 0
    %6628 = vperm.xlu0 %6627, %v6337
    %v6629 = vpop.permute.xlu0 %6628
    %6632 = vset.pattern.permute.xlu0 0
    %6633 = vperm.xlu0 %6632, %v6338
    %v6634 = vpop.permute.xlu0 %6633
    %6637 = vset.pattern.permute.xlu0 0
    %6638 = vperm.xlu0 %6637, %v6339
    %v6639 = vpop.permute.xlu0 %6638
    %6642 = vset.pattern.permute.xlu0 0
    %6643 = vperm.xlu0 %6642, %v6340
    %v6644 = vpop.permute.xlu0 %6643
    %6647 = vset.pattern.permute.xlu0 0
    %6648 = vperm.xlu0 %6647, %v6341
    %v6649 = vpop.permute.xlu0 %6648
    %6652 = vset.pattern.permute.xlu0 0
    %6653 = vperm.xlu0 %6652, %v6342
    %v6654 = vpop.permute.xlu0 %6653
    %6657 = vset.pattern.permute.xlu0 0
    %6658 = vperm.xlu0 %6657, %v6343
    %v6659 = vpop.permute.xlu0 %6658
    %6662 = vset.pattern.permute.xlu0 0
    %6663 = vperm.xlu0 %6662, %v6344
    %v6664 = vpop.permute.xlu0 %6663
    %6667 = vset.pattern.permute.xlu0 0
    %6668 = vperm.xlu0 %6667, %v6345
    %v6669 = vpop.permute.xlu0 %6668
    %6672 = vset.pattern.permute.xlu0 0
    %6673 = vperm.xlu0 %6672, %v6346
    %v6674 = vpop.permute.xlu0 %6673
    %6677 = vset.pattern.permute.xlu0 0
    %6678 = vperm.xlu0 %6677, %v6347
    %v6679 = vpop.permute.xlu0 %6678
    %6682 = vset.pattern.permute.xlu0 0
    %6683 = vperm.xlu0 %6682, %v6348
    %v6684 = vpop.permute.xlu0 %6683
    %6687 = vset.pattern.permute.xlu0 0
    %6688 = vperm.xlu0 %6687, %v6349
    %v6689 = vpop.permute.xlu0 %6688
    %6692 = vset.pattern.permute.xlu0 0
    %6693 = vperm.xlu0 %6692, %v6350
    %v6694 = vpop.permute.xlu0 %6693
    %6697 = vset.pattern.permute.xlu0 0
    %6698 = vperm.xlu0 %6697, %v6351
    %v6699 = vpop.permute.xlu0 %6698
    %6702 = vset.pattern.permute.xlu0 0
    %6703 = vperm.xlu0 %6702, %v6352
    %v6704 = vpop.permute.xlu0 %6703
    %6707 = vset.pattern.permute.xlu0 0
    %6708 = vperm.xlu0 %6707, %v6353
    %v6709 = vpop.permute.xlu0 %6708
    %6712 = vset.pattern.permute.xlu0 0
    %6713 = vperm.xlu0 %6712, %v6354
    %v6714 = vpop.permute.xlu0 %6713
    %6717 = vset.pattern.permute.xlu0 0
    %6718 = vperm.xlu0 %6717, %v6355
    %v6719 = vpop.permute.xlu0 %6718
    %6722 = vset.pattern.permute.xlu0 0
    %6723 = vperm.xlu0 %6722, %v6356
    %v6724 = vpop.permute.xlu0 %6723
    %6727 = vset.pattern.permute.xlu0 0
    %6728 = vperm.xlu0 %6727, %v6357
    %v6729 = vpop.permute.xlu0 %6728
    %6732 = vset.pattern.permute.xlu0 0
    %6733 = vperm.xlu0 %6732, %v6358
    %v6734 = vpop.permute.xlu0 %6733
    %6737 = vset.pattern.permute.xlu0 0
    %6738 = vperm.xlu0 %6737, %v6359
    %v6739 = vpop.permute.xlu0 %6738
    %6742 = vset.pattern.permute.xlu0 0
    %6743 = vperm.xlu0 %6742, %v6360
    %v6744 = vpop.permute.xlu0 %6743
    %6747 = vset.pattern.permute.xlu0 0
    %6748 = vperm.xlu0 %6747, %v6361
    %v6749 = vpop.permute.xlu0 %6748
    %6752 = vset.pattern.permute.xlu0 0
    %6753 = vperm.xlu0 %6752, %v6362
    %v6754 = vpop.permute.xlu0 %6753
    %6757 = vset.pattern.permute.xlu0 0
    %6758 = vperm.xlu0 %6757, %v6363
    %v6759 = vpop.permute.xlu0 %6758
    %6762 = vset.pattern.permute.xlu0 0
    %6763 = vperm.xlu0 %6762, %v6364
    %v6764 = vpop.permute.xlu0 %6763
    %6767 = vset.pattern.permute.xlu0 0
    %6768 = vperm.xlu0 %6767, %v6365
    %v6769 = vpop.permute.xlu0 %6768
    %v6771 = vmul.f32 %v6203, %v6369
    %v6772 = vmul.f32 %v6204, %v6374
    %v6773 = vmul.f32 %v6205, %v6379
    %v6774 = vmul.f32 %v6206, %v6384
    %v6775 = vmul.f32 %v6207, %v6389
    %v6776 = vmul.f32 %v6208, %v6394
    %v6777 = vmul.f32 %v6209, %v6399
    %v6778 = vmul.f32 %v6210, %v6404
    %v6779 = vmul.f32 %v6211, %v6409
    %v6780 = vmul.f32 %v6212, %v6414
    %v6781 = vmul.f32 %v6213, %v6419
    %v6782 = vmul.f32 %v6214, %v6424
    %v6783 = vmul.f32 %v6215, %v6429
    %v6784 = vmul.f32 %v6216, %v6434
    %v6785 = vmul.f32 %v6217, %v6439
    %v6786 = vmul.f32 %v6218, %v6444
    %v6787 = vmul.f32 %v6219, %v6449
    %v6788 = vmul.f32 %v6220, %v6454
    %v6789 = vmul.f32 %v6221, %v6459
    %v6790 = vmul.f32 %v6222, %v6464
    %v6791 = vmul.f32 %v6223, %v6469
    %v6792 = vmul.f32 %v6224, %v6474
    %v6793 = vmul.f32 %v6225, %v6479
    %v6794 = vmul.f32 %v6226, %v6484
    %v6795 = vmul.f32 %v6227, %v6489
    %v6796 = vmul.f32 %v6228, %v6494
    %v6797 = vmul.f32 %v6229, %v6499
    %v6798 = vmul.f32 %v6230, %v6504
    %v6799 = vmul.f32 %v6231, %v6509
    %v6800 = vmul.f32 %v6232, %v6514
    %v6801 = vmul.f32 %v6233, %v6519
    %v6802 = vmul.f32 %v6234, %v6524
    %v6803 = vmul.f32 %v6235, %v6529
    %v6804 = vmul.f32 %v6236, %v6534
    %v6805 = vmul.f32 %v6237, %v6539
    %v6806 = vmul.f32 %v6238, %v6544
    %v6807 = vmul.f32 %v6239, %v6549
    %v6808 = vmul.f32 %v6240, %v6554
    %v6809 = vmul.f32 %v6241, %v6559
    %v6810 = vmul.f32 %v6242, %v6564
    %v6811 = vmul.f32 %v6243, %v6569
    %v6812 = vmul.f32 %v6244, %v6574
    %v6813 = vmul.f32 %v6245, %v6579
    %v6814 = vmul.f32 %v6246, %v6584
    %v6815 = vmul.f32 %v6247, %v6589
    %v6816 = vmul.f32 %v6248, %v6594
    %v6817 = vmul.f32 %v6249, %v6599
    %v6818 = vmul.f32 %v6250, %v6604
    %v6819 = vmul.f32 %v6251, %v6609
    %v6820 = vmul.f32 %v6252, %v6614
    %v6821 = vmul.f32 %v6253, %v6619
    %v6822 = vmul.f32 %v6254, %v6624
    %v6823 = vmul.f32 %v6255, %v6629
    %v6824 = vmul.f32 %v6256, %v6634
    %v6825 = vmul.f32 %v6257, %v6639
    %v6826 = vmul.f32 %v6258, %v6644
    %v6827 = vmul.f32 %v6259, %v6649
    %v6828 = vmul.f32 %v6260, %v6654
    %v6829 = vmul.f32 %v6261, %v6659
    %v6830 = vmul.f32 %v6262, %v6664
    %v6831 = vmul.f32 %v6263, %v6669
    %v6832 = vmul.f32 %v6264, %v6674
    %v6833 = vmul.f32 %v6265, %v6679
    %v6834 = vmul.f32 %v6266, %v6684
    %v6835 = vmul.f32 %v6267, %v6689
    %v6836 = vmul.f32 %v6268, %v6694
    %v6837 = vmul.f32 %v6269, %v6699
    %v6838 = vmul.f32 %v6270, %v6704
    %v6839 = vmul.f32 %v6271, %v6709
    %v6840 = vmul.f32 %v6272, %v6714
    %v6841 = vmul.f32 %v6273, %v6719
    %v6842 = vmul.f32 %v6274, %v6724
    %v6843 = vmul.f32 %v6275, %v6729
    %v6844 = vmul.f32 %v6276, %v6734
    %v6845 = vmul.f32 %v6277, %v6739
    %v6846 = vmul.f32 %v6278, %v6744
    %v6847 = vmul.f32 %v6279, %v6749
    %v6848 = vmul.f32 %v6280, %v6754
    %v6849 = vmul.f32 %v6281, %v6759
    %v6850 = vmul.f32 %v6282, %v6764
    %v6851 = vmul.f32 %v6283, %v6769
    %6933 = vrot.lane.b32.xlu0 %v6771, 32
    %v6934 = vpop.permute.xlu0 %6933
    %6935 = vrot.lane.b32.xlu0 %v6772, 32
    %v6936 = vpop.permute.xlu0 %6935
    %6937 = vrot.lane.b32.xlu0 %v6773, 32
    %v6938 = vpop.permute.xlu0 %6937
    %6939 = vrot.lane.b32.xlu0 %v6774, 32
    %v6940 = vpop.permute.xlu0 %6939
    %6941 = vrot.lane.b32.xlu0 %v6775, 32
    %v6942 = vpop.permute.xlu0 %6941
    %6943 = vrot.lane.b32.xlu0 %v6776, 32
    %v6944 = vpop.permute.xlu0 %6943
    %6945 = vrot.lane.b32.xlu0 %v6777, 32
    %v6946 = vpop.permute.xlu0 %6945
    %6947 = vrot.lane.b32.xlu0 %v6778, 32
    %v6948 = vpop.permute.xlu0 %6947
    %6949 = vrot.lane.b32.xlu0 %v6779, 32
    %v6950 = vpop.permute.xlu0 %6949
    %6951 = vrot.lane.b32.xlu0 %v6780, 32
    %v6952 = vpop.permute.xlu0 %6951
    %6953 = vrot.lane.b32.xlu0 %v6781, 32
    %v6954 = vpop.permute.xlu0 %6953
    %6955 = vrot.lane.b32.xlu0 %v6782, 32
    %v6956 = vpop.permute.xlu0 %6955
    %6957 = vrot.lane.b32.xlu0 %v6783, 32
    %v6958 = vpop.permute.xlu0 %6957
    %6959 = vrot.lane.b32.xlu0 %v6784, 32
    %v6960 = vpop.permute.xlu0 %6959
    %6961 = vrot.lane.b32.xlu0 %v6785, 32
    %v6962 = vpop.permute.xlu0 %6961
    %6963 = vrot.lane.b32.xlu0 %v6786, 32
    %v6964 = vpop.permute.xlu0 %6963
    %6965 = vrot.lane.b32.xlu0 %v6787, 32
    %v6966 = vpop.permute.xlu0 %6965
    %6967 = vrot.lane.b32.xlu0 %v6788, 32
    %v6968 = vpop.permute.xlu0 %6967
    %6969 = vrot.lane.b32.xlu0 %v6789, 32
    %v6970 = vpop.permute.xlu0 %6969
    %6971 = vrot.lane.b32.xlu0 %v6790, 32
    %v6972 = vpop.permute.xlu0 %6971
    %6973 = vrot.lane.b32.xlu0 %v6791, 32
    %v6974 = vpop.permute.xlu0 %6973
    %6975 = vrot.lane.b32.xlu0 %v6792, 32
    %v6976 = vpop.permute.xlu0 %6975
    %6977 = vrot.lane.b32.xlu0 %v6793, 32
    %v6978 = vpop.permute.xlu0 %6977
    %6979 = vrot.lane.b32.xlu0 %v6794, 32
    %v6980 = vpop.permute.xlu0 %6979
    %6981 = vrot.lane.b32.xlu0 %v6795, 32
    %v6982 = vpop.permute.xlu0 %6981
    %6983 = vrot.lane.b32.xlu0 %v6796, 32
    %v6984 = vpop.permute.xlu0 %6983
    %6985 = vrot.lane.b32.xlu0 %v6797, 32
    %v6986 = vpop.permute.xlu0 %6985
    %6987 = vrot.lane.b32.xlu0 %v6798, 32
    %v6988 = vpop.permute.xlu0 %6987
    %6989 = vrot.lane.b32.xlu0 %v6799, 32
    %v6990 = vpop.permute.xlu0 %6989
    %6991 = vrot.lane.b32.xlu0 %v6800, 32
    %v6992 = vpop.permute.xlu0 %6991
    %6993 = vrot.lane.b32.xlu0 %v6801, 32
    %v6994 = vpop.permute.xlu0 %6993
    %6995 = vrot.lane.b32.xlu0 %v6802, 32
    %v6996 = vpop.permute.xlu0 %6995
    %6997 = vrot.lane.b32.xlu0 %v6803, 32
    %v6998 = vpop.permute.xlu0 %6997
    %6999 = vrot.lane.b32.xlu0 %v6804, 32
    %v7000 = vpop.permute.xlu0 %6999
    %7001 = vrot.lane.b32.xlu0 %v6805, 32
    %v7002 = vpop.permute.xlu0 %7001
    %7003 = vrot.lane.b32.xlu0 %v6806, 32
    %v7004 = vpop.permute.xlu0 %7003
    %7005 = vrot.lane.b32.xlu0 %v6807, 32
    %v7006 = vpop.permute.xlu0 %7005
    %7007 = vrot.lane.b32.xlu0 %v6808, 32
    %v7008 = vpop.permute.xlu0 %7007
    %7009 = vrot.lane.b32.xlu0 %v6809, 32
    %v7010 = vpop.permute.xlu0 %7009
    %7011 = vrot.lane.b32.xlu0 %v6810, 32
    %v7012 = vpop.permute.xlu0 %7011
    %7013 = vrot.lane.b32.xlu0 %v6811, 32
    %v7014 = vpop.permute.xlu0 %7013
    %7015 = vrot.lane.b32.xlu0 %v6812, 32
    %v7016 = vpop.permute.xlu0 %7015
    %7017 = vrot.lane.b32.xlu0 %v6813, 32
    %v7018 = vpop.permute.xlu0 %7017
    %7019 = vrot.lane.b32.xlu0 %v6814, 32
    %v7020 = vpop.permute.xlu0 %7019
    %7021 = vrot.lane.b32.xlu0 %v6815, 32
    %v7022 = vpop.permute.xlu0 %7021
    %7023 = vrot.lane.b32.xlu0 %v6816, 32
    %v7024 = vpop.permute.xlu0 %7023
    %7025 = vrot.lane.b32.xlu0 %v6817, 32
    %v7026 = vpop.permute.xlu0 %7025
    %7027 = vrot.lane.b32.xlu0 %v6818, 32
    %v7028 = vpop.permute.xlu0 %7027
    %7029 = vrot.lane.b32.xlu0 %v6819, 32
    %v7030 = vpop.permute.xlu0 %7029
    %7031 = vrot.lane.b32.xlu0 %v6820, 32
    %v7032 = vpop.permute.xlu0 %7031
    %7033 = vrot.lane.b32.xlu0 %v6821, 32
    %v7034 = vpop.permute.xlu0 %7033
    %7035 = vrot.lane.b32.xlu0 %v6822, 32
    %v7036 = vpop.permute.xlu0 %7035
    %7037 = vrot.lane.b32.xlu0 %v6823, 32
    %v7038 = vpop.permute.xlu0 %7037
    %7039 = vrot.lane.b32.xlu0 %v6824, 32
    %v7040 = vpop.permute.xlu0 %7039
    %7041 = vrot.lane.b32.xlu0 %v6825, 32
    %v7042 = vpop.permute.xlu0 %7041
    %7043 = vrot.lane.b32.xlu0 %v6826, 32
    %v7044 = vpop.permute.xlu0 %7043
    %7045 = vrot.lane.b32.xlu0 %v6827, 32
    %v7046 = vpop.permute.xlu0 %7045
    %7047 = vrot.lane.b32.xlu0 %v6828, 32
    %v7048 = vpop.permute.xlu0 %7047
    %7049 = vrot.lane.b32.xlu0 %v6829, 32
    %v7050 = vpop.permute.xlu0 %7049
    %7051 = vrot.lane.b32.xlu0 %v6830, 32
    %v7052 = vpop.permute.xlu0 %7051
    %7053 = vrot.lane.b32.xlu0 %v6831, 32
    %v7054 = vpop.permute.xlu0 %7053
    %7055 = vrot.lane.b32.xlu0 %v6832, 32
    %v7056 = vpop.permute.xlu0 %7055
    %7057 = vrot.lane.b32.xlu0 %v6833, 32
    %v7058 = vpop.permute.xlu0 %7057
    %7059 = vrot.lane.b32.xlu0 %v6834, 32
    %v7060 = vpop.permute.xlu0 %7059
    %7061 = vrot.lane.b32.xlu0 %v6835, 32
    %v7062 = vpop.permute.xlu0 %7061
    %7063 = vrot.lane.b32.xlu0 %v6836, 32
    %v7064 = vpop.permute.xlu0 %7063
    %7065 = vrot.lane.b32.xlu0 %v6837, 32
    %v7066 = vpop.permute.xlu0 %7065
    %7067 = vrot.lane.b32.xlu0 %v6838, 32
    %v7068 = vpop.permute.xlu0 %7067
    %7069 = vrot.lane.b32.xlu0 %v6839, 32
    %v7070 = vpop.permute.xlu0 %7069
    %7071 = vrot.lane.b32.xlu0 %v6840, 32
    %v7072 = vpop.permute.xlu0 %7071
    %7073 = vrot.lane.b32.xlu0 %v6841, 32
    %v7074 = vpop.permute.xlu0 %7073
    %7075 = vrot.lane.b32.xlu0 %v6842, 32
    %v7076 = vpop.permute.xlu0 %7075
    %7077 = vrot.lane.b32.xlu0 %v6843, 32
    %v7078 = vpop.permute.xlu0 %7077
    %7079 = vrot.lane.b32.xlu0 %v6844, 32
    %v7080 = vpop.permute.xlu0 %7079
    %7081 = vrot.lane.b32.xlu0 %v6845, 32
    %v7082 = vpop.permute.xlu0 %7081
    %7083 = vrot.lane.b32.xlu0 %v6846, 32
    %v7084 = vpop.permute.xlu0 %7083
    %7085 = vrot.lane.b32.xlu0 %v6847, 32
    %v7086 = vpop.permute.xlu0 %7085
    %7087 = vrot.lane.b32.xlu0 %v6848, 32
    %v7088 = vpop.permute.xlu0 %7087
    %7089 = vrot.lane.b32.xlu0 %v6849, 32
    %v7090 = vpop.permute.xlu0 %7089
    %7091 = vrot.lane.b32.xlu0 %v6850, 32
    %v7092 = vpop.permute.xlu0 %7091
    %7093 = vrot.lane.b32.xlu0 %v6851, 32
    %v7094 = vpop.permute.xlu0 %7093
    %7176 = vst.msk [vmem:[#allocation3 + $0x8] sm:$0xff] %vm3849, %v6934
    %7177 = vst.msk [vmem:[#allocation3 + $0x20] sm:$0xff] %vm3849, %v6936
    %7178 = vst.msk [vmem:[#allocation3 + $0x38] sm:$0xff] %vm3849, %v6938
    %7179 = vst.msk [vmem:[#allocation3 + $0x50] sm:$0xff] %vm3849, %v6940
    %7180 = vst.msk [vmem:[#allocation3 + $0x68] sm:$0xff] %vm3849, %v6942
    %7181 = vst.msk [vmem:[#allocation3 + $0x80] sm:$0xff] %vm3849, %v6944
    %7182 = vst.msk [vmem:[#allocation3 + $0x98] sm:$0xff] %vm3849, %v6946
    %7183 = vst.msk [vmem:[#allocation3 + $0xb0] sm:$0xff] %vm3849, %v6948
    %7184 = vst.msk [vmem:[#allocation3 + $0xc8] sm:$0xff] %vm3849, %v6950
    %7185 = vst.msk [vmem:[#allocation3 + $0xe0] sm:$0xff] %vm3849, %v6952
    %7186 = vst.msk [vmem:[#allocation3 + $0xf8] sm:$0xff] %vm3849, %v6954
    %7187 = vst.msk [vmem:[#allocation3 + $0x110] sm:$0xff] %vm3849, %v6956
    %7188 = vst.msk [vmem:[#allocation3 + $0x128] sm:$0xff] %vm3849, %v6958
    %7189 = vst.msk [vmem:[#allocation3 + $0x140] sm:$0xff] %vm3849, %v6960
    %7190 = vst.msk [vmem:[#allocation3 + $0x158] sm:$0xff] %vm3849, %v6962
    %7191 = vst.msk [vmem:[#allocation3 + $0x170] sm:$0xff] %vm3849, %v6964
    %7192 = vst.msk [vmem:[#allocation3 + $0x188] sm:$0xff] %vm3849, %v6966
    %7193 = vst.msk [vmem:[#allocation3 + $0x1a0] sm:$0xff] %vm3849, %v6968
    %7194 = vst.msk [vmem:[#allocation3 + $0x1b8] sm:$0xff] %vm3849, %v6970
    %7195 = vst.msk [vmem:[#allocation3 + $0x1d0] sm:$0xff] %vm3849, %v6972
    %7196 = vst.msk [vmem:[#allocation3 + $0x1e8] sm:$0xff] %vm3849, %v6974
    %7197 = vst.msk [vmem:[#allocation3 + $0x200] sm:$0xff] %vm3849, %v6976
    %7198 = vst.msk [vmem:[#allocation3 + $0x218] sm:$0xff] %vm3849, %v6978
    %7199 = vst.msk [vmem:[#allocation3 + $0x230] sm:$0xff] %vm3849, %v6980
    %7200 = vst.msk [vmem:[#allocation3 + $0x248] sm:$0xff] %vm3849, %v6982
    %7201 = vst.msk [vmem:[#allocation3 + $0x260] sm:$0xff] %vm3849, %v6984
    %7202 = vst.msk [vmem:[#allocation3 + $0x278] sm:$0xff] %vm3849, %v6986
    %7203 = vst.msk [vmem:[#allocation3 + $0x290] sm:$0xff] %vm3849, %v6988
    %7204 = vst.msk [vmem:[#allocation3 + $0x2a8] sm:$0xff] %vm3849, %v6990
    %7205 = vst.msk [vmem:[#allocation3 + $0x2c0] sm:$0xff] %vm3849, %v6992
    %7206 = vst.msk [vmem:[#allocation3 + $0x2d8] sm:$0xff] %vm3849, %v6994
    %7207 = vst.msk [vmem:[#allocation3 + $0x2f0] sm:$0xff] %vm3849, %v6996
    %7208 = vst.msk [vmem:[#allocation3 + $0x308] sm:$0xff] %vm3849, %v6998
    %7209 = vst.msk [vmem:[#allocation3 + $0x320] sm:$0xff] %vm3849, %v7000
    %7210 = vst.msk [vmem:[#allocation3 + $0x338] sm:$0xff] %vm3849, %v7002
    %7211 = vst.msk [vmem:[#allocation3 + $0x350] sm:$0xff] %vm3849, %v7004
    %7212 = vst.msk [vmem:[#allocation3 + $0x368] sm:$0xff] %vm3849, %v7006
    %7213 = vst.msk [vmem:[#allocation3 + $0x380] sm:$0xff] %vm3849, %v7008
    %7214 = vst.msk [vmem:[#allocation3 + $0x398] sm:$0xff] %vm3849, %v7010
    %7215 = vst.msk [vmem:[#allocation3 + $0x3b0] sm:$0xff] %vm3849, %v7012
    %7216 = vst.msk [vmem:[#allocation3 + $0x3c8] sm:$0xff] %vm3849, %v7014
    %7217 = vst.msk [vmem:[#allocation3 + $0x3e0] sm:$0xff] %vm3849, %v7016
    %7218 = vst.msk [vmem:[#allocation3 + $0x3f8] sm:$0xff] %vm3849, %v7018
    %7219 = vst.msk [vmem:[#allocation3 + $0x410] sm:$0xff] %vm3849, %v7020
    %7220 = vst.msk [vmem:[#allocation3 + $0x428] sm:$0xff] %vm3849, %v7022
    %7221 = vst.msk [vmem:[#allocation3 + $0x440] sm:$0xff] %vm3849, %v7024
    %7222 = vst.msk [vmem:[#allocation3 + $0x458] sm:$0xff] %vm3849, %v7026
    %7223 = vst.msk [vmem:[#allocation3 + $0x470] sm:$0xff] %vm3849, %v7028
    %7224 = vst.msk [vmem:[#allocation3 + $0x488] sm:$0xff] %vm3849, %v7030
    %7225 = vst.msk [vmem:[#allocation3 + $0x4a0] sm:$0xff] %vm3849, %v7032
    %7226 = vst.msk [vmem:[#allocation3 + $0x4b8] sm:$0xff] %vm3849, %v7034
    %7227 = vst.msk [vmem:[#allocation3 + $0x4d0] sm:$0xff] %vm3849, %v7036
    %7228 = vst.msk [vmem:[#allocation3 + $0x4e8] sm:$0xff] %vm3849, %v7038
    %7229 = vst.msk [vmem:[#allocation3 + $0x500] sm:$0xff] %vm3849, %v7040
    %7230 = vst.msk [vmem:[#allocation3 + $0x518] sm:$0xff] %vm3849, %v7042
    %7231 = vst.msk [vmem:[#allocation3 + $0x530] sm:$0xff] %vm3849, %v7044
    %7232 = vst.msk [vmem:[#allocation3 + $0x548] sm:$0xff] %vm3849, %v7046
    %7233 = vst.msk [vmem:[#allocation3 + $0x560] sm:$0xff] %vm3849, %v7048
    %7234 = vst.msk [vmem:[#allocation3 + $0x578] sm:$0xff] %vm3849, %v7050
    %7235 = vst.msk [vmem:[#allocation3 + $0x590] sm:$0xff] %vm3849, %v7052
    %7236 = vst.msk [vmem:[#allocation3 + $0x5a8] sm:$0xff] %vm3849, %v7054
    %7237 = vst.msk [vmem:[#allocation3 + $0x5c0] sm:$0xff] %vm3849, %v7056
    %7238 = vst.msk [vmem:[#allocation3 + $0x5d8] sm:$0xff] %vm3849, %v7058
    %7239 = vst.msk [vmem:[#allocation3 + $0x5f0] sm:$0xff] %vm3849, %v7060
    %7240 = vst.msk [vmem:[#allocation3 + $0x608] sm:$0xff] %vm3849, %v7062
    %7241 = vst.msk [vmem:[#allocation3 + $0x620] sm:$0xff] %vm3849, %v7064
    %7242 = vst.msk [vmem:[#allocation3 + $0x638] sm:$0xff] %vm3849, %v7066
    %7243 = vst.msk [vmem:[#allocation3 + $0x650] sm:$0xff] %vm3849, %v7068
    %7244 = vst.msk [vmem:[#allocation3 + $0x668] sm:$0xff] %vm3849, %v7070
    %7245 = vst.msk [vmem:[#allocation3 + $0x680] sm:$0xff] %vm3849, %v7072
    %7246 = vst.msk [vmem:[#allocation3 + $0x698] sm:$0xff] %vm3849, %v7074
    %7247 = vst.msk [vmem:[#allocation3 + $0x6b0] sm:$0xff] %vm3849, %v7076
    %7248 = vst.msk [vmem:[#allocation3 + $0x6c8] sm:$0xff] %vm3849, %v7078
    %7249 = vst.msk [vmem:[#allocation3 + $0x6e0] sm:$0xff] %vm3849, %v7080
    %7250 = vst.msk [vmem:[#allocation3 + $0x6f8] sm:$0xff] %vm3849, %v7082
    %7251 = vst.msk [vmem:[#allocation3 + $0x710] sm:$0xff] %vm3849, %v7084
    %7252 = vst.msk [vmem:[#allocation3 + $0x728] sm:$0xff] %vm3849, %v7086
    %7253 = vst.msk [vmem:[#allocation3 + $0x740] sm:$0xff] %vm3849, %v7088
    %7254 = vst.msk [vmem:[#allocation3 + $0x758] sm:$0xff] %vm3849, %v7090
    %7255 = vst.msk [vmem:[#allocation3 + $0x770] sm:$0xff] %vm3849, %v7092
    %7256 = vst.msk [vmem:[#allocation3 + $0x788] sm:$0xff] %vm3849, %v7094
    %v7257 = vld [vmem:[#allocation2 + $0x29] sm:$0xff]
    %v7258 = vld [vmem:[#allocation2 + $0x31] sm:$0xff]
    %v7259 = vld [vmem:[#allocation2 + $0x39] sm:$0xff]
    %v7260 = vld [vmem:[#allocation2 + $0x41] sm:$0xff]
    %v7261 = vld [vmem:[#allocation2 + $0x49] sm:$0xff]
    %v7262 = vld [vmem:[#allocation2 + $0x51] sm:$0xff]
    %v7263 = vld [vmem:[#allocation2 + $0x59] sm:$0xff]
    %v7264 = vld [vmem:[#allocation2 + $0x61] sm:$0xff]
    %v7265 = vld [vmem:[#allocation2 + $0x69] sm:$0xff]
    %v7266 = vld [vmem:[#allocation2 + $0x71] sm:$0xff]
    %v7267 = vld [vmem:[#allocation2 + $0x79] sm:$0xff]
    %v7268 = vld [vmem:[#allocation2 + $0x81] sm:$0xff]
    %v7269 = vld [vmem:[#allocation2 + $0x89] sm:$0xff]
    %v7270 = vld [vmem:[#allocation2 + $0x91] sm:$0xff]
    %v7271 = vld [vmem:[#allocation2 + $0x99] sm:$0xff]
    %v7272 = vld [vmem:[#allocation2 + $0xa1] sm:$0xff]
    %v7273 = vld [vmem:[#allocation2 + $0xa9] sm:$0xff]
    %v7274 = vld [vmem:[#allocation2 + $0xb1] sm:$0xff]
    %v7275 = vld [vmem:[#allocation2 + $0xb9] sm:$0xff]
    %v7276 = vld [vmem:[#allocation2 + $0xc1] sm:$0xff]
    %v7277 = vld [vmem:[#allocation2 + $0xc9] sm:$0xff]
    %v7278 = vld [vmem:[#allocation2 + $0xd1] sm:$0xff]
    %v7279 = vld [vmem:[#allocation2 + $0xd9] sm:$0xff]
    %v7280 = vld [vmem:[#allocation2 + $0xe1] sm:$0xff]
    %v7281 = vld [vmem:[#allocation2 + $0xe9] sm:$0xff]
    %v7282 = vld [vmem:[#allocation2 + $0xf1] sm:$0xff]
    %v7283 = vld [vmem:[#allocation2 + $0xf9] sm:$0xff]
    %v7284 = vld [vmem:[#allocation2 + $0x101] sm:$0xff]
    %v7285 = vld [vmem:[#allocation2 + $0x109] sm:$0xff]
    %v7286 = vld [vmem:[#allocation2 + $0x111] sm:$0xff]
    %v7287 = vld [vmem:[#allocation2 + $0x119] sm:$0xff]
    %v7288 = vld [vmem:[#allocation2 + $0x121] sm:$0xff]
    %v7289 = vld [vmem:[#allocation2 + $0x129] sm:$0xff]
    %v7290 = vld [vmem:[#allocation2 + $0x131] sm:$0xff]
    %v7291 = vld [vmem:[#allocation2 + $0x139] sm:$0xff]
    %v7292 = vld [vmem:[#allocation2 + $0x141] sm:$0xff]
    %v7293 = vld [vmem:[#allocation2 + $0x149] sm:$0xff]
    %v7294 = vld [vmem:[#allocation2 + $0x151] sm:$0xff]
    %v7295 = vld [vmem:[#allocation2 + $0x159] sm:$0xff]
    %v7296 = vld [vmem:[#allocation2 + $0x161] sm:$0xff]
    %v7297 = vld [vmem:[#allocation2 + $0x169] sm:$0xff]
    %v7298 = vld [vmem:[#allocation2 + $0x171] sm:$0xff]
    %v7299 = vld [vmem:[#allocation2 + $0x179] sm:$0xff]
    %v7300 = vld [vmem:[#allocation2 + $0x181] sm:$0xff]
    %v7301 = vld [vmem:[#allocation2 + $0x189] sm:$0xff]
    %v7302 = vld [vmem:[#allocation2 + $0x191] sm:$0xff]
    %v7303 = vld [vmem:[#allocation2 + $0x199] sm:$0xff]
    %v7304 = vld [vmem:[#allocation2 + $0x1a1] sm:$0xff]
    %v7305 = vld [vmem:[#allocation2 + $0x1a9] sm:$0xff]
    %v7306 = vld [vmem:[#allocation2 + $0x1b1] sm:$0xff]
    %v7307 = vld [vmem:[#allocation2 + $0x1b9] sm:$0xff]
    %v7308 = vld [vmem:[#allocation2 + $0x1c1] sm:$0xff]
    %v7309 = vld [vmem:[#allocation2 + $0x1c9] sm:$0xff]
    %v7310 = vld [vmem:[#allocation2 + $0x1d1] sm:$0xff]
    %v7311 = vld [vmem:[#allocation2 + $0x1d9] sm:$0xff]
    %v7312 = vld [vmem:[#allocation2 + $0x1e1] sm:$0xff]
    %v7313 = vld [vmem:[#allocation2 + $0x1e9] sm:$0xff]
    %v7314 = vld [vmem:[#allocation2 + $0x1f1] sm:$0xff]
    %v7315 = vld [vmem:[#allocation2 + $0x1f9] sm:$0xff]
    %v7316 = vld [vmem:[#allocation2 + $0x201] sm:$0xff]
    %v7317 = vld [vmem:[#allocation2 + $0x209] sm:$0xff]
    %v7318 = vld [vmem:[#allocation2 + $0x211] sm:$0xff]
    %v7319 = vld [vmem:[#allocation2 + $0x219] sm:$0xff]
    %v7320 = vld [vmem:[#allocation2 + $0x221] sm:$0xff]
    %v7321 = vld [vmem:[#allocation2 + $0x229] sm:$0xff]
    %v7322 = vld [vmem:[#allocation2 + $0x231] sm:$0xff]
    %v7323 = vld [vmem:[#allocation2 + $0x239] sm:$0xff]
    %v7324 = vld [vmem:[#allocation2 + $0x241] sm:$0xff]
    %v7325 = vld [vmem:[#allocation2 + $0x249] sm:$0xff]
    %v7326 = vld [vmem:[#allocation2 + $0x251] sm:$0xff]
    %v7327 = vld [vmem:[#allocation2 + $0x259] sm:$0xff]
    %v7328 = vld [vmem:[#allocation2 + $0x261] sm:$0xff]
    %v7329 = vld [vmem:[#allocation2 + $0x269] sm:$0xff]
    %v7330 = vld [vmem:[#allocation2 + $0x271] sm:$0xff]
    %v7331 = vld [vmem:[#allocation2 + $0x279] sm:$0xff]
    %v7332 = vld [vmem:[#allocation2 + $0x281] sm:$0xff]
    %v7333 = vld [vmem:[#allocation2 + $0x289] sm:$0xff]
    %v7334 = vld [vmem:[#allocation2 + $0x291] sm:$0xff]
    %v7335 = vld [vmem:[#allocation2 + $0x299] sm:$0xff]
    %v7336 = vld [vmem:[#allocation2 + $0x2a1] sm:$0xff]
    %v7337 = vld [vmem:[#allocation2 + $0x2a9] sm:$0xff]
    %s7338 = scalar_lea.vmem %s3, 3888
    %v7339 = vld [vmem:[%s7338] sm:$0xff]
    %v7340 = vld [vmem:[%s7338 + $0x8] sm:$0xff]
    %v7341 = vld [vmem:[%s7338 + $0x10] sm:$0xff]
    %v7342 = vld [vmem:[%s7338 + $0x18] sm:$0xff]
    %v7343 = vld [vmem:[%s7338 + $0x20] sm:$0xff]
    %v7344 = vld [vmem:[%s7338 + $0x28] sm:$0xff]
    %v7345 = vld [vmem:[%s7338 + $0x30] sm:$0xff]
    %v7346 = vld [vmem:[%s7338 + $0x38] sm:$0xff]
    %v7347 = vld [vmem:[%s7338 + $0x40] sm:$0xff]
    %v7348 = vld [vmem:[%s7338 + $0x48] sm:$0xff]
    %v7349 = vld [vmem:[%s7338 + $0x50] sm:$0xff]
    %v7350 = vld [vmem:[%s7338 + $0x58] sm:$0xff]
    %v7351 = vld [vmem:[%s7338 + $0x60] sm:$0xff]
    %v7352 = vld [vmem:[%s7338 + $0x68] sm:$0xff]
    %v7353 = vld [vmem:[%s7338 + $0x70] sm:$0xff]
    %v7354 = vld [vmem:[%s7338 + $0x78] sm:$0xff]
    %v7355 = vld [vmem:[%s7338 + $0x80] sm:$0xff]
    %v7356 = vld [vmem:[%s7338 + $0x88] sm:$0xff]
    %v7357 = vld [vmem:[%s7338 + $0x90] sm:$0xff]
    %v7358 = vld [vmem:[%s7338 + $0x98] sm:$0xff]
    %v7359 = vld [vmem:[%s7338 + $0xa0] sm:$0xff]
    %v7360 = vld [vmem:[%s7338 + $0xa8] sm:$0xff]
    %v7361 = vld [vmem:[%s7338 + $0xb0] sm:$0xff]
    %v7362 = vld [vmem:[%s7338 + $0xb8] sm:$0xff]
    %v7363 = vld [vmem:[%s7338 + $0xc0] sm:$0xff]
    %v7364 = vld [vmem:[%s7338 + $0xc8] sm:$0xff]
    %v7365 = vld [vmem:[%s7338 + $0xd0] sm:$0xff]
    %v7366 = vld [vmem:[%s7338 + $0xd8] sm:$0xff]
    %v7367 = vld [vmem:[%s7338 + $0xe0] sm:$0xff]
    %v7368 = vld [vmem:[%s7338 + $0xe8] sm:$0xff]
    %v7369 = vld [vmem:[%s7338 + $0xf0] sm:$0xff]
    %v7370 = vld [vmem:[%s7338 + $0xf8] sm:$0xff]
    %v7371 = vld [vmem:[%s7338 + $0x100] sm:$0xff]
    %v7372 = vld [vmem:[%s7338 + $0x108] sm:$0xff]
    %v7373 = vld [vmem:[%s7338 + $0x110] sm:$0xff]
    %v7374 = vld [vmem:[%s7338 + $0x118] sm:$0xff]
    %v7375 = vld [vmem:[%s7338 + $0x120] sm:$0xff]
    %v7376 = vld [vmem:[%s7338 + $0x128] sm:$0xff]
    %v7377 = vld [vmem:[%s7338 + $0x130] sm:$0xff]
    %v7378 = vld [vmem:[%s7338 + $0x138] sm:$0xff]
    %v7379 = vld [vmem:[%s7338 + $0x140] sm:$0xff]
    %v7380 = vld [vmem:[%s7338 + $0x148] sm:$0xff]
    %v7381 = vld [vmem:[%s7338 + $0x150] sm:$0xff]
    %v7382 = vld [vmem:[%s7338 + $0x158] sm:$0xff]
    %v7383 = vld [vmem:[%s7338 + $0x160] sm:$0xff]
    %v7384 = vld [vmem:[%s7338 + $0x168] sm:$0xff]
    %v7385 = vld [vmem:[%s7338 + $0x170] sm:$0xff]
    %v7386 = vld [vmem:[%s7338 + $0x178] sm:$0xff]
    %v7387 = vld [vmem:[%s7338 + $0x180] sm:$0xff]
    %v7388 = vld [vmem:[%s7338 + $0x188] sm:$0xff]
    %v7389 = vld [vmem:[%s7338 + $0x190] sm:$0xff]
    %v7390 = vld [vmem:[%s7338 + $0x198] sm:$0xff]
    %v7391 = vld [vmem:[%s7338 + $0x1a0] sm:$0xff]
    %v7392 = vld [vmem:[%s7338 + $0x1a8] sm:$0xff]
    %v7393 = vld [vmem:[%s7338 + $0x1b0] sm:$0xff]
    %v7394 = vld [vmem:[%s7338 + $0x1b8] sm:$0xff]
    %v7395 = vld [vmem:[%s7338 + $0x1c0] sm:$0xff]
    %v7396 = vld [vmem:[%s7338 + $0x1c8] sm:$0xff]
    %v7397 = vld [vmem:[%s7338 + $0x1d0] sm:$0xff]
    %v7398 = vld [vmem:[%s7338 + $0x1d8] sm:$0xff]
    %v7399 = vld [vmem:[%s7338 + $0x1e0] sm:$0xff]
    %v7400 = vld [vmem:[%s7338 + $0x1e8] sm:$0xff]
    %v7401 = vld [vmem:[%s7338 + $0x1f0] sm:$0xff]
    %v7402 = vld [vmem:[%s7338 + $0x1f8] sm:$0xff]
    %v7403 = vld [vmem:[%s7338 + $0x200] sm:$0xff]
    %v7404 = vld [vmem:[%s7338 + $0x208] sm:$0xff]
    %v7405 = vld [vmem:[%s7338 + $0x210] sm:$0xff]
    %v7406 = vld [vmem:[%s7338 + $0x218] sm:$0xff]
    %v7407 = vld [vmem:[%s7338 + $0x220] sm:$0xff]
    %v7408 = vld [vmem:[%s7338 + $0x228] sm:$0xff]
    %v7409 = vld [vmem:[%s7338 + $0x230] sm:$0xff]
    %v7410 = vld [vmem:[%s7338 + $0x238] sm:$0xff]
    %v7411 = vld [vmem:[%s7338 + $0x240] sm:$0xff]
    %v7412 = vld [vmem:[%s7338 + $0x248] sm:$0xff]
    %v7413 = vld [vmem:[%s7338 + $0x250] sm:$0xff]
    %v7414 = vld [vmem:[%s7338 + $0x258] sm:$0xff]
    %v7415 = vld [vmem:[%s7338 + $0x260] sm:$0xff]
    %v7416 = vld [vmem:[%s7338 + $0x268] sm:$0xff]
    %v7417 = vld [vmem:[%s7338 + $0x270] sm:$0xff]
    %v7418 = vld [vmem:[%s7338 + $0x278] sm:$0xff]
    %v7419 = vld [vmem:[%s7338 + $0x280] sm:$0xff]
    %7421 = vset.pattern.permute.xlu0 0
    %7422 = vperm.xlu0 %7421, %v7339
    %v7423 = vpop.permute.xlu0 %7422
    %7426 = vset.pattern.permute.xlu0 0
    %7427 = vperm.xlu0 %7426, %v7340
    %v7428 = vpop.permute.xlu0 %7427
    %7431 = vset.pattern.permute.xlu0 0
    %7432 = vperm.xlu0 %7431, %v7341
    %v7433 = vpop.permute.xlu0 %7432
    %7436 = vset.pattern.permute.xlu0 0
    %7437 = vperm.xlu0 %7436, %v7342
    %v7438 = vpop.permute.xlu0 %7437
    %7441 = vset.pattern.permute.xlu0 0
    %7442 = vperm.xlu0 %7441, %v7343
    %v7443 = vpop.permute.xlu0 %7442
    %7446 = vset.pattern.permute.xlu0 0
    %7447 = vperm.xlu0 %7446, %v7344
    %v7448 = vpop.permute.xlu0 %7447
    %7451 = vset.pattern.permute.xlu0 0
    %7452 = vperm.xlu0 %7451, %v7345
    %v7453 = vpop.permute.xlu0 %7452
    %7456 = vset.pattern.permute.xlu0 0
    %7457 = vperm.xlu0 %7456, %v7346
    %v7458 = vpop.permute.xlu0 %7457
    %7461 = vset.pattern.permute.xlu0 0
    %7462 = vperm.xlu0 %7461, %v7347
    %v7463 = vpop.permute.xlu0 %7462
    %7466 = vset.pattern.permute.xlu0 0
    %7467 = vperm.xlu0 %7466, %v7348
    %v7468 = vpop.permute.xlu0 %7467
    %7471 = vset.pattern.permute.xlu0 0
    %7472 = vperm.xlu0 %7471, %v7349
    %v7473 = vpop.permute.xlu0 %7472
    %7476 = vset.pattern.permute.xlu0 0
    %7477 = vperm.xlu0 %7476, %v7350
    %v7478 = vpop.permute.xlu0 %7477
    %7481 = vset.pattern.permute.xlu0 0
    %7482 = vperm.xlu0 %7481, %v7351
    %v7483 = vpop.permute.xlu0 %7482
    %7486 = vset.pattern.permute.xlu0 0
    %7487 = vperm.xlu0 %7486, %v7352
    %v7488 = vpop.permute.xlu0 %7487
    %7491 = vset.pattern.permute.xlu0 0
    %7492 = vperm.xlu0 %7491, %v7353
    %v7493 = vpop.permute.xlu0 %7492
    %7496 = vset.pattern.permute.xlu0 0
    %7497 = vperm.xlu0 %7496, %v7354
    %v7498 = vpop.permute.xlu0 %7497
    %7501 = vset.pattern.permute.xlu0 0
    %7502 = vperm.xlu0 %7501, %v7355
    %v7503 = vpop.permute.xlu0 %7502
    %7506 = vset.pattern.permute.xlu0 0
    %7507 = vperm.xlu0 %7506, %v7356
    %v7508 = vpop.permute.xlu0 %7507
    %7511 = vset.pattern.permute.xlu0 0
    %7512 = vperm.xlu0 %7511, %v7357
    %v7513 = vpop.permute.xlu0 %7512
    %7516 = vset.pattern.permute.xlu0 0
    %7517 = vperm.xlu0 %7516, %v7358
    %v7518 = vpop.permute.xlu0 %7517
    %7521 = vset.pattern.permute.xlu0 0
    %7522 = vperm.xlu0 %7521, %v7359
    %v7523 = vpop.permute.xlu0 %7522
    %7526 = vset.pattern.permute.xlu0 0
    %7527 = vperm.xlu0 %7526, %v7360
    %v7528 = vpop.permute.xlu0 %7527
    %7531 = vset.pattern.permute.xlu0 0
    %7532 = vperm.xlu0 %7531, %v7361
    %v7533 = vpop.permute.xlu0 %7532
    %7536 = vset.pattern.permute.xlu0 0
    %7537 = vperm.xlu0 %7536, %v7362
    %v7538 = vpop.permute.xlu0 %7537
    %7541 = vset.pattern.permute.xlu0 0
    %7542 = vperm.xlu0 %7541, %v7363
    %v7543 = vpop.permute.xlu0 %7542
    %7546 = vset.pattern.permute.xlu0 0
    %7547 = vperm.xlu0 %7546, %v7364
    %v7548 = vpop.permute.xlu0 %7547
    %7551 = vset.pattern.permute.xlu0 0
    %7552 = vperm.xlu0 %7551, %v7365
    %v7553 = vpop.permute.xlu0 %7552
    %7556 = vset.pattern.permute.xlu0 0
    %7557 = vperm.xlu0 %7556, %v7366
    %v7558 = vpop.permute.xlu0 %7557
    %7561 = vset.pattern.permute.xlu0 0
    %7562 = vperm.xlu0 %7561, %v7367
    %v7563 = vpop.permute.xlu0 %7562
    %7566 = vset.pattern.permute.xlu0 0
    %7567 = vperm.xlu0 %7566, %v7368
    %v7568 = vpop.permute.xlu0 %7567
    %7571 = vset.pattern.permute.xlu0 0
    %7572 = vperm.xlu0 %7571, %v7369
    %v7573 = vpop.permute.xlu0 %7572
    %7576 = vset.pattern.permute.xlu0 0
    %7577 = vperm.xlu0 %7576, %v7370
    %v7578 = vpop.permute.xlu0 %7577
    %7581 = vset.pattern.permute.xlu0 0
    %7582 = vperm.xlu0 %7581, %v7371
    %v7583 = vpop.permute.xlu0 %7582
    %7586 = vset.pattern.permute.xlu0 0
    %7587 = vperm.xlu0 %7586, %v7372
    %v7588 = vpop.permute.xlu0 %7587
    %7591 = vset.pattern.permute.xlu0 0
    %7592 = vperm.xlu0 %7591, %v7373
    %v7593 = vpop.permute.xlu0 %7592
    %7596 = vset.pattern.permute.xlu0 0
    %7597 = vperm.xlu0 %7596, %v7374
    %v7598 = vpop.permute.xlu0 %7597
    %7601 = vset.pattern.permute.xlu0 0
    %7602 = vperm.xlu0 %7601, %v7375
    %v7603 = vpop.permute.xlu0 %7602
    %7606 = vset.pattern.permute.xlu0 0
    %7607 = vperm.xlu0 %7606, %v7376
    %v7608 = vpop.permute.xlu0 %7607
    %7611 = vset.pattern.permute.xlu0 0
    %7612 = vperm.xlu0 %7611, %v7377
    %v7613 = vpop.permute.xlu0 %7612
    %7616 = vset.pattern.permute.xlu0 0
    %7617 = vperm.xlu0 %7616, %v7378
    %v7618 = vpop.permute.xlu0 %7617
    %7621 = vset.pattern.permute.xlu0 0
    %7622 = vperm.xlu0 %7621, %v7379
    %v7623 = vpop.permute.xlu0 %7622
    %7626 = vset.pattern.permute.xlu0 0
    %7627 = vperm.xlu0 %7626, %v7380
    %v7628 = vpop.permute.xlu0 %7627
    %7631 = vset.pattern.permute.xlu0 0
    %7632 = vperm.xlu0 %7631, %v7381
    %v7633 = vpop.permute.xlu0 %7632
    %7636 = vset.pattern.permute.xlu0 0
    %7637 = vperm.xlu0 %7636, %v7382
    %v7638 = vpop.permute.xlu0 %7637
    %7641 = vset.pattern.permute.xlu0 0
    %7642 = vperm.xlu0 %7641, %v7383
    %v7643 = vpop.permute.xlu0 %7642
    %7646 = vset.pattern.permute.xlu0 0
    %7647 = vperm.xlu0 %7646, %v7384
    %v7648 = vpop.permute.xlu0 %7647
    %7651 = vset.pattern.permute.xlu0 0
    %7652 = vperm.xlu0 %7651, %v7385
    %v7653 = vpop.permute.xlu0 %7652
    %7656 = vset.pattern.permute.xlu0 0
    %7657 = vperm.xlu0 %7656, %v7386
    %v7658 = vpop.permute.xlu0 %7657
    %7661 = vset.pattern.permute.xlu0 0
    %7662 = vperm.xlu0 %7661, %v7387
    %v7663 = vpop.permute.xlu0 %7662
    %7666 = vset.pattern.permute.xlu0 0
    %7667 = vperm.xlu0 %7666, %v7388
    %v7668 = vpop.permute.xlu0 %7667
    %7671 = vset.pattern.permute.xlu0 0
    %7672 = vperm.xlu0 %7671, %v7389
    %v7673 = vpop.permute.xlu0 %7672
    %7676 = vset.pattern.permute.xlu0 0
    %7677 = vperm.xlu0 %7676, %v7390
    %v7678 = vpop.permute.xlu0 %7677
    %7681 = vset.pattern.permute.xlu0 0
    %7682 = vperm.xlu0 %7681, %v7391
    %v7683 = vpop.permute.xlu0 %7682
    %7686 = vset.pattern.permute.xlu0 0
    %7687 = vperm.xlu0 %7686, %v7392
    %v7688 = vpop.permute.xlu0 %7687
    %7691 = vset.pattern.permute.xlu0 0
    %7692 = vperm.xlu0 %7691, %v7393
    %v7693 = vpop.permute.xlu0 %7692
    %7696 = vset.pattern.permute.xlu0 0
    %7697 = vperm.xlu0 %7696, %v7394
    %v7698 = vpop.permute.xlu0 %7697
    %7701 = vset.pattern.permute.xlu0 0
    %7702 = vperm.xlu0 %7701, %v7395
    %v7703 = vpop.permute.xlu0 %7702
    %7706 = vset.pattern.permute.xlu0 0
    %7707 = vperm.xlu0 %7706, %v7396
    %v7708 = vpop.permute.xlu0 %7707
    %7711 = vset.pattern.permute.xlu0 0
    %7712 = vperm.xlu0 %7711, %v7397
    %v7713 = vpop.permute.xlu0 %7712
    %7716 = vset.pattern.permute.xlu0 0
    %7717 = vperm.xlu0 %7716, %v7398
    %v7718 = vpop.permute.xlu0 %7717
    %7721 = vset.pattern.permute.xlu0 0
    %7722 = vperm.xlu0 %7721, %v7399
    %v7723 = vpop.permute.xlu0 %7722
    %7726 = vset.pattern.permute.xlu0 0
    %7727 = vperm.xlu0 %7726, %v7400
    %v7728 = vpop.permute.xlu0 %7727
    %7731 = vset.pattern.permute.xlu0 0
    %7732 = vperm.xlu0 %7731, %v7401
    %v7733 = vpop.permute.xlu0 %7732
    %7736 = vset.pattern.permute.xlu0 0
    %7737 = vperm.xlu0 %7736, %v7402
    %v7738 = vpop.permute.xlu0 %7737
    %7741 = vset.pattern.permute.xlu0 0
    %7742 = vperm.xlu0 %7741, %v7403
    %v7743 = vpop.permute.xlu0 %7742
    %7746 = vset.pattern.permute.xlu0 0
    %7747 = vperm.xlu0 %7746, %v7404
    %v7748 = vpop.permute.xlu0 %7747
    %7751 = vset.pattern.permute.xlu0 0
    %7752 = vperm.xlu0 %7751, %v7405
    %v7753 = vpop.permute.xlu0 %7752
    %7756 = vset.pattern.permute.xlu0 0
    %7757 = vperm.xlu0 %7756, %v7406
    %v7758 = vpop.permute.xlu0 %7757
    %7761 = vset.pattern.permute.xlu0 0
    %7762 = vperm.xlu0 %7761, %v7407
    %v7763 = vpop.permute.xlu0 %7762
    %7766 = vset.pattern.permute.xlu0 0
    %7767 = vperm.xlu0 %7766, %v7408
    %v7768 = vpop.permute.xlu0 %7767
    %7771 = vset.pattern.permute.xlu0 0
    %7772 = vperm.xlu0 %7771, %v7409
    %v7773 = vpop.permute.xlu0 %7772
    %7776 = vset.pattern.permute.xlu0 0
    %7777 = vperm.xlu0 %7776, %v7410
    %v7778 = vpop.permute.xlu0 %7777
    %7781 = vset.pattern.permute.xlu0 0
    %7782 = vperm.xlu0 %7781, %v7411
    %v7783 = vpop.permute.xlu0 %7782
    %7786 = vset.pattern.permute.xlu0 0
    %7787 = vperm.xlu0 %7786, %v7412
    %v7788 = vpop.permute.xlu0 %7787
    %7791 = vset.pattern.permute.xlu0 0
    %7792 = vperm.xlu0 %7791, %v7413
    %v7793 = vpop.permute.xlu0 %7792
    %7796 = vset.pattern.permute.xlu0 0
    %7797 = vperm.xlu0 %7796, %v7414
    %v7798 = vpop.permute.xlu0 %7797
    %7801 = vset.pattern.permute.xlu0 0
    %7802 = vperm.xlu0 %7801, %v7415
    %v7803 = vpop.permute.xlu0 %7802
    %7806 = vset.pattern.permute.xlu0 0
    %7807 = vperm.xlu0 %7806, %v7416
    %v7808 = vpop.permute.xlu0 %7807
    %7811 = vset.pattern.permute.xlu0 0
    %7812 = vperm.xlu0 %7811, %v7417
    %v7813 = vpop.permute.xlu0 %7812
    %7816 = vset.pattern.permute.xlu0 0
    %7817 = vperm.xlu0 %7816, %v7418
    %v7818 = vpop.permute.xlu0 %7817
    %7821 = vset.pattern.permute.xlu0 0
    %7822 = vperm.xlu0 %7821, %v7419
    %v7823 = vpop.permute.xlu0 %7822
    %v7825 = vmul.f32 %v7257, %v7423
    %v7826 = vmul.f32 %v7258, %v7428
    %v7827 = vmul.f32 %v7259, %v7433
    %v7828 = vmul.f32 %v7260, %v7438
    %v7829 = vmul.f32 %v7261, %v7443
    %v7830 = vmul.f32 %v7262, %v7448
    %v7831 = vmul.f32 %v7263, %v7453
    %v7832 = vmul.f32 %v7264, %v7458
    %v7833 = vmul.f32 %v7265, %v7463
    %v7834 = vmul.f32 %v7266, %v7468
    %v7835 = vmul.f32 %v7267, %v7473
    %v7836 = vmul.f32 %v7268, %v7478
    %v7837 = vmul.f32 %v7269, %v7483
    %v7838 = vmul.f32 %v7270, %v7488
    %v7839 = vmul.f32 %v7271, %v7493
    %v7840 = vmul.f32 %v7272, %v7498
    %v7841 = vmul.f32 %v7273, %v7503
    %v7842 = vmul.f32 %v7274, %v7508
    %v7843 = vmul.f32 %v7275, %v7513
    %v7844 = vmul.f32 %v7276, %v7518
    %v7845 = vmul.f32 %v7277, %v7523
    %v7846 = vmul.f32 %v7278, %v7528
    %v7847 = vmul.f32 %v7279, %v7533
    %v7848 = vmul.f32 %v7280, %v7538
    %v7849 = vmul.f32 %v7281, %v7543
    %v7850 = vmul.f32 %v7282, %v7548
    %v7851 = vmul.f32 %v7283, %v7553
    %v7852 = vmul.f32 %v7284, %v7558
    %v7853 = vmul.f32 %v7285, %v7563
    %v7854 = vmul.f32 %v7286, %v7568
    %v7855 = vmul.f32 %v7287, %v7573
    %v7856 = vmul.f32 %v7288, %v7578
    %v7857 = vmul.f32 %v7289, %v7583
    %v7858 = vmul.f32 %v7290, %v7588
    %v7859 = vmul.f32 %v7291, %v7593
    %v7860 = vmul.f32 %v7292, %v7598
    %v7861 = vmul.f32 %v7293, %v7603
    %v7862 = vmul.f32 %v7294, %v7608
    %v7863 = vmul.f32 %v7295, %v7613
    %v7864 = vmul.f32 %v7296, %v7618
    %v7865 = vmul.f32 %v7297, %v7623
    %v7866 = vmul.f32 %v7298, %v7628
    %v7867 = vmul.f32 %v7299, %v7633
    %v7868 = vmul.f32 %v7300, %v7638
    %v7869 = vmul.f32 %v7301, %v7643
    %v7870 = vmul.f32 %v7302, %v7648
    %v7871 = vmul.f32 %v7303, %v7653
    %v7872 = vmul.f32 %v7304, %v7658
    %v7873 = vmul.f32 %v7305, %v7663
    %v7874 = vmul.f32 %v7306, %v7668
    %v7875 = vmul.f32 %v7307, %v7673
    %v7876 = vmul.f32 %v7308, %v7678
    %v7877 = vmul.f32 %v7309, %v7683
    %v7878 = vmul.f32 %v7310, %v7688
    %v7879 = vmul.f32 %v7311, %v7693
    %v7880 = vmul.f32 %v7312, %v7698
    %v7881 = vmul.f32 %v7313, %v7703
    %v7882 = vmul.f32 %v7314, %v7708
    %v7883 = vmul.f32 %v7315, %v7713
    %v7884 = vmul.f32 %v7316, %v7718
    %v7885 = vmul.f32 %v7317, %v7723
    %v7886 = vmul.f32 %v7318, %v7728
    %v7887 = vmul.f32 %v7319, %v7733
    %v7888 = vmul.f32 %v7320, %v7738
    %v7889 = vmul.f32 %v7321, %v7743
    %v7890 = vmul.f32 %v7322, %v7748
    %v7891 = vmul.f32 %v7323, %v7753
    %v7892 = vmul.f32 %v7324, %v7758
    %v7893 = vmul.f32 %v7325, %v7763
    %v7894 = vmul.f32 %v7326, %v7768
    %v7895 = vmul.f32 %v7327, %v7773
    %v7896 = vmul.f32 %v7328, %v7778
    %v7897 = vmul.f32 %v7329, %v7783
    %v7898 = vmul.f32 %v7330, %v7788
    %v7899 = vmul.f32 %v7331, %v7793
    %v7900 = vmul.f32 %v7332, %v7798
    %v7901 = vmul.f32 %v7333, %v7803
    %v7902 = vmul.f32 %v7334, %v7808
    %v7903 = vmul.f32 %v7335, %v7813
    %v7904 = vmul.f32 %v7336, %v7818
    %v7905 = vmul.f32 %v7337, %v7823
    %7987 = vrot.lane.b32.xlu0 %v7825, 64
    %v7988 = vpop.permute.xlu0 %7987
    %7989 = vrot.lane.b32.xlu0 %v7826, 64
    %v7990 = vpop.permute.xlu0 %7989
    %7991 = vrot.lane.b32.xlu0 %v7827, 64
    %v7992 = vpop.permute.xlu0 %7991
    %7993 = vrot.lane.b32.xlu0 %v7828, 64
    %v7994 = vpop.permute.xlu0 %7993
    %7995 = vrot.lane.b32.xlu0 %v7829, 64
    %v7996 = vpop.permute.xlu0 %7995
    %7997 = vrot.lane.b32.xlu0 %v7830, 64
    %v7998 = vpop.permute.xlu0 %7997
    %7999 = vrot.lane.b32.xlu0 %v7831, 64
    %v8000 = vpop.permute.xlu0 %7999
    %8001 = vrot.lane.b32.xlu0 %v7832, 64
    %v8002 = vpop.permute.xlu0 %8001
    %8003 = vrot.lane.b32.xlu0 %v7833, 64
    %v8004 = vpop.permute.xlu0 %8003
    %8005 = vrot.lane.b32.xlu0 %v7834, 64
    %v8006 = vpop.permute.xlu0 %8005
    %8007 = vrot.lane.b32.xlu0 %v7835, 64
    %v8008 = vpop.permute.xlu0 %8007
    %8009 = vrot.lane.b32.xlu0 %v7836, 64
    %v8010 = vpop.permute.xlu0 %8009
    %8011 = vrot.lane.b32.xlu0 %v7837, 64
    %v8012 = vpop.permute.xlu0 %8011
    %8013 = vrot.lane.b32.xlu0 %v7838, 64
    %v8014 = vpop.permute.xlu0 %8013
    %8015 = vrot.lane.b32.xlu0 %v7839, 64
    %v8016 = vpop.permute.xlu0 %8015
    %8017 = vrot.lane.b32.xlu0 %v7840, 64
    %v8018 = vpop.permute.xlu0 %8017
    %8019 = vrot.lane.b32.xlu0 %v7841, 64
    %v8020 = vpop.permute.xlu0 %8019
    %8021 = vrot.lane.b32.xlu0 %v7842, 64
    %v8022 = vpop.permute.xlu0 %8021
    %8023 = vrot.lane.b32.xlu0 %v7843, 64
    %v8024 = vpop.permute.xlu0 %8023
    %8025 = vrot.lane.b32.xlu0 %v7844, 64
    %v8026 = vpop.permute.xlu0 %8025
    %8027 = vrot.lane.b32.xlu0 %v7845, 64
    %v8028 = vpop.permute.xlu0 %8027
    %8029 = vrot.lane.b32.xlu0 %v7846, 64
    %v8030 = vpop.permute.xlu0 %8029
    %8031 = vrot.lane.b32.xlu0 %v7847, 64
    %v8032 = vpop.permute.xlu0 %8031
    %8033 = vrot.lane.b32.xlu0 %v7848, 64
    %v8034 = vpop.permute.xlu0 %8033
    %8035 = vrot.lane.b32.xlu0 %v7849, 64
    %v8036 = vpop.permute.xlu0 %8035
    %8037 = vrot.lane.b32.xlu0 %v7850, 64
    %v8038 = vpop.permute.xlu0 %8037
    %8039 = vrot.lane.b32.xlu0 %v7851, 64
    %v8040 = vpop.permute.xlu0 %8039
    %8041 = vrot.lane.b32.xlu0 %v7852, 64
    %v8042 = vpop.permute.xlu0 %8041
    %8043 = vrot.lane.b32.xlu0 %v7853, 64
    %v8044 = vpop.permute.xlu0 %8043
    %8045 = vrot.lane.b32.xlu0 %v7854, 64
    %v8046 = vpop.permute.xlu0 %8045
    %8047 = vrot.lane.b32.xlu0 %v7855, 64
    %v8048 = vpop.permute.xlu0 %8047
    %8049 = vrot.lane.b32.xlu0 %v7856, 64
    %v8050 = vpop.permute.xlu0 %8049
    %8051 = vrot.lane.b32.xlu0 %v7857, 64
    %v8052 = vpop.permute.xlu0 %8051
    %8053 = vrot.lane.b32.xlu0 %v7858, 64
    %v8054 = vpop.permute.xlu0 %8053
    %8055 = vrot.lane.b32.xlu0 %v7859, 64
    %v8056 = vpop.permute.xlu0 %8055
    %8057 = vrot.lane.b32.xlu0 %v7860, 64
    %v8058 = vpop.permute.xlu0 %8057
    %8059 = vrot.lane.b32.xlu0 %v7861, 64
    %v8060 = vpop.permute.xlu0 %8059
    %8061 = vrot.lane.b32.xlu0 %v7862, 64
    %v8062 = vpop.permute.xlu0 %8061
    %8063 = vrot.lane.b32.xlu0 %v7863, 64
    %v8064 = vpop.permute.xlu0 %8063
    %8065 = vrot.lane.b32.xlu0 %v7864, 64
    %v8066 = vpop.permute.xlu0 %8065
    %8067 = vrot.lane.b32.xlu0 %v7865, 64
    %v8068 = vpop.permute.xlu0 %8067
    %8069 = vrot.lane.b32.xlu0 %v7866, 64
    %v8070 = vpop.permute.xlu0 %8069
    %8071 = vrot.lane.b32.xlu0 %v7867, 64
    %v8072 = vpop.permute.xlu0 %8071
    %8073 = vrot.lane.b32.xlu0 %v7868, 64
    %v8074 = vpop.permute.xlu0 %8073
    %8075 = vrot.lane.b32.xlu0 %v7869, 64
    %v8076 = vpop.permute.xlu0 %8075
    %8077 = vrot.lane.b32.xlu0 %v7870, 64
    %v8078 = vpop.permute.xlu0 %8077
    %8079 = vrot.lane.b32.xlu0 %v7871, 64
    %v8080 = vpop.permute.xlu0 %8079
    %8081 = vrot.lane.b32.xlu0 %v7872, 64
    %v8082 = vpop.permute.xlu0 %8081
    %8083 = vrot.lane.b32.xlu0 %v7873, 64
    %v8084 = vpop.permute.xlu0 %8083
    %8085 = vrot.lane.b32.xlu0 %v7874, 64
    %v8086 = vpop.permute.xlu0 %8085
    %8087 = vrot.lane.b32.xlu0 %v7875, 64
    %v8088 = vpop.permute.xlu0 %8087
    %8089 = vrot.lane.b32.xlu0 %v7876, 64
    %v8090 = vpop.permute.xlu0 %8089
    %8091 = vrot.lane.b32.xlu0 %v7877, 64
    %v8092 = vpop.permute.xlu0 %8091
    %8093 = vrot.lane.b32.xlu0 %v7878, 64
    %v8094 = vpop.permute.xlu0 %8093
    %8095 = vrot.lane.b32.xlu0 %v7879, 64
    %v8096 = vpop.permute.xlu0 %8095
    %8097 = vrot.lane.b32.xlu0 %v7880, 64
    %v8098 = vpop.permute.xlu0 %8097
    %8099 = vrot.lane.b32.xlu0 %v7881, 64
    %v8100 = vpop.permute.xlu0 %8099
    %8101 = vrot.lane.b32.xlu0 %v7882, 64
    %v8102 = vpop.permute.xlu0 %8101
    %8103 = vrot.lane.b32.xlu0 %v7883, 64
    %v8104 = vpop.permute.xlu0 %8103
    %8105 = vrot.lane.b32.xlu0 %v7884, 64
    %v8106 = vpop.permute.xlu0 %8105
    %8107 = vrot.lane.b32.xlu0 %v7885, 64
    %v8108 = vpop.permute.xlu0 %8107
    %8109 = vrot.lane.b32.xlu0 %v7886, 64
    %v8110 = vpop.permute.xlu0 %8109
    %8111 = vrot.lane.b32.xlu0 %v7887, 64
    %v8112 = vpop.permute.xlu0 %8111
    %8113 = vrot.lane.b32.xlu0 %v7888, 64
    %v8114 = vpop.permute.xlu0 %8113
    %8115 = vrot.lane.b32.xlu0 %v7889, 64
    %v8116 = vpop.permute.xlu0 %8115
    %8117 = vrot.lane.b32.xlu0 %v7890, 64
    %v8118 = vpop.permute.xlu0 %8117
    %8119 = vrot.lane.b32.xlu0 %v7891, 64
    %v8120 = vpop.permute.xlu0 %8119
    %8121 = vrot.lane.b32.xlu0 %v7892, 64
    %v8122 = vpop.permute.xlu0 %8121
    %8123 = vrot.lane.b32.xlu0 %v7893, 64
    %v8124 = vpop.permute.xlu0 %8123
    %8125 = vrot.lane.b32.xlu0 %v7894, 64
    %v8126 = vpop.permute.xlu0 %8125
    %8127 = vrot.lane.b32.xlu0 %v7895, 64
    %v8128 = vpop.permute.xlu0 %8127
    %8129 = vrot.lane.b32.xlu0 %v7896, 64
    %v8130 = vpop.permute.xlu0 %8129
    %8131 = vrot.lane.b32.xlu0 %v7897, 64
    %v8132 = vpop.permute.xlu0 %8131
    %8133 = vrot.lane.b32.xlu0 %v7898, 64
    %v8134 = vpop.permute.xlu0 %8133
    %8135 = vrot.lane.b32.xlu0 %v7899, 64
    %v8136 = vpop.permute.xlu0 %8135
    %8137 = vrot.lane.b32.xlu0 %v7900, 64
    %v8138 = vpop.permute.xlu0 %8137
    %8139 = vrot.lane.b32.xlu0 %v7901, 64
    %v8140 = vpop.permute.xlu0 %8139
    %8141 = vrot.lane.b32.xlu0 %v7902, 64
    %v8142 = vpop.permute.xlu0 %8141
    %8143 = vrot.lane.b32.xlu0 %v7903, 64
    %v8144 = vpop.permute.xlu0 %8143
    %8145 = vrot.lane.b32.xlu0 %v7904, 64
    %v8146 = vpop.permute.xlu0 %8145
    %8147 = vrot.lane.b32.xlu0 %v7905, 64
    %v8148 = vpop.permute.xlu0 %8147
    %8230 = vst.msk [vmem:[#allocation3 + $0x8] sm:$0xff] %vm4904, %v7988
    %8231 = vst.msk [vmem:[#allocation3 + $0x20] sm:$0xff] %vm4904, %v7990
    %8232 = vst.msk [vmem:[#allocation3 + $0x38] sm:$0xff] %vm4904, %v7992
    %8233 = vst.msk [vmem:[#allocation3 + $0x50] sm:$0xff] %vm4904, %v7994
    %8234 = vst.msk [vmem:[#allocation3 + $0x68] sm:$0xff] %vm4904, %v7996
    %8235 = vst.msk [vmem:[#allocation3 + $0x80] sm:$0xff] %vm4904, %v7998
    %8236 = vst.msk [vmem:[#allocation3 + $0x98] sm:$0xff] %vm4904, %v8000
    %8237 = vst.msk [vmem:[#allocation3 + $0xb0] sm:$0xff] %vm4904, %v8002
    %8238 = vst.msk [vmem:[#allocation3 + $0xc8] sm:$0xff] %vm4904, %v8004
    %8239 = vst.msk [vmem:[#allocation3 + $0xe0] sm:$0xff] %vm4904, %v8006
    %8240 = vst.msk [vmem:[#allocation3 + $0xf8] sm:$0xff] %vm4904, %v8008
    %8241 = vst.msk [vmem:[#allocation3 + $0x110] sm:$0xff] %vm4904, %v8010
    %8242 = vst.msk [vmem:[#allocation3 + $0x128] sm:$0xff] %vm4904, %v8012
    %8243 = vst.msk [vmem:[#allocation3 + $0x140] sm:$0xff] %vm4904, %v8014
    %8244 = vst.msk [vmem:[#allocation3 + $0x158] sm:$0xff] %vm4904, %v8016
    %8245 = vst.msk [vmem:[#allocation3 + $0x170] sm:$0xff] %vm4904, %v8018
    %8246 = vst.msk [vmem:[#allocation3 + $0x188] sm:$0xff] %vm4904, %v8020
    %8247 = vst.msk [vmem:[#allocation3 + $0x1a0] sm:$0xff] %vm4904, %v8022
    %8248 = vst.msk [vmem:[#allocation3 + $0x1b8] sm:$0xff] %vm4904, %v8024
    %8249 = vst.msk [vmem:[#allocation3 + $0x1d0] sm:$0xff] %vm4904, %v8026
    %8250 = vst.msk [vmem:[#allocation3 + $0x1e8] sm:$0xff] %vm4904, %v8028
    %8251 = vst.msk [vmem:[#allocation3 + $0x200] sm:$0xff] %vm4904, %v8030
    %8252 = vst.msk [vmem:[#allocation3 + $0x218] sm:$0xff] %vm4904, %v8032
    %8253 = vst.msk [vmem:[#allocation3 + $0x230] sm:$0xff] %vm4904, %v8034
    %8254 = vst.msk [vmem:[#allocation3 + $0x248] sm:$0xff] %vm4904, %v8036
    %8255 = vst.msk [vmem:[#allocation3 + $0x260] sm:$0xff] %vm4904, %v8038
    %8256 = vst.msk [vmem:[#allocation3 + $0x278] sm:$0xff] %vm4904, %v8040
    %8257 = vst.msk [vmem:[#allocation3 + $0x290] sm:$0xff] %vm4904, %v8042
    %8258 = vst.msk [vmem:[#allocation3 + $0x2a8] sm:$0xff] %vm4904, %v8044
    %8259 = vst.msk [vmem:[#allocation3 + $0x2c0] sm:$0xff] %vm4904, %v8046
    %8260 = vst.msk [vmem:[#allocation3 + $0x2d8] sm:$0xff] %vm4904, %v8048
    %8261 = vst.msk [vmem:[#allocation3 + $0x2f0] sm:$0xff] %vm4904, %v8050
    %8262 = vst.msk [vmem:[#allocation3 + $0x308] sm:$0xff] %vm4904, %v8052
    %8263 = vst.msk [vmem:[#allocation3 + $0x320] sm:$0xff] %vm4904, %v8054
    %8264 = vst.msk [vmem:[#allocation3 + $0x338] sm:$0xff] %vm4904, %v8056
    %8265 = vst.msk [vmem:[#allocation3 + $0x350] sm:$0xff] %vm4904, %v8058
    %8266 = vst.msk [vmem:[#allocation3 + $0x368] sm:$0xff] %vm4904, %v8060
    %8267 = vst.msk [vmem:[#allocation3 + $0x380] sm:$0xff] %vm4904, %v8062
    %8268 = vst.msk [vmem:[#allocation3 + $0x398] sm:$0xff] %vm4904, %v8064
    %8269 = vst.msk [vmem:[#allocation3 + $0x3b0] sm:$0xff] %vm4904, %v8066
    %8270 = vst.msk [vmem:[#allocation3 + $0x3c8] sm:$0xff] %vm4904, %v8068
    %8271 = vst.msk [vmem:[#allocation3 + $0x3e0] sm:$0xff] %vm4904, %v8070
    %8272 = vst.msk [vmem:[#allocation3 + $0x3f8] sm:$0xff] %vm4904, %v8072
    %8273 = vst.msk [vmem:[#allocation3 + $0x410] sm:$0xff] %vm4904, %v8074
    %8274 = vst.msk [vmem:[#allocation3 + $0x428] sm:$0xff] %vm4904, %v8076
    %8275 = vst.msk [vmem:[#allocation3 + $0x440] sm:$0xff] %vm4904, %v8078
    %8276 = vst.msk [vmem:[#allocation3 + $0x458] sm:$0xff] %vm4904, %v8080
    %8277 = vst.msk [vmem:[#allocation3 + $0x470] sm:$0xff] %vm4904, %v8082
    %8278 = vst.msk [vmem:[#allocation3 + $0x488] sm:$0xff] %vm4904, %v8084
    %8279 = vst.msk [vmem:[#allocation3 + $0x4a0] sm:$0xff] %vm4904, %v8086
    %8280 = vst.msk [vmem:[#allocation3 + $0x4b8] sm:$0xff] %vm4904, %v8088
    %8281 = vst.msk [vmem:[#allocation3 + $0x4d0] sm:$0xff] %vm4904, %v8090
    %8282 = vst.msk [vmem:[#allocation3 + $0x4e8] sm:$0xff] %vm4904, %v8092
    %8283 = vst.msk [vmem:[#allocation3 + $0x500] sm:$0xff] %vm4904, %v8094
    %8284 = vst.msk [vmem:[#allocation3 + $0x518] sm:$0xff] %vm4904, %v8096
    %8285 = vst.msk [vmem:[#allocation3 + $0x530] sm:$0xff] %vm4904, %v8098
    %8286 = vst.msk [vmem:[#allocation3 + $0x548] sm:$0xff] %vm4904, %v8100
    %8287 = vst.msk [vmem:[#allocation3 + $0x560] sm:$0xff] %vm4904, %v8102
    %8288 = vst.msk [vmem:[#allocation3 + $0x578] sm:$0xff] %vm4904, %v8104
    %8289 = vst.msk [vmem:[#allocation3 + $0x590] sm:$0xff] %vm4904, %v8106
    %8290 = vst.msk [vmem:[#allocation3 + $0x5a8] sm:$0xff] %vm4904, %v8108
    %8291 = vst.msk [vmem:[#allocation3 + $0x5c0] sm:$0xff] %vm4904, %v8110
    %8292 = vst.msk [vmem:[#allocation3 + $0x5d8] sm:$0xff] %vm4904, %v8112
    %8293 = vst.msk [vmem:[#allocation3 + $0x5f0] sm:$0xff] %vm4904, %v8114
    %8294 = vst.msk [vmem:[#allocation3 + $0x608] sm:$0xff] %vm4904, %v8116
    %8295 = vst.msk [vmem:[#allocation3 + $0x620] sm:$0xff] %vm4904, %v8118
    %8296 = vst.msk [vmem:[#allocation3 + $0x638] sm:$0xff] %vm4904, %v8120
    %8297 = vst.msk [vmem:[#allocation3 + $0x650] sm:$0xff] %vm4904, %v8122
    %8298 = vst.msk [vmem:[#allocation3 + $0x668] sm:$0xff] %vm4904, %v8124
    %8299 = vst.msk [vmem:[#allocation3 + $0x680] sm:$0xff] %vm4904, %v8126
    %8300 = vst.msk [vmem:[#allocation3 + $0x698] sm:$0xff] %vm4904, %v8128
    %8301 = vst.msk [vmem:[#allocation3 + $0x6b0] sm:$0xff] %vm4904, %v8130
    %8302 = vst.msk [vmem:[#allocation3 + $0x6c8] sm:$0xff] %vm4904, %v8132
    %8303 = vst.msk [vmem:[#allocation3 + $0x6e0] sm:$0xff] %vm4904, %v8134
    %8304 = vst.msk [vmem:[#allocation3 + $0x6f8] sm:$0xff] %vm4904, %v8136
    %8305 = vst.msk [vmem:[#allocation3 + $0x710] sm:$0xff] %vm4904, %v8138
    %8306 = vst.msk [vmem:[#allocation3 + $0x728] sm:$0xff] %vm4904, %v8140
    %8307 = vst.msk [vmem:[#allocation3 + $0x740] sm:$0xff] %vm4904, %v8142
    %8308 = vst.msk [vmem:[#allocation3 + $0x758] sm:$0xff] %vm4904, %v8144
    %8309 = vst.msk [vmem:[#allocation3 + $0x770] sm:$0xff] %vm4904, %v8146
    %8310 = vst.msk [vmem:[#allocation3 + $0x788] sm:$0xff] %vm4904, %v8148
    %v8311 = vld [vmem:[#allocation2 + $0x2a] sm:$0xff]
    %v8312 = vld [vmem:[#allocation2 + $0x32] sm:$0xff]
    %v8313 = vld [vmem:[#allocation2 + $0x3a] sm:$0xff]
    %v8314 = vld [vmem:[#allocation2 + $0x42] sm:$0xff]
    %v8315 = vld [vmem:[#allocation2 + $0x4a] sm:$0xff]
    %v8316 = vld [vmem:[#allocation2 + $0x52] sm:$0xff]
    %v8317 = vld [vmem:[#allocation2 + $0x5a] sm:$0xff]
    %v8318 = vld [vmem:[#allocation2 + $0x62] sm:$0xff]
    %v8319 = vld [vmem:[#allocation2 + $0x6a] sm:$0xff]
    %v8320 = vld [vmem:[#allocation2 + $0x72] sm:$0xff]
    %v8321 = vld [vmem:[#allocation2 + $0x7a] sm:$0xff]
    %v8322 = vld [vmem:[#allocation2 + $0x82] sm:$0xff]
    %v8323 = vld [vmem:[#allocation2 + $0x8a] sm:$0xff]
    %v8324 = vld [vmem:[#allocation2 + $0x92] sm:$0xff]
    %v8325 = vld [vmem:[#allocation2 + $0x9a] sm:$0xff]
    %v8326 = vld [vmem:[#allocation2 + $0xa2] sm:$0xff]
    %v8327 = vld [vmem:[#allocation2 + $0xaa] sm:$0xff]
    %v8328 = vld [vmem:[#allocation2 + $0xb2] sm:$0xff]
    %v8329 = vld [vmem:[#allocation2 + $0xba] sm:$0xff]
    %v8330 = vld [vmem:[#allocation2 + $0xc2] sm:$0xff]
    %v8331 = vld [vmem:[#allocation2 + $0xca] sm:$0xff]
    %v8332 = vld [vmem:[#allocation2 + $0xd2] sm:$0xff]
    %v8333 = vld [vmem:[#allocation2 + $0xda] sm:$0xff]
    %v8334 = vld [vmem:[#allocation2 + $0xe2] sm:$0xff]
    %v8335 = vld [vmem:[#allocation2 + $0xea] sm:$0xff]
    %v8336 = vld [vmem:[#allocation2 + $0xf2] sm:$0xff]
    %v8337 = vld [vmem:[#allocation2 + $0xfa] sm:$0xff]
    %v8338 = vld [vmem:[#allocation2 + $0x102] sm:$0xff]
    %v8339 = vld [vmem:[#allocation2 + $0x10a] sm:$0xff]
    %v8340 = vld [vmem:[#allocation2 + $0x112] sm:$0xff]
    %v8341 = vld [vmem:[#allocation2 + $0x11a] sm:$0xff]
    %v8342 = vld [vmem:[#allocation2 + $0x122] sm:$0xff]
    %v8343 = vld [vmem:[#allocation2 + $0x12a] sm:$0xff]
    %v8344 = vld [vmem:[#allocation2 + $0x132] sm:$0xff]
    %v8345 = vld [vmem:[#allocation2 + $0x13a] sm:$0xff]
    %v8346 = vld [vmem:[#allocation2 + $0x142] sm:$0xff]
    %v8347 = vld [vmem:[#allocation2 + $0x14a] sm:$0xff]
    %v8348 = vld [vmem:[#allocation2 + $0x152] sm:$0xff]
    %v8349 = vld [vmem:[#allocation2 + $0x15a] sm:$0xff]
    %v8350 = vld [vmem:[#allocation2 + $0x162] sm:$0xff]
    %v8351 = vld [vmem:[#allocation2 + $0x16a] sm:$0xff]
    %v8352 = vld [vmem:[#allocation2 + $0x172] sm:$0xff]
    %v8353 = vld [vmem:[#allocation2 + $0x17a] sm:$0xff]
    %v8354 = vld [vmem:[#allocation2 + $0x182] sm:$0xff]
    %v8355 = vld [vmem:[#allocation2 + $0x18a] sm:$0xff]
    %v8356 = vld [vmem:[#allocation2 + $0x192] sm:$0xff]
    %v8357 = vld [vmem:[#allocation2 + $0x19a] sm:$0xff]
    %v8358 = vld [vmem:[#allocation2 + $0x1a2] sm:$0xff]
    %v8359 = vld [vmem:[#allocation2 + $0x1aa] sm:$0xff]
    %v8360 = vld [vmem:[#allocation2 + $0x1b2] sm:$0xff]
    %v8361 = vld [vmem:[#allocation2 + $0x1ba] sm:$0xff]
    %v8362 = vld [vmem:[#allocation2 + $0x1c2] sm:$0xff]
    %v8363 = vld [vmem:[#allocation2 + $0x1ca] sm:$0xff]
    %v8364 = vld [vmem:[#allocation2 + $0x1d2] sm:$0xff]
    %v8365 = vld [vmem:[#allocation2 + $0x1da] sm:$0xff]
    %v8366 = vld [vmem:[#allocation2 + $0x1e2] sm:$0xff]
    %v8367 = vld [vmem:[#allocation2 + $0x1ea] sm:$0xff]
    %v8368 = vld [vmem:[#allocation2 + $0x1f2] sm:$0xff]
    %v8369 = vld [vmem:[#allocation2 + $0x1fa] sm:$0xff]
    %v8370 = vld [vmem:[#allocation2 + $0x202] sm:$0xff]
    %v8371 = vld [vmem:[#allocation2 + $0x20a] sm:$0xff]
    %v8372 = vld [vmem:[#allocation2 + $0x212] sm:$0xff]
    %v8373 = vld [vmem:[#allocation2 + $0x21a] sm:$0xff]
    %v8374 = vld [vmem:[#allocation2 + $0x222] sm:$0xff]
    %v8375 = vld [vmem:[#allocation2 + $0x22a] sm:$0xff]
    %v8376 = vld [vmem:[#allocation2 + $0x232] sm:$0xff]
    %v8377 = vld [vmem:[#allocation2 + $0x23a] sm:$0xff]
    %v8378 = vld [vmem:[#allocation2 + $0x242] sm:$0xff]
    %v8379 = vld [vmem:[#allocation2 + $0x24a] sm:$0xff]
    %v8380 = vld [vmem:[#allocation2 + $0x252] sm:$0xff]
    %v8381 = vld [vmem:[#allocation2 + $0x25a] sm:$0xff]
    %v8382 = vld [vmem:[#allocation2 + $0x262] sm:$0xff]
    %v8383 = vld [vmem:[#allocation2 + $0x26a] sm:$0xff]
    %v8384 = vld [vmem:[#allocation2 + $0x272] sm:$0xff]
    %v8385 = vld [vmem:[#allocation2 + $0x27a] sm:$0xff]
    %v8386 = vld [vmem:[#allocation2 + $0x282] sm:$0xff]
    %v8387 = vld [vmem:[#allocation2 + $0x28a] sm:$0xff]
    %v8388 = vld [vmem:[#allocation2 + $0x292] sm:$0xff]
    %v8389 = vld [vmem:[#allocation2 + $0x29a] sm:$0xff]
    %v8390 = vld [vmem:[#allocation2 + $0x2a2] sm:$0xff]
    %v8391 = vld [vmem:[#allocation2 + $0x2aa] sm:$0xff]
    %s8392 = scalar_lea.vmem %s3, 4536
    %v8393 = vld [vmem:[%s8392] sm:$0xff]
    %v8394 = vld [vmem:[%s8392 + $0x8] sm:$0xff]
    %v8395 = vld [vmem:[%s8392 + $0x10] sm:$0xff]
    %v8396 = vld [vmem:[%s8392 + $0x18] sm:$0xff]
    %v8397 = vld [vmem:[%s8392 + $0x20] sm:$0xff]
    %v8398 = vld [vmem:[%s8392 + $0x28] sm:$0xff]
    %v8399 = vld [vmem:[%s8392 + $0x30] sm:$0xff]
    %v8400 = vld [vmem:[%s8392 + $0x38] sm:$0xff]
    %v8401 = vld [vmem:[%s8392 + $0x40] sm:$0xff]
    %v8402 = vld [vmem:[%s8392 + $0x48] sm:$0xff]
    %v8403 = vld [vmem:[%s8392 + $0x50] sm:$0xff]
    %v8404 = vld [vmem:[%s8392 + $0x58] sm:$0xff]
    %v8405 = vld [vmem:[%s8392 + $0x60] sm:$0xff]
    %v8406 = vld [vmem:[%s8392 + $0x68] sm:$0xff]
    %v8407 = vld [vmem:[%s8392 + $0x70] sm:$0xff]
    %v8408 = vld [vmem:[%s8392 + $0x78] sm:$0xff]
    %v8409 = vld [vmem:[%s8392 + $0x80] sm:$0xff]
    %v8410 = vld [vmem:[%s8392 + $0x88] sm:$0xff]
    %v8411 = vld [vmem:[%s8392 + $0x90] sm:$0xff]
    %v8412 = vld [vmem:[%s8392 + $0x98] sm:$0xff]
    %v8413 = vld [vmem:[%s8392 + $0xa0] sm:$0xff]
    %v8414 = vld [vmem:[%s8392 + $0xa8] sm:$0xff]
    %v8415 = vld [vmem:[%s8392 + $0xb0] sm:$0xff]
    %v8416 = vld [vmem:[%s8392 + $0xb8] sm:$0xff]
    %v8417 = vld [vmem:[%s8392 + $0xc0] sm:$0xff]
    %v8418 = vld [vmem:[%s8392 + $0xc8] sm:$0xff]
    %v8419 = vld [vmem:[%s8392 + $0xd0] sm:$0xff]
    %v8420 = vld [vmem:[%s8392 + $0xd8] sm:$0xff]
    %v8421 = vld [vmem:[%s8392 + $0xe0] sm:$0xff]
    %v8422 = vld [vmem:[%s8392 + $0xe8] sm:$0xff]
    %v8423 = vld [vmem:[%s8392 + $0xf0] sm:$0xff]
    %v8424 = vld [vmem:[%s8392 + $0xf8] sm:$0xff]
    %v8425 = vld [vmem:[%s8392 + $0x100] sm:$0xff]
    %v8426 = vld [vmem:[%s8392 + $0x108] sm:$0xff]
    %v8427 = vld [vmem:[%s8392 + $0x110] sm:$0xff]
    %v8428 = vld [vmem:[%s8392 + $0x118] sm:$0xff]
    %v8429 = vld [vmem:[%s8392 + $0x120] sm:$0xff]
    %v8430 = vld [vmem:[%s8392 + $0x128] sm:$0xff]
    %v8431 = vld [vmem:[%s8392 + $0x130] sm:$0xff]
    %v8432 = vld [vmem:[%s8392 + $0x138] sm:$0xff]
    %v8433 = vld [vmem:[%s8392 + $0x140] sm:$0xff]
    %v8434 = vld [vmem:[%s8392 + $0x148] sm:$0xff]
    %v8435 = vld [vmem:[%s8392 + $0x150] sm:$0xff]
    %v8436 = vld [vmem:[%s8392 + $0x158] sm:$0xff]
    %v8437 = vld [vmem:[%s8392 + $0x160] sm:$0xff]
    %v8438 = vld [vmem:[%s8392 + $0x168] sm:$0xff]
    %v8439 = vld [vmem:[%s8392 + $0x170] sm:$0xff]
    %v8440 = vld [vmem:[%s8392 + $0x178] sm:$0xff]
    %v8441 = vld [vmem:[%s8392 + $0x180] sm:$0xff]
    %v8442 = vld [vmem:[%s8392 + $0x188] sm:$0xff]
    %v8443 = vld [vmem:[%s8392 + $0x190] sm:$0xff]
    %v8444 = vld [vmem:[%s8392 + $0x198] sm:$0xff]
    %v8445 = vld [vmem:[%s8392 + $0x1a0] sm:$0xff]
    %v8446 = vld [vmem:[%s8392 + $0x1a8] sm:$0xff]
    %v8447 = vld [vmem:[%s8392 + $0x1b0] sm:$0xff]
    %v8448 = vld [vmem:[%s8392 + $0x1b8] sm:$0xff]
    %v8449 = vld [vmem:[%s8392 + $0x1c0] sm:$0xff]
    %v8450 = vld [vmem:[%s8392 + $0x1c8] sm:$0xff]
    %v8451 = vld [vmem:[%s8392 + $0x1d0] sm:$0xff]
    %v8452 = vld [vmem:[%s8392 + $0x1d8] sm:$0xff]
    %v8453 = vld [vmem:[%s8392 + $0x1e0] sm:$0xff]
    %v8454 = vld [vmem:[%s8392 + $0x1e8] sm:$0xff]
    %v8455 = vld [vmem:[%s8392 + $0x1f0] sm:$0xff]
    %v8456 = vld [vmem:[%s8392 + $0x1f8] sm:$0xff]
    %v8457 = vld [vmem:[%s8392 + $0x200] sm:$0xff]
    %v8458 = vld [vmem:[%s8392 + $0x208] sm:$0xff]
    %v8459 = vld [vmem:[%s8392 + $0x210] sm:$0xff]
    %v8460 = vld [vmem:[%s8392 + $0x218] sm:$0xff]
    %v8461 = vld [vmem:[%s8392 + $0x220] sm:$0xff]
    %v8462 = vld [vmem:[%s8392 + $0x228] sm:$0xff]
    %v8463 = vld [vmem:[%s8392 + $0x230] sm:$0xff]
    %v8464 = vld [vmem:[%s8392 + $0x238] sm:$0xff]
    %v8465 = vld [vmem:[%s8392 + $0x240] sm:$0xff]
    %v8466 = vld [vmem:[%s8392 + $0x248] sm:$0xff]
    %v8467 = vld [vmem:[%s8392 + $0x250] sm:$0xff]
    %v8468 = vld [vmem:[%s8392 + $0x258] sm:$0xff]
    %v8469 = vld [vmem:[%s8392 + $0x260] sm:$0xff]
    %v8470 = vld [vmem:[%s8392 + $0x268] sm:$0xff]
    %v8471 = vld [vmem:[%s8392 + $0x270] sm:$0xff]
    %v8472 = vld [vmem:[%s8392 + $0x278] sm:$0xff]
    %v8473 = vld [vmem:[%s8392 + $0x280] sm:$0xff]
    %8475 = vset.pattern.permute.xlu0 0
    %8476 = vperm.xlu0 %8475, %v8393
    %v8477 = vpop.permute.xlu0 %8476
    %8480 = vset.pattern.permute.xlu0 0
    %8481 = vperm.xlu0 %8480, %v8394
    %v8482 = vpop.permute.xlu0 %8481
    %8485 = vset.pattern.permute.xlu0 0
    %8486 = vperm.xlu0 %8485, %v8395
    %v8487 = vpop.permute.xlu0 %8486
    %8490 = vset.pattern.permute.xlu0 0
    %8491 = vperm.xlu0 %8490, %v8396
    %v8492 = vpop.permute.xlu0 %8491
    %8495 = vset.pattern.permute.xlu0 0
    %8496 = vperm.xlu0 %8495, %v8397
    %v8497 = vpop.permute.xlu0 %8496
    %8500 = vset.pattern.permute.xlu0 0
    %8501 = vperm.xlu0 %8500, %v8398
    %v8502 = vpop.permute.xlu0 %8501
    %8505 = vset.pattern.permute.xlu0 0
    %8506 = vperm.xlu0 %8505, %v8399
    %v8507 = vpop.permute.xlu0 %8506
    %8510 = vset.pattern.permute.xlu0 0
    %8511 = vperm.xlu0 %8510, %v8400
    %v8512 = vpop.permute.xlu0 %8511
    %8515 = vset.pattern.permute.xlu0 0
    %8516 = vperm.xlu0 %8515, %v8401
    %v8517 = vpop.permute.xlu0 %8516
    %8520 = vset.pattern.permute.xlu0 0
    %8521 = vperm.xlu0 %8520, %v8402
    %v8522 = vpop.permute.xlu0 %8521
    %8525 = vset.pattern.permute.xlu0 0
    %8526 = vperm.xlu0 %8525, %v8403
    %v8527 = vpop.permute.xlu0 %8526
    %8530 = vset.pattern.permute.xlu0 0
    %8531 = vperm.xlu0 %8530, %v8404
    %v8532 = vpop.permute.xlu0 %8531
    %8535 = vset.pattern.permute.xlu0 0
    %8536 = vperm.xlu0 %8535, %v8405
    %v8537 = vpop.permute.xlu0 %8536
    %8540 = vset.pattern.permute.xlu0 0
    %8541 = vperm.xlu0 %8540, %v8406
    %v8542 = vpop.permute.xlu0 %8541
    %8545 = vset.pattern.permute.xlu0 0
    %8546 = vperm.xlu0 %8545, %v8407
    %v8547 = vpop.permute.xlu0 %8546
    %8550 = vset.pattern.permute.xlu0 0
    %8551 = vperm.xlu0 %8550, %v8408
    %v8552 = vpop.permute.xlu0 %8551
    %8555 = vset.pattern.permute.xlu0 0
    %8556 = vperm.xlu0 %8555, %v8409
    %v8557 = vpop.permute.xlu0 %8556
    %8560 = vset.pattern.permute.xlu0 0
    %8561 = vperm.xlu0 %8560, %v8410
    %v8562 = vpop.permute.xlu0 %8561
    %8565 = vset.pattern.permute.xlu0 0
    %8566 = vperm.xlu0 %8565, %v8411
    %v8567 = vpop.permute.xlu0 %8566
    %8570 = vset.pattern.permute.xlu0 0
    %8571 = vperm.xlu0 %8570, %v8412
    %v8572 = vpop.permute.xlu0 %8571
    %8575 = vset.pattern.permute.xlu0 0
    %8576 = vperm.xlu0 %8575, %v8413
    %v8577 = vpop.permute.xlu0 %8576
    %8580 = vset.pattern.permute.xlu0 0
    %8581 = vperm.xlu0 %8580, %v8414
    %v8582 = vpop.permute.xlu0 %8581
    %8585 = vset.pattern.permute.xlu0 0
    %8586 = vperm.xlu0 %8585, %v8415
    %v8587 = vpop.permute.xlu0 %8586
    %8590 = vset.pattern.permute.xlu0 0
    %8591 = vperm.xlu0 %8590, %v8416
    %v8592 = vpop.permute.xlu0 %8591
    %8595 = vset.pattern.permute.xlu0 0
    %8596 = vperm.xlu0 %8595, %v8417
    %v8597 = vpop.permute.xlu0 %8596
    %8600 = vset.pattern.permute.xlu0 0
    %8601 = vperm.xlu0 %8600, %v8418
    %v8602 = vpop.permute.xlu0 %8601
    %8605 = vset.pattern.permute.xlu0 0
    %8606 = vperm.xlu0 %8605, %v8419
    %v8607 = vpop.permute.xlu0 %8606
    %8610 = vset.pattern.permute.xlu0 0
    %8611 = vperm.xlu0 %8610, %v8420
    %v8612 = vpop.permute.xlu0 %8611
    %8615 = vset.pattern.permute.xlu0 0
    %8616 = vperm.xlu0 %8615, %v8421
    %v8617 = vpop.permute.xlu0 %8616
    %8620 = vset.pattern.permute.xlu0 0
    %8621 = vperm.xlu0 %8620, %v8422
    %v8622 = vpop.permute.xlu0 %8621
    %8625 = vset.pattern.permute.xlu0 0
    %8626 = vperm.xlu0 %8625, %v8423
    %v8627 = vpop.permute.xlu0 %8626
    %8630 = vset.pattern.permute.xlu0 0
    %8631 = vperm.xlu0 %8630, %v8424
    %v8632 = vpop.permute.xlu0 %8631
    %8635 = vset.pattern.permute.xlu0 0
    %8636 = vperm.xlu0 %8635, %v8425
    %v8637 = vpop.permute.xlu0 %8636
    %8640 = vset.pattern.permute.xlu0 0
    %8641 = vperm.xlu0 %8640, %v8426
    %v8642 = vpop.permute.xlu0 %8641
    %8645 = vset.pattern.permute.xlu0 0
    %8646 = vperm.xlu0 %8645, %v8427
    %v8647 = vpop.permute.xlu0 %8646
    %8650 = vset.pattern.permute.xlu0 0
    %8651 = vperm.xlu0 %8650, %v8428
    %v8652 = vpop.permute.xlu0 %8651
    %8655 = vset.pattern.permute.xlu0 0
    %8656 = vperm.xlu0 %8655, %v8429
    %v8657 = vpop.permute.xlu0 %8656
    %8660 = vset.pattern.permute.xlu0 0
    %8661 = vperm.xlu0 %8660, %v8430
    %v8662 = vpop.permute.xlu0 %8661
    %8665 = vset.pattern.permute.xlu0 0
    %8666 = vperm.xlu0 %8665, %v8431
    %v8667 = vpop.permute.xlu0 %8666
    %8670 = vset.pattern.permute.xlu0 0
    %8671 = vperm.xlu0 %8670, %v8432
    %v8672 = vpop.permute.xlu0 %8671
    %8675 = vset.pattern.permute.xlu0 0
    %8676 = vperm.xlu0 %8675, %v8433
    %v8677 = vpop.permute.xlu0 %8676
    %8680 = vset.pattern.permute.xlu0 0
    %8681 = vperm.xlu0 %8680, %v8434
    %v8682 = vpop.permute.xlu0 %8681
    %8685 = vset.pattern.permute.xlu0 0
    %8686 = vperm.xlu0 %8685, %v8435
    %v8687 = vpop.permute.xlu0 %8686
    %8690 = vset.pattern.permute.xlu0 0
    %8691 = vperm.xlu0 %8690, %v8436
    %v8692 = vpop.permute.xlu0 %8691
    %8695 = vset.pattern.permute.xlu0 0
    %8696 = vperm.xlu0 %8695, %v8437
    %v8697 = vpop.permute.xlu0 %8696
    %8700 = vset.pattern.permute.xlu0 0
    %8701 = vperm.xlu0 %8700, %v8438
    %v8702 = vpop.permute.xlu0 %8701
    %8705 = vset.pattern.permute.xlu0 0
    %8706 = vperm.xlu0 %8705, %v8439
    %v8707 = vpop.permute.xlu0 %8706
    %8710 = vset.pattern.permute.xlu0 0
    %8711 = vperm.xlu0 %8710, %v8440
    %v8712 = vpop.permute.xlu0 %8711
    %8715 = vset.pattern.permute.xlu0 0
    %8716 = vperm.xlu0 %8715, %v8441
    %v8717 = vpop.permute.xlu0 %8716
    %8720 = vset.pattern.permute.xlu0 0
    %8721 = vperm.xlu0 %8720, %v8442
    %v8722 = vpop.permute.xlu0 %8721
    %8725 = vset.pattern.permute.xlu0 0
    %8726 = vperm.xlu0 %8725, %v8443
    %v8727 = vpop.permute.xlu0 %8726
    %8730 = vset.pattern.permute.xlu0 0
    %8731 = vperm.xlu0 %8730, %v8444
    %v8732 = vpop.permute.xlu0 %8731
    %8735 = vset.pattern.permute.xlu0 0
    %8736 = vperm.xlu0 %8735, %v8445
    %v8737 = vpop.permute.xlu0 %8736
    %8740 = vset.pattern.permute.xlu0 0
    %8741 = vperm.xlu0 %8740, %v8446
    %v8742 = vpop.permute.xlu0 %8741
    %8745 = vset.pattern.permute.xlu0 0
    %8746 = vperm.xlu0 %8745, %v8447
    %v8747 = vpop.permute.xlu0 %8746
    %8750 = vset.pattern.permute.xlu0 0
    %8751 = vperm.xlu0 %8750, %v8448
    %v8752 = vpop.permute.xlu0 %8751
    %8755 = vset.pattern.permute.xlu0 0
    %8756 = vperm.xlu0 %8755, %v8449
    %v8757 = vpop.permute.xlu0 %8756
    %8760 = vset.pattern.permute.xlu0 0
    %8761 = vperm.xlu0 %8760, %v8450
    %v8762 = vpop.permute.xlu0 %8761
    %8765 = vset.pattern.permute.xlu0 0
    %8766 = vperm.xlu0 %8765, %v8451
    %v8767 = vpop.permute.xlu0 %8766
    %8770 = vset.pattern.permute.xlu0 0
    %8771 = vperm.xlu0 %8770, %v8452
    %v8772 = vpop.permute.xlu0 %8771
    %8775 = vset.pattern.permute.xlu0 0
    %8776 = vperm.xlu0 %8775, %v8453
    %v8777 = vpop.permute.xlu0 %8776
    %8780 = vset.pattern.permute.xlu0 0
    %8781 = vperm.xlu0 %8780, %v8454
    %v8782 = vpop.permute.xlu0 %8781
    %8785 = vset.pattern.permute.xlu0 0
    %8786 = vperm.xlu0 %8785, %v8455
    %v8787 = vpop.permute.xlu0 %8786
    %8790 = vset.pattern.permute.xlu0 0
    %8791 = vperm.xlu0 %8790, %v8456
    %v8792 = vpop.permute.xlu0 %8791
    %8795 = vset.pattern.permute.xlu0 0
    %8796 = vperm.xlu0 %8795, %v8457
    %v8797 = vpop.permute.xlu0 %8796
    %8800 = vset.pattern.permute.xlu0 0
    %8801 = vperm.xlu0 %8800, %v8458
    %v8802 = vpop.permute.xlu0 %8801
    %8805 = vset.pattern.permute.xlu0 0
    %8806 = vperm.xlu0 %8805, %v8459
    %v8807 = vpop.permute.xlu0 %8806
    %8810 = vset.pattern.permute.xlu0 0
    %8811 = vperm.xlu0 %8810, %v8460
    %v8812 = vpop.permute.xlu0 %8811
    %8815 = vset.pattern.permute.xlu0 0
    %8816 = vperm.xlu0 %8815, %v8461
    %v8817 = vpop.permute.xlu0 %8816
    %8820 = vset.pattern.permute.xlu0 0
    %8821 = vperm.xlu0 %8820, %v8462
    %v8822 = vpop.permute.xlu0 %8821
    %8825 = vset.pattern.permute.xlu0 0
    %8826 = vperm.xlu0 %8825, %v8463
    %v8827 = vpop.permute.xlu0 %8826
    %8830 = vset.pattern.permute.xlu0 0
    %8831 = vperm.xlu0 %8830, %v8464
    %v8832 = vpop.permute.xlu0 %8831
    %8835 = vset.pattern.permute.xlu0 0
    %8836 = vperm.xlu0 %8835, %v8465
    %v8837 = vpop.permute.xlu0 %8836
    %8840 = vset.pattern.permute.xlu0 0
    %8841 = vperm.xlu0 %8840, %v8466
    %v8842 = vpop.permute.xlu0 %8841
    %8845 = vset.pattern.permute.xlu0 0
    %8846 = vperm.xlu0 %8845, %v8467
    %v8847 = vpop.permute.xlu0 %8846
    %8850 = vset.pattern.permute.xlu0 0
    %8851 = vperm.xlu0 %8850, %v8468
    %v8852 = vpop.permute.xlu0 %8851
    %8855 = vset.pattern.permute.xlu0 0
    %8856 = vperm.xlu0 %8855, %v8469
    %v8857 = vpop.permute.xlu0 %8856
    %8860 = vset.pattern.permute.xlu0 0
    %8861 = vperm.xlu0 %8860, %v8470
    %v8862 = vpop.permute.xlu0 %8861
    %8865 = vset.pattern.permute.xlu0 0
    %8866 = vperm.xlu0 %8865, %v8471
    %v8867 = vpop.permute.xlu0 %8866
    %8870 = vset.pattern.permute.xlu0 0
    %8871 = vperm.xlu0 %8870, %v8472
    %v8872 = vpop.permute.xlu0 %8871
    %8875 = vset.pattern.permute.xlu0 0
    %8876 = vperm.xlu0 %8875, %v8473
    %v8877 = vpop.permute.xlu0 %8876
    %v8879 = vmul.f32 %v8311, %v8477
    %v8880 = vmul.f32 %v8312, %v8482
    %v8881 = vmul.f32 %v8313, %v8487
    %v8882 = vmul.f32 %v8314, %v8492
    %v8883 = vmul.f32 %v8315, %v8497
    %v8884 = vmul.f32 %v8316, %v8502
    %v8885 = vmul.f32 %v8317, %v8507
    %v8886 = vmul.f32 %v8318, %v8512
    %v8887 = vmul.f32 %v8319, %v8517
    %v8888 = vmul.f32 %v8320, %v8522
    %v8889 = vmul.f32 %v8321, %v8527
    %v8890 = vmul.f32 %v8322, %v8532
    %v8891 = vmul.f32 %v8323, %v8537
    %v8892 = vmul.f32 %v8324, %v8542
    %v8893 = vmul.f32 %v8325, %v8547
    %v8894 = vmul.f32 %v8326, %v8552
    %v8895 = vmul.f32 %v8327, %v8557
    %v8896 = vmul.f32 %v8328, %v8562
    %v8897 = vmul.f32 %v8329, %v8567
    %v8898 = vmul.f32 %v8330, %v8572
    %v8899 = vmul.f32 %v8331, %v8577
    %v8900 = vmul.f32 %v8332, %v8582
    %v8901 = vmul.f32 %v8333, %v8587
    %v8902 = vmul.f32 %v8334, %v8592
    %v8903 = vmul.f32 %v8335, %v8597
    %v8904 = vmul.f32 %v8336, %v8602
    %v8905 = vmul.f32 %v8337, %v8607
    %v8906 = vmul.f32 %v8338, %v8612
    %v8907 = vmul.f32 %v8339, %v8617
    %v8908 = vmul.f32 %v8340, %v8622
    %v8909 = vmul.f32 %v8341, %v8627
    %v8910 = vmul.f32 %v8342, %v8632
    %v8911 = vmul.f32 %v8343, %v8637
    %v8912 = vmul.f32 %v8344, %v8642
    %v8913 = vmul.f32 %v8345, %v8647
    %v8914 = vmul.f32 %v8346, %v8652
    %v8915 = vmul.f32 %v8347, %v8657
    %v8916 = vmul.f32 %v8348, %v8662
    %v8917 = vmul.f32 %v8349, %v8667
    %v8918 = vmul.f32 %v8350, %v8672
    %v8919 = vmul.f32 %v8351, %v8677
    %v8920 = vmul.f32 %v8352, %v8682
    %v8921 = vmul.f32 %v8353, %v8687
    %v8922 = vmul.f32 %v8354, %v8692
    %v8923 = vmul.f32 %v8355, %v8697
    %v8924 = vmul.f32 %v8356, %v8702
    %v8925 = vmul.f32 %v8357, %v8707
    %v8926 = vmul.f32 %v8358, %v8712
    %v8927 = vmul.f32 %v8359, %v8717
    %v8928 = vmul.f32 %v8360, %v8722
    %v8929 = vmul.f32 %v8361, %v8727
    %v8930 = vmul.f32 %v8362, %v8732
    %v8931 = vmul.f32 %v8363, %v8737
    %v8932 = vmul.f32 %v8364, %v8742
    %v8933 = vmul.f32 %v8365, %v8747
    %v8934 = vmul.f32 %v8366, %v8752
    %v8935 = vmul.f32 %v8367, %v8757
    %v8936 = vmul.f32 %v8368, %v8762
    %v8937 = vmul.f32 %v8369, %v8767
    %v8938 = vmul.f32 %v8370, %v8772
    %v8939 = vmul.f32 %v8371, %v8777
    %v8940 = vmul.f32 %v8372, %v8782
    %v8941 = vmul.f32 %v8373, %v8787
    %v8942 = vmul.f32 %v8374, %v8792
    %v8943 = vmul.f32 %v8375, %v8797
    %v8944 = vmul.f32 %v8376, %v8802
    %v8945 = vmul.f32 %v8377, %v8807
    %v8946 = vmul.f32 %v8378, %v8812
    %v8947 = vmul.f32 %v8379, %v8817
    %v8948 = vmul.f32 %v8380, %v8822
    %v8949 = vmul.f32 %v8381, %v8827
    %v8950 = vmul.f32 %v8382, %v8832
    %v8951 = vmul.f32 %v8383, %v8837
    %v8952 = vmul.f32 %v8384, %v8842
    %v8953 = vmul.f32 %v8385, %v8847
    %v8954 = vmul.f32 %v8386, %v8852
    %v8955 = vmul.f32 %v8387, %v8857
    %v8956 = vmul.f32 %v8388, %v8862
    %v8957 = vmul.f32 %v8389, %v8867
    %v8958 = vmul.f32 %v8390, %v8872
    %v8959 = vmul.f32 %v8391, %v8877
    %9041 = vrot.lane.b32.xlu0 %v8879, 96
    %v9042 = vpop.permute.xlu0 %9041
    %9043 = vrot.lane.b32.xlu0 %v8880, 96
    %v9044 = vpop.permute.xlu0 %9043
    %9045 = vrot.lane.b32.xlu0 %v8881, 96
    %v9046 = vpop.permute.xlu0 %9045
    %9047 = vrot.lane.b32.xlu0 %v8882, 96
    %v9048 = vpop.permute.xlu0 %9047
    %9049 = vrot.lane.b32.xlu0 %v8883, 96
    %v9050 = vpop.permute.xlu0 %9049
    %9051 = vrot.lane.b32.xlu0 %v8884, 96
    %v9052 = vpop.permute.xlu0 %9051
    %9053 = vrot.lane.b32.xlu0 %v8885, 96
    %v9054 = vpop.permute.xlu0 %9053
    %9055 = vrot.lane.b32.xlu0 %v8886, 96
    %v9056 = vpop.permute.xlu0 %9055
    %9057 = vrot.lane.b32.xlu0 %v8887, 96
    %v9058 = vpop.permute.xlu0 %9057
    %9059 = vrot.lane.b32.xlu0 %v8888, 96
    %v9060 = vpop.permute.xlu0 %9059
    %9061 = vrot.lane.b32.xlu0 %v8889, 96
    %v9062 = vpop.permute.xlu0 %9061
    %9063 = vrot.lane.b32.xlu0 %v8890, 96
    %v9064 = vpop.permute.xlu0 %9063
    %9065 = vrot.lane.b32.xlu0 %v8891, 96
    %v9066 = vpop.permute.xlu0 %9065
    %9067 = vrot.lane.b32.xlu0 %v8892, 96
    %v9068 = vpop.permute.xlu0 %9067
    %9069 = vrot.lane.b32.xlu0 %v8893, 96
    %v9070 = vpop.permute.xlu0 %9069
    %9071 = vrot.lane.b32.xlu0 %v8894, 96
    %v9072 = vpop.permute.xlu0 %9071
    %9073 = vrot.lane.b32.xlu0 %v8895, 96
    %v9074 = vpop.permute.xlu0 %9073
    %9075 = vrot.lane.b32.xlu0 %v8896, 96
    %v9076 = vpop.permute.xlu0 %9075
    %9077 = vrot.lane.b32.xlu0 %v8897, 96
    %v9078 = vpop.permute.xlu0 %9077
    %9079 = vrot.lane.b32.xlu0 %v8898, 96
    %v9080 = vpop.permute.xlu0 %9079
    %9081 = vrot.lane.b32.xlu0 %v8899, 96
    %v9082 = vpop.permute.xlu0 %9081
    %9083 = vrot.lane.b32.xlu0 %v8900, 96
    %v9084 = vpop.permute.xlu0 %9083
    %9085 = vrot.lane.b32.xlu0 %v8901, 96
    %v9086 = vpop.permute.xlu0 %9085
    %9087 = vrot.lane.b32.xlu0 %v8902, 96
    %v9088 = vpop.permute.xlu0 %9087
    %9089 = vrot.lane.b32.xlu0 %v8903, 96
    %v9090 = vpop.permute.xlu0 %9089
    %9091 = vrot.lane.b32.xlu0 %v8904, 96
    %v9092 = vpop.permute.xlu0 %9091
    %9093 = vrot.lane.b32.xlu0 %v8905, 96
    %v9094 = vpop.permute.xlu0 %9093
    %9095 = vrot.lane.b32.xlu0 %v8906, 96
    %v9096 = vpop.permute.xlu0 %9095
    %9097 = vrot.lane.b32.xlu0 %v8907, 96
    %v9098 = vpop.permute.xlu0 %9097
    %9099 = vrot.lane.b32.xlu0 %v8908, 96
    %v9100 = vpop.permute.xlu0 %9099
    %9101 = vrot.lane.b32.xlu0 %v8909, 96
    %v9102 = vpop.permute.xlu0 %9101
    %9103 = vrot.lane.b32.xlu0 %v8910, 96
    %v9104 = vpop.permute.xlu0 %9103
    %9105 = vrot.lane.b32.xlu0 %v8911, 96
    %v9106 = vpop.permute.xlu0 %9105
    %9107 = vrot.lane.b32.xlu0 %v8912, 96
    %v9108 = vpop.permute.xlu0 %9107
    %9109 = vrot.lane.b32.xlu0 %v8913, 96
    %v9110 = vpop.permute.xlu0 %9109
    %9111 = vrot.lane.b32.xlu0 %v8914, 96
    %v9112 = vpop.permute.xlu0 %9111
    %9113 = vrot.lane.b32.xlu0 %v8915, 96
    %v9114 = vpop.permute.xlu0 %9113
    %9115 = vrot.lane.b32.xlu0 %v8916, 96
    %v9116 = vpop.permute.xlu0 %9115
    %9117 = vrot.lane.b32.xlu0 %v8917, 96
    %v9118 = vpop.permute.xlu0 %9117
    %9119 = vrot.lane.b32.xlu0 %v8918, 96
    %v9120 = vpop.permute.xlu0 %9119
    %9121 = vrot.lane.b32.xlu0 %v8919, 96
    %v9122 = vpop.permute.xlu0 %9121
    %9123 = vrot.lane.b32.xlu0 %v8920, 96
    %v9124 = vpop.permute.xlu0 %9123
    %9125 = vrot.lane.b32.xlu0 %v8921, 96
    %v9126 = vpop.permute.xlu0 %9125
    %9127 = vrot.lane.b32.xlu0 %v8922, 96
    %v9128 = vpop.permute.xlu0 %9127
    %9129 = vrot.lane.b32.xlu0 %v8923, 96
    %v9130 = vpop.permute.xlu0 %9129
    %9131 = vrot.lane.b32.xlu0 %v8924, 96
    %v9132 = vpop.permute.xlu0 %9131
    %9133 = vrot.lane.b32.xlu0 %v8925, 96
    %v9134 = vpop.permute.xlu0 %9133
    %9135 = vrot.lane.b32.xlu0 %v8926, 96
    %v9136 = vpop.permute.xlu0 %9135
    %9137 = vrot.lane.b32.xlu0 %v8927, 96
    %v9138 = vpop.permute.xlu0 %9137
    %9139 = vrot.lane.b32.xlu0 %v8928, 96
    %v9140 = vpop.permute.xlu0 %9139
    %9141 = vrot.lane.b32.xlu0 %v8929, 96
    %v9142 = vpop.permute.xlu0 %9141
    %9143 = vrot.lane.b32.xlu0 %v8930, 96
    %v9144 = vpop.permute.xlu0 %9143
    %9145 = vrot.lane.b32.xlu0 %v8931, 96
    %v9146 = vpop.permute.xlu0 %9145
    %9147 = vrot.lane.b32.xlu0 %v8932, 96
    %v9148 = vpop.permute.xlu0 %9147
    %9149 = vrot.lane.b32.xlu0 %v8933, 96
    %v9150 = vpop.permute.xlu0 %9149
    %9151 = vrot.lane.b32.xlu0 %v8934, 96
    %v9152 = vpop.permute.xlu0 %9151
    %9153 = vrot.lane.b32.xlu0 %v8935, 96
    %v9154 = vpop.permute.xlu0 %9153
    %9155 = vrot.lane.b32.xlu0 %v8936, 96
    %v9156 = vpop.permute.xlu0 %9155
    %9157 = vrot.lane.b32.xlu0 %v8937, 96
    %v9158 = vpop.permute.xlu0 %9157
    %9159 = vrot.lane.b32.xlu0 %v8938, 96
    %v9160 = vpop.permute.xlu0 %9159
    %9161 = vrot.lane.b32.xlu0 %v8939, 96
    %v9162 = vpop.permute.xlu0 %9161
    %9163 = vrot.lane.b32.xlu0 %v8940, 96
    %v9164 = vpop.permute.xlu0 %9163
    %9165 = vrot.lane.b32.xlu0 %v8941, 96
    %v9166 = vpop.permute.xlu0 %9165
    %9167 = vrot.lane.b32.xlu0 %v8942, 96
    %v9168 = vpop.permute.xlu0 %9167
    %9169 = vrot.lane.b32.xlu0 %v8943, 96
    %v9170 = vpop.permute.xlu0 %9169
    %9171 = vrot.lane.b32.xlu0 %v8944, 96
    %v9172 = vpop.permute.xlu0 %9171
    %9173 = vrot.lane.b32.xlu0 %v8945, 96
    %v9174 = vpop.permute.xlu0 %9173
    %9175 = vrot.lane.b32.xlu0 %v8946, 96
    %v9176 = vpop.permute.xlu0 %9175
    %9177 = vrot.lane.b32.xlu0 %v8947, 96
    %v9178 = vpop.permute.xlu0 %9177
    %9179 = vrot.lane.b32.xlu0 %v8948, 96
    %v9180 = vpop.permute.xlu0 %9179
    %9181 = vrot.lane.b32.xlu0 %v8949, 96
    %v9182 = vpop.permute.xlu0 %9181
    %9183 = vrot.lane.b32.xlu0 %v8950, 96
    %v9184 = vpop.permute.xlu0 %9183
    %9185 = vrot.lane.b32.xlu0 %v8951, 96
    %v9186 = vpop.permute.xlu0 %9185
    %9187 = vrot.lane.b32.xlu0 %v8952, 96
    %v9188 = vpop.permute.xlu0 %9187
    %9189 = vrot.lane.b32.xlu0 %v8953, 96
    %v9190 = vpop.permute.xlu0 %9189
    %9191 = vrot.lane.b32.xlu0 %v8954, 96
    %v9192 = vpop.permute.xlu0 %9191
    %9193 = vrot.lane.b32.xlu0 %v8955, 96
    %v9194 = vpop.permute.xlu0 %9193
    %9195 = vrot.lane.b32.xlu0 %v8956, 96
    %v9196 = vpop.permute.xlu0 %9195
    %9197 = vrot.lane.b32.xlu0 %v8957, 96
    %v9198 = vpop.permute.xlu0 %9197
    %9199 = vrot.lane.b32.xlu0 %v8958, 96
    %v9200 = vpop.permute.xlu0 %9199
    %9201 = vrot.lane.b32.xlu0 %v8959, 96
    %v9202 = vpop.permute.xlu0 %9201
    %9284 = vst.msk [vmem:[#allocation3 + $0x8] sm:$0xff] %vm5959, %v9042
    %9285 = vst.msk [vmem:[#allocation3 + $0x20] sm:$0xff] %vm5959, %v9044
    %9286 = vst.msk [vmem:[#allocation3 + $0x38] sm:$0xff] %vm5959, %v9046
    %9287 = vst.msk [vmem:[#allocation3 + $0x50] sm:$0xff] %vm5959, %v9048
    %9288 = vst.msk [vmem:[#allocation3 + $0x68] sm:$0xff] %vm5959, %v9050
    %9289 = vst.msk [vmem:[#allocation3 + $0x80] sm:$0xff] %vm5959, %v9052
    %9290 = vst.msk [vmem:[#allocation3 + $0x98] sm:$0xff] %vm5959, %v9054
    %9291 = vst.msk [vmem:[#allocation3 + $0xb0] sm:$0xff] %vm5959, %v9056
    %9292 = vst.msk [vmem:[#allocation3 + $0xc8] sm:$0xff] %vm5959, %v9058
    %9293 = vst.msk [vmem:[#allocation3 + $0xe0] sm:$0xff] %vm5959, %v9060
    %9294 = vst.msk [vmem:[#allocation3 + $0xf8] sm:$0xff] %vm5959, %v9062
    %9295 = vst.msk [vmem:[#allocation3 + $0x110] sm:$0xff] %vm5959, %v9064
    %9296 = vst.msk [vmem:[#allocation3 + $0x128] sm:$0xff] %vm5959, %v9066
    %9297 = vst.msk [vmem:[#allocation3 + $0x140] sm:$0xff] %vm5959, %v9068
    %9298 = vst.msk [vmem:[#allocation3 + $0x158] sm:$0xff] %vm5959, %v9070
    %9299 = vst.msk [vmem:[#allocation3 + $0x170] sm:$0xff] %vm5959, %v9072
    %9300 = vst.msk [vmem:[#allocation3 + $0x188] sm:$0xff] %vm5959, %v9074
    %9301 = vst.msk [vmem:[#allocation3 + $0x1a0] sm:$0xff] %vm5959, %v9076
    %9302 = vst.msk [vmem:[#allocation3 + $0x1b8] sm:$0xff] %vm5959, %v9078
    %9303 = vst.msk [vmem:[#allocation3 + $0x1d0] sm:$0xff] %vm5959, %v9080
    %9304 = vst.msk [vmem:[#allocation3 + $0x1e8] sm:$0xff] %vm5959, %v9082
    %9305 = vst.msk [vmem:[#allocation3 + $0x200] sm:$0xff] %vm5959, %v9084
    %9306 = vst.msk [vmem:[#allocation3 + $0x218] sm:$0xff] %vm5959, %v9086
    %9307 = vst.msk [vmem:[#allocation3 + $0x230] sm:$0xff] %vm5959, %v9088
    %9308 = vst.msk [vmem:[#allocation3 + $0x248] sm:$0xff] %vm5959, %v9090
    %9309 = vst.msk [vmem:[#allocation3 + $0x260] sm:$0xff] %vm5959, %v9092
    %9310 = vst.msk [vmem:[#allocation3 + $0x278] sm:$0xff] %vm5959, %v9094
    %9311 = vst.msk [vmem:[#allocation3 + $0x290] sm:$0xff] %vm5959, %v9096
    %9312 = vst.msk [vmem:[#allocation3 + $0x2a8] sm:$0xff] %vm5959, %v9098
    %9313 = vst.msk [vmem:[#allocation3 + $0x2c0] sm:$0xff] %vm5959, %v9100
    %9314 = vst.msk [vmem:[#allocation3 + $0x2d8] sm:$0xff] %vm5959, %v9102
    %9315 = vst.msk [vmem:[#allocation3 + $0x2f0] sm:$0xff] %vm5959, %v9104
    %9316 = vst.msk [vmem:[#allocation3 + $0x308] sm:$0xff] %vm5959, %v9106
    %9317 = vst.msk [vmem:[#allocation3 + $0x320] sm:$0xff] %vm5959, %v9108
    %9318 = vst.msk [vmem:[#allocation3 + $0x338] sm:$0xff] %vm5959, %v9110
    %9319 = vst.msk [vmem:[#allocation3 + $0x350] sm:$0xff] %vm5959, %v9112
    %9320 = vst.msk [vmem:[#allocation3 + $0x368] sm:$0xff] %vm5959, %v9114
    %9321 = vst.msk [vmem:[#allocation3 + $0x380] sm:$0xff] %vm5959, %v9116
    %9322 = vst.msk [vmem:[#allocation3 + $0x398] sm:$0xff] %vm5959, %v9118
    %9323 = vst.msk [vmem:[#allocation3 + $0x3b0] sm:$0xff] %vm5959, %v9120
    %9324 = vst.msk [vmem:[#allocation3 + $0x3c8] sm:$0xff] %vm5959, %v9122
    %9325 = vst.msk [vmem:[#allocation3 + $0x3e0] sm:$0xff] %vm5959, %v9124
    %9326 = vst.msk [vmem:[#allocation3 + $0x3f8] sm:$0xff] %vm5959, %v9126
    %9327 = vst.msk [vmem:[#allocation3 + $0x410] sm:$0xff] %vm5959, %v9128
    %9328 = vst.msk [vmem:[#allocation3 + $0x428] sm:$0xff] %vm5959, %v9130
    %9329 = vst.msk [vmem:[#allocation3 + $0x440] sm:$0xff] %vm5959, %v9132
    %9330 = vst.msk [vmem:[#allocation3 + $0x458] sm:$0xff] %vm5959, %v9134
    %9331 = vst.msk [vmem:[#allocation3 + $0x470] sm:$0xff] %vm5959, %v9136
    %9332 = vst.msk [vmem:[#allocation3 + $0x488] sm:$0xff] %vm5959, %v9138
    %9333 = vst.msk [vmem:[#allocation3 + $0x4a0] sm:$0xff] %vm5959, %v9140
    %9334 = vst.msk [vmem:[#allocation3 + $0x4b8] sm:$0xff] %vm5959, %v9142
    %9335 = vst.msk [vmem:[#allocation3 + $0x4d0] sm:$0xff] %vm5959, %v9144
    %9336 = vst.msk [vmem:[#allocation3 + $0x4e8] sm:$0xff] %vm5959, %v9146
    %9337 = vst.msk [vmem:[#allocation3 + $0x500] sm:$0xff] %vm5959, %v9148
    %9338 = vst.msk [vmem:[#allocation3 + $0x518] sm:$0xff] %vm5959, %v9150
    %9339 = vst.msk [vmem:[#allocation3 + $0x530] sm:$0xff] %vm5959, %v9152
    %9340 = vst.msk [vmem:[#allocation3 + $0x548] sm:$0xff] %vm5959, %v9154
    %9341 = vst.msk [vmem:[#allocation3 + $0x560] sm:$0xff] %vm5959, %v9156
    %9342 = vst.msk [vmem:[#allocation3 + $0x578] sm:$0xff] %vm5959, %v9158
    %9343 = vst.msk [vmem:[#allocation3 + $0x590] sm:$0xff] %vm5959, %v9160
    %9344 = vst.msk [vmem:[#allocation3 + $0x5a8] sm:$0xff] %vm5959, %v9162
    %9345 = vst.msk [vmem:[#allocation3 + $0x5c0] sm:$0xff] %vm5959, %v9164
    %9346 = vst.msk [vmem:[#allocation3 + $0x5d8] sm:$0xff] %vm5959, %v9166
    %9347 = vst.msk [vmem:[#allocation3 + $0x5f0] sm:$0xff] %vm5959, %v9168
    %9348 = vst.msk [vmem:[#allocation3 + $0x608] sm:$0xff] %vm5959, %v9170
    %9349 = vst.msk [vmem:[#allocation3 + $0x620] sm:$0xff] %vm5959, %v9172
    %9350 = vst.msk [vmem:[#allocation3 + $0x638] sm:$0xff] %vm5959, %v9174
    %9351 = vst.msk [vmem:[#allocation3 + $0x650] sm:$0xff] %vm5959, %v9176
    %9352 = vst.msk [vmem:[#allocation3 + $0x668] sm:$0xff] %vm5959, %v9178
    %9353 = vst.msk [vmem:[#allocation3 + $0x680] sm:$0xff] %vm5959, %v9180
    %9354 = vst.msk [vmem:[#allocation3 + $0x698] sm:$0xff] %vm5959, %v9182
    %9355 = vst.msk [vmem:[#allocation3 + $0x6b0] sm:$0xff] %vm5959, %v9184
    %9356 = vst.msk [vmem:[#allocation3 + $0x6c8] sm:$0xff] %vm5959, %v9186
    %9357 = vst.msk [vmem:[#allocation3 + $0x6e0] sm:$0xff] %vm5959, %v9188
    %9358 = vst.msk [vmem:[#allocation3 + $0x6f8] sm:$0xff] %vm5959, %v9190
    %9359 = vst.msk [vmem:[#allocation3 + $0x710] sm:$0xff] %vm5959, %v9192
    %9360 = vst.msk [vmem:[#allocation3 + $0x728] sm:$0xff] %vm5959, %v9194
    %9361 = vst.msk [vmem:[#allocation3 + $0x740] sm:$0xff] %vm5959, %v9196
    %9362 = vst.msk [vmem:[#allocation3 + $0x758] sm:$0xff] %vm5959, %v9198
    %9363 = vst.msk [vmem:[#allocation3 + $0x770] sm:$0xff] %vm5959, %v9200
    %9364 = vst.msk [vmem:[#allocation3 + $0x788] sm:$0xff] %vm5959, %v9202
    %v9365 = vld [vmem:[#allocation2 + $0x2b] sm:$0xff]
    %v9366 = vld [vmem:[#allocation2 + $0x33] sm:$0xff]
    %v9367 = vld [vmem:[#allocation2 + $0x3b] sm:$0xff]
    %v9368 = vld [vmem:[#allocation2 + $0x43] sm:$0xff]
    %v9369 = vld [vmem:[#allocation2 + $0x4b] sm:$0xff]
    %v9370 = vld [vmem:[#allocation2 + $0x53] sm:$0xff]
    %v9371 = vld [vmem:[#allocation2 + $0x5b] sm:$0xff]
    %v9372 = vld [vmem:[#allocation2 + $0x63] sm:$0xff]
    %v9373 = vld [vmem:[#allocation2 + $0x6b] sm:$0xff]
    %v9374 = vld [vmem:[#allocation2 + $0x73] sm:$0xff]
    %v9375 = vld [vmem:[#allocation2 + $0x7b] sm:$0xff]
    %v9376 = vld [vmem:[#allocation2 + $0x83] sm:$0xff]
    %v9377 = vld [vmem:[#allocation2 + $0x8b] sm:$0xff]
    %v9378 = vld [vmem:[#allocation2 + $0x93] sm:$0xff]
    %v9379 = vld [vmem:[#allocation2 + $0x9b] sm:$0xff]
    %v9380 = vld [vmem:[#allocation2 + $0xa3] sm:$0xff]
    %v9381 = vld [vmem:[#allocation2 + $0xab] sm:$0xff]
    %v9382 = vld [vmem:[#allocation2 + $0xb3] sm:$0xff]
    %v9383 = vld [vmem:[#allocation2 + $0xbb] sm:$0xff]
    %v9384 = vld [vmem:[#allocation2 + $0xc3] sm:$0xff]
    %v9385 = vld [vmem:[#allocation2 + $0xcb] sm:$0xff]
    %v9386 = vld [vmem:[#allocation2 + $0xd3] sm:$0xff]
    %v9387 = vld [vmem:[#allocation2 + $0xdb] sm:$0xff]
    %v9388 = vld [vmem:[#allocation2 + $0xe3] sm:$0xff]
    %v9389 = vld [vmem:[#allocation2 + $0xeb] sm:$0xff]
    %v9390 = vld [vmem:[#allocation2 + $0xf3] sm:$0xff]
    %v9391 = vld [vmem:[#allocation2 + $0xfb] sm:$0xff]
    %v9392 = vld [vmem:[#allocation2 + $0x103] sm:$0xff]
    %v9393 = vld [vmem:[#allocation2 + $0x10b] sm:$0xff]
    %v9394 = vld [vmem:[#allocation2 + $0x113] sm:$0xff]
    %v9395 = vld [vmem:[#allocation2 + $0x11b] sm:$0xff]
    %v9396 = vld [vmem:[#allocation2 + $0x123] sm:$0xff]
    %v9397 = vld [vmem:[#allocation2 + $0x12b] sm:$0xff]
    %v9398 = vld [vmem:[#allocation2 + $0x133] sm:$0xff]
    %v9399 = vld [vmem:[#allocation2 + $0x13b] sm:$0xff]
    %v9400 = vld [vmem:[#allocation2 + $0x143] sm:$0xff]
    %v9401 = vld [vmem:[#allocation2 + $0x14b] sm:$0xff]
    %v9402 = vld [vmem:[#allocation2 + $0x153] sm:$0xff]
    %v9403 = vld [vmem:[#allocation2 + $0x15b] sm:$0xff]
    %v9404 = vld [vmem:[#allocation2 + $0x163] sm:$0xff]
    %v9405 = vld [vmem:[#allocation2 + $0x16b] sm:$0xff]
    %v9406 = vld [vmem:[#allocation2 + $0x173] sm:$0xff]
    %v9407 = vld [vmem:[#allocation2 + $0x17b] sm:$0xff]
    %v9408 = vld [vmem:[#allocation2 + $0x183] sm:$0xff]
    %v9409 = vld [vmem:[#allocation2 + $0x18b] sm:$0xff]
    %v9410 = vld [vmem:[#allocation2 + $0x193] sm:$0xff]
    %v9411 = vld [vmem:[#allocation2 + $0x19b] sm:$0xff]
    %v9412 = vld [vmem:[#allocation2 + $0x1a3] sm:$0xff]
    %v9413 = vld [vmem:[#allocation2 + $0x1ab] sm:$0xff]
    %v9414 = vld [vmem:[#allocation2 + $0x1b3] sm:$0xff]
    %v9415 = vld [vmem:[#allocation2 + $0x1bb] sm:$0xff]
    %v9416 = vld [vmem:[#allocation2 + $0x1c3] sm:$0xff]
    %v9417 = vld [vmem:[#allocation2 + $0x1cb] sm:$0xff]
    %v9418 = vld [vmem:[#allocation2 + $0x1d3] sm:$0xff]
    %v9419 = vld [vmem:[#allocation2 + $0x1db] sm:$0xff]
    %v9420 = vld [vmem:[#allocation2 + $0x1e3] sm:$0xff]
    %v9421 = vld [vmem:[#allocation2 + $0x1eb] sm:$0xff]
    %v9422 = vld [vmem:[#allocation2 + $0x1f3] sm:$0xff]
    %v9423 = vld [vmem:[#allocation2 + $0x1fb] sm:$0xff]
    %v9424 = vld [vmem:[#allocation2 + $0x203] sm:$0xff]
    %v9425 = vld [vmem:[#allocation2 + $0x20b] sm:$0xff]
    %v9426 = vld [vmem:[#allocation2 + $0x213] sm:$0xff]
    %v9427 = vld [vmem:[#allocation2 + $0x21b] sm:$0xff]
    %v9428 = vld [vmem:[#allocation2 + $0x223] sm:$0xff]
    %v9429 = vld [vmem:[#allocation2 + $0x22b] sm:$0xff]
    %v9430 = vld [vmem:[#allocation2 + $0x233] sm:$0xff]
    %v9431 = vld [vmem:[#allocation2 + $0x23b] sm:$0xff]
    %v9432 = vld [vmem:[#allocation2 + $0x243] sm:$0xff]
    %v9433 = vld [vmem:[#allocation2 + $0x24b] sm:$0xff]
    %v9434 = vld [vmem:[#allocation2 + $0x253] sm:$0xff]
    %v9435 = vld [vmem:[#allocation2 + $0x25b] sm:$0xff]
    %v9436 = vld [vmem:[#allocation2 + $0x263] sm:$0xff]
    %v9437 = vld [vmem:[#allocation2 + $0x26b] sm:$0xff]
    %v9438 = vld [vmem:[#allocation2 + $0x273] sm:$0xff]
    %v9439 = vld [vmem:[#allocation2 + $0x27b] sm:$0xff]
    %v9440 = vld [vmem:[#allocation2 + $0x283] sm:$0xff]
    %v9441 = vld [vmem:[#allocation2 + $0x28b] sm:$0xff]
    %v9442 = vld [vmem:[#allocation2 + $0x293] sm:$0xff]
    %v9443 = vld [vmem:[#allocation2 + $0x29b] sm:$0xff]
    %v9444 = vld [vmem:[#allocation2 + $0x2a3] sm:$0xff]
    %v9445 = vld [vmem:[#allocation2 + $0x2ab] sm:$0xff]
    %s9446 = scalar_lea.vmem %s3, 5184
    %v9447 = vld [vmem:[%s9446] sm:$0xff]
    %v9448 = vld [vmem:[%s9446 + $0x8] sm:$0xff]
    %v9449 = vld [vmem:[%s9446 + $0x10] sm:$0xff]
    %v9450 = vld [vmem:[%s9446 + $0x18] sm:$0xff]
    %v9451 = vld [vmem:[%s9446 + $0x20] sm:$0xff]
    %v9452 = vld [vmem:[%s9446 + $0x28] sm:$0xff]
    %v9453 = vld [vmem:[%s9446 + $0x30] sm:$0xff]
    %v9454 = vld [vmem:[%s9446 + $0x38] sm:$0xff]
    %v9455 = vld [vmem:[%s9446 + $0x40] sm:$0xff]
    %v9456 = vld [vmem:[%s9446 + $0x48] sm:$0xff]
    %v9457 = vld [vmem:[%s9446 + $0x50] sm:$0xff]
    %v9458 = vld [vmem:[%s9446 + $0x58] sm:$0xff]
    %v9459 = vld [vmem:[%s9446 + $0x60] sm:$0xff]
    %v9460 = vld [vmem:[%s9446 + $0x68] sm:$0xff]
    %v9461 = vld [vmem:[%s9446 + $0x70] sm:$0xff]
    %v9462 = vld [vmem:[%s9446 + $0x78] sm:$0xff]
    %v9463 = vld [vmem:[%s9446 + $0x80] sm:$0xff]
    %v9464 = vld [vmem:[%s9446 + $0x88] sm:$0xff]
    %v9465 = vld [vmem:[%s9446 + $0x90] sm:$0xff]
    %v9466 = vld [vmem:[%s9446 + $0x98] sm:$0xff]
    %v9467 = vld [vmem:[%s9446 + $0xa0] sm:$0xff]
    %v9468 = vld [vmem:[%s9446 + $0xa8] sm:$0xff]
    %v9469 = vld [vmem:[%s9446 + $0xb0] sm:$0xff]
    %v9470 = vld [vmem:[%s9446 + $0xb8] sm:$0xff]
    %v9471 = vld [vmem:[%s9446 + $0xc0] sm:$0xff]
    %v9472 = vld [vmem:[%s9446 + $0xc8] sm:$0xff]
    %v9473 = vld [vmem:[%s9446 + $0xd0] sm:$0xff]
    %v9474 = vld [vmem:[%s9446 + $0xd8] sm:$0xff]
    %v9475 = vld [vmem:[%s9446 + $0xe0] sm:$0xff]
    %v9476 = vld [vmem:[%s9446 + $0xe8] sm:$0xff]
    %v9477 = vld [vmem:[%s9446 + $0xf0] sm:$0xff]
    %v9478 = vld [vmem:[%s9446 + $0xf8] sm:$0xff]
    %v9479 = vld [vmem:[%s9446 + $0x100] sm:$0xff]
    %v9480 = vld [vmem:[%s9446 + $0x108] sm:$0xff]
    %v9481 = vld [vmem:[%s9446 + $0x110] sm:$0xff]
    %v9482 = vld [vmem:[%s9446 + $0x118] sm:$0xff]
    %v9483 = vld [vmem:[%s9446 + $0x120] sm:$0xff]
    %v9484 = vld [vmem:[%s9446 + $0x128] sm:$0xff]
    %v9485 = vld [vmem:[%s9446 + $0x130] sm:$0xff]
    %v9486 = vld [vmem:[%s9446 + $0x138] sm:$0xff]
    %v9487 = vld [vmem:[%s9446 + $0x140] sm:$0xff]
    %v9488 = vld [vmem:[%s9446 + $0x148] sm:$0xff]
    %v9489 = vld [vmem:[%s9446 + $0x150] sm:$0xff]
    %v9490 = vld [vmem:[%s9446 + $0x158] sm:$0xff]
    %v9491 = vld [vmem:[%s9446 + $0x160] sm:$0xff]
    %v9492 = vld [vmem:[%s9446 + $0x168] sm:$0xff]
    %v9493 = vld [vmem:[%s9446 + $0x170] sm:$0xff]
    %v9494 = vld [vmem:[%s9446 + $0x178] sm:$0xff]
    %v9495 = vld [vmem:[%s9446 + $0x180] sm:$0xff]
    %v9496 = vld [vmem:[%s9446 + $0x188] sm:$0xff]
    %v9497 = vld [vmem:[%s9446 + $0x190] sm:$0xff]
    %v9498 = vld [vmem:[%s9446 + $0x198] sm:$0xff]
    %v9499 = vld [vmem:[%s9446 + $0x1a0] sm:$0xff]
    %v9500 = vld [vmem:[%s9446 + $0x1a8] sm:$0xff]
    %v9501 = vld [vmem:[%s9446 + $0x1b0] sm:$0xff]
    %v9502 = vld [vmem:[%s9446 + $0x1b8] sm:$0xff]
    %v9503 = vld [vmem:[%s9446 + $0x1c0] sm:$0xff]
    %v9504 = vld [vmem:[%s9446 + $0x1c8] sm:$0xff]
    %v9505 = vld [vmem:[%s9446 + $0x1d0] sm:$0xff]
    %v9506 = vld [vmem:[%s9446 + $0x1d8] sm:$0xff]
    %v9507 = vld [vmem:[%s9446 + $0x1e0] sm:$0xff]
    %v9508 = vld [vmem:[%s9446 + $0x1e8] sm:$0xff]
    %v9509 = vld [vmem:[%s9446 + $0x1f0] sm:$0xff]
    %v9510 = vld [vmem:[%s9446 + $0x1f8] sm:$0xff]
    %v9511 = vld [vmem:[%s9446 + $0x200] sm:$0xff]
    %v9512 = vld [vmem:[%s9446 + $0x208] sm:$0xff]
    %v9513 = vld [vmem:[%s9446 + $0x210] sm:$0xff]
    %v9514 = vld [vmem:[%s9446 + $0x218] sm:$0xff]
    %v9515 = vld [vmem:[%s9446 + $0x220] sm:$0xff]
    %v9516 = vld [vmem:[%s9446 + $0x228] sm:$0xff]
    %v9517 = vld [vmem:[%s9446 + $0x230] sm:$0xff]
    %v9518 = vld [vmem:[%s9446 + $0x238] sm:$0xff]
    %v9519 = vld [vmem:[%s9446 + $0x240] sm:$0xff]
    %v9520 = vld [vmem:[%s9446 + $0x248] sm:$0xff]
    %v9521 = vld [vmem:[%s9446 + $0x250] sm:$0xff]
    %v9522 = vld [vmem:[%s9446 + $0x258] sm:$0xff]
    %v9523 = vld [vmem:[%s9446 + $0x260] sm:$0xff]
    %v9524 = vld [vmem:[%s9446 + $0x268] sm:$0xff]
    %v9525 = vld [vmem:[%s9446 + $0x270] sm:$0xff]
    %v9526 = vld [vmem:[%s9446 + $0x278] sm:$0xff]
    %v9527 = vld [vmem:[%s9446 + $0x280] sm:$0xff]
    %9529 = vset.pattern.permute.xlu0 0
    %9530 = vperm.xlu0 %9529, %v9447
    %v9531 = vpop.permute.xlu0 %9530
    %9534 = vset.pattern.permute.xlu0 0
    %9535 = vperm.xlu0 %9534, %v9448
    %v9536 = vpop.permute.xlu0 %9535
    %9539 = vset.pattern.permute.xlu0 0
    %9540 = vperm.xlu0 %9539, %v9449
    %v9541 = vpop.permute.xlu0 %9540
    %9544 = vset.pattern.permute.xlu0 0
    %9545 = vperm.xlu0 %9544, %v9450
    %v9546 = vpop.permute.xlu0 %9545
    %9549 = vset.pattern.permute.xlu0 0
    %9550 = vperm.xlu0 %9549, %v9451
    %v9551 = vpop.permute.xlu0 %9550
    %9554 = vset.pattern.permute.xlu0 0
    %9555 = vperm.xlu0 %9554, %v9452
    %v9556 = vpop.permute.xlu0 %9555
    %9559 = vset.pattern.permute.xlu0 0
    %9560 = vperm.xlu0 %9559, %v9453
    %v9561 = vpop.permute.xlu0 %9560
    %9564 = vset.pattern.permute.xlu0 0
    %9565 = vperm.xlu0 %9564, %v9454
    %v9566 = vpop.permute.xlu0 %9565
    %9569 = vset.pattern.permute.xlu0 0
    %9570 = vperm.xlu0 %9569, %v9455
    %v9571 = vpop.permute.xlu0 %9570
    %9574 = vset.pattern.permute.xlu0 0
    %9575 = vperm.xlu0 %9574, %v9456
    %v9576 = vpop.permute.xlu0 %9575
    %9579 = vset.pattern.permute.xlu0 0
    %9580 = vperm.xlu0 %9579, %v9457
    %v9581 = vpop.permute.xlu0 %9580
    %9584 = vset.pattern.permute.xlu0 0
    %9585 = vperm.xlu0 %9584, %v9458
    %v9586 = vpop.permute.xlu0 %9585
    %9589 = vset.pattern.permute.xlu0 0
    %9590 = vperm.xlu0 %9589, %v9459
    %v9591 = vpop.permute.xlu0 %9590
    %9594 = vset.pattern.permute.xlu0 0
    %9595 = vperm.xlu0 %9594, %v9460
    %v9596 = vpop.permute.xlu0 %9595
    %9599 = vset.pattern.permute.xlu0 0
    %9600 = vperm.xlu0 %9599, %v9461
    %v9601 = vpop.permute.xlu0 %9600
    %9604 = vset.pattern.permute.xlu0 0
    %9605 = vperm.xlu0 %9604, %v9462
    %v9606 = vpop.permute.xlu0 %9605
    %9609 = vset.pattern.permute.xlu0 0
    %9610 = vperm.xlu0 %9609, %v9463
    %v9611 = vpop.permute.xlu0 %9610
    %9614 = vset.pattern.permute.xlu0 0
    %9615 = vperm.xlu0 %9614, %v9464
    %v9616 = vpop.permute.xlu0 %9615
    %9619 = vset.pattern.permute.xlu0 0
    %9620 = vperm.xlu0 %9619, %v9465
    %v9621 = vpop.permute.xlu0 %9620
    %9624 = vset.pattern.permute.xlu0 0
    %9625 = vperm.xlu0 %9624, %v9466
    %v9626 = vpop.permute.xlu0 %9625
    %9629 = vset.pattern.permute.xlu0 0
    %9630 = vperm.xlu0 %9629, %v9467
    %v9631 = vpop.permute.xlu0 %9630
    %9634 = vset.pattern.permute.xlu0 0
    %9635 = vperm.xlu0 %9634, %v9468
    %v9636 = vpop.permute.xlu0 %9635
    %9639 = vset.pattern.permute.xlu0 0
    %9640 = vperm.xlu0 %9639, %v9469
    %v9641 = vpop.permute.xlu0 %9640
    %9644 = vset.pattern.permute.xlu0 0
    %9645 = vperm.xlu0 %9644, %v9470
    %v9646 = vpop.permute.xlu0 %9645
    %9649 = vset.pattern.permute.xlu0 0
    %9650 = vperm.xlu0 %9649, %v9471
    %v9651 = vpop.permute.xlu0 %9650
    %9654 = vset.pattern.permute.xlu0 0
    %9655 = vperm.xlu0 %9654, %v9472
    %v9656 = vpop.permute.xlu0 %9655
    %9659 = vset.pattern.permute.xlu0 0
    %9660 = vperm.xlu0 %9659, %v9473
    %v9661 = vpop.permute.xlu0 %9660
    %9664 = vset.pattern.permute.xlu0 0
    %9665 = vperm.xlu0 %9664, %v9474
    %v9666 = vpop.permute.xlu0 %9665
    %9669 = vset.pattern.permute.xlu0 0
    %9670 = vperm.xlu0 %9669, %v9475
    %v9671 = vpop.permute.xlu0 %9670
    %9674 = vset.pattern.permute.xlu0 0
    %9675 = vperm.xlu0 %9674, %v9476
    %v9676 = vpop.permute.xlu0 %9675
    %9679 = vset.pattern.permute.xlu0 0
    %9680 = vperm.xlu0 %9679, %v9477
    %v9681 = vpop.permute.xlu0 %9680
    %9684 = vset.pattern.permute.xlu0 0
    %9685 = vperm.xlu0 %9684, %v9478
    %v9686 = vpop.permute.xlu0 %9685
    %9689 = vset.pattern.permute.xlu0 0
    %9690 = vperm.xlu0 %9689, %v9479
    %v9691 = vpop.permute.xlu0 %9690
    %9694 = vset.pattern.permute.xlu0 0
    %9695 = vperm.xlu0 %9694, %v9480
    %v9696 = vpop.permute.xlu0 %9695
    %9699 = vset.pattern.permute.xlu0 0
    %9700 = vperm.xlu0 %9699, %v9481
    %v9701 = vpop.permute.xlu0 %9700
    %9704 = vset.pattern.permute.xlu0 0
    %9705 = vperm.xlu0 %9704, %v9482
    %v9706 = vpop.permute.xlu0 %9705
    %9709 = vset.pattern.permute.xlu0 0
    %9710 = vperm.xlu0 %9709, %v9483
    %v9711 = vpop.permute.xlu0 %9710
    %9714 = vset.pattern.permute.xlu0 0
    %9715 = vperm.xlu0 %9714, %v9484
    %v9716 = vpop.permute.xlu0 %9715
    %9719 = vset.pattern.permute.xlu0 0
    %9720 = vperm.xlu0 %9719, %v9485
    %v9721 = vpop.permute.xlu0 %9720
    %9724 = vset.pattern.permute.xlu0 0
    %9725 = vperm.xlu0 %9724, %v9486
    %v9726 = vpop.permute.xlu0 %9725
    %9729 = vset.pattern.permute.xlu0 0
    %9730 = vperm.xlu0 %9729, %v9487
    %v9731 = vpop.permute.xlu0 %9730
    %9734 = vset.pattern.permute.xlu0 0
    %9735 = vperm.xlu0 %9734, %v9488
    %v9736 = vpop.permute.xlu0 %9735
    %9739 = vset.pattern.permute.xlu0 0
    %9740 = vperm.xlu0 %9739, %v9489
    %v9741 = vpop.permute.xlu0 %9740
    %9744 = vset.pattern.permute.xlu0 0
    %9745 = vperm.xlu0 %9744, %v9490
    %v9746 = vpop.permute.xlu0 %9745
    %9749 = vset.pattern.permute.xlu0 0
    %9750 = vperm.xlu0 %9749, %v9491
    %v9751 = vpop.permute.xlu0 %9750
    %9754 = vset.pattern.permute.xlu0 0
    %9755 = vperm.xlu0 %9754, %v9492
    %v9756 = vpop.permute.xlu0 %9755
    %9759 = vset.pattern.permute.xlu0 0
    %9760 = vperm.xlu0 %9759, %v9493
    %v9761 = vpop.permute.xlu0 %9760
    %9764 = vset.pattern.permute.xlu0 0
    %9765 = vperm.xlu0 %9764, %v9494
    %v9766 = vpop.permute.xlu0 %9765
    %9769 = vset.pattern.permute.xlu0 0
    %9770 = vperm.xlu0 %9769, %v9495
    %v9771 = vpop.permute.xlu0 %9770
    %9774 = vset.pattern.permute.xlu0 0
    %9775 = vperm.xlu0 %9774, %v9496
    %v9776 = vpop.permute.xlu0 %9775
    %9779 = vset.pattern.permute.xlu0 0
    %9780 = vperm.xlu0 %9779, %v9497
    %v9781 = vpop.permute.xlu0 %9780
    %9784 = vset.pattern.permute.xlu0 0
    %9785 = vperm.xlu0 %9784, %v9498
    %v9786 = vpop.permute.xlu0 %9785
    %9789 = vset.pattern.permute.xlu0 0
    %9790 = vperm.xlu0 %9789, %v9499
    %v9791 = vpop.permute.xlu0 %9790
    %9794 = vset.pattern.permute.xlu0 0
    %9795 = vperm.xlu0 %9794, %v9500
    %v9796 = vpop.permute.xlu0 %9795
    %9799 = vset.pattern.permute.xlu0 0
    %9800 = vperm.xlu0 %9799, %v9501
    %v9801 = vpop.permute.xlu0 %9800
    %9804 = vset.pattern.permute.xlu0 0
    %9805 = vperm.xlu0 %9804, %v9502
    %v9806 = vpop.permute.xlu0 %9805
    %9809 = vset.pattern.permute.xlu0 0
    %9810 = vperm.xlu0 %9809, %v9503
    %v9811 = vpop.permute.xlu0 %9810
    %9814 = vset.pattern.permute.xlu0 0
    %9815 = vperm.xlu0 %9814, %v9504
    %v9816 = vpop.permute.xlu0 %9815
    %9819 = vset.pattern.permute.xlu0 0
    %9820 = vperm.xlu0 %9819, %v9505
    %v9821 = vpop.permute.xlu0 %9820
    %9824 = vset.pattern.permute.xlu0 0
    %9825 = vperm.xlu0 %9824, %v9506
    %v9826 = vpop.permute.xlu0 %9825
    %9829 = vset.pattern.permute.xlu0 0
    %9830 = vperm.xlu0 %9829, %v9507
    %v9831 = vpop.permute.xlu0 %9830
    %9834 = vset.pattern.permute.xlu0 0
    %9835 = vperm.xlu0 %9834, %v9508
    %v9836 = vpop.permute.xlu0 %9835
    %9839 = vset.pattern.permute.xlu0 0
    %9840 = vperm.xlu0 %9839, %v9509
    %v9841 = vpop.permute.xlu0 %9840
    %9844 = vset.pattern.permute.xlu0 0
    %9845 = vperm.xlu0 %9844, %v9510
    %v9846 = vpop.permute.xlu0 %9845
    %9849 = vset.pattern.permute.xlu0 0
    %9850 = vperm.xlu0 %9849, %v9511
    %v9851 = vpop.permute.xlu0 %9850
    %9854 = vset.pattern.permute.xlu0 0
    %9855 = vperm.xlu0 %9854, %v9512
    %v9856 = vpop.permute.xlu0 %9855
    %9859 = vset.pattern.permute.xlu0 0
    %9860 = vperm.xlu0 %9859, %v9513
    %v9861 = vpop.permute.xlu0 %9860
    %9864 = vset.pattern.permute.xlu0 0
    %9865 = vperm.xlu0 %9864, %v9514
    %v9866 = vpop.permute.xlu0 %9865
    %9869 = vset.pattern.permute.xlu0 0
    %9870 = vperm.xlu0 %9869, %v9515
    %v9871 = vpop.permute.xlu0 %9870
    %9874 = vset.pattern.permute.xlu0 0
    %9875 = vperm.xlu0 %9874, %v9516
    %v9876 = vpop.permute.xlu0 %9875
    %9879 = vset.pattern.permute.xlu0 0
    %9880 = vperm.xlu0 %9879, %v9517
    %v9881 = vpop.permute.xlu0 %9880
    %9884 = vset.pattern.permute.xlu0 0
    %9885 = vperm.xlu0 %9884, %v9518
    %v9886 = vpop.permute.xlu0 %9885
    %9889 = vset.pattern.permute.xlu0 0
    %9890 = vperm.xlu0 %9889, %v9519
    %v9891 = vpop.permute.xlu0 %9890
    %9894 = vset.pattern.permute.xlu0 0
    %9895 = vperm.xlu0 %9894, %v9520
    %v9896 = vpop.permute.xlu0 %9895
    %9899 = vset.pattern.permute.xlu0 0
    %9900 = vperm.xlu0 %9899, %v9521
    %v9901 = vpop.permute.xlu0 %9900
    %9904 = vset.pattern.permute.xlu0 0
    %9905 = vperm.xlu0 %9904, %v9522
    %v9906 = vpop.permute.xlu0 %9905
    %9909 = vset.pattern.permute.xlu0 0
    %9910 = vperm.xlu0 %9909, %v9523
    %v9911 = vpop.permute.xlu0 %9910
    %9914 = vset.pattern.permute.xlu0 0
    %9915 = vperm.xlu0 %9914, %v9524
    %v9916 = vpop.permute.xlu0 %9915
    %9919 = vset.pattern.permute.xlu0 0
    %9920 = vperm.xlu0 %9919, %v9525
    %v9921 = vpop.permute.xlu0 %9920
    %9924 = vset.pattern.permute.xlu0 0
    %9925 = vperm.xlu0 %9924, %v9526
    %v9926 = vpop.permute.xlu0 %9925
    %9929 = vset.pattern.permute.xlu0 0
    %9930 = vperm.xlu0 %9929, %v9527
    %v9931 = vpop.permute.xlu0 %9930
    %v9933 = vmul.f32 %v9365, %v9531
    %v9934 = vmul.f32 %v9366, %v9536
    %v9935 = vmul.f32 %v9367, %v9541
    %v9936 = vmul.f32 %v9368, %v9546
    %v9937 = vmul.f32 %v9369, %v9551
    %v9938 = vmul.f32 %v9370, %v9556
    %v9939 = vmul.f32 %v9371, %v9561
    %v9940 = vmul.f32 %v9372, %v9566
    %v9941 = vmul.f32 %v9373, %v9571
    %v9942 = vmul.f32 %v9374, %v9576
    %v9943 = vmul.f32 %v9375, %v9581
    %v9944 = vmul.f32 %v9376, %v9586
    %v9945 = vmul.f32 %v9377, %v9591
    %v9946 = vmul.f32 %v9378, %v9596
    %v9947 = vmul.f32 %v9379, %v9601
    %v9948 = vmul.f32 %v9380, %v9606
    %v9949 = vmul.f32 %v9381, %v9611
    %v9950 = vmul.f32 %v9382, %v9616
    %v9951 = vmul.f32 %v9383, %v9621
    %v9952 = vmul.f32 %v9384, %v9626
    %v9953 = vmul.f32 %v9385, %v9631
    %v9954 = vmul.f32 %v9386, %v9636
    %v9955 = vmul.f32 %v9387, %v9641
    %v9956 = vmul.f32 %v9388, %v9646
    %v9957 = vmul.f32 %v9389, %v9651
    %v9958 = vmul.f32 %v9390, %v9656
    %v9959 = vmul.f32 %v9391, %v9661
    %v9960 = vmul.f32 %v9392, %v9666
    %v9961 = vmul.f32 %v9393, %v9671
    %v9962 = vmul.f32 %v9394, %v9676
    %v9963 = vmul.f32 %v9395, %v9681
    %v9964 = vmul.f32 %v9396, %v9686
    %v9965 = vmul.f32 %v9397, %v9691
    %v9966 = vmul.f32 %v9398, %v9696
    %v9967 = vmul.f32 %v9399, %v9701
    %v9968 = vmul.f32 %v9400, %v9706
    %v9969 = vmul.f32 %v9401, %v9711
    %v9970 = vmul.f32 %v9402, %v9716
    %v9971 = vmul.f32 %v9403, %v9721
    %v9972 = vmul.f32 %v9404, %v9726
    %v9973 = vmul.f32 %v9405, %v9731
    %v9974 = vmul.f32 %v9406, %v9736
    %v9975 = vmul.f32 %v9407, %v9741
    %v9976 = vmul.f32 %v9408, %v9746
    %v9977 = vmul.f32 %v9409, %v9751
    %v9978 = vmul.f32 %v9410, %v9756
    %v9979 = vmul.f32 %v9411, %v9761
    %v9980 = vmul.f32 %v9412, %v9766
    %v9981 = vmul.f32 %v9413, %v9771
    %v9982 = vmul.f32 %v9414, %v9776
    %v9983 = vmul.f32 %v9415, %v9781
    %v9984 = vmul.f32 %v9416, %v9786
    %v9985 = vmul.f32 %v9417, %v9791
    %v9986 = vmul.f32 %v9418, %v9796
    %v9987 = vmul.f32 %v9419, %v9801
    %v9988 = vmul.f32 %v9420, %v9806
    %v9989 = vmul.f32 %v9421, %v9811
    %v9990 = vmul.f32 %v9422, %v9816
    %v9991 = vmul.f32 %v9423, %v9821
    %v9992 = vmul.f32 %v9424, %v9826
    %v9993 = vmul.f32 %v9425, %v9831
    %v9994 = vmul.f32 %v9426, %v9836
    %v9995 = vmul.f32 %v9427, %v9841
    %v9996 = vmul.f32 %v9428, %v9846
    %v9997 = vmul.f32 %v9429, %v9851
    %v9998 = vmul.f32 %v9430, %v9856
    %v9999 = vmul.f32 %v9431, %v9861
    %v10000 = vmul.f32 %v9432, %v9866
    %v10001 = vmul.f32 %v9433, %v9871
    %v10002 = vmul.f32 %v9434, %v9876
    %v10003 = vmul.f32 %v9435, %v9881
    %v10004 = vmul.f32 %v9436, %v9886
    %v10005 = vmul.f32 %v9437, %v9891
    %v10006 = vmul.f32 %v9438, %v9896
    %v10007 = vmul.f32 %v9439, %v9901
    %v10008 = vmul.f32 %v9440, %v9906
    %v10009 = vmul.f32 %v9441, %v9911
    %v10010 = vmul.f32 %v9442, %v9916
    %v10011 = vmul.f32 %v9443, %v9921
    %v10012 = vmul.f32 %v9444, %v9926
    %v10013 = vmul.f32 %v9445, %v9931
    %10014 = vst.msk [vmem:[#allocation3 + $0x10] sm:$0xff] %vm2059, %v9933
    %10015 = vst.msk [vmem:[#allocation3 + $0x28] sm:$0xff] %vm2059, %v9934
    %10016 = vst.msk [vmem:[#allocation3 + $0x40] sm:$0xff] %vm2059, %v9935
    %10017 = vst.msk [vmem:[#allocation3 + $0x58] sm:$0xff] %vm2059, %v9936
    %10018 = vst.msk [vmem:[#allocation3 + $0x70] sm:$0xff] %vm2059, %v9937
    %10019 = vst.msk [vmem:[#allocation3 + $0x88] sm:$0xff] %vm2059, %v9938
    %10020 = vst.msk [vmem:[#allocation3 + $0xa0] sm:$0xff] %vm2059, %v9939
    %10021 = vst.msk [vmem:[#allocation3 + $0xb8] sm:$0xff] %vm2059, %v9940
    %10022 = vst.msk [vmem:[#allocation3 + $0xd0] sm:$0xff] %vm2059, %v9941
    %10023 = vst.msk [vmem:[#allocation3 + $0xe8] sm:$0xff] %vm2059, %v9942
    %10024 = vst.msk [vmem:[#allocation3 + $0x100] sm:$0xff] %vm2059, %v9943
    %10025 = vst.msk [vmem:[#allocation3 + $0x118] sm:$0xff] %vm2059, %v9944
    %10026 = vst.msk [vmem:[#allocation3 + $0x130] sm:$0xff] %vm2059, %v9945
    %10027 = vst.msk [vmem:[#allocation3 + $0x148] sm:$0xff] %vm2059, %v9946
    %10028 = vst.msk [vmem:[#allocation3 + $0x160] sm:$0xff] %vm2059, %v9947
    %10029 = vst.msk [vmem:[#allocation3 + $0x178] sm:$0xff] %vm2059, %v9948
    %10030 = vst.msk [vmem:[#allocation3 + $0x190] sm:$0xff] %vm2059, %v9949
    %10031 = vst.msk [vmem:[#allocation3 + $0x1a8] sm:$0xff] %vm2059, %v9950
    %10032 = vst.msk [vmem:[#allocation3 + $0x1c0] sm:$0xff] %vm2059, %v9951
    %10033 = vst.msk [vmem:[#allocation3 + $0x1d8] sm:$0xff] %vm2059, %v9952
    %10034 = vst.msk [vmem:[#allocation3 + $0x1f0] sm:$0xff] %vm2059, %v9953
    %10035 = vst.msk [vmem:[#allocation3 + $0x208] sm:$0xff] %vm2059, %v9954
    %10036 = vst.msk [vmem:[#allocation3 + $0x220] sm:$0xff] %vm2059, %v9955
    %10037 = vst.msk [vmem:[#allocation3 + $0x238] sm:$0xff] %vm2059, %v9956
    %10038 = vst.msk [vmem:[#allocation3 + $0x250] sm:$0xff] %vm2059, %v9957
    %10039 = vst.msk [vmem:[#allocation3 + $0x268] sm:$0xff] %vm2059, %v9958
    %10040 = vst.msk [vmem:[#allocation3 + $0x280] sm:$0xff] %vm2059, %v9959
    %10041 = vst.msk [vmem:[#allocation3 + $0x298] sm:$0xff] %vm2059, %v9960
    %10042 = vst.msk [vmem:[#allocation3 + $0x2b0] sm:$0xff] %vm2059, %v9961
    %10043 = vst.msk [vmem:[#allocation3 + $0x2c8] sm:$0xff] %vm2059, %v9962
    %10044 = vst.msk [vmem:[#allocation3 + $0x2e0] sm:$0xff] %vm2059, %v9963
    %10045 = vst.msk [vmem:[#allocation3 + $0x2f8] sm:$0xff] %vm2059, %v9964
    %10046 = vst.msk [vmem:[#allocation3 + $0x310] sm:$0xff] %vm2059, %v9965
    %10047 = vst.msk [vmem:[#allocation3 + $0x328] sm:$0xff] %vm2059, %v9966
    %10048 = vst.msk [vmem:[#allocation3 + $0x340] sm:$0xff] %vm2059, %v9967
    %10049 = vst.msk [vmem:[#allocation3 + $0x358] sm:$0xff] %vm2059, %v9968
    %10050 = vst.msk [vmem:[#allocation3 + $0x370] sm:$0xff] %vm2059, %v9969
    %10051 = vst.msk [vmem:[#allocation3 + $0x388] sm:$0xff] %vm2059, %v9970
    %10052 = vst.msk [vmem:[#allocation3 + $0x3a0] sm:$0xff] %vm2059, %v9971
    %10053 = vst.msk [vmem:[#allocation3 + $0x3b8] sm:$0xff] %vm2059, %v9972
    %10054 = vst.msk [vmem:[#allocation3 + $0x3d0] sm:$0xff] %vm2059, %v9973
    %10055 = vst.msk [vmem:[#allocation3 + $0x3e8] sm:$0xff] %vm2059, %v9974
    %10056 = vst.msk [vmem:[#allocation3 + $0x400] sm:$0xff] %vm2059, %v9975
    %10057 = vst.msk [vmem:[#allocation3 + $0x418] sm:$0xff] %vm2059, %v9976
    %10058 = vst.msk [vmem:[#allocation3 + $0x430] sm:$0xff] %vm2059, %v9977
    %10059 = vst.msk [vmem:[#allocation3 + $0x448] sm:$0xff] %vm2059, %v9978
    %10060 = vst.msk [vmem:[#allocation3 + $0x460] sm:$0xff] %vm2059, %v9979
    %10061 = vst.msk [vmem:[#allocation3 + $0x478] sm:$0xff] %vm2059, %v9980
    %10062 = vst.msk [vmem:[#allocation3 + $0x490] sm:$0xff] %vm2059, %v9981
    %10063 = vst.msk [vmem:[#allocation3 + $0x4a8] sm:$0xff] %vm2059, %v9982
    %10064 = vst.msk [vmem:[#allocation3 + $0x4c0] sm:$0xff] %vm2059, %v9983
    %10065 = vst.msk [vmem:[#allocation3 + $0x4d8] sm:$0xff] %vm2059, %v9984
    %10066 = vst.msk [vmem:[#allocation3 + $0x4f0] sm:$0xff] %vm2059, %v9985
    %10067 = vst.msk [vmem:[#allocation3 + $0x508] sm:$0xff] %vm2059, %v9986
    %10068 = vst.msk [vmem:[#allocation3 + $0x520] sm:$0xff] %vm2059, %v9987
    %10069 = vst.msk [vmem:[#allocation3 + $0x538] sm:$0xff] %vm2059, %v9988
    %10070 = vst.msk [vmem:[#allocation3 + $0x550] sm:$0xff] %vm2059, %v9989
    %10071 = vst.msk [vmem:[#allocation3 + $0x568] sm:$0xff] %vm2059, %v9990
    %10072 = vst.msk [vmem:[#allocation3 + $0x580] sm:$0xff] %vm2059, %v9991
    %10073 = vst.msk [vmem:[#allocation3 + $0x598] sm:$0xff] %vm2059, %v9992
    %10074 = vst.msk [vmem:[#allocation3 + $0x5b0] sm:$0xff] %vm2059, %v9993
    %10075 = vst.msk [vmem:[#allocation3 + $0x5c8] sm:$0xff] %vm2059, %v9994
    %10076 = vst.msk [vmem:[#allocation3 + $0x5e0] sm:$0xff] %vm2059, %v9995
    %10077 = vst.msk [vmem:[#allocation3 + $0x5f8] sm:$0xff] %vm2059, %v9996
    %10078 = vst.msk [vmem:[#allocation3 + $0x610] sm:$0xff] %vm2059, %v9997
    %10079 = vst.msk [vmem:[#allocation3 + $0x628] sm:$0xff] %vm2059, %v9998
    %10080 = vst.msk [vmem:[#allocation3 + $0x640] sm:$0xff] %vm2059, %v9999
    %10081 = vst.msk [vmem:[#allocation3 + $0x658] sm:$0xff] %vm2059, %v10000
    %10082 = vst.msk [vmem:[#allocation3 + $0x670] sm:$0xff] %vm2059, %v10001
    %10083 = vst.msk [vmem:[#allocation3 + $0x688] sm:$0xff] %vm2059, %v10002
    %10084 = vst.msk [vmem:[#allocation3 + $0x6a0] sm:$0xff] %vm2059, %v10003
    %10085 = vst.msk [vmem:[#allocation3 + $0x6b8] sm:$0xff] %vm2059, %v10004
    %10086 = vst.msk [vmem:[#allocation3 + $0x6d0] sm:$0xff] %vm2059, %v10005
    %10087 = vst.msk [vmem:[#allocation3 + $0x6e8] sm:$0xff] %vm2059, %v10006
    %10088 = vst.msk [vmem:[#allocation3 + $0x700] sm:$0xff] %vm2059, %v10007
    %10089 = vst.msk [vmem:[#allocation3 + $0x718] sm:$0xff] %vm2059, %v10008
    %10090 = vst.msk [vmem:[#allocation3 + $0x730] sm:$0xff] %vm2059, %v10009
    %10091 = vst.msk [vmem:[#allocation3 + $0x748] sm:$0xff] %vm2059, %v10010
    %10092 = vst.msk [vmem:[#allocation3 + $0x760] sm:$0xff] %vm2059, %v10011
    %10093 = vst.msk [vmem:[#allocation3 + $0x778] sm:$0xff] %vm2059, %v10012
    %10094 = vst.msk [vmem:[#allocation3 + $0x790] sm:$0xff] %vm2059, %v10013
    %v10095 = vld [vmem:[#allocation3] sm:$0xff]
    %v10096 = vld [vmem:[#allocation3 + $0x8] sm:$0xff]
    %v10097 = vld [vmem:[#allocation3 + $0x10] sm:$0xff]
    %v10098 = vld [vmem:[#allocation3 + $0x18] sm:$0xff]
    %v10099 = vld [vmem:[#allocation3 + $0x20] sm:$0xff]
    %v10100 = vld [vmem:[#allocation3 + $0x28] sm:$0xff]
    %v10101 = vld [vmem:[#allocation3 + $0x30] sm:$0xff]
    %v10102 = vld [vmem:[#allocation3 + $0x38] sm:$0xff]
    %v10103 = vld [vmem:[#allocation3 + $0x40] sm:$0xff]
    %v10104 = vld [vmem:[#allocation3 + $0x48] sm:$0xff]
    %v10105 = vld [vmem:[#allocation3 + $0x50] sm:$0xff]
    %v10106 = vld [vmem:[#allocation3 + $0x58] sm:$0xff]
    %v10107 = vld [vmem:[#allocation3 + $0x60] sm:$0xff]
    %v10108 = vld [vmem:[#allocation3 + $0x68] sm:$0xff]
    %v10109 = vld [vmem:[#allocation3 + $0x70] sm:$0xff]
    %v10110 = vld [vmem:[#allocation3 + $0x78] sm:$0xff]
    %v10111 = vld [vmem:[#allocation3 + $0x80] sm:$0xff]
    %v10112 = vld [vmem:[#allocation3 + $0x88] sm:$0xff]
    %v10113 = vld [vmem:[#allocation3 + $0x90] sm:$0xff]
    %v10114 = vld [vmem:[#allocation3 + $0x98] sm:$0xff]
    %v10115 = vld [vmem:[#allocation3 + $0xa0] sm:$0xff]
    %v10116 = vld [vmem:[#allocation3 + $0xa8] sm:$0xff]
    %v10117 = vld [vmem:[#allocation3 + $0xb0] sm:$0xff]
    %v10118 = vld [vmem:[#allocation3 + $0xb8] sm:$0xff]
    %v10119 = vld [vmem:[#allocation3 + $0xc0] sm:$0xff]
    %v10120 = vld [vmem:[#allocation3 + $0xc8] sm:$0xff]
    %v10121 = vld [vmem:[#allocation3 + $0xd0] sm:$0xff]
    %v10122 = vld [vmem:[#allocation3 + $0xd8] sm:$0xff]
    %v10123 = vld [vmem:[#allocation3 + $0xe0] sm:$0xff]
    %v10124 = vld [vmem:[#allocation3 + $0xe8] sm:$0xff]
    %v10125 = vld [vmem:[#allocation3 + $0xf0] sm:$0xff]
    %v10126 = vld [vmem:[#allocation3 + $0xf8] sm:$0xff]
    %v10127 = vld [vmem:[#allocation3 + $0x100] sm:$0xff]
    %v10128 = vld [vmem:[#allocation3 + $0x108] sm:$0xff]
    %v10129 = vld [vmem:[#allocation3 + $0x110] sm:$0xff]
    %v10130 = vld [vmem:[#allocation3 + $0x118] sm:$0xff]
    %v10131 = vld [vmem:[#allocation3 + $0x120] sm:$0xff]
    %v10132 = vld [vmem:[#allocation3 + $0x128] sm:$0xff]
    %v10133 = vld [vmem:[#allocation3 + $0x130] sm:$0xff]
    %v10134 = vld [vmem:[#allocation3 + $0x138] sm:$0xff]
    %v10135 = vld [vmem:[#allocation3 + $0x140] sm:$0xff]
    %v10136 = vld [vmem:[#allocation3 + $0x148] sm:$0xff]
    %v10137 = vld [vmem:[#allocation3 + $0x150] sm:$0xff]
    %v10138 = vld [vmem:[#allocation3 + $0x158] sm:$0xff]
    %v10139 = vld [vmem:[#allocation3 + $0x160] sm:$0xff]
    %v10140 = vld [vmem:[#allocation3 + $0x168] sm:$0xff]
    %v10141 = vld [vmem:[#allocation3 + $0x170] sm:$0xff]
    %v10142 = vld [vmem:[#allocation3 + $0x178] sm:$0xff]
    %v10143 = vld [vmem:[#allocation3 + $0x180] sm:$0xff]
    %v10144 = vld [vmem:[#allocation3 + $0x188] sm:$0xff]
    %v10145 = vld [vmem:[#allocation3 + $0x190] sm:$0xff]
    %v10146 = vld [vmem:[#allocation3 + $0x198] sm:$0xff]
    %v10147 = vld [vmem:[#allocation3 + $0x1a0] sm:$0xff]
    %v10148 = vld [vmem:[#allocation3 + $0x1a8] sm:$0xff]
    %v10149 = vld [vmem:[#allocation3 + $0x1b0] sm:$0xff]
    %v10150 = vld [vmem:[#allocation3 + $0x1b8] sm:$0xff]
    %v10151 = vld [vmem:[#allocation3 + $0x1c0] sm:$0xff]
    %v10152 = vld [vmem:[#allocation3 + $0x1c8] sm:$0xff]
    %v10153 = vld [vmem:[#allocation3 + $0x1d0] sm:$0xff]
    %v10154 = vld [vmem:[#allocation3 + $0x1d8] sm:$0xff]
    %v10155 = vld [vmem:[#allocation3 + $0x1e0] sm:$0xff]
    %v10156 = vld [vmem:[#allocation3 + $0x1e8] sm:$0xff]
    %v10157 = vld [vmem:[#allocation3 + $0x1f0] sm:$0xff]
    %v10158 = vld [vmem:[#allocation3 + $0x1f8] sm:$0xff]
    %v10159 = vld [vmem:[#allocation3 + $0x200] sm:$0xff]
    %v10160 = vld [vmem:[#allocation3 + $0x208] sm:$0xff]
    %v10161 = vld [vmem:[#allocation3 + $0x210] sm:$0xff]
    %v10162 = vld [vmem:[#allocation3 + $0x218] sm:$0xff]
    %v10163 = vld [vmem:[#allocation3 + $0x220] sm:$0xff]
    %v10164 = vld [vmem:[#allocation3 + $0x228] sm:$0xff]
    %v10165 = vld [vmem:[#allocation3 + $0x230] sm:$0xff]
    %v10166 = vld [vmem:[#allocation3 + $0x238] sm:$0xff]
    %v10167 = vld [vmem:[#allocation3 + $0x240] sm:$0xff]
    %v10168 = vld [vmem:[#allocation3 + $0x248] sm:$0xff]
    %v10169 = vld [vmem:[#allocation3 + $0x250] sm:$0xff]
    %v10170 = vld [vmem:[#allocation3 + $0x258] sm:$0xff]
    %v10171 = vld [vmem:[#allocation3 + $0x260] sm:$0xff]
    %v10172 = vld [vmem:[#allocation3 + $0x268] sm:$0xff]
    %v10173 = vld [vmem:[#allocation3 + $0x270] sm:$0xff]
    %v10174 = vld [vmem:[#allocation3 + $0x278] sm:$0xff]
    %v10175 = vld [vmem:[#allocation3 + $0x280] sm:$0xff]
    %v10176 = vld [vmem:[#allocation3 + $0x288] sm:$0xff]
    %v10177 = vld [vmem:[#allocation3 + $0x290] sm:$0xff]
    %v10178 = vld [vmem:[#allocation3 + $0x298] sm:$0xff]
    %v10179 = vld [vmem:[#allocation3 + $0x2a0] sm:$0xff]
    %v10180 = vld [vmem:[#allocation3 + $0x2a8] sm:$0xff]
    %v10181 = vld [vmem:[#allocation3 + $0x2b0] sm:$0xff]
    %v10182 = vld [vmem:[#allocation3 + $0x2b8] sm:$0xff]
    %v10183 = vld [vmem:[#allocation3 + $0x2c0] sm:$0xff]
    %v10184 = vld [vmem:[#allocation3 + $0x2c8] sm:$0xff]
    %v10185 = vld [vmem:[#allocation3 + $0x2d0] sm:$0xff]
    %v10186 = vld [vmem:[#allocation3 + $0x2d8] sm:$0xff]
    %v10187 = vld [vmem:[#allocation3 + $0x2e0] sm:$0xff]
    %v10188 = vld [vmem:[#allocation3 + $0x2e8] sm:$0xff]
    %v10189 = vld [vmem:[#allocation3 + $0x2f0] sm:$0xff]
    %v10190 = vld [vmem:[#allocation3 + $0x2f8] sm:$0xff]
    %v10191 = vld [vmem:[#allocation3 + $0x300] sm:$0xff]
    %v10192 = vld [vmem:[#allocation3 + $0x308] sm:$0xff]
    %v10193 = vld [vmem:[#allocation3 + $0x310] sm:$0xff]
    %v10194 = vld [vmem:[#allocation3 + $0x318] sm:$0xff]
    %v10195 = vld [vmem:[#allocation3 + $0x320] sm:$0xff]
    %v10196 = vld [vmem:[#allocation3 + $0x328] sm:$0xff]
    %v10197 = vld [vmem:[#allocation3 + $0x330] sm:$0xff]
    %v10198 = vld [vmem:[#allocation3 + $0x338] sm:$0xff]
    %v10199 = vld [vmem:[#allocation3 + $0x340] sm:$0xff]
    %v10200 = vld [vmem:[#allocation3 + $0x348] sm:$0xff]
    %v10201 = vld [vmem:[#allocation3 + $0x350] sm:$0xff]
    %v10202 = vld [vmem:[#allocation3 + $0x358] sm:$0xff]
    %v10203 = vld [vmem:[#allocation3 + $0x360] sm:$0xff]
    %v10204 = vld [vmem:[#allocation3 + $0x368] sm:$0xff]
    %v10205 = vld [vmem:[#allocation3 + $0x370] sm:$0xff]
    %v10206 = vld [vmem:[#allocation3 + $0x378] sm:$0xff]
    %v10207 = vld [vmem:[#allocation3 + $0x380] sm:$0xff]
    %v10208 = vld [vmem:[#allocation3 + $0x388] sm:$0xff]
    %v10209 = vld [vmem:[#allocation3 + $0x390] sm:$0xff]
    %v10210 = vld [vmem:[#allocation3 + $0x398] sm:$0xff]
    %v10211 = vld [vmem:[#allocation3 + $0x3a0] sm:$0xff]
    %v10212 = vld [vmem:[#allocation3 + $0x3a8] sm:$0xff]
    %v10213 = vld [vmem:[#allocation3 + $0x3b0] sm:$0xff]
    %v10214 = vld [vmem:[#allocation3 + $0x3b8] sm:$0xff]
    %v10215 = vld [vmem:[#allocation3 + $0x3c0] sm:$0xff]
    %v10216 = vld [vmem:[#allocation3 + $0x3c8] sm:$0xff]
    %v10217 = vld [vmem:[#allocation3 + $0x3d0] sm:$0xff]
    %v10218 = vld [vmem:[#allocation3 + $0x3d8] sm:$0xff]
    %v10219 = vld [vmem:[#allocation3 + $0x3e0] sm:$0xff]
    %v10220 = vld [vmem:[#allocation3 + $0x3e8] sm:$0xff]
    %v10221 = vld [vmem:[#allocation3 + $0x3f0] sm:$0xff]
    %v10222 = vld [vmem:[#allocation3 + $0x3f8] sm:$0xff]
    %v10223 = vld [vmem:[#allocation3 + $0x400] sm:$0xff]
    %v10224 = vld [vmem:[#allocation3 + $0x408] sm:$0xff]
    %v10225 = vld [vmem:[#allocation3 + $0x410] sm:$0xff]
    %v10226 = vld [vmem:[#allocation3 + $0x418] sm:$0xff]
    %v10227 = vld [vmem:[#allocation3 + $0x420] sm:$0xff]
    %v10228 = vld [vmem:[#allocation3 + $0x428] sm:$0xff]
    %v10229 = vld [vmem:[#allocation3 + $0x430] sm:$0xff]
    %v10230 = vld [vmem:[#allocation3 + $0x438] sm:$0xff]
    %v10231 = vld [vmem:[#allocation3 + $0x440] sm:$0xff]
    %v10232 = vld [vmem:[#allocation3 + $0x448] sm:$0xff]
    %v10233 = vld [vmem:[#allocation3 + $0x450] sm:$0xff]
    %v10234 = vld [vmem:[#allocation3 + $0x458] sm:$0xff]
    %v10235 = vld [vmem:[#allocation3 + $0x460] sm:$0xff]
    %v10236 = vld [vmem:[#allocation3 + $0x468] sm:$0xff]
    %v10237 = vld [vmem:[#allocation3 + $0x470] sm:$0xff]
    %v10238 = vld [vmem:[#allocation3 + $0x478] sm:$0xff]
    %v10239 = vld [vmem:[#allocation3 + $0x480] sm:$0xff]
    %v10240 = vld [vmem:[#allocation3 + $0x488] sm:$0xff]
    %v10241 = vld [vmem:[#allocation3 + $0x490] sm:$0xff]
    %v10242 = vld [vmem:[#allocation3 + $0x498] sm:$0xff]
    %v10243 = vld [vmem:[#allocation3 + $0x4a0] sm:$0xff]
    %v10244 = vld [vmem:[#allocation3 + $0x4a8] sm:$0xff]
    %v10245 = vld [vmem:[#allocation3 + $0x4b0] sm:$0xff]
    %v10246 = vld [vmem:[#allocation3 + $0x4b8] sm:$0xff]
    %v10247 = vld [vmem:[#allocation3 + $0x4c0] sm:$0xff]
    %v10248 = vld [vmem:[#allocation3 + $0x4c8] sm:$0xff]
    %v10249 = vld [vmem:[#allocation3 + $0x4d0] sm:$0xff]
    %v10250 = vld [vmem:[#allocation3 + $0x4d8] sm:$0xff]
    %v10251 = vld [vmem:[#allocation3 + $0x4e0] sm:$0xff]
    %v10252 = vld [vmem:[#allocation3 + $0x4e8] sm:$0xff]
    %v10253 = vld [vmem:[#allocation3 + $0x4f0] sm:$0xff]
    %v10254 = vld [vmem:[#allocation3 + $0x4f8] sm:$0xff]
    %v10255 = vld [vmem:[#allocation3 + $0x500] sm:$0xff]
    %v10256 = vld [vmem:[#allocation3 + $0x508] sm:$0xff]
    %v10257 = vld [vmem:[#allocation3 + $0x510] sm:$0xff]
    %v10258 = vld [vmem:[#allocation3 + $0x518] sm:$0xff]
    %v10259 = vld [vmem:[#allocation3 + $0x520] sm:$0xff]
    %v10260 = vld [vmem:[#allocation3 + $0x528] sm:$0xff]
    %v10261 = vld [vmem:[#allocation3 + $0x530] sm:$0xff]
    %v10262 = vld [vmem:[#allocation3 + $0x538] sm:$0xff]
    %v10263 = vld [vmem:[#allocation3 + $0x540] sm:$0xff]
    %v10264 = vld [vmem:[#allocation3 + $0x548] sm:$0xff]
    %v10265 = vld [vmem:[#allocation3 + $0x550] sm:$0xff]
    %v10266 = vld [vmem:[#allocation3 + $0x558] sm:$0xff]
    %v10267 = vld [vmem:[#allocation3 + $0x560] sm:$0xff]
    %v10268 = vld [vmem:[#allocation3 + $0x568] sm:$0xff]
    %v10269 = vld [vmem:[#allocation3 + $0x570] sm:$0xff]
    %v10270 = vld [vmem:[#allocation3 + $0x578] sm:$0xff]
    %v10271 = vld [vmem:[#allocation3 + $0x580] sm:$0xff]
    %v10272 = vld [vmem:[#allocation3 + $0x588] sm:$0xff]
    %v10273 = vld [vmem:[#allocation3 + $0x590] sm:$0xff]
    %v10274 = vld [vmem:[#allocation3 + $0x598] sm:$0xff]
    %v10275 = vld [vmem:[#allocation3 + $0x5a0] sm:$0xff]
    %v10276 = vld [vmem:[#allocation3 + $0x5a8] sm:$0xff]
    %v10277 = vld [vmem:[#allocation3 + $0x5b0] sm:$0xff]
    %v10278 = vld [vmem:[#allocation3 + $0x5b8] sm:$0xff]
    %v10279 = vld [vmem:[#allocation3 + $0x5c0] sm:$0xff]
    %v10280 = vld [vmem:[#allocation3 + $0x5c8] sm:$0xff]
    %v10281 = vld [vmem:[#allocation3 + $0x5d0] sm:$0xff]
    %v10282 = vld [vmem:[#allocation3 + $0x5d8] sm:$0xff]
    %v10283 = vld [vmem:[#allocation3 + $0x5e0] sm:$0xff]
    %v10284 = vld [vmem:[#allocation3 + $0x5e8] sm:$0xff]
    %v10285 = vld [vmem:[#allocation3 + $0x5f0] sm:$0xff]
    %v10286 = vld [vmem:[#allocation3 + $0x5f8] sm:$0xff]
    %v10287 = vld [vmem:[#allocation3 + $0x600] sm:$0xff]
    %v10288 = vld [vmem:[#allocation3 + $0x608] sm:$0xff]
    %v10289 = vld [vmem:[#allocation3 + $0x610] sm:$0xff]
    %v10290 = vld [vmem:[#allocation3 + $0x618] sm:$0xff]
    %v10291 = vld [vmem:[#allocation3 + $0x620] sm:$0xff]
    %v10292 = vld [vmem:[#allocation3 + $0x628] sm:$0xff]
    %v10293 = vld [vmem:[#allocation3 + $0x630] sm:$0xff]
    %v10294 = vld [vmem:[#allocation3 + $0x638] sm:$0xff]
    %v10295 = vld [vmem:[#allocation3 + $0x640] sm:$0xff]
    %v10296 = vld [vmem:[#allocation3 + $0x648] sm:$0xff]
    %v10297 = vld [vmem:[#allocation3 + $0x650] sm:$0xff]
    %v10298 = vld [vmem:[#allocation3 + $0x658] sm:$0xff]
    %v10299 = vld [vmem:[#allocation3 + $0x660] sm:$0xff]
    %v10300 = vld [vmem:[#allocation3 + $0x668] sm:$0xff]
    %v10301 = vld [vmem:[#allocation3 + $0x670] sm:$0xff]
    %v10302 = vld [vmem:[#allocation3 + $0x678] sm:$0xff]
    %v10303 = vld [vmem:[#allocation3 + $0x680] sm:$0xff]
    %v10304 = vld [vmem:[#allocation3 + $0x688] sm:$0xff]
    %v10305 = vld [vmem:[#allocation3 + $0x690] sm:$0xff]
    %v10306 = vld [vmem:[#allocation3 + $0x698] sm:$0xff]
    %v10307 = vld [vmem:[#allocation3 + $0x6a0] sm:$0xff]
    %v10308 = vld [vmem:[#allocation3 + $0x6a8] sm:$0xff]
    %v10309 = vld [vmem:[#allocation3 + $0x6b0] sm:$0xff]
    %v10310 = vld [vmem:[#allocation3 + $0x6b8] sm:$0xff]
    %v10311 = vld [vmem:[#allocation3 + $0x6c0] sm:$0xff]
    %v10312 = vld [vmem:[#allocation3 + $0x6c8] sm:$0xff]
    %v10313 = vld [vmem:[#allocation3 + $0x6d0] sm:$0xff]
    %v10314 = vld [vmem:[#allocation3 + $0x6d8] sm:$0xff]
    %v10315 = vld [vmem:[#allocation3 + $0x6e0] sm:$0xff]
    %v10316 = vld [vmem:[#allocation3 + $0x6e8] sm:$0xff]
    %v10317 = vld [vmem:[#allocation3 + $0x6f0] sm:$0xff]
    %v10318 = vld [vmem:[#allocation3 + $0x6f8] sm:$0xff]
    %v10319 = vld [vmem:[#allocation3 + $0x700] sm:$0xff]
    %v10320 = vld [vmem:[#allocation3 + $0x708] sm:$0xff]
    %v10321 = vld [vmem:[#allocation3 + $0x710] sm:$0xff]
    %v10322 = vld [vmem:[#allocation3 + $0x718] sm:$0xff]
    %v10323 = vld [vmem:[#allocation3 + $0x720] sm:$0xff]
    %v10324 = vld [vmem:[#allocation3 + $0x728] sm:$0xff]
    %v10325 = vld [vmem:[#allocation3 + $0x730] sm:$0xff]
    %v10326 = vld [vmem:[#allocation3 + $0x738] sm:$0xff]
    %v10327 = vld [vmem:[#allocation3 + $0x740] sm:$0xff]
    %v10328 = vld [vmem:[#allocation3 + $0x748] sm:$0xff]
    %v10329 = vld [vmem:[#allocation3 + $0x750] sm:$0xff]
    %v10330 = vld [vmem:[#allocation3 + $0x758] sm:$0xff]
    %v10331 = vld [vmem:[#allocation3 + $0x760] sm:$0xff]
    %v10332 = vld [vmem:[#allocation3 + $0x768] sm:$0xff]
    %v10333 = vld [vmem:[#allocation3 + $0x770] sm:$0xff]
    %v10334 = vld [vmem:[#allocation3 + $0x778] sm:$0xff]
    %v10335 = vld [vmem:[#allocation3 + $0x780] sm:$0xff]
    %v10336 = vld [vmem:[#allocation3 + $0x788] sm:$0xff]
    %v10337 = vld [vmem:[#allocation3 + $0x790] sm:$0xff]
    %v10338 = vld [vmem:[%s4] sm:$0xff]
    %v10339 = vld [vmem:[%s4 + $0x8] sm:$0xff]
    %v10340 = vld [vmem:[%s4 + $0x10] sm:$0xff]
    %v10341 = vld [vmem:[%s4 + $0x18] sm:$0xff]
    %v10342 = vld [vmem:[%s4 + $0x20] sm:$0xff]
    %v10343 = vld [vmem:[%s4 + $0x28] sm:$0xff]
    %v10344 = vld [vmem:[%s4 + $0x30] sm:$0xff]
    %v10345 = vld [vmem:[%s4 + $0x38] sm:$0xff]
    %v10346 = vld [vmem:[%s4 + $0x40] sm:$0xff]
    %v10347 = vld [vmem:[%s4 + $0x48] sm:$0xff]
    %v10348 = vld [vmem:[%s4 + $0x50] sm:$0xff]
    %v10349 = vld [vmem:[%s4 + $0x58] sm:$0xff]
    %v10350 = vld [vmem:[%s4 + $0x60] sm:$0xff]
    %v10351 = vld [vmem:[%s4 + $0x68] sm:$0xff]
    %v10352 = vld [vmem:[%s4 + $0x70] sm:$0xff]
    %v10353 = vld [vmem:[%s4 + $0x78] sm:$0xff]
    %v10354 = vld [vmem:[%s4 + $0x80] sm:$0xff]
    %v10355 = vld [vmem:[%s4 + $0x88] sm:$0xff]
    %v10356 = vld [vmem:[%s4 + $0x90] sm:$0xff]
    %v10357 = vld [vmem:[%s4 + $0x98] sm:$0xff]
    %v10358 = vld [vmem:[%s4 + $0xa0] sm:$0xff]
    %v10359 = vld [vmem:[%s4 + $0xa8] sm:$0xff]
    %v10360 = vld [vmem:[%s4 + $0xb0] sm:$0xff]
    %v10361 = vld [vmem:[%s4 + $0xb8] sm:$0xff]
    %v10362 = vld [vmem:[%s4 + $0xc0] sm:$0xff]
    %v10363 = vld [vmem:[%s4 + $0xc8] sm:$0xff]
    %v10364 = vld [vmem:[%s4 + $0xd0] sm:$0xff]
    %v10365 = vld [vmem:[%s4 + $0xd8] sm:$0xff]
    %v10366 = vld [vmem:[%s4 + $0xe0] sm:$0xff]
    %v10367 = vld [vmem:[%s4 + $0xe8] sm:$0xff]
    %v10368 = vld [vmem:[%s4 + $0xf0] sm:$0xff]
    %v10369 = vld [vmem:[%s4 + $0xf8] sm:$0xff]
    %v10370 = vld [vmem:[%s4 + $0x100] sm:$0xff]
    %v10371 = vld [vmem:[%s4 + $0x108] sm:$0xff]
    %v10372 = vld [vmem:[%s4 + $0x110] sm:$0xff]
    %v10373 = vld [vmem:[%s4 + $0x118] sm:$0xff]
    %v10374 = vld [vmem:[%s5] sm:$0x1]
    %v10376 = vlaneseq
    %v10377 = vshrl.u32 %v10376, 7
    %v10378 = vsub.s32 0, %v10377
    %v10379 = vrot.slane %v10374, %v10378
    %v10382 = vsel %vm2059, %v10097, 0
    %v10385 = vsel %vm2059, %v10100, 0
    %v10388 = vsel %vm2059, %v10103, 0
    %v10391 = vsel %vm2059, %v10106, 0
    %v10394 = vsel %vm2059, %v10109, 0
    %v10397 = vsel %vm2059, %v10112, 0
    %v10400 = vsel %vm2059, %v10115, 0
    %v10403 = vsel %vm2059, %v10118, 0
    %v10406 = vsel %vm2059, %v10121, 0
    %v10409 = vsel %vm2059, %v10124, 0
    %v10412 = vsel %vm2059, %v10127, 0
    %v10415 = vsel %vm2059, %v10130, 0
    %v10418 = vsel %vm2059, %v10133, 0
    %v10421 = vsel %vm2059, %v10136, 0
    %v10424 = vsel %vm2059, %v10139, 0
    %v10427 = vsel %vm2059, %v10142, 0
    %v10430 = vsel %vm2059, %v10145, 0
    %v10433 = vsel %vm2059, %v10148, 0
    %v10436 = vsel %vm2059, %v10151, 0
    %v10439 = vsel %vm2059, %v10154, 0
    %v10442 = vsel %vm2059, %v10157, 0
    %v10445 = vsel %vm2059, %v10160, 0
    %v10448 = vsel %vm2059, %v10163, 0
    %v10451 = vsel %vm2059, %v10166, 0
    %v10454 = vsel %vm2059, %v10169, 0
    %v10457 = vsel %vm2059, %v10172, 0
    %v10460 = vsel %vm2059, %v10175, 0
    %v10463 = vsel %vm2059, %v10178, 0
    %v10466 = vsel %vm2059, %v10181, 0
    %v10469 = vsel %vm2059, %v10184, 0
    %v10472 = vsel %vm2059, %v10187, 0
    %v10475 = vsel %vm2059, %v10190, 0
    %v10478 = vsel %vm2059, %v10193, 0
    %v10481 = vsel %vm2059, %v10196, 0
    %v10484 = vsel %vm2059, %v10199, 0
    %v10487 = vsel %vm2059, %v10202, 0
    %v10490 = vsel %vm2059, %v10205, 0
    %v10493 = vsel %vm2059, %v10208, 0
    %v10496 = vsel %vm2059, %v10211, 0
    %v10499 = vsel %vm2059, %v10214, 0
    %v10502 = vsel %vm2059, %v10217, 0
    %v10505 = vsel %vm2059, %v10220, 0
    %v10508 = vsel %vm2059, %v10223, 0
    %v10511 = vsel %vm2059, %v10226, 0
    %v10514 = vsel %vm2059, %v10229, 0
    %v10517 = vsel %vm2059, %v10232, 0
    %v10520 = vsel %vm2059, %v10235, 0
    %v10523 = vsel %vm2059, %v10238, 0
    %v10526 = vsel %vm2059, %v10241, 0
    %v10529 = vsel %vm2059, %v10244, 0
    %v10532 = vsel %vm2059, %v10247, 0
    %v10535 = vsel %vm2059, %v10250, 0
    %v10538 = vsel %vm2059, %v10253, 0
    %v10541 = vsel %vm2059, %v10256, 0
    %v10544 = vsel %vm2059, %v10259, 0
    %v10547 = vsel %vm2059, %v10262, 0
    %v10550 = vsel %vm2059, %v10265, 0
    %v10553 = vsel %vm2059, %v10268, 0
    %v10556 = vsel %vm2059, %v10271, 0
    %v10559 = vsel %vm2059, %v10274, 0
    %v10562 = vsel %vm2059, %v10277, 0
    %v10565 = vsel %vm2059, %v10280, 0
    %v10568 = vsel %vm2059, %v10283, 0
    %v10571 = vsel %vm2059, %v10286, 0
    %v10574 = vsel %vm2059, %v10289, 0
    %v10577 = vsel %vm2059, %v10292, 0
    %v10580 = vsel %vm2059, %v10295, 0
    %v10583 = vsel %vm2059, %v10298, 0
    %v10586 = vsel %vm2059, %v10301, 0
    %v10589 = vsel %vm2059, %v10304, 0
    %v10592 = vsel %vm2059, %v10307, 0
    %v10595 = vsel %vm2059, %v10310, 0
    %v10598 = vsel %vm2059, %v10313, 0
    %v10601 = vsel %vm2059, %v10316, 0
    %v10604 = vsel %vm2059, %v10319, 0
    %v10607 = vsel %vm2059, %v10322, 0
    %v10610 = vsel %vm2059, %v10325, 0
    %v10613 = vsel %vm2059, %v10328, 0
    %v10616 = vsel %vm2059, %v10331, 0
    %v10619 = vsel %vm2059, %v10334, 0
    %v10622 = vsel %vm2059, %v10337, 0
    %10624 = vmatprep.subr.mxu0 0.0
    %10625 = vmatpush1.msra.mxu0 %v10338
    %10626 = vmatprep.subr.mxu0 0.0
    %10627 = vmatpush1.msra.mxu0 %v10339
    %10628 = vmatprep.subr.mxu0 0.0
    %10629 = vmatpush1.msra.mxu0 %v10340
    %10630 = vmatprep.subr.mxu0 0.0
    %10631 = vmatpush1.msra.mxu0 %v10341
    %10632 = vmatprep.subr.mxu0 0.0
    %10633 = vmatpush1.msra.mxu0 %v10342
    %10634 = vmatprep.subr.mxu0 0.0
    %10635 = vmatpush1.msra.mxu0 %v10343
    %10636 = vmatprep.subr.mxu0 0.0
    %10637 = vmatpush1.msra.mxu0 %v10344
    %10638 = vmatprep.subr.mxu0 0.0
    %10639 = vmatpush1.msra.mxu0 %v10345
    %10640 = vmatprep.subr.mxu0 0.0
    %10641 = vmatpush1.msra.mxu0 %v10346
    %10642 = vmatprep.subr.mxu0 0.0
    %10643 = vmatpush1.msra.mxu0 %v10347
    %10644 = vmatprep.subr.mxu0 0.0
    %10645 = vmatpush1.msra.mxu0 %v10348
    %10646 = vmatprep.subr.mxu0 0.0
    %10647 = vmatpush1.msra.mxu0 %v10349
    %10648 = vmatprep.subr.mxu0 0.0
    %10649 = vmatpush1.msra.mxu0 %v10350
    %10650 = vmatprep.subr.mxu0 0.0
    %10651 = vmatpush1.msra.mxu0 %v10351
    %10652 = vmatprep.subr.mxu0 0.0
    %10653 = vmatpush1.msra.mxu0 %v10352
    %10654 = vmatprep.subr.mxu0 0.0
    %10655 = vmatpush1.msra.mxu0 %v10353
    %10656 = vmatprep.subr.mxu0 0.0
    %10657 = vmatpush1.msra.mxu0 %v10354
    %10658 = vmatprep.subr.mxu0 0.0
    %10659 = vmatpush1.msra.mxu0 %v10355
    %10660 = vmatprep.subr.mxu0 0.0
    %10661 = vmatpush1.msra.mxu0 %v10356
    %10662 = vmatprep.subr.mxu0 0.0
    %10663 = vmatpush1.msra.mxu0 %v10357
    %10664 = vmatprep.subr.mxu0 0.0
    %10665 = vmatpush1.msra.mxu0 %v10358
    %10666 = vmatprep.subr.mxu0 0.0
    %10667 = vmatpush1.msra.mxu0 %v10359
    %10668 = vmatprep.subr.mxu0 0.0
    %10669 = vmatpush1.msra.mxu0 %v10360
    %10670 = vmatprep.subr.mxu0 0.0
    %10671 = vmatpush1.msra.mxu0 %v10361
    %10672 = vmatprep.subr.mxu0 0.0
    %10673 = vmatpush1.msra.mxu0 %v10362
    %10674 = vmatprep.subr.mxu0 0.0
    %10675 = vmatpush1.msra.mxu0 %v10363
    %10676 = vmatprep.subr.mxu0 0.0
    %10677 = vmatpush1.msra.mxu0 %v10364
    %10678 = vmatprep.subr.mxu0 0.0
    %10679 = vmatpush1.msra.mxu0 %v10365
    %10680 = vmatprep.subr.mxu0 0.0
    %10681 = vmatpush1.msra.mxu0 %v10366
    %10682 = vmatprep.subr.mxu0 0.0
    %10683 = vmatpush1.msra.mxu0 %v10367
    %10684 = vmatprep.subr.mxu0 0.0
    %10685 = vmatpush1.msra.mxu0 %v10368
    %10686 = vmatprep.subr.mxu0 0.0
    %10687 = vmatpush1.msra.mxu0 %v10369
    %10688 = vmatprep.mubr.f32.mxu0 %v10096
    %10689 = vmatmul.mubr.f32.gmra.mrb[0].mxu0 %v10095
    %v10690 = vpop.f32.mrb[0].mxu0
    %v10691 = vadd.f32 %v10379, %v10690
    %v10692 = vpop.f32.mrb[0].mxu0
    %10693 = vmatprep.mubr.f32.mxu0 %v10099
    %10694 = vmatmul.mubr.f32.gmra.mrb[0].mxu0 %v10098
    %v10695 = vpop.f32.mrb[0].mxu0
    %v10696 = vadd.f32 %v10379, %v10695
    %v10697 = vpop.f32.mrb[0].mxu0
    %10698 = vmatprep.mubr.f32.mxu0 %v10102
    %10699 = vmatmul.mubr.f32.gmra.mrb[0].mxu0 %v10101
    %v10700 = vpop.f32.mrb[0].mxu0
    %v10701 = vadd.f32 %v10379, %v10700
    %v10702 = vpop.f32.mrb[0].mxu0
    %10703 = vmatprep.mubr.f32.mxu0 %v10105
    %10704 = vmatmul.mubr.f32.gmra.mrb[0].mxu0 %v10104
    %v10705 = vpop.f32.mrb[0].mxu0
    %v10706 = vadd.f32 %v10379, %v10705
    %v10707 = vpop.f32.mrb[0].mxu0
    %10708 = vmatprep.mubr.f32.mxu0 %v10108
    %10709 = vmatmul.mubr.f32.gmra.mrb[0].mxu0 %v10107
    %v10710 = vpop.f32.mrb[0].mxu0
    %v10711 = vadd.f32 %v10379, %v10710
    %v10712 = vpop.f32.mrb[0].mxu0
    %10713 = vmatprep.mubr.f32.mxu0 %v10111
    %10714 = vmatmul.mubr.f32.gmra.mrb[0].mxu0 %v10110
    %v10715 = vpop.f32.mrb[0].mxu0
    %v10716 = vadd.f32 %v10379, %v10715
    %v10717 = vpop.f32.mrb[0].mxu0
    %10718 = vmatprep.mubr.f32.mxu0 %v10114
    %10719 = vmatmul.mubr.f32.gmra.mrb[0].mxu0 %v10113
    %v10720 = vpop.f32.mrb[0].mxu0
    %v10721 = vadd.f32 %v10379, %v10720
    %v10722 = vpop.f32.mrb[0].mxu0
    %10723 = vmatprep.mubr.f32.mxu0 %v10117
    %10724 = vmatmul.mubr.f32.gmra.mrb[0].mxu0 %v10116
    %v10725 = vpop.f32.mrb[0].mxu0
    %v10726 = vadd.f32 %v10379, %v10725
    %v10727 = vpop.f32.mrb[0].mxu0
    %10728 = vmatprep.mubr.f32.mxu0 %v10120
    %10729 = vmatmul.mubr.f32.gmra.mrb[0].mxu0 %v10119
    %v10730 = vpop.f32.mrb[0].mxu0
    %v10731 = vadd.f32 %v10379, %v10730
    %v10732 = vpop.f32.mrb[0].mxu0
    %10733 = vmatprep.mubr.f32.mxu0 %v10123
    %10734 = vmatmul.mubr.f32.gmra.mrb[0].mxu0 %v10122
    %v10735 = vpop.f32.mrb[0].mxu0
    %v10736 = vadd.f32 %v10379, %v10735
    %v10737 = vpop.f32.mrb[0].mxu0
    %10738 = vmatprep.mubr.f32.mxu0 %v10126
    %10739 = vmatmul.mubr.f32.gmra.mrb[0].mxu0 %v10125
    %v10740 = vpop.f32.mrb[0].mxu0
    %v10741 = vadd.f32 %v10379, %v10740
    %v10742 = vpop.f32.mrb[0].mxu0
    %10743 = vmatprep.mubr.f32.mxu0 %v10129
    %10744 = vmatmul.mubr.f32.gmra.mrb[0].mxu0 %v10128
    %v10745 = vpop.f32.mrb[0].mxu0
    %v10746 = vadd.f32 %v10379, %v10745
    %v10747 = vpop.f32.mrb[0].mxu0
    %10748 = vmatprep.mubr.f32.mxu0 %v10132
    %10749 = vmatmul.mubr.f32.gmra.mrb[0].mxu0 %v10131
    %v10750 = vpop.f32.mrb[0].mxu0
    %v10751 = vadd.f32 %v10379, %v10750
    %v10752 = vpop.f32.mrb[0].mxu0
    %10753 = vmatprep.mubr.f32.mxu0 %v10135
    %10754 = vmatmul.mubr.f32.gmra.mrb[0].mxu0 %v10134
    %v10755 = vpop.f32.mrb[0].mxu0
    %v10756 = vadd.f32 %v10379, %v10755
    %v10757 = vpop.f32.mrb[0].mxu0
    %10758 = vmatprep.mubr.f32.mxu0 %v10138
    %10759 = vmatmul.mubr.f32.gmra.mrb[0].mxu0 %v10137
    %v10760 = vpop.f32.mrb[0].mxu0
    %v10761 = vadd.f32 %v10379, %v10760
    %v10762 = vpop.f32.mrb[0].mxu0
    %10763 = vmatprep.mubr.f32.mxu0 %v10141
    %10764 = vmatmul.mubr.f32.gmra.mrb[0].mxu0 %v10140
    %v10765 = vpop.f32.mrb[0].mxu0
    %v10766 = vadd.f32 %v10379, %v10765
    %v10767 = vpop.f32.mrb[0].mxu0
    %10768 = vmatprep.mubr.f32.mxu0 %v10144
    %10769 = vmatmul.mubr.f32.gmra.mrb[0].mxu0 %v10143
    %v10770 = vpop.f32.mrb[0].mxu0
    %v10771 = vadd.f32 %v10379, %v10770
    %v10772 = vpop.f32.mrb[0].mxu0
    %10773 = vmatprep.mubr.f32.mxu0 %v10147
    %10774 = vmatmul.mubr.f32.gmra.mrb[0].mxu0 %v10146
    %v10775 = vpop.f32.mrb[0].mxu0
    %v10776 = vadd.f32 %v10379, %v10775
    %v10777 = vpop.f32.mrb[0].mxu0
    %10778 = vmatprep.mubr.f32.mxu0 %v10150
    %10779 = vmatmul.mubr.f32.gmra.mrb[0].mxu0 %v10149
    %v10780 = vpop.f32.mrb[0].mxu0
    %v10781 = vadd.f32 %v10379, %v10780
    %v10782 = vpop.f32.mrb[0].mxu0
    %10783 = vmatprep.mubr.f32.mxu0 %v10153
    %10784 = vmatmul.mubr.f32.gmra.mrb[0].mxu0 %v10152
    %v10785 = vpop.f32.mrb[0].mxu0
    %v10786 = vadd.f32 %v10379, %v10785
    %v10787 = vpop.f32.mrb[0].mxu0
    %10788 = vmatprep.mubr.f32.mxu0 %v10156
    %10789 = vmatmul.mubr.f32.gmra.mrb[0].mxu0 %v10155
    %v10790 = vpop.f32.mrb[0].mxu0
    %v10791 = vadd.f32 %v10379, %v10790
    %v10792 = vpop.f32.mrb[0].mxu0
    %10793 = vmatprep.mubr.f32.mxu0 %v10159
    %10794 = vmatmul.mubr.f32.gmra.mrb[0].mxu0 %v10158
    %v10795 = vpop.f32.mrb[0].mxu0
    %v10796 = vadd.f32 %v10379, %v10795
    %v10797 = vpop.f32.mrb[0].mxu0
    %10798 = vmatprep.mubr.f32.mxu0 %v10162
    %10799 = vmatmul.mubr.f32.gmra.mrb[0].mxu0 %v10161
    %v10800 = vpop.f32.mrb[0].mxu0
    %v10801 = vadd.f32 %v10379, %v10800
    %v10802 = vpop.f32.mrb[0].mxu0
    %10803 = vmatprep.mubr.f32.mxu0 %v10165
    %10804 = vmatmul.mubr.f32.gmra.mrb[0].mxu0 %v10164
    %v10805 = vpop.f32.mrb[0].mxu0
    %v10806 = vadd.f32 %v10379, %v10805
    %v10807 = vpop.f32.mrb[0].mxu0
    %10808 = vmatprep.mubr.f32.mxu0 %v10168
    %10809 = vmatmul.mubr.f32.gmra.mrb[0].mxu0 %v10167
    %v10810 = vpop.f32.mrb[0].mxu0
    %v10811 = vadd.f32 %v10379, %v10810
    %v10812 = vpop.f32.mrb[0].mxu0
    %10813 = vmatprep.mubr.f32.mxu0 %v10171
    %10814 = vmatmul.mubr.f32.gmra.mrb[0].mxu0 %v10170
    %v10815 = vpop.f32.mrb[0].mxu0
    %v10816 = vadd.f32 %v10379, %v10815
    %v10817 = vpop.f32.mrb[0].mxu0
    %10818 = vmatprep.mubr.f32.mxu0 %v10174
    %10819 = vmatmul.mubr.f32.gmra.mrb[0].mxu0 %v10173
    %v10820 = vpop.f32.mrb[0].mxu0
    %v10821 = vadd.f32 %v10379, %v10820
    %v10822 = vpop.f32.mrb[0].mxu0
    %10823 = vmatprep.mubr.f32.mxu0 %v10177
    %10824 = vmatmul.mubr.f32.gmra.mrb[0].mxu0 %v10176
    %v10825 = vpop.f32.mrb[0].mxu0
    %v10826 = vadd.f32 %v10379, %v10825
    %v10827 = vpop.f32.mrb[0].mxu0
    %10828 = vmatprep.mubr.f32.mxu0 %v10180
    %10829 = vmatmul.mubr.f32.gmra.mrb[0].mxu0 %v10179
    %v10830 = vpop.f32.mrb[0].mxu0
    %v10831 = vadd.f32 %v10379, %v10830
    %v10832 = vpop.f32.mrb[0].mxu0
    %10833 = vmatprep.mubr.f32.mxu0 %v10183
    %10834 = vmatmul.mubr.f32.gmra.mrb[0].mxu0 %v10182
    %v10835 = vpop.f32.mrb[0].mxu0
    %v10836 = vadd.f32 %v10379, %v10835
    %v10837 = vpop.f32.mrb[0].mxu0
    %10838 = vmatprep.mubr.f32.mxu0 %v10186
    %10839 = vmatmul.mubr.f32.gmra.mrb[0].mxu0 %v10185
    %v10840 = vpop.f32.mrb[0].mxu0
    %v10841 = vadd.f32 %v10379, %v10840
    %v10842 = vpop.f32.mrb[0].mxu0
    %10843 = vmatprep.mubr.f32.mxu0 %v10189
    %10844 = vmatmul.mubr.f32.gmra.mrb[0].mxu0 %v10188
    %v10845 = vpop.f32.mrb[0].mxu0
    %v10846 = vadd.f32 %v10379, %v10845
    %v10847 = vpop.f32.mrb[0].mxu0
    %10848 = vmatprep.mubr.f32.mxu0 %v10192
    %10849 = vmatmul.mubr.f32.gmra.mrb[0].mxu0 %v10191
    %v10850 = vpop.f32.mrb[0].mxu0
    %v10851 = vadd.f32 %v10379, %v10850
    %v10852 = vpop.f32.mrb[0].mxu0
    %10853 = vmatprep.mubr.f32.mxu0 %v10195
    %10854 = vmatmul.mubr.f32.gmra.mrb[0].mxu0 %v10194
    %v10855 = vpop.f32.mrb[0].mxu0
    %v10856 = vadd.f32 %v10379, %v10855
    %v10857 = vpop.f32.mrb[0].mxu0
    %10858 = vmatprep.mubr.f32.mxu0 %v10198
    %10859 = vmatmul.mubr.f32.gmra.mrb[0].mxu0 %v10197
    %v10860 = vpop.f32.mrb[0].mxu0
    %v10861 = vadd.f32 %v10379, %v10860
    %v10862 = vpop.f32.mrb[0].mxu0
    %10863 = vmatprep.mubr.f32.mxu0 %v10201
    %10864 = vmatmul.mubr.f32.gmra.mrb[0].mxu0 %v10200
    %v10865 = vpop.f32.mrb[0].mxu0
    %v10866 = vadd.f32 %v10379, %v10865
    %v10867 = vpop.f32.mrb[0].mxu0
    %10868 = vmatprep.mubr.f32.mxu0 %v10204
    %10869 = vmatmul.mubr.f32.gmra.mrb[0].mxu0 %v10203
    %v10870 = vpop.f32.mrb[0].mxu0
    %v10871 = vadd.f32 %v10379, %v10870
    %v10872 = vpop.f32.mrb[0].mxu0
    %10873 = vmatprep.mubr.f32.mxu0 %v10207
    %10874 = vmatmul.mubr.f32.gmra.mrb[0].mxu0 %v10206
    %v10875 = vpop.f32.mrb[0].mxu0
    %v10876 = vadd.f32 %v10379, %v10875
    %v10877 = vpop.f32.mrb[0].mxu0
    %10878 = vmatprep.mubr.f32.mxu0 %v10210
    %10879 = vmatmul.mubr.f32.gmra.mrb[0].mxu0 %v10209
    %v10880 = vpop.f32.mrb[0].mxu0
    %v10881 = vadd.f32 %v10379, %v10880
    %v10882 = vpop.f32.mrb[0].mxu0
    %10883 = vmatprep.mubr.f32.mxu0 %v10213
    %10884 = vmatmul.mubr.f32.gmra.mrb[0].mxu0 %v10212
    %v10885 = vpop.f32.mrb[0].mxu0
    %v10886 = vadd.f32 %v10379, %v10885
    %v10887 = vpop.f32.mrb[0].mxu0
    %10888 = vmatprep.mubr.f32.mxu0 %v10216
    %10889 = vmatmul.mubr.f32.gmra.mrb[0].mxu0 %v10215
    %v10890 = vpop.f32.mrb[0].mxu0
    %v10891 = vadd.f32 %v10379, %v10890
    %v10892 = vpop.f32.mrb[0].mxu0
    %10893 = vmatprep.mubr.f32.mxu0 %v10219
    %10894 = vmatmul.mubr.f32.gmra.mrb[0].mxu0 %v10218
    %v10895 = vpop.f32.mrb[0].mxu0
    %v10896 = vadd.f32 %v10379, %v10895
    %v10897 = vpop.f32.mrb[0].mxu0
    %10898 = vmatprep.mubr.f32.mxu0 %v10222
    %10899 = vmatmul.mubr.f32.gmra.mrb[0].mxu0 %v10221
    %v10900 = vpop.f32.mrb[0].mxu0
    %v10901 = vadd.f32 %v10379, %v10900
    %v10902 = vpop.f32.mrb[0].mxu0
    %10903 = vmatprep.mubr.f32.mxu0 %v10225
    %10904 = vmatmul.mubr.f32.gmra.mrb[0].mxu0 %v10224
    %v10905 = vpop.f32.mrb[0].mxu0
    %v10906 = vadd.f32 %v10379, %v10905
    %v10907 = vpop.f32.mrb[0].mxu0
    %10908 = vmatprep.mubr.f32.mxu0 %v10228
    %10909 = vmatmul.mubr.f32.gmra.mrb[0].mxu0 %v10227
    %v10910 = vpop.f32.mrb[0].mxu0
    %v10911 = vadd.f32 %v10379, %v10910
    %v10912 = vpop.f32.mrb[0].mxu0
    %10913 = vmatprep.mubr.f32.mxu0 %v10231
    %10914 = vmatmul.mubr.f32.gmra.mrb[0].mxu0 %v10230
    %v10915 = vpop.f32.mrb[0].mxu0
    %v10916 = vadd.f32 %v10379, %v10915
    %v10917 = vpop.f32.mrb[0].mxu0
    %10918 = vmatprep.mubr.f32.mxu0 %v10234
    %10919 = vmatmul.mubr.f32.gmra.mrb[0].mxu0 %v10233
    %v10920 = vpop.f32.mrb[0].mxu0
    %v10921 = vadd.f32 %v10379, %v10920
    %v10922 = vpop.f32.mrb[0].mxu0
    %10923 = vmatprep.mubr.f32.mxu0 %v10237
    %10924 = vmatmul.mubr.f32.gmra.mrb[0].mxu0 %v10236
    %v10925 = vpop.f32.mrb[0].mxu0
    %v10926 = vadd.f32 %v10379, %v10925
    %v10927 = vpop.f32.mrb[0].mxu0
    %10928 = vmatprep.mubr.f32.mxu0 %v10240
    %10929 = vmatmul.mubr.f32.gmra.mrb[0].mxu0 %v10239
    %v10930 = vpop.f32.mrb[0].mxu0
    %v10931 = vadd.f32 %v10379, %v10930
    %v10932 = vpop.f32.mrb[0].mxu0
    %10933 = vmatprep.mubr.f32.mxu0 %v10243
    %10934 = vmatmul.mubr.f32.gmra.mrb[0].mxu0 %v10242
    %v10935 = vpop.f32.mrb[0].mxu0
    %v10936 = vadd.f32 %v10379, %v10935
    %v10937 = vpop.f32.mrb[0].mxu0
    %10938 = vmatprep.mubr.f32.mxu0 %v10246
    %10939 = vmatmul.mubr.f32.gmra.mrb[0].mxu0 %v10245
    %v10940 = vpop.f32.mrb[0].mxu0
    %v10941 = vadd.f32 %v10379, %v10940
    %v10942 = vpop.f32.mrb[0].mxu0
    %10943 = vmatprep.mubr.f32.mxu0 %v10249
    %10944 = vmatmul.mubr.f32.gmra.mrb[0].mxu0 %v10248
    %v10945 = vpop.f32.mrb[0].mxu0
    %v10946 = vadd.f32 %v10379, %v10945
    %v10947 = vpop.f32.mrb[0].mxu0
    %10948 = vmatprep.mubr.f32.mxu0 %v10252
    %10949 = vmatmul.mubr.f32.gmra.mrb[0].mxu0 %v10251
    %v10950 = vpop.f32.mrb[0].mxu0
    %v10951 = vadd.f32 %v10379, %v10950
    %v10952 = vpop.f32.mrb[0].mxu0
    %10953 = vmatprep.mubr.f32.mxu0 %v10255
    %10954 = vmatmul.mubr.f32.gmra.mrb[0].mxu0 %v10254
    %v10955 = vpop.f32.mrb[0].mxu0
    %v10956 = vadd.f32 %v10379, %v10955
    %v10957 = vpop.f32.mrb[0].mxu0
    %10958 = vmatprep.mubr.f32.mxu0 %v10258
    %10959 = vmatmul.mubr.f32.gmra.mrb[0].mxu0 %v10257
    %v10960 = vpop.f32.mrb[0].mxu0
    %v10961 = vadd.f32 %v10379, %v10960
    %v10962 = vpop.f32.mrb[0].mxu0
    %10963 = vmatprep.mubr.f32.mxu0 %v10261
    %10964 = vmatmul.mubr.f32.gmra.mrb[0].mxu0 %v10260
    %v10965 = vpop.f32.mrb[0].mxu0
    %v10966 = vadd.f32 %v10379, %v10965
    %v10967 = vpop.f32.mrb[0].mxu0
    %10968 = vmatprep.mubr.f32.mxu0 %v10264
    %10969 = vmatmul.mubr.f32.gmra.mrb[0].mxu0 %v10263
    %v10970 = vpop.f32.mrb[0].mxu0
    %v10971 = vadd.f32 %v10379, %v10970
    %v10972 = vpop.f32.mrb[0].mxu0
    %10973 = vmatprep.mubr.f32.mxu0 %v10267
    %10974 = vmatmul.mubr.f32.gmra.mrb[0].mxu0 %v10266
    %v10975 = vpop.f32.mrb[0].mxu0
    %v10976 = vadd.f32 %v10379, %v10975
    %v10977 = vpop.f32.mrb[0].mxu0
    %10978 = vmatprep.mubr.f32.mxu0 %v10270
    %10979 = vmatmul.mubr.f32.gmra.mrb[0].mxu0 %v10269
    %v10980 = vpop.f32.mrb[0].mxu0
    %v10981 = vadd.f32 %v10379, %v10980
    %v10982 = vpop.f32.mrb[0].mxu0
    %10983 = vmatprep.mubr.f32.mxu0 %v10273
    %10984 = vmatmul.mubr.f32.gmra.mrb[0].mxu0 %v10272
    %v10985 = vpop.f32.mrb[0].mxu0
    %v10986 = vadd.f32 %v10379, %v10985
    %v10987 = vpop.f32.mrb[0].mxu0
    %10988 = vmatprep.mubr.f32.mxu0 %v10276
    %10989 = vmatmul.mubr.f32.gmra.mrb[0].mxu0 %v10275
    %v10990 = vpop.f32.mrb[0].mxu0
    %v10991 = vadd.f32 %v10379, %v10990
    %v10992 = vpop.f32.mrb[0].mxu0
    %10993 = vmatprep.mubr.f32.mxu0 %v10279
    %10994 = vmatmul.mubr.f32.gmra.mrb[0].mxu0 %v10278
    %v10995 = vpop.f32.mrb[0].mxu0
    %v10996 = vadd.f32 %v10379, %v10995
    %v10997 = vpop.f32.mrb[0].mxu0
    %10998 = vmatprep.mubr.f32.mxu0 %v10282
    %10999 = vmatmul.mubr.f32.gmra.mrb[0].mxu0 %v10281
    %v11000 = vpop.f32.mrb[0].mxu0
    %v11001 = vadd.f32 %v10379, %v11000
    %v11002 = vpop.f32.mrb[0].mxu0
    %11003 = vmatprep.mubr.f32.mxu0 %v10285
    %11004 = vmatmul.mubr.f32.gmra.mrb[0].mxu0 %v10284
    %v11005 = vpop.f32.mrb[0].mxu0
    %v11006 = vadd.f32 %v10379, %v11005
    %v11007 = vpop.f32.mrb[0].mxu0
    %11008 = vmatprep.mubr.f32.mxu0 %v10288
    %11009 = vmatmul.mubr.f32.gmra.mrb[0].mxu0 %v10287
    %v11010 = vpop.f32.mrb[0].mxu0
    %v11011 = vadd.f32 %v10379, %v11010
    %v11012 = vpop.f32.mrb[0].mxu0
    %11013 = vmatprep.mubr.f32.mxu0 %v10291
    %11014 = vmatmul.mubr.f32.gmra.mrb[0].mxu0 %v10290
    %v11015 = vpop.f32.mrb[0].mxu0
    %v11016 = vadd.f32 %v10379, %v11015
    %v11017 = vpop.f32.mrb[0].mxu0
    %11018 = vmatprep.mubr.f32.mxu0 %v10294
    %11019 = vmatmul.mubr.f32.gmra.mrb[0].mxu0 %v10293
    %v11020 = vpop.f32.mrb[0].mxu0
    %v11021 = vadd.f32 %v10379, %v11020
    %v11022 = vpop.f32.mrb[0].mxu0
    %11023 = vmatprep.mubr.f32.mxu0 %v10297
    %11024 = vmatmul.mubr.f32.gmra.mrb[0].mxu0 %v10296
    %v11025 = vpop.f32.mrb[0].mxu0
    %v11026 = vadd.f32 %v10379, %v11025
    %v11027 = vpop.f32.mrb[0].mxu0
    %11028 = vmatprep.mubr.f32.mxu0 %v10300
    %11029 = vmatmul.mubr.f32.gmra.mrb[0].mxu0 %v10299
    %v11030 = vpop.f32.mrb[0].mxu0
    %v11031 = vadd.f32 %v10379, %v11030
    %v11032 = vpop.f32.mrb[0].mxu0
    %11033 = vmatprep.mubr.f32.mxu0 %v10303
    %11034 = vmatmul.mubr.f32.gmra.mrb[0].mxu0 %v10302
    %v11035 = vpop.f32.mrb[0].mxu0
    %v11036 = vadd.f32 %v10379, %v11035
    %v11037 = vpop.f32.mrb[0].mxu0
    %11038 = vmatprep.mubr.f32.mxu0 %v10306
    %11039 = vmatmul.mubr.f32.gmra.mrb[0].mxu0 %v10305
    %v11040 = vpop.f32.mrb[0].mxu0
    %v11041 = vadd.f32 %v10379, %v11040
    %v11042 = vpop.f32.mrb[0].mxu0
    %11043 = vmatprep.mubr.f32.mxu0 %v10309
    %11044 = vmatmul.mubr.f32.gmra.mrb[0].mxu0 %v10308
    %v11045 = vpop.f32.mrb[0].mxu0
    %v11046 = vadd.f32 %v10379, %v11045
    %v11047 = vpop.f32.mrb[0].mxu0
    %11048 = vmatprep.mubr.f32.mxu0 %v10312
    %11049 = vmatmul.mubr.f32.gmra.mrb[0].mxu0 %v10311
    %v11050 = vpop.f32.mrb[0].mxu0
    %v11051 = vadd.f32 %v10379, %v11050
    %v11052 = vpop.f32.mrb[0].mxu0
    %11053 = vmatprep.mubr.f32.mxu0 %v10315
    %11054 = vmatmul.mubr.f32.gmra.mrb[0].mxu0 %v10314
    %v11055 = vpop.f32.mrb[0].mxu0
    %v11056 = vadd.f32 %v10379, %v11055
    %v11057 = vpop.f32.mrb[0].mxu0
    %11058 = vmatprep.mubr.f32.mxu0 %v10318
    %11059 = vmatmul.mubr.f32.gmra.mrb[0].mxu0 %v10317
    %v11060 = vpop.f32.mrb[0].mxu0
    %v11061 = vadd.f32 %v10379, %v11060
    %v11062 = vpop.f32.mrb[0].mxu0
    %11063 = vmatprep.mubr.f32.mxu0 %v10321
    %11064 = vmatmul.mubr.f32.gmra.mrb[0].mxu0 %v10320
    %v11065 = vpop.f32.mrb[0].mxu0
    %v11066 = vadd.f32 %v10379, %v11065
    %v11067 = vpop.f32.mrb[0].mxu0
    %11068 = vmatprep.mubr.f32.mxu0 %v10324
    %11069 = vmatmul.mubr.f32.gmra.mrb[0].mxu0 %v10323
    %v11070 = vpop.f32.mrb[0].mxu0
    %v11071 = vadd.f32 %v10379, %v11070
    %v11072 = vpop.f32.mrb[0].mxu0
    %11073 = vmatprep.mubr.f32.mxu0 %v10327
    %11074 = vmatmul.mubr.f32.gmra.mrb[0].mxu0 %v10326
    %v11075 = vpop.f32.mrb[0].mxu0
    %v11076 = vadd.f32 %v10379, %v11075
    %v11077 = vpop.f32.mrb[0].mxu0
    %11078 = vmatprep.mubr.f32.mxu0 %v10330
    %11079 = vmatmul.mubr.f32.gmra.mrb[0].mxu0 %v10329
    %v11080 = vpop.f32.mrb[0].mxu0
    %v11081 = vadd.f32 %v10379, %v11080
    %v11082 = vpop.f32.mrb[0].mxu0
    %11083 = vmatprep.mubr.f32.mxu0 %v10333
    %11084 = vmatmul.mubr.f32.gmra.mrb[0].mxu0 %v10332
    %v11085 = vpop.f32.mrb[0].mxu0
    %v11086 = vadd.f32 %v10379, %v11085
    %v11087 = vpop.f32.mrb[0].mxu0
    %11088 = vmatprep.mubr.f32.mxu0 %v10336
    %11089 = vmatmul.mubr.f32.gmra.mrb[0].mxu0 %v10335
    %v11090 = vpop.f32.mrb[0].mxu0
    %v11091 = vadd.f32 %v10379, %v11090
    %v11092 = vpop.f32.mrb[0].mxu0
    %11093 = vdwg.mxu0
    %11094 = vmatprep.subr.mxu0 0.0
    %11095 = vmatpush1.msra.mxu0 %v10370
    %11096 = vmatprep.subr.mxu0 0.0
    %11097 = vmatpush1.msra.mxu0 %v10371
    %11098 = vmatprep.subr.mxu0 0.0
    %11099 = vmatpush1.msra.mxu0 %v10372
    %11100 = vmatprep.subr.mxu0 0.0
    %11101 = vmatpush1.msra.mxu0 %v10373
    %11102 = vmatprep.subr.mxu0 0.0
    %11103 = vmatpush1.msra.mxu0 0.0
    %11104 = vmatprep.subr.mxu0 0.0
    %11105 = vmatpush1.msra.mxu0 0.0
    %11106 = vmatprep.subr.mxu0 0.0
    %11107 = vmatpush1.msra.mxu0 0.0
    %11108 = vmatprep.subr.mxu0 0.0
    %11109 = vmatpush1.msra.mxu0 0.0
    %11110 = vmatprep.subr.mxu0 0.0
    %11111 = vmatpush1.msra.mxu0 0.0
    %11112 = vmatprep.subr.mxu0 0.0
    %11113 = vmatpush1.msra.mxu0 0.0
    %11114 = vmatprep.subr.mxu0 0.0
    %11115 = vmatpush1.msra.mxu0 0.0
    %11116 = vmatprep.subr.mxu0 0.0
    %11117 = vmatpush1.msra.mxu0 0.0
    %11118 = vmatprep.subr.mxu0 0.0
    %11119 = vmatpush1.msra.mxu0 0.0
    %11120 = vmatprep.subr.mxu0 0.0
    %11121 = vmatpush1.msra.mxu0 0.0
    %11122 = vmatprep.subr.mxu0 0.0
    %11123 = vmatpush1.msra.mxu0 0.0
    %11124 = vmatprep.subr.mxu0 0.0
    %11125 = vmatpush1.msra.mxu0 0.0
    %11126 = vmatprep.subr.mxu0 0.0
    %11127 = vmatpush1.msra.mxu0 0.0
    %11128 = vmatprep.subr.mxu0 0.0
    %11129 = vmatpush1.msra.mxu0 0.0
    %11130 = vmatprep.subr.mxu0 0.0
    %11131 = vmatpush1.msra.mxu0 0.0
    %11132 = vmatprep.subr.mxu0 0.0
    %11133 = vmatpush1.msra.mxu0 0.0
    %11134 = vmatprep.subr.mxu0 0.0
    %11135 = vmatpush1.msra.mxu0 0.0
    %11136 = vmatprep.subr.mxu0 0.0
    %11137 = vmatpush1.msra.mxu0 0.0
    %11138 = vmatprep.subr.mxu0 0.0
    %11139 = vmatpush1.msra.mxu0 0.0
    %11140 = vmatprep.subr.mxu0 0.0
    %11141 = vmatpush1.msra.mxu0 0.0
    %11142 = vmatprep.subr.mxu0 0.0
    %11143 = vmatpush1.msra.mxu0 0.0
    %11144 = vmatprep.subr.mxu0 0.0
    %11145 = vmatpush1.msra.mxu0 0.0
    %11146 = vmatprep.subr.mxu0 0.0
    %11147 = vmatpush1.msra.mxu0 0.0
    %11148 = vmatprep.subr.mxu0 0.0
    %11149 = vmatpush1.msra.mxu0 0.0
    %11150 = vmatprep.subr.mxu0 0.0
    %11151 = vmatpush1.msra.mxu0 0.0
    %11152 = vmatprep.subr.mxu0 0.0
    %11153 = vmatpush1.msra.mxu0 0.0
    %11154 = vmatprep.subr.mxu0 0.0
    %11155 = vmatpush1.msra.mxu0 0.0
    %11156 = vmatprep.subr.mxu0 0.0
    %11157 = vmatpush1.msra.mxu0 0.0
    %11158 = vmatprep.mubr.f32.mxu0 0.0
    %11159 = vmatmul.mubr.f32.gmra.mrb[0].mxu0 %v10382
    %v11160 = vpop.f32.mrb[0].mxu0
    %v11161 = vadd.f32 %v10691, %v11160
    %v11162 = vpop.f32.mrb[0].mxu0
    %11163 = vmatprep.mubr.f32.mxu0 0.0
    %11164 = vmatmul.mubr.f32.gmra.mrb[0].mxu0 %v10385
    %v11165 = vpop.f32.mrb[0].mxu0
    %v11166 = vadd.f32 %v10696, %v11165
    %v11167 = vpop.f32.mrb[0].mxu0
    %11168 = vmatprep.mubr.f32.mxu0 0.0
    %11169 = vmatmul.mubr.f32.gmra.mrb[0].mxu0 %v10388
    %v11170 = vpop.f32.mrb[0].mxu0
    %v11171 = vadd.f32 %v10701, %v11170
    %v11172 = vpop.f32.mrb[0].mxu0
    %11173 = vmatprep.mubr.f32.mxu0 0.0
    %11174 = vmatmul.mubr.f32.gmra.mrb[0].mxu0 %v10391
    %v11175 = vpop.f32.mrb[0].mxu0
    %v11176 = vadd.f32 %v10706, %v11175
    %v11177 = vpop.f32.mrb[0].mxu0
    %11178 = vmatprep.mubr.f32.mxu0 0.0
    %11179 = vmatmul.mubr.f32.gmra.mrb[0].mxu0 %v10394
    %v11180 = vpop.f32.mrb[0].mxu0
    %v11181 = vadd.f32 %v10711, %v11180
    %v11182 = vpop.f32.mrb[0].mxu0
    %11183 = vmatprep.mubr.f32.mxu0 0.0
    %11184 = vmatmul.mubr.f32.gmra.mrb[0].mxu0 %v10397
    %v11185 = vpop.f32.mrb[0].mxu0
    %v11186 = vadd.f32 %v10716, %v11185
    %v11187 = vpop.f32.mrb[0].mxu0
    %11188 = vmatprep.mubr.f32.mxu0 0.0
    %11189 = vmatmul.mubr.f32.gmra.mrb[0].mxu0 %v10400
    %v11190 = vpop.f32.mrb[0].mxu0
    %v11191 = vadd.f32 %v10721, %v11190
    %v11192 = vpop.f32.mrb[0].mxu0
    %11193 = vmatprep.mubr.f32.mxu0 0.0
    %11194 = vmatmul.mubr.f32.gmra.mrb[0].mxu0 %v10403
    %v11195 = vpop.f32.mrb[0].mxu0
    %v11196 = vadd.f32 %v10726, %v11195
    %v11197 = vpop.f32.mrb[0].mxu0
    %11198 = vmatprep.mubr.f32.mxu0 0.0
    %11199 = vmatmul.mubr.f32.gmra.mrb[0].mxu0 %v10406
    %v11200 = vpop.f32.mrb[0].mxu0
    %v11201 = vadd.f32 %v10731, %v11200
    %v11202 = vpop.f32.mrb[0].mxu0
    %11203 = vmatprep.mubr.f32.mxu0 0.0
    %11204 = vmatmul.mubr.f32.gmra.mrb[0].mxu0 %v10409
    %v11205 = vpop.f32.mrb[0].mxu0
    %v11206 = vadd.f32 %v10736, %v11205
    %v11207 = vpop.f32.mrb[0].mxu0
    %11208 = vmatprep.mubr.f32.mxu0 0.0
    %11209 = vmatmul.mubr.f32.gmra.mrb[0].mxu0 %v10412
    %v11210 = vpop.f32.mrb[0].mxu0
    %v11211 = vadd.f32 %v10741, %v11210
    %v11212 = vpop.f32.mrb[0].mxu0
    %11213 = vmatprep.mubr.f32.mxu0 0.0
    %11214 = vmatmul.mubr.f32.gmra.mrb[0].mxu0 %v10415
    %v11215 = vpop.f32.mrb[0].mxu0
    %v11216 = vadd.f32 %v10746, %v11215
    %v11217 = vpop.f32.mrb[0].mxu0
    %11218 = vmatprep.mubr.f32.mxu0 0.0
    %11219 = vmatmul.mubr.f32.gmra.mrb[0].mxu0 %v10418
    %v11220 = vpop.f32.mrb[0].mxu0
    %v11221 = vadd.f32 %v10751, %v11220
    %v11222 = vpop.f32.mrb[0].mxu0
    %11223 = vmatprep.mubr.f32.mxu0 0.0
    %11224 = vmatmul.mubr.f32.gmra.mrb[0].mxu0 %v10421
    %v11225 = vpop.f32.mrb[0].mxu0
    %v11226 = vadd.f32 %v10756, %v11225
    %v11227 = vpop.f32.mrb[0].mxu0
    %11228 = vmatprep.mubr.f32.mxu0 0.0
    %11229 = vmatmul.mubr.f32.gmra.mrb[0].mxu0 %v10424
    %v11230 = vpop.f32.mrb[0].mxu0
    %v11231 = vadd.f32 %v10761, %v11230
    %v11232 = vpop.f32.mrb[0].mxu0
    %11233 = vmatprep.mubr.f32.mxu0 0.0
    %11234 = vmatmul.mubr.f32.gmra.mrb[0].mxu0 %v10427
    %v11235 = vpop.f32.mrb[0].mxu0
    %v11236 = vadd.f32 %v10766, %v11235
    %v11237 = vpop.f32.mrb[0].mxu0
    %11238 = vmatprep.mubr.f32.mxu0 0.0
    %11239 = vmatmul.mubr.f32.gmra.mrb[0].mxu0 %v10430
    %v11240 = vpop.f32.mrb[0].mxu0
    %v11241 = vadd.f32 %v10771, %v11240
    %v11242 = vpop.f32.mrb[0].mxu0
    %11243 = vmatprep.mubr.f32.mxu0 0.0
    %11244 = vmatmul.mubr.f32.gmra.mrb[0].mxu0 %v10433
    %v11245 = vpop.f32.mrb[0].mxu0
    %v11246 = vadd.f32 %v10776, %v11245
    %v11247 = vpop.f32.mrb[0].mxu0
    %11248 = vmatprep.mubr.f32.mxu0 0.0
    %11249 = vmatmul.mubr.f32.gmra.mrb[0].mxu0 %v10436
    %v11250 = vpop.f32.mrb[0].mxu0
    %v11251 = vadd.f32 %v10781, %v11250
    %v11252 = vpop.f32.mrb[0].mxu0
    %11253 = vmatprep.mubr.f32.mxu0 0.0
    %11254 = vmatmul.mubr.f32.gmra.mrb[0].mxu0 %v10439
    %v11255 = vpop.f32.mrb[0].mxu0
    %v11256 = vadd.f32 %v10786, %v11255
    %v11257 = vpop.f32.mrb[0].mxu0
    %11258 = vmatprep.mubr.f32.mxu0 0.0
    %11259 = vmatmul.mubr.f32.gmra.mrb[0].mxu0 %v10442
    %v11260 = vpop.f32.mrb[0].mxu0
    %v11261 = vadd.f32 %v10791, %v11260
    %v11262 = vpop.f32.mrb[0].mxu0
    %11263 = vmatprep.mubr.f32.mxu0 0.0
    %11264 = vmatmul.mubr.f32.gmra.mrb[0].mxu0 %v10445
    %v11265 = vpop.f32.mrb[0].mxu0
    %v11266 = vadd.f32 %v10796, %v11265
    %v11267 = vpop.f32.mrb[0].mxu0
    %11268 = vmatprep.mubr.f32.mxu0 0.0
    %11269 = vmatmul.mubr.f32.gmra.mrb[0].mxu0 %v10448
    %v11270 = vpop.f32.mrb[0].mxu0
    %v11271 = vadd.f32 %v10801, %v11270
    %v11272 = vpop.f32.mrb[0].mxu0
    %11273 = vmatprep.mubr.f32.mxu0 0.0
    %11274 = vmatmul.mubr.f32.gmra.mrb[0].mxu0 %v10451
    %v11275 = vpop.f32.mrb[0].mxu0
    %v11276 = vadd.f32 %v10806, %v11275
    %v11277 = vpop.f32.mrb[0].mxu0
    %11278 = vmatprep.mubr.f32.mxu0 0.0
    %11279 = vmatmul.mubr.f32.gmra.mrb[0].mxu0 %v10454
    %v11280 = vpop.f32.mrb[0].mxu0
    %v11281 = vadd.f32 %v10811, %v11280
    %v11282 = vpop.f32.mrb[0].mxu0
    %11283 = vmatprep.mubr.f32.mxu0 0.0
    %11284 = vmatmul.mubr.f32.gmra.mrb[0].mxu0 %v10457
    %v11285 = vpop.f32.mrb[0].mxu0
    %v11286 = vadd.f32 %v10816, %v11285
    %v11287 = vpop.f32.mrb[0].mxu0
    %11288 = vmatprep.mubr.f32.mxu0 0.0
    %11289 = vmatmul.mubr.f32.gmra.mrb[0].mxu0 %v10460
    %v11290 = vpop.f32.mrb[0].mxu0
    %v11291 = vadd.f32 %v10821, %v11290
    %v11292 = vpop.f32.mrb[0].mxu0
    %11293 = vmatprep.mubr.f32.mxu0 0.0
    %11294 = vmatmul.mubr.f32.gmra.mrb[0].mxu0 %v10463
    %v11295 = vpop.f32.mrb[0].mxu0
    %v11296 = vadd.f32 %v10826, %v11295
    %v11297 = vpop.f32.mrb[0].mxu0
    %11298 = vmatprep.mubr.f32.mxu0 0.0
    %11299 = vmatmul.mubr.f32.gmra.mrb[0].mxu0 %v10466
    %v11300 = vpop.f32.mrb[0].mxu0
    %v11301 = vadd.f32 %v10831, %v11300
    %v11302 = vpop.f32.mrb[0].mxu0
    %11303 = vmatprep.mubr.f32.mxu0 0.0
    %11304 = vmatmul.mubr.f32.gmra.mrb[0].mxu0 %v10469
    %v11305 = vpop.f32.mrb[0].mxu0
    %v11306 = vadd.f32 %v10836, %v11305
    %v11307 = vpop.f32.mrb[0].mxu0
    %11308 = vmatprep.mubr.f32.mxu0 0.0
    %11309 = vmatmul.mubr.f32.gmra.mrb[0].mxu0 %v10472
    %v11310 = vpop.f32.mrb[0].mxu0
    %v11311 = vadd.f32 %v10841, %v11310
    %v11312 = vpop.f32.mrb[0].mxu0
    %11313 = vmatprep.mubr.f32.mxu0 0.0
    %11314 = vmatmul.mubr.f32.gmra.mrb[0].mxu0 %v10475
    %v11315 = vpop.f32.mrb[0].mxu0
    %v11316 = vadd.f32 %v10846, %v11315
    %v11317 = vpop.f32.mrb[0].mxu0
    %11318 = vmatprep.mubr.f32.mxu0 0.0
    %11319 = vmatmul.mubr.f32.gmra.mrb[0].mxu0 %v10478
    %v11320 = vpop.f32.mrb[0].mxu0
    %v11321 = vadd.f32 %v10851, %v11320
    %v11322 = vpop.f32.mrb[0].mxu0
    %11323 = vmatprep.mubr.f32.mxu0 0.0
    %11324 = vmatmul.mubr.f32.gmra.mrb[0].mxu0 %v10481
    %v11325 = vpop.f32.mrb[0].mxu0
    %v11326 = vadd.f32 %v10856, %v11325
    %v11327 = vpop.f32.mrb[0].mxu0
    %11328 = vmatprep.mubr.f32.mxu0 0.0
    %11329 = vmatmul.mubr.f32.gmra.mrb[0].mxu0 %v10484
    %v11330 = vpop.f32.mrb[0].mxu0
    %v11331 = vadd.f32 %v10861, %v11330
    %v11332 = vpop.f32.mrb[0].mxu0
    %11333 = vmatprep.mubr.f32.mxu0 0.0
    %11334 = vmatmul.mubr.f32.gmra.mrb[0].mxu0 %v10487
    %v11335 = vpop.f32.mrb[0].mxu0
    %v11336 = vadd.f32 %v10866, %v11335
    %v11337 = vpop.f32.mrb[0].mxu0
    %11338 = vmatprep.mubr.f32.mxu0 0.0
    %11339 = vmatmul.mubr.f32.gmra.mrb[0].mxu0 %v10490
    %v11340 = vpop.f32.mrb[0].mxu0
    %v11341 = vadd.f32 %v10871, %v11340
    %v11342 = vpop.f32.mrb[0].mxu0
    %11343 = vmatprep.mubr.f32.mxu0 0.0
    %11344 = vmatmul.mubr.f32.gmra.mrb[0].mxu0 %v10493
    %v11345 = vpop.f32.mrb[0].mxu0
    %v11346 = vadd.f32 %v10876, %v11345
    %v11347 = vpop.f32.mrb[0].mxu0
    %11348 = vmatprep.mubr.f32.mxu0 0.0
    %11349 = vmatmul.mubr.f32.gmra.mrb[0].mxu0 %v10496
    %v11350 = vpop.f32.mrb[0].mxu0
    %v11351 = vadd.f32 %v10881, %v11350
    %v11352 = vpop.f32.mrb[0].mxu0
    %11353 = vmatprep.mubr.f32.mxu0 0.0
    %11354 = vmatmul.mubr.f32.gmra.mrb[0].mxu0 %v10499
    %v11355 = vpop.f32.mrb[0].mxu0
    %v11356 = vadd.f32 %v10886, %v11355
    %v11357 = vpop.f32.mrb[0].mxu0
    %11358 = vmatprep.mubr.f32.mxu0 0.0
    %11359 = vmatmul.mubr.f32.gmra.mrb[0].mxu0 %v10502
    %v11360 = vpop.f32.mrb[0].mxu0
    %v11361 = vadd.f32 %v10891, %v11360
    %v11362 = vpop.f32.mrb[0].mxu0
    %11363 = vmatprep.mubr.f32.mxu0 0.0
    %11364 = vmatmul.mubr.f32.gmra.mrb[0].mxu0 %v10505
    %v11365 = vpop.f32.mrb[0].mxu0
    %v11366 = vadd.f32 %v10896, %v11365
    %v11367 = vpop.f32.mrb[0].mxu0
    %11368 = vmatprep.mubr.f32.mxu0 0.0
    %11369 = vmatmul.mubr.f32.gmra.mrb[0].mxu0 %v10508
    %v11370 = vpop.f32.mrb[0].mxu0
    %v11371 = vadd.f32 %v10901, %v11370
    %v11372 = vpop.f32.mrb[0].mxu0
    %11373 = vmatprep.mubr.f32.mxu0 0.0
    %11374 = vmatmul.mubr.f32.gmra.mrb[0].mxu0 %v10511
    %v11375 = vpop.f32.mrb[0].mxu0
    %v11376 = vadd.f32 %v10906, %v11375
    %v11377 = vpop.f32.mrb[0].mxu0
    %11378 = vmatprep.mubr.f32.mxu0 0.0
    %11379 = vmatmul.mubr.f32.gmra.mrb[0].mxu0 %v10514
    %v11380 = vpop.f32.mrb[0].mxu0
    %v11381 = vadd.f32 %v10911, %v11380
    %v11382 = vpop.f32.mrb[0].mxu0
    %11383 = vmatprep.mubr.f32.mxu0 0.0
    %11384 = vmatmul.mubr.f32.gmra.mrb[0].mxu0 %v10517
    %v11385 = vpop.f32.mrb[0].mxu0
    %v11386 = vadd.f32 %v10916, %v11385
    %v11387 = vpop.f32.mrb[0].mxu0
    %11388 = vmatprep.mubr.f32.mxu0 0.0
    %11389 = vmatmul.mubr.f32.gmra.mrb[0].mxu0 %v10520
    %v11390 = vpop.f32.mrb[0].mxu0
    %v11391 = vadd.f32 %v10921, %v11390
    %v11392 = vpop.f32.mrb[0].mxu0
    %11393 = vmatprep.mubr.f32.mxu0 0.0
    %11394 = vmatmul.mubr.f32.gmra.mrb[0].mxu0 %v10523
    %v11395 = vpop.f32.mrb[0].mxu0
    %v11396 = vadd.f32 %v10926, %v11395
    %v11397 = vpop.f32.mrb[0].mxu0
    %11398 = vmatprep.mubr.f32.mxu0 0.0
    %11399 = vmatmul.mubr.f32.gmra.mrb[0].mxu0 %v10526
    %v11400 = vpop.f32.mrb[0].mxu0
    %v11401 = vadd.f32 %v10931, %v11400
    %v11402 = vpop.f32.mrb[0].mxu0
    %11403 = vmatprep.mubr.f32.mxu0 0.0
    %11404 = vmatmul.mubr.f32.gmra.mrb[0].mxu0 %v10529
    %v11405 = vpop.f32.mrb[0].mxu0
    %v11406 = vadd.f32 %v10936, %v11405
    %v11407 = vpop.f32.mrb[0].mxu0
    %11408 = vmatprep.mubr.f32.mxu0 0.0
    %11409 = vmatmul.mubr.f32.gmra.mrb[0].mxu0 %v10532
    %v11410 = vpop.f32.mrb[0].mxu0
    %v11411 = vadd.f32 %v10941, %v11410
    %v11412 = vpop.f32.mrb[0].mxu0
    %11413 = vmatprep.mubr.f32.mxu0 0.0
    %11414 = vmatmul.mubr.f32.gmra.mrb[0].mxu0 %v10535
    %v11415 = vpop.f32.mrb[0].mxu0
    %v11416 = vadd.f32 %v10946, %v11415
    %v11417 = vpop.f32.mrb[0].mxu0
    %11418 = vmatprep.mubr.f32.mxu0 0.0
    %11419 = vmatmul.mubr.f32.gmra.mrb[0].mxu0 %v10538
    %v11420 = vpop.f32.mrb[0].mxu0
    %v11421 = vadd.f32 %v10951, %v11420
    %v11422 = vpop.f32.mrb[0].mxu0
    %11423 = vmatprep.mubr.f32.mxu0 0.0
    %11424 = vmatmul.mubr.f32.gmra.mrb[0].mxu0 %v10541
    %v11425 = vpop.f32.mrb[0].mxu0
    %v11426 = vadd.f32 %v10956, %v11425
    %v11427 = vpop.f32.mrb[0].mxu0
    %11428 = vmatprep.mubr.f32.mxu0 0.0
    %11429 = vmatmul.mubr.f32.gmra.mrb[0].mxu0 %v10544
    %v11430 = vpop.f32.mrb[0].mxu0
    %v11431 = vadd.f32 %v10961, %v11430
    %v11432 = vpop.f32.mrb[0].mxu0
    %11433 = vmatprep.mubr.f32.mxu0 0.0
    %11434 = vmatmul.mubr.f32.gmra.mrb[0].mxu0 %v10547
    %v11435 = vpop.f32.mrb[0].mxu0
    %v11436 = vadd.f32 %v10966, %v11435
    %v11437 = vpop.f32.mrb[0].mxu0
    %11438 = vmatprep.mubr.f32.mxu0 0.0
    %11439 = vmatmul.mubr.f32.gmra.mrb[0].mxu0 %v10550
    %v11440 = vpop.f32.mrb[0].mxu0
    %v11441 = vadd.f32 %v10971, %v11440
    %v11442 = vpop.f32.mrb[0].mxu0
    %11443 = vmatprep.mubr.f32.mxu0 0.0
    %11444 = vmatmul.mubr.f32.gmra.mrb[0].mxu0 %v10553
    %v11445 = vpop.f32.mrb[0].mxu0
    %v11446 = vadd.f32 %v10976, %v11445
    %v11447 = vpop.f32.mrb[0].mxu0
    %11448 = vmatprep.mubr.f32.mxu0 0.0
    %11449 = vmatmul.mubr.f32.gmra.mrb[0].mxu0 %v10556
    %v11450 = vpop.f32.mrb[0].mxu0
    %v11451 = vadd.f32 %v10981, %v11450
    %v11452 = vpop.f32.mrb[0].mxu0
    %11453 = vmatprep.mubr.f32.mxu0 0.0
    %11454 = vmatmul.mubr.f32.gmra.mrb[0].mxu0 %v10559
    %v11455 = vpop.f32.mrb[0].mxu0
    %v11456 = vadd.f32 %v10986, %v11455
    %v11457 = vpop.f32.mrb[0].mxu0
    %11458 = vmatprep.mubr.f32.mxu0 0.0
    %11459 = vmatmul.mubr.f32.gmra.mrb[0].mxu0 %v10562
    %v11460 = vpop.f32.mrb[0].mxu0
    %v11461 = vadd.f32 %v10991, %v11460
    %v11462 = vpop.f32.mrb[0].mxu0
    %11463 = vmatprep.mubr.f32.mxu0 0.0
    %11464 = vmatmul.mubr.f32.gmra.mrb[0].mxu0 %v10565
    %v11465 = vpop.f32.mrb[0].mxu0
    %v11466 = vadd.f32 %v10996, %v11465
    %v11467 = vpop.f32.mrb[0].mxu0
    %11468 = vmatprep.mubr.f32.mxu0 0.0
    %11469 = vmatmul.mubr.f32.gmra.mrb[0].mxu0 %v10568
    %v11470 = vpop.f32.mrb[0].mxu0
    %v11471 = vadd.f32 %v11001, %v11470
    %v11472 = vpop.f32.mrb[0].mxu0
    %11473 = vmatprep.mubr.f32.mxu0 0.0
    %11474 = vmatmul.mubr.f32.gmra.mrb[0].mxu0 %v10571
    %v11475 = vpop.f32.mrb[0].mxu0
    %v11476 = vadd.f32 %v11006, %v11475
    %v11477 = vpop.f32.mrb[0].mxu0
    %11478 = vmatprep.mubr.f32.mxu0 0.0
    %11479 = vmatmul.mubr.f32.gmra.mrb[0].mxu0 %v10574
    %v11480 = vpop.f32.mrb[0].mxu0
    %v11481 = vadd.f32 %v11011, %v11480
    %v11482 = vpop.f32.mrb[0].mxu0
    %11483 = vmatprep.mubr.f32.mxu0 0.0
    %11484 = vmatmul.mubr.f32.gmra.mrb[0].mxu0 %v10577
    %v11485 = vpop.f32.mrb[0].mxu0
    %v11486 = vadd.f32 %v11016, %v11485
    %v11487 = vpop.f32.mrb[0].mxu0
    %11488 = vmatprep.mubr.f32.mxu0 0.0
    %11489 = vmatmul.mubr.f32.gmra.mrb[0].mxu0 %v10580
    %v11490 = vpop.f32.mrb[0].mxu0
    %v11491 = vadd.f32 %v11021, %v11490
    %v11492 = vpop.f32.mrb[0].mxu0
    %11493 = vmatprep.mubr.f32.mxu0 0.0
    %11494 = vmatmul.mubr.f32.gmra.mrb[0].mxu0 %v10583
    %v11495 = vpop.f32.mrb[0].mxu0
    %v11496 = vadd.f32 %v11026, %v11495
    %v11497 = vpop.f32.mrb[0].mxu0
    %11498 = vmatprep.mubr.f32.mxu0 0.0
    %11499 = vmatmul.mubr.f32.gmra.mrb[0].mxu0 %v10586
    %v11500 = vpop.f32.mrb[0].mxu0
    %v11501 = vadd.f32 %v11031, %v11500
    %v11502 = vpop.f32.mrb[0].mxu0
    %11503 = vmatprep.mubr.f32.mxu0 0.0
    %11504 = vmatmul.mubr.f32.gmra.mrb[0].mxu0 %v10589
    %v11505 = vpop.f32.mrb[0].mxu0
    %v11506 = vadd.f32 %v11036, %v11505
    %v11507 = vpop.f32.mrb[0].mxu0
    %11508 = vmatprep.mubr.f32.mxu0 0.0
    %11509 = vmatmul.mubr.f32.gmra.mrb[0].mxu0 %v10592
    %v11510 = vpop.f32.mrb[0].mxu0
    %v11511 = vadd.f32 %v11041, %v11510
    %v11512 = vpop.f32.mrb[0].mxu0
    %11513 = vmatprep.mubr.f32.mxu0 0.0
    %11514 = vmatmul.mubr.f32.gmra.mrb[0].mxu0 %v10595
    %v11515 = vpop.f32.mrb[0].mxu0
    %v11516 = vadd.f32 %v11046, %v11515
    %v11517 = vpop.f32.mrb[0].mxu0
    %11518 = vmatprep.mubr.f32.mxu0 0.0
    %11519 = vmatmul.mubr.f32.gmra.mrb[0].mxu0 %v10598
    %v11520 = vpop.f32.mrb[0].mxu0
    %v11521 = vadd.f32 %v11051, %v11520
    %v11522 = vpop.f32.mrb[0].mxu0
    %11523 = vmatprep.mubr.f32.mxu0 0.0
    %11524 = vmatmul.mubr.f32.gmra.mrb[0].mxu0 %v10601
    %v11525 = vpop.f32.mrb[0].mxu0
    %v11526 = vadd.f32 %v11056, %v11525
    %v11527 = vpop.f32.mrb[0].mxu0
    %11528 = vmatprep.mubr.f32.mxu0 0.0
    %11529 = vmatmul.mubr.f32.gmra.mrb[0].mxu0 %v10604
    %v11530 = vpop.f32.mrb[0].mxu0
    %v11531 = vadd.f32 %v11061, %v11530
    %v11532 = vpop.f32.mrb[0].mxu0
    %11533 = vmatprep.mubr.f32.mxu0 0.0
    %11534 = vmatmul.mubr.f32.gmra.mrb[0].mxu0 %v10607
    %v11535 = vpop.f32.mrb[0].mxu0
    %v11536 = vadd.f32 %v11066, %v11535
    %v11537 = vpop.f32.mrb[0].mxu0
    %11538 = vmatprep.mubr.f32.mxu0 0.0
    %11539 = vmatmul.mubr.f32.gmra.mrb[0].mxu0 %v10610
    %v11540 = vpop.f32.mrb[0].mxu0
    %v11541 = vadd.f32 %v11071, %v11540
    %v11542 = vpop.f32.mrb[0].mxu0
    %11543 = vmatprep.mubr.f32.mxu0 0.0
    %11544 = vmatmul.mubr.f32.gmra.mrb[0].mxu0 %v10613
    %v11545 = vpop.f32.mrb[0].mxu0
    %v11546 = vadd.f32 %v11076, %v11545
    %v11547 = vpop.f32.mrb[0].mxu0
    %11548 = vmatprep.mubr.f32.mxu0 0.0
    %11549 = vmatmul.mubr.f32.gmra.mrb[0].mxu0 %v10616
    %v11550 = vpop.f32.mrb[0].mxu0
    %v11551 = vadd.f32 %v11081, %v11550
    %v11552 = vpop.f32.mrb[0].mxu0
    %11553 = vmatprep.mubr.f32.mxu0 0.0
    %11554 = vmatmul.mubr.f32.gmra.mrb[0].mxu0 %v10619
    %v11555 = vpop.f32.mrb[0].mxu0
    %v11556 = vadd.f32 %v11086, %v11555
    %v11557 = vpop.f32.mrb[0].mxu0
    %11558 = vmatprep.mubr.f32.mxu0 0.0
    %11559 = vmatmul.mubr.f32.gmra.mrb[0].mxu0 %v10622
    %v11560 = vpop.f32.mrb[0].mxu0
    %v11561 = vadd.f32 %v11091, %v11560
    %v11562 = vpop.f32.mrb[0].mxu0
    %11563 = vdwg.mxu0
    %v11564 = vmax.f32 %v11161, 0.0
    %v11565 = vmax.f32 %v11166, 0.0
    %v11566 = vmax.f32 %v11171, 0.0
    %v11567 = vmax.f32 %v11176, 0.0
    %v11568 = vmax.f32 %v11181, 0.0
    %v11569 = vmax.f32 %v11186, 0.0
    %v11570 = vmax.f32 %v11191, 0.0
    %v11571 = vmax.f32 %v11196, 0.0
    %v11572 = vmax.f32 %v11201, 0.0
    %v11573 = vmax.f32 %v11206, 0.0
    %v11574 = vmax.f32 %v11211, 0.0
    %v11575 = vmax.f32 %v11216, 0.0
    %v11576 = vmax.f32 %v11221, 0.0
    %v11577 = vmax.f32 %v11226, 0.0
    %v11578 = vmax.f32 %v11231, 0.0
    %v11579 = vmax.f32 %v11236, 0.0
    %v11580 = vmax.f32 %v11241, 0.0
    %v11581 = vmax.f32 %v11246, 0.0
    %v11582 = vmax.f32 %v11251, 0.0
    %v11583 = vmax.f32 %v11256, 0.0
    %v11584 = vmax.f32 %v11261, 0.0
    %v11585 = vmax.f32 %v11266, 0.0
    %v11586 = vmax.f32 %v11271, 0.0
    %v11587 = vmax.f32 %v11276, 0.0
    %v11588 = vmax.f32 %v11281, 0.0
    %v11589 = vmax.f32 %v11286, 0.0
    %v11590 = vmax.f32 %v11291, 0.0
    %v11591 = vmax.f32 %v11296, 0.0
    %v11592 = vmax.f32 %v11301, 0.0
    %v11593 = vmax.f32 %v11306, 0.0
    %v11594 = vmax.f32 %v11311, 0.0
    %v11595 = vmax.f32 %v11316, 0.0
    %v11596 = vmax.f32 %v11321, 0.0
    %v11597 = vmax.f32 %v11326, 0.0
    %v11598 = vmax.f32 %v11331, 0.0
    %v11599 = vmax.f32 %v11336, 0.0
    %v11600 = vmax.f32 %v11341, 0.0
    %v11601 = vmax.f32 %v11346, 0.0
    %v11602 = vmax.f32 %v11351, 0.0
    %v11603 = vmax.f32 %v11356, 0.0
    %v11604 = vmax.f32 %v11361, 0.0
    %v11605 = vmax.f32 %v11366, 0.0
    %v11606 = vmax.f32 %v11371, 0.0
    %v11607 = vmax.f32 %v11376, 0.0
    %v11608 = vmax.f32 %v11381, 0.0
    %v11609 = vmax.f32 %v11386, 0.0
    %v11610 = vmax.f32 %v11391, 0.0
    %v11611 = vmax.f32 %v11396, 0.0
    %v11612 = vmax.f32 %v11401, 0.0
    %v11613 = vmax.f32 %v11406, 0.0
    %v11614 = vmax.f32 %v11411, 0.0
    %v11615 = vmax.f32 %v11416, 0.0
    %v11616 = vmax.f32 %v11421, 0.0
    %v11617 = vmax.f32 %v11426, 0.0
    %v11618 = vmax.f32 %v11431, 0.0
    %v11619 = vmax.f32 %v11436, 0.0
    %v11620 = vmax.f32 %v11441, 0.0
    %v11621 = vmax.f32 %v11446, 0.0
    %v11622 = vmax.f32 %v11451, 0.0
    %v11623 = vmax.f32 %v11456, 0.0
    %v11624 = vmax.f32 %v11461, 0.0
    %v11625 = vmax.f32 %v11466, 0.0
    %v11626 = vmax.f32 %v11471, 0.0
    %v11627 = vmax.f32 %v11476, 0.0
    %v11628 = vmax.f32 %v11481, 0.0
    %v11629 = vmax.f32 %v11486, 0.0
    %v11630 = vmax.f32 %v11491, 0.0
    %v11631 = vmax.f32 %v11496, 0.0
    %v11632 = vmax.f32 %v11501, 0.0
    %v11633 = vmax.f32 %v11506, 0.0
    %v11634 = vmax.f32 %v11511, 0.0
    %v11635 = vmax.f32 %v11516, 0.0
    %v11636 = vmax.f32 %v11521, 0.0
    %v11637 = vmax.f32 %v11526, 0.0
    %v11638 = vmax.f32 %v11531, 0.0
    %v11639 = vmax.f32 %v11536, 0.0
    %v11640 = vmax.f32 %v11541, 0.0
    %v11641 = vmax.f32 %v11546, 0.0
    %v11642 = vmax.f32 %v11551, 0.0
    %v11643 = vmax.f32 %v11556, 0.0
    %v11644 = vmax.f32 %v11561, 0.0
    %v11645 = vld [vmem:[%s6] sm:$0xff]
    %v11646 = vld [vmem:[%s6 + $0x8] sm:$0xf]
    %v11649 = vcombine.high %v11645, %v11645
    %v11651 = vunpack.c.l.s4 1983009808
    %v11652 = vunpack.c.0.s8 %v11651
    %v11653 = vlaneseq
    %v11654 = vshrl.u32 %v11653, 7
    %v11655 = vsub.s32 %v11652, %v11654
    %v11656 = vrot.slane %v11645, %v11655
    %v11658 = vunpack.c.l.s4 1983009808
    %v11659 = vunpack.c.0.s8 %v11658
    %v11660 = vlaneseq
    %v11661 = vshrl.u32 %v11660, 7
    %v11662 = vsub.s32 %v11659, %v11661
    %v11663 = vrot.slane %v11649, %v11662
    %v11664 = vcombine.high %v11656, %v11656
    %v11665 = vcombine.high %v11663, %v11663
    %v11667 = vunpack.c.l.s4 1983009808
    %v11668 = vunpack.c.0.s8 %v11667
    %v11669 = vlaneseq
    %v11670 = vshrl.u32 %v11669, 7
    %v11671 = vsub.s32 %v11668, %v11670
    %v11672 = vrot.slane %v11646, %v11671
    %v11673 = vcombine.high %v11672, %v11672
    %vm11679 = vcmask 64512
    %v11680 = vsel %vm11679, %v11673, 0
    %11682 = vmatprep.subr.mxu0 0.0
    %11683 = vmatpush1.msra.mxu0 %v11564
    %11684 = vmatprep.subr.mxu0 0.0
    %11685 = vmatpush1.msra.mxu0 %v11565
    %11686 = vmatprep.subr.mxu0 0.0
    %11687 = vmatpush1.msra.mxu0 %v11566
    %11688 = vmatprep.subr.mxu0 0.0
    %11689 = vmatpush1.msra.mxu0 %v11567
    %11690 = vmatprep.subr.mxu0 0.0
    %11691 = vmatpush1.msra.mxu0 %v11568
    %11692 = vmatprep.subr.mxu0 0.0
    %11693 = vmatpush1.msra.mxu0 %v11569
    %11694 = vmatprep.subr.mxu0 0.0
    %11695 = vmatpush1.msra.mxu0 %v11570
    %11696 = vmatprep.subr.mxu0 0.0
    %11697 = vmatpush1.msra.mxu0 %v11571
    %11698 = vmatprep.subr.mxu0 0.0
    %11699 = vmatpush1.msra.mxu0 %v11572
    %11700 = vmatprep.subr.mxu0 0.0
    %11701 = vmatpush1.msra.mxu0 %v11573
    %11702 = vmatprep.subr.mxu0 0.0
    %11703 = vmatpush1.msra.mxu0 %v11574
    %11704 = vmatprep.subr.mxu0 0.0
    %11705 = vmatpush1.msra.mxu0 %v11575
    %11706 = vmatprep.subr.mxu0 0.0
    %11707 = vmatpush1.msra.mxu0 %v11576
    %11708 = vmatprep.subr.mxu0 0.0
    %11709 = vmatpush1.msra.mxu0 %v11577
    %11710 = vmatprep.subr.mxu0 0.0
    %11711 = vmatpush1.msra.mxu0 %v11578
    %11712 = vmatprep.subr.mxu0 0.0
    %11713 = vmatpush1.msra.mxu0 %v11579
    %11714 = vmatprep.subr.mxu0 0.0
    %11715 = vmatpush1.msra.mxu0 %v11580
    %11716 = vmatprep.subr.mxu0 0.0
    %11717 = vmatpush1.msra.mxu0 %v11581
    %11718 = vmatprep.subr.mxu0 0.0
    %11719 = vmatpush1.msra.mxu0 %v11582
    %11720 = vmatprep.subr.mxu0 0.0
    %11721 = vmatpush1.msra.mxu0 %v11583
    %11722 = vmatprep.subr.mxu0 0.0
    %11723 = vmatpush1.msra.mxu0 %v11584
    %11724 = vmatprep.subr.mxu0 0.0
    %11725 = vmatpush1.msra.mxu0 %v11585
    %11726 = vmatprep.subr.mxu0 0.0
    %11727 = vmatpush1.msra.mxu0 %v11586
    %11728 = vmatprep.subr.mxu0 0.0
    %11729 = vmatpush1.msra.mxu0 %v11587
    %11730 = vmatprep.subr.mxu0 0.0
    %11731 = vmatpush1.msra.mxu0 %v11588
    %11732 = vmatprep.subr.mxu0 0.0
    %11733 = vmatpush1.msra.mxu0 %v11589
    %11734 = vmatprep.subr.mxu0 0.0
    %11735 = vmatpush1.msra.mxu0 %v11590
    %11736 = vmatprep.subr.mxu0 0.0
    %11737 = vmatpush1.msra.mxu0 %v11591
    %11738 = vmatprep.subr.mxu0 0.0
    %11739 = vmatpush1.msra.mxu0 %v11592
    %11740 = vmatprep.subr.mxu0 0.0
    %11741 = vmatpush1.msra.mxu0 %v11593
    %11742 = vmatprep.subr.mxu0 0.0
    %11743 = vmatpush1.msra.mxu0 %v11594
    %11744 = vmatprep.subr.mxu0 0.0
    %11745 = vmatpush1.msra.mxu0 %v11595
    %11746 = vmatprep.mubr.f32.mxu0 %v11664
    %11747 = vmatmul.mubr.f32.gmra.mrb[0].mxu0 %v11656
    %v11748 = vpop.f32.mrb[0].mxu0
    %v11749 = vadd.f32 0.0, %v11748
    %v11750 = vpop.f32.mrb[0].mxu0
    %11751 = vdwg.mxu0
    %11752 = vmatprep.subr.mxu0 0.0
    %11753 = vmatpush1.msra.mxu0 %v11596
    %11754 = vmatprep.subr.mxu0 0.0
    %11755 = vmatpush1.msra.mxu0 %v11597
    %11756 = vmatprep.subr.mxu0 0.0
    %11757 = vmatpush1.msra.mxu0 %v11598
    %11758 = vmatprep.subr.mxu0 0.0
    %11759 = vmatpush1.msra.mxu0 %v11599
    %11760 = vmatprep.subr.mxu0 0.0
    %11761 = vmatpush1.msra.mxu0 %v11600
    %11762 = vmatprep.subr.mxu0 0.0
    %11763 = vmatpush1.msra.mxu0 %v11601
    %11764 = vmatprep.subr.mxu0 0.0
    %11765 = vmatpush1.msra.mxu0 %v11602
    %11766 = vmatprep.subr.mxu0 0.0
    %11767 = vmatpush1.msra.mxu0 %v11603
    %11768 = vmatprep.subr.mxu0 0.0
    %11769 = vmatpush1.msra.mxu0 %v11604
    %11770 = vmatprep.subr.mxu0 0.0
    %11771 = vmatpush1.msra.mxu0 %v11605
    %11772 = vmatprep.subr.mxu0 0.0
    %11773 = vmatpush1.msra.mxu0 %v11606
    %11774 = vmatprep.subr.mxu0 0.0
    %11775 = vmatpush1.msra.mxu0 %v11607
    %11776 = vmatprep.subr.mxu0 0.0
    %11777 = vmatpush1.msra.mxu0 %v11608
    %11778 = vmatprep.subr.mxu0 0.0
    %11779 = vmatpush1.msra.mxu0 %v11609
    %11780 = vmatprep.subr.mxu0 0.0
    %11781 = vmatpush1.msra.mxu0 %v11610
    %11782 = vmatprep.subr.mxu0 0.0
    %11783 = vmatpush1.msra.mxu0 %v11611
    %11784 = vmatprep.subr.mxu0 0.0
    %11785 = vmatpush1.msra.mxu0 %v11612
    %11786 = vmatprep.subr.mxu0 0.0
    %11787 = vmatpush1.msra.mxu0 %v11613
    %11788 = vmatprep.subr.mxu0 0.0
    %11789 = vmatpush1.msra.mxu0 %v11614
    %11790 = vmatprep.subr.mxu0 0.0
    %11791 = vmatpush1.msra.mxu0 %v11615
    %11792 = vmatprep.subr.mxu0 0.0
    %11793 = vmatpush1.msra.mxu0 %v11616
    %11794 = vmatprep.subr.mxu0 0.0
    %11795 = vmatpush1.msra.mxu0 %v11617
    %11796 = vmatprep.subr.mxu0 0.0
    %11797 = vmatpush1.msra.mxu0 %v11618
    %11798 = vmatprep.subr.mxu0 0.0
    %11799 = vmatpush1.msra.mxu0 %v11619
    %11800 = vmatprep.subr.mxu0 0.0
    %11801 = vmatpush1.msra.mxu0 %v11620
    %11802 = vmatprep.subr.mxu0 0.0
    %11803 = vmatpush1.msra.mxu0 %v11621
    %11804 = vmatprep.subr.mxu0 0.0
    %11805 = vmatpush1.msra.mxu0 %v11622
    %11806 = vmatprep.subr.mxu0 0.0
    %11807 = vmatpush1.msra.mxu0 %v11623
    %11808 = vmatprep.subr.mxu0 0.0
    %11809 = vmatpush1.msra.mxu0 %v11624
    %11810 = vmatprep.subr.mxu0 0.0
    %11811 = vmatpush1.msra.mxu0 %v11625
    %11812 = vmatprep.subr.mxu0 0.0
    %11813 = vmatpush1.msra.mxu0 %v11626
    %11814 = vmatprep.subr.mxu0 0.0
    %11815 = vmatpush1.msra.mxu0 %v11627
    %11816 = vmatprep.mubr.f32.mxu0 %v11665
    %11817 = vmatmul.mubr.f32.gmra.mrb[0].mxu0 %v11663
    %v11818 = vpop.f32.mrb[0].mxu0
    %v11819 = vadd.f32 %v11749, %v11818
    %v11820 = vpop.f32.mrb[0].mxu0
    %11821 = vdwg.mxu0
    %11822 = vmatprep.subr.mxu0 0.0
    %11823 = vmatpush1.msra.mxu0 %v11628
    %11824 = vmatprep.subr.mxu0 0.0
    %11825 = vmatpush1.msra.mxu0 %v11629
    %11826 = vmatprep.subr.mxu0 0.0
    %11827 = vmatpush1.msra.mxu0 %v11630
    %11828 = vmatprep.subr.mxu0 0.0
    %11829 = vmatpush1.msra.mxu0 %v11631
    %11830 = vmatprep.subr.mxu0 0.0
    %11831 = vmatpush1.msra.mxu0 %v11632
    %11832 = vmatprep.subr.mxu0 0.0
    %11833 = vmatpush1.msra.mxu0 %v11633
    %11834 = vmatprep.subr.mxu0 0.0
    %11835 = vmatpush1.msra.mxu0 %v11634
    %11836 = vmatprep.subr.mxu0 0.0
    %11837 = vmatpush1.msra.mxu0 %v11635
    %11838 = vmatprep.subr.mxu0 0.0
    %11839 = vmatpush1.msra.mxu0 %v11636
    %11840 = vmatprep.subr.mxu0 0.0
    %11841 = vmatpush1.msra.mxu0 %v11637
    %11842 = vmatprep.subr.mxu0 0.0
    %11843 = vmatpush1.msra.mxu0 %v11638
    %11844 = vmatprep.subr.mxu0 0.0
    %11845 = vmatpush1.msra.mxu0 %v11639
    %11846 = vmatprep.subr.mxu0 0.0
    %11847 = vmatpush1.msra.mxu0 %v11640
    %11848 = vmatprep.subr.mxu0 0.0
    %11849 = vmatpush1.msra.mxu0 %v11641
    %11850 = vmatprep.subr.mxu0 0.0
    %11851 = vmatpush1.msra.mxu0 %v11642
    %11852 = vmatprep.subr.mxu0 0.0
    %11853 = vmatpush1.msra.mxu0 %v11643
    %11854 = vmatprep.subr.mxu0 0.0
    %11855 = vmatpush1.msra.mxu0 %v11644
    %11856 = vmatprep.subr.mxu0 0.0
    %11857 = vmatpush1.msra.mxu0 0.0
    %11858 = vmatprep.subr.mxu0 0.0
    %11859 = vmatpush1.msra.mxu0 0.0
    %11860 = vmatprep.subr.mxu0 0.0
    %11861 = vmatpush1.msra.mxu0 0.0
    %11862 = vmatprep.subr.mxu0 0.0
    %11863 = vmatpush1.msra.mxu0 0.0
    %11864 = vmatprep.subr.mxu0 0.0
    %11865 = vmatpush1.msra.mxu0 0.0
    %11866 = vmatprep.subr.mxu0 0.0
    %11867 = vmatpush1.msra.mxu0 0.0
    %11868 = vmatprep.subr.mxu0 0.0
    %11869 = vmatpush1.msra.mxu0 0.0
    %11870 = vmatprep.subr.mxu0 0.0
    %11871 = vmatpush1.msra.mxu0 0.0
    %11872 = vmatprep.subr.mxu0 0.0
    %11873 = vmatpush1.msra.mxu0 0.0
    %11874 = vmatprep.subr.mxu0 0.0
    %11875 = vmatpush1.msra.mxu0 0.0
    %11876 = vmatprep.subr.mxu0 0.0
    %11877 = vmatpush1.msra.mxu0 0.0
    %11878 = vmatprep.subr.mxu0 0.0
    %11879 = vmatpush1.msra.mxu0 0.0
    %11880 = vmatprep.subr.mxu0 0.0
    %11881 = vmatpush1.msra.mxu0 0.0
    %11882 = vmatprep.subr.mxu0 0.0
    %11883 = vmatpush1.msra.mxu0 0.0
    %11884 = vmatprep.subr.mxu0 0.0
    %11885 = vmatpush1.msra.mxu0 0.0
    %11886 = vmatprep.mubr.f32.mxu0 %v11680
    %11887 = vmatmul.mubr.f32.gmra.mrb[0].mxu0 %v11672
    %v11888 = vpop.f32.mrb[0].mxu0
    %v11889 = vadd.f32 %v11819, %v11888
    %v11890 = vpop.f32.mrb[0].mxu0
    %11891 = vdwg.mxu0
    %v11892 = vld [vmem:[%s7] sm:$0xff]
    %v11893 = vld [vmem:[%s7 + $0x8] sm:$0xff]
    %v11894 = vld [vmem:[%s7 + $0x10] sm:$0xff]
    %v11895 = vld [vmem:[%s7 + $0x18] sm:$0xff]
    %v11896 = vld [vmem:[%s8] sm:$0x1]
    %v11898 = vlaneseq
    %v11899 = vshrl.u32 %v11898, 7
    %v11900 = vsub.s32 0, %v11899
    %v11901 = vrot.slane %v11896, %v11900
    %v11904 = vsel %vm2059, %v11889, 0
    %11906 = vmatprep.subr.mxu0 0.0
    %11907 = vmatpush1.msra.mxu0 %v11892
    %11908 = vmatprep.subr.mxu0 0.0
    %11909 = vmatpush1.msra.mxu0 %v11893
    %11910 = vmatprep.subr.mxu0 0.0
    %11911 = vmatpush1.msra.mxu0 %v11894
    %11912 = vmatprep.subr.mxu0 0.0
    %11913 = vmatpush1.msra.mxu0 %v11895
    %11914 = vmatprep.subr.mxu0 0.0
    %11915 = vmatpush1.msra.mxu0 0.0
    %11916 = vmatprep.subr.mxu0 0.0
    %11917 = vmatpush1.msra.mxu0 0.0
    %11918 = vmatprep.subr.mxu0 0.0
    %11919 = vmatpush1.msra.mxu0 0.0
    %11920 = vmatprep.subr.mxu0 0.0
    %11921 = vmatpush1.msra.mxu0 0.0
    %11922 = vmatprep.subr.mxu0 0.0
    %11923 = vmatpush1.msra.mxu0 0.0
    %11924 = vmatprep.subr.mxu0 0.0
    %11925 = vmatpush1.msra.mxu0 0.0
    %11926 = vmatprep.subr.mxu0 0.0
    %11927 = vmatpush1.msra.mxu0 0.0
    %11928 = vmatprep.subr.mxu0 0.0
    %11929 = vmatpush1.msra.mxu0 0.0
    %11930 = vmatprep.subr.mxu0 0.0
    %11931 = vmatpush1.msra.mxu0 0.0
    %11932 = vmatprep.subr.mxu0 0.0
    %11933 = vmatpush1.msra.mxu0 0.0
    %11934 = vmatprep.subr.mxu0 0.0
    %11935 = vmatpush1.msra.mxu0 0.0
    %11936 = vmatprep.subr.mxu0 0.0
    %11937 = vmatpush1.msra.mxu0 0.0
    %11938 = vmatprep.subr.mxu0 0.0
    %11939 = vmatpush1.msra.mxu0 0.0
    %11940 = vmatprep.subr.mxu0 0.0
    %11941 = vmatpush1.msra.mxu0 0.0
    %11942 = vmatprep.subr.mxu0 0.0
    %11943 = vmatpush1.msra.mxu0 0.0
    %11944 = vmatprep.subr.mxu0 0.0
    %11945 = vmatpush1.msra.mxu0 0.0
    %11946 = vmatprep.subr.mxu0 0.0
    %11947 = vmatpush1.msra.mxu0 0.0
    %11948 = vmatprep.subr.mxu0 0.0
    %11949 = vmatpush1.msra.mxu0 0.0
    %11950 = vmatprep.subr.mxu0 0.0
    %11951 = vmatpush1.msra.mxu0 0.0
    %11952 = vmatprep.subr.mxu0 0.0
    %11953 = vmatpush1.msra.mxu0 0.0
    %11954 = vmatprep.subr.mxu0 0.0
    %11955 = vmatpush1.msra.mxu0 0.0
    %11956 = vmatprep.subr.mxu0 0.0
    %11957 = vmatpush1.msra.mxu0 0.0
    %11958 = vmatprep.subr.mxu0 0.0
    %11959 = vmatpush1.msra.mxu0 0.0
    %11960 = vmatprep.subr.mxu0 0.0
    %11961 = vmatpush1.msra.mxu0 0.0
    %11962 = vmatprep.subr.mxu0 0.0
    %11963 = vmatpush1.msra.mxu0 0.0
    %11964 = vmatprep.subr.mxu0 0.0
    %11965 = vmatpush1.msra.mxu0 0.0
    %11966 = vmatprep.subr.mxu0 0.0
    %11967 = vmatpush1.msra.mxu0 0.0
    %11968 = vmatprep.subr.mxu0 0.0
    %11969 = vmatpush1.msra.mxu0 0.0
    %11970 = vmatprep.mubr.f32.mxu0 0.0
    %11971 = vmatmul.mubr.f32.gmra.mrb[0].mxu0 %v11904
    %v11972 = vpop.f32.mrb[0].mxu0
    %v11973 = vadd.f32 %v11901, %v11972
    %v11974 = vpop.f32.mrb[0].mxu0
    %11975 = vdwg.mxu0
    %11976 = vst [vmem:[#allocation4] sm:$0x3] %v11973
    // Predicated region
    $region38: #{cnn3_forward.1} parent=1 // pred_check
      _
    $region39: #{cnn3_forward.1} parent=1 // pred_check_branch
      %11978 = sbr.rel (0) target = $region41
    $region40: #{cnn3_forward.1} parent=1 // pred_region
      %s11980 = ssub.s32 32, 32
      %11981 = vsyncadd [#allocation5], %s11980
      %s11983 = sshll.u32 [#allocation4], 4
      %s11984 = int_to_ptr.vmem [resolvable:$true] %s11983
      %11986 = dma.vmem_to_hbm [thread:$0]  %s11984, 32, %s9, [#allocation5]
    $region41: #{cnn3_forward.1} parent=1 // pred_fallthru
      _
    // Predicated region
    $region42: #{cnn3_forward.1} parent=1 // pred_check
      _
    $region43: #{cnn3_forward.1} parent=1 // pred_check_branch
      %11988 = sbr.rel (0) target = $region45
    $region44: #{cnn3_forward.1} parent=1 // pred_region
      %11989 = dma.done [#allocation5], 32
    $region45: #{cnn3_forward.1} parent=1 // pred_fallthru
      _
    %11990 = vsyncpa [#allocation5], 1

</llo_original>
